<compile_context>
chip_gen: v7x
topology: tpu7x:2x2x1
jax: 0.10.0
libtpu: 0.0.40
codegen_flags: <defaults>
</compile_context>

<pallas_src>
import jax
import jax.numpy as jnp
import numpy as np
from jax.experimental import pallas as pl
from jax.experimental.pallas import tpu as pltpu

# ----------------------------- hyper-params (small, synthetic) ----------------
N_PAIRS = 16          # total entity pairs across the batch
R_SPEC = 6            # Relation_Specific_num
S = R_SPEC + 1        # slots per entity: pooling + R relation-specific
D_RED = 64            # reduced_dim
E_EXT = 64            # extractor_dim (== reduced_dim, as the reference assumes)
BLOCK = 8             # block_size for the grouped bilinear
NUM_CLS = 4           # config.num_labels
LANE = 128            # lane padding for the narrow classifier / ET heads

# The SAIS ET diagonal multiplies extractor outputs elementwise with the
# (R+1, reduced_dim) ET weight — only valid when extractor_dim == reduced_dim.
assert E_EXT == D_RED, "kernel assumes extractor_dim == reduced_dim"


# ----------------------------- fused Pallas kernel -----------------------------
def _docre_fused_kernel(
        types_ref,                      # (n, 2) int32   head/tail entity types
        hs_stk_ref, ts_stk_ref,         # (s*n, d) f32   slot-major stacked hs / ts
        rs_ref,                         # (n, s, s, d)   relation-specific contexts
        wh_ref, bh_ref,                 # (2d, e), (1, e)
        wt_ref, bt_ref,                 # (2d, e), (1, e)
        wet_ref,                        # (s, d)         ET weight (native shape)
        bet_ref,                        # (1, LANE)      ET bias (lane padded)
        ph_ref, pt_ref,                 # (e, e*b)       bilinear selection constants
        wbil_ref, bbil_ref,             # (e*b, LANE), (1, LANE)  classifier (lane padded)
        logits_ref, pred_ref, et_out_ref, scl_ref,
        hin_ref, tin_ref):              # (s*n, 2d) VMEM scratch: fused extractor inputs
    n = types_ref.shape[0]
    s = wet_ref.shape[0]
    d = wet_ref.shape[1]
    e = wh_ref.shape[1]
    lane = bet_ref.shape[1]

    # ---- 2-D one-hot type masks built in-kernel (no (n,s,1) mask inputs) -------
    types = types_ref[...]                                         # (n, 2) int32
    iota_s = jax.lax.broadcasted_iota(jnp.int32, (n, s), 1)
    oh_h2 = (iota_s == types[:, 0:1]).astype(jnp.float32)          # (n, s)
    oh_t2 = (iota_s == types[:, 1:2]).astype(jnp.float32)

    # ---- fused extractor inputs assembled in VMEM scratch ----------------------
    # hin row j*n+m = [hs[m, j] | rsh[m, j]],  tin row j*n+m = [ts[m, j] | rst[m, j]]
    #   rsh[m, j, :] = rs[m, j, tail_type_m, :]   (one-hot contraction over k)
    #   rst[m, j, :] = rs[m, head_type_m, j, :]
    # All 2-D ops: (n, d) slices of rs weighted by (n, 1) mask columns.
    hin_ref[:, :d] = hs_stk_ref[...]
    tin_ref[:, :d] = ts_stk_ref[...]
    for j in range(s):                                             # static unroll, s == 7
        rsh_j = jnp.zeros((n, d), jnp.float32)
        rst_j = jnp.zeros((n, d), jnp.float32)
        for k in range(s):
            rsh_j = rsh_j + oh_t2[:, k:k + 1] * rs_ref[:, j, k, :]
            rst_j = rst_j + oh_h2[:, k:k + 1] * rs_ref[:, k, j, :]
        hin_ref[j * n:(j + 1) * n, d:] = rsh_j
        tin_ref[j * n:(j + 1) * n, d:] = rst_j

    # ---- head / tail extractors: ONE lane-dense K=2d MXU matmul each -----------
    hext = jnp.tanh(
        jnp.dot(hin_ref[...], wh_ref[...], preferred_element_type=jnp.float32)
        + bh_ref[...])                                             # (s*n, e)
    text = jnp.tanh(
        jnp.dot(tin_ref[...], wt_ref[...], preferred_element_type=jnp.float32)
        + bt_ref[...])                                             # (s*n, e)

    # ---- SAIS ET diagonal + ground-truth-type slot selection (per-slot 2-D) ----
    # et[m, j] = sum_e ext[m, j, e] * w_et[j, e]  (bias added on the full slab)
    col = jax.lax.broadcasted_iota(jnp.int32, (n, lane), 1)
    et_h = jnp.zeros((n, lane), jnp.float32)
    et_t = jnp.zeros((n, lane), jnp.float32)
    hs_sel = jnp.zeros((n, e), jnp.float32)
    ts_sel = jnp.zeros((n, e), jnp.float32)
    for j in range(s):                                             # static unroll
        lo = j * n
        h_j = hext[lo:lo + n, :]                                   # (n, e)
        t_j = text[lo:lo + n, :]
        w_row = wet_ref[j:j + 1, :]                                # (1, d)
        et_h = et_h + jnp.where(col == j, jnp.sum(h_j * w_row, axis=-1, keepdims=True), 0.0)
        et_t = et_t + jnp.where(col == j, jnp.sum(t_j * w_row, axis=-1, keepdims=True), 0.0)
        hs_sel = hs_sel + oh_h2[:, j:j + 1] * h_j
        ts_sel = ts_sel + oh_t2[:, j:j + 1] * t_j
    # (2n, LANE) lane-dense ET slab: rows [0,n) head, [n,2n) tail
    et_out_ref[...] = jnp.concatenate([et_h, et_t], axis=0) + bet_ref[...]

    # ---- grouped bilinear: precomputed 0/1 selection matrices on the MXU -------
    # bl[m, g*b*b + i*b + k] = hs_sel[m, g*b + i] * ts_sel[m, g*b + k]
    h_rep = jnp.dot(hs_sel, ph_ref[...], preferred_element_type=jnp.float32)   # (n, e*b)
    t_til = jnp.dot(ts_sel, pt_ref[...], preferred_element_type=jnp.float32)
    bl = h_rep * t_til
    scl_ref[...] = bl                                              # SCL_bl (T == 1 -> mean is identity)

    logits = (jnp.dot(bl, wbil_ref[...], preferred_element_type=jnp.float32)
              + bbil_ref[...])                                     # (n, LANE), lane-dense
    logits_ref[...] = logits

    # ---- ATLoss.get_label with num_labels == -1 --------------------------------
    # positive iff logit > class-0 (TH) logit; class 0 set iff nothing positive.
    th = logits[:, 0:1]
    mask = (logits > th) & (col >= 1) & (col < NUM_CLS)            # ignore padded lanes
    maskf = mask.astype(jnp.float32)
    has_pos = jnp.sum(maskf, axis=-1, keepdims=True) > 0.0
    pred_ref[...] = jnp.where(col == 0, jnp.where(has_pos, 0.0, 1.0), maskf)


# ----------------------------- params & forward --------------------------------
def init_params(key):
    ks = jax.random.split(key, 8)
    sc = 0.02
    b_et = jax.random.normal(ks[5], (1, S), jnp.float32) * sc
    w_bil = jax.random.normal(ks[6], (E_EXT * BLOCK, NUM_CLS), jnp.float32) * sc
    b_bil = jax.random.normal(ks[7], (1, NUM_CLS), jnp.float32) * sc

    # Grouped-bilinear selection constants, built ONCE here (not in the kernel):
    #   ph[f, c] = 1  iff  f == c // b            (picks h[g*b + i])
    #   pt[f, c] = 1  iff  f == (c // b^2)*b + c%b (picks t[g*b + k])
    src = np.arange(E_EXT)[:, None]
    dst = np.arange(E_EXT * BLOCK)[None, :]
    ph = (src == dst // BLOCK).astype(np.float32)
    pt = (src == (dst // (BLOCK * BLOCK)) * BLOCK + dst % BLOCK).astype(np.float32)

    return {
        # head/tail extractor: Linear(2*reduced_dim, extractor_dim), stored (in, out)
        'w_head': jax.random.normal(ks[0], (2 * D_RED, E_EXT), jnp.float32) * sc,
        'b_head': jax.random.normal(ks[1], (1, E_EXT), jnp.float32) * sc,
        'w_tail': jax.random.normal(ks[2], (2 * D_RED, E_EXT), jnp.float32) * sc,
        'b_tail': jax.random.normal(ks[3], (1, E_EXT), jnp.float32) * sc,
        # ET_predictor_module: Linear(reduced_dim, R+1), stored (out, in)
        'w_et': jax.random.normal(ks[4], (S, D_RED), jnp.float32) * sc,
        # narrow heads lane-padded ONCE at init (lane-dense outputs, no masked stores).
        # NOTE: padded lanes MUST stay exactly zero for logits/pred correctness.
        'b_et_pad': jnp.zeros((1, LANE), jnp.float32).at[:, :S].set(b_et),
        'w_bil_pad': jnp.zeros((E_EXT * BLOCK, LANE), jnp.float32).at[:, :NUM_CLS].set(w_bil),
        'b_bil_pad': jnp.zeros((1, LANE), jnp.float32).at[:, :NUM_CLS].set(b_bil),
        # bilinear expansion selection constants
        'ph': jnp.asarray(ph),
        'pt': jnp.asarray(pt),
    }


def docre_forward(params, hs, ts, rs, epair_types):
    """Post-encoder DocRE forward in a single fused pallas_call (single grid
    step, every operand resident in VMEM).  The only XLA work is tiny layout
    plumbing: slot-major stacking of hs/ts, a type clamp, and slicing the
    lane-padded outputs."""
    n, s, d = hs.shape
    e, b = E_EXT, BLOCK
    assert d == D_RED and e == d, "kernel assumes extractor_dim == reduced_dim"

    hs_stk = jnp.transpose(hs, (1, 0, 2)).reshape(s * n, d)        # row j*n+m == hs[m, j]
    ts_stk = jnp.transpose(ts, (1, 0, 2)).reshape(s * n, d)
    # clamp so OOB types behave like a jnp gather (clamp) instead of zeroing
    ept = jnp.clip(epair_types.astype(jnp.int32), 0, s - 1)

    logits_pad, pred_pad, et_pad, scl_bl = pl.pallas_call(
        _docre_fused_kernel,
        out_shape=(
            jax.ShapeDtypeStruct((n, LANE), jnp.float32),          # logits (lane padded)
            jax.ShapeDtypeStruct((n, LANE), jnp.float32),          # rel_pred (lane padded)
            jax.ShapeDtypeStruct((2 * n, LANE), jnp.float32),      # ET logits (lane padded)
            jax.ShapeDtypeStruct((n, e * b), jnp.float32),         # SCL_bl
        ),
        grid=(1,),                                                 # single step: no pipeline overhead
        in_specs=[
            pl.BlockSpec((n, 2), lambda i: (0, 0)),                # epair_types
            pl.BlockSpec((s * n, d), lambda i: (0, 0)),            # hs_stk
            pl.BlockSpec((s * n, d), lambda i: (0, 0)),            # ts_stk
            pl.BlockSpec((n, s, s, d), lambda i: (0, 0, 0, 0)),    # rs (passed once, no rs_sw)
            pl.BlockSpec((2 * d, e), lambda i: (0, 0)),            # w_head
            pl.BlockSpec((1, e), lambda i: (0, 0)),                # b_head
            pl.BlockSpec((2 * d, e), lambda i: (0, 0)),            # w_tail
            pl.BlockSpec((1, e), lambda i: (0, 0)),                # b_tail
            pl.BlockSpec((s, d), lambda i: (0, 0)),                # w_et (native shape)
            pl.BlockSpec((1, LANE), lambda i: (0, 0)),             # b_et_pad
            pl.BlockSpec((e, e * b), lambda i: (0, 0)),            # ph
            pl.BlockSpec((e, e * b), lambda i: (0, 0)),            # pt
            pl.BlockSpec((e * b, LANE), lambda i: (0, 0)),         # w_bil_pad
            pl.BlockSpec((1, LANE), lambda i: (0, 0)),             # b_bil_pad
        ],
        out_specs=(
            pl.BlockSpec((n, LANE), lambda i: (0, 0)),
            pl.BlockSpec((n, LANE), lambda i: (0, 0)),
            pl.BlockSpec((2 * n, LANE), lambda i: (0, 0)),
            pl.BlockSpec((n, e * b), lambda i: (0, 0)),
        ),
        scratch_shapes=[
            pltpu.VMEM((s * n, 2 * d), jnp.float32),               # fused [hs | rsh]
            pltpu.VMEM((s * n, 2 * d), jnp.float32),               # fused [ts | rst]
        ],
        compiler_params=pltpu.CompilerParams(
            dimension_semantics=("arbitrary",),                    # don't lean on megacore for 1 step
            vmem_limit_bytes=16 * 1024 * 1024),                    # tight; actual footprint ~3 MiB
    )(ept, hs_stk, ts_stk, rs,
      params['w_head'], params['b_head'], params['w_tail'], params['b_tail'],
      params['w_et'], params['b_et_pad'], params['ph'], params['pt'],
      params['w_bil_pad'], params['b_bil_pad'])

    return {
        'logits': logits_pad[:, :NUM_CLS],
        'rel_pred': pred_pad[:, :NUM_CLS],
        'SCL_bl': scl_bl,
        'et_logits': et_pad[:, 1:s],        # drop the pooling slot, keep the R type columns
    }


# ----------------------------- pure-JAX / numpy references ---------------------
def reference_forward(params, hs, ts, rs, epair_types):
    n, s, d = hs.shape
    idx = jnp.arange(n)
    rsh = rs[idx, :, epair_types[:, 1], :]
    rst = rs[idx, epair_types[:, 0], :, :]
    hs_ext = jnp.tanh(jnp.concatenate([hs, rsh], -1) @ params['w_head'] + params['b_head'][0])
    ts_ext = jnp.tanh(jnp.concatenate([ts, rst], -1) @ params['w_tail'] + params['b_tail'][0])
    et_reps = jnp.concatenate([hs_ext, ts_ext], 0)
    et_full = et_reps @ params['w_et'].T + params['b_et_pad'][0, :s]
    et_logits = jnp.diagonal(et_full, axis1=-2, axis2=-1)[:, 1:]
    hs_sel = hs_ext[idx, epair_types[:, 0], :]
    ts_sel = ts_ext[idx, epair_types[:, 1], :]
    b1 = hs_sel.reshape(n, E_EXT // BLOCK, BLOCK)
    b2 = ts_sel.reshape(n, E_EXT // BLOCK, BLOCK)
    bl = (b1[:, :, :, None] * b2[:, :, None, :]).reshape(n, E_EXT * BLOCK)
    logits = bl @ params['w_bil_pad'][:, :NUM_CLS] + params['b_bil_pad'][0, :NUM_CLS]
    return logits, et_logits, bl


def reference_get_label(logits):
    """ATLoss.get_label with num_labels == -1 (numpy)."""
    logits = np.asarray(logits)
    th = logits[:, 0:1]
    out = (logits > th).astype(np.float32)
    out[:, 0] = (out.sum(axis=1) == 0.0).astype(np.float32)
    return out


# ----------------------------- main ---------------------------------------------
if __name__ == "__main__":
    key = jax.random.PRNGKey(0)
    kp, kh, kt, kr, ke = jax.random.split(key, 5)
    params = init_params(kp)
    hs = jax.random.normal(kh, (N_PAIRS, S, D_RED), jnp.float32)
    ts = jax.random.normal(kt, (N_PAIRS, S, D_RED), jnp.float32)
    rs = jax.random.normal(kr, (N_PAIRS, S, S, D_RED), jnp.float32)
    epair_types = jax.random.randint(ke, (N_PAIRS, 2), 1, S, dtype=jnp.int32)

    out = jax.jit(docre_forward)(params, hs, ts, rs, epair_types)
    jax.block_until_ready(out)

    ref_logits, ref_et, ref_bl = reference_forward(params, hs, ts, rs, epair_types)
    assert np.allclose(np.asarray(out['logits']), np.asarray(ref_logits), atol=1e-3)
    assert np.allclose(np.asarray(out['et_logits']), np.asarray(ref_et), atol=1e-3)
    assert np.allclose(np.asarray(out['SCL_bl']), np.asarray(ref_bl), atol=1e-3)
    # validate ATLoss.get_label on the kernel's own logits (avoids fp-tie sensitivity)
    assert np.array_equal(np.asarray(out['rel_pred']), reference_get_label(out['logits']))
    assert out['rel_pred'].shape == (N_PAIRS, NUM_CLS)
    print("KERNEL_OK")
</pallas_src>

<mosaic_0001>
module attributes {stable_mosaic.version = 11 : i64} {
  func.func @_docre_fused_kernel(%arg0: i32, %arg1: memref<16x2xi32, #tpu.memory_space<vmem>>, %arg2: memref<112x64xf32, #tpu.memory_space<vmem>>, %arg3: memref<112x64xf32, #tpu.memory_space<vmem>>, %arg4: memref<16x7x7x64xf32, #tpu.memory_space<vmem>>, %arg5: memref<128x64xf32, #tpu.memory_space<vmem>>, %arg6: memref<1x64xf32, #tpu.memory_space<vmem>>, %arg7: memref<128x64xf32, #tpu.memory_space<vmem>>, %arg8: memref<1x64xf32, #tpu.memory_space<vmem>>, %arg9: memref<7x64xf32, #tpu.memory_space<vmem>>, %arg10: memref<1x128xf32, #tpu.memory_space<vmem>>, %arg11: memref<64x512xf32, #tpu.memory_space<vmem>>, %arg12: memref<64x512xf32, #tpu.memory_space<vmem>>, %arg13: memref<512x128xf32, #tpu.memory_space<vmem>>, %arg14: memref<1x128xf32, #tpu.memory_space<vmem>>, %arg15: memref<16x128xf32, #tpu.memory_space<vmem>>, %arg16: memref<16x128xf32, #tpu.memory_space<vmem>>, %arg17: memref<32x128xf32, #tpu.memory_space<vmem>>, %arg18: memref<16x512xf32, #tpu.memory_space<vmem>>, %arg19: memref<112x128xf32, #tpu.memory_space<vmem>>, %arg20: memref<112x128xf32, #tpu.memory_space<vmem>>) attributes {dimension_semantics = [#tpu.dimension_semantics<arbitrary>], iteration_bounds = array<i64: 1>, scalar_prefetch = 0 : i64, scratch_operands = 2 : i64, tpu.core_type = #tpu.core_type<tc>, window_params = [{pipeline_mode = #tpu.pipeline_mode<synchronous>, transform_indices = @transform_0, window_bounds = array<i64: 16, 2>}, {pipeline_mode = #tpu.pipeline_mode<synchronous>, transform_indices = @transform_1, window_bounds = array<i64: 112, 64>}, {pipeline_mode = #tpu.pipeline_mode<synchronous>, transform_indices = @transform_2, window_bounds = array<i64: 112, 64>}, {pipeline_mode = #tpu.pipeline_mode<synchronous>, transform_indices = @transform_3, window_bounds = array<i64: 16, 7, 7, 64>}, {pipeline_mode = #tpu.pipeline_mode<synchronous>, transform_indices = @transform_4, window_bounds = array<i64: 128, 64>}, {pipeline_mode = #tpu.pipeline_mode<synchronous>, transform_indices = @transform_5, window_bounds = array<i64: 1, 64>}, {pipeline_mode = #tpu.pipeline_mode<synchronous>, transform_indices = @transform_6, window_bounds = array<i64: 128, 64>}, {pipeline_mode = #tpu.pipeline_mode<synchronous>, transform_indices = @transform_7, window_bounds = array<i64: 1, 64>}, {pipeline_mode = #tpu.pipeline_mode<synchronous>, transform_indices = @transform_8, window_bounds = array<i64: 7, 64>}, {pipeline_mode = #tpu.pipeline_mode<synchronous>, transform_indices = @transform_9, window_bounds = array<i64: 1, 128>}, {pipeline_mode = #tpu.pipeline_mode<synchronous>, transform_indices = @transform_10, window_bounds = array<i64: 64, 512>}, {pipeline_mode = #tpu.pipeline_mode<synchronous>, transform_indices = @transform_11, window_bounds = array<i64: 64, 512>}, {pipeline_mode = #tpu.pipeline_mode<synchronous>, transform_indices = @transform_12, window_bounds = array<i64: 512, 128>}, {pipeline_mode = #tpu.pipeline_mode<synchronous>, transform_indices = @transform_13, window_bounds = array<i64: 1, 128>}, {pipeline_mode = #tpu.pipeline_mode<synchronous>, transform_indices = @transform_14, window_bounds = array<i64: 16, 128>}, {pipeline_mode = #tpu.pipeline_mode<synchronous>, transform_indices = @transform_15, window_bounds = array<i64: 16, 128>}, {pipeline_mode = #tpu.pipeline_mode<synchronous>, transform_indices = @transform_16, window_bounds = array<i64: 32, 128>}, {pipeline_mode = #tpu.pipeline_mode<synchronous>, transform_indices = @transform_17, window_bounds = array<i64: 16, 512>}]} {
    %c0 = arith.constant 0 : index
    %c0_0 = arith.constant 0 : index
    %0 = vector.load %arg1[%c0, %c0_0] : memref<16x2xi32, #tpu.memory_space<vmem>>, vector<16x2xi32>
    %1 = tpu.iota {dimensions = array<i32: 1>} : vector<16x7xi32>
    %2 = vector.extract_strided_slice %0 {offsets = [0, 0], sizes = [16, 1], strides = [1, 1]} : vector<16x2xi32> to vector<16x1xi32>
    %3 = vector.broadcast %2 : vector<16x1xi32> to vector<16x7xi32>
    %4 = arith.cmpi eq, %1, %3 : vector<16x7xi32>
    %5 = arith.extui %4 : vector<16x7xi1> to vector<16x7xi32>
    %6 = arith.sitofp %5 : vector<16x7xi32> to vector<16x7xf32>
    %7 = vector.extract_strided_slice %0 {offsets = [0, 1], sizes = [16, 1], strides = [1, 1]} : vector<16x2xi32> to vector<16x1xi32>
    %8 = vector.broadcast %7 : vector<16x1xi32> to vector<16x7xi32>
    %9 = arith.cmpi eq, %1, %8 : vector<16x7xi32>
    %10 = arith.extui %9 : vector<16x7xi1> to vector<16x7xi32>
    %11 = arith.sitofp %10 : vector<16x7xi32> to vector<16x7xf32>
    %c0_1 = arith.constant 0 : index
    %c0_2 = arith.constant 0 : index
    %12 = vector.load %arg2[%c0_1, %c0_2] : memref<112x64xf32, #tpu.memory_space<vmem>>, vector<112x64xf32>
    %c0_3 = arith.constant 0 : index
    %c0_4 = arith.constant 0 : index
    %13 = vector.load %arg19[%c0_3, %c0_4] : memref<112x128xf32, #tpu.memory_space<vmem>>, vector<112x64xf32>
    tpu.vector_store %arg19[%c0_3, %c0_4], %12 {strides = array<i32>} : memref<112x128xf32, #tpu.memory_space<vmem>>, vector<112x64xf32>,
    %c0_5 = arith.constant 0 : index
    %c0_6 = arith.constant 0 : index
    %14 = vector.load %arg3[%c0_5, %c0_6] : memref<112x64xf32, #tpu.memory_space<vmem>>, vector<112x64xf32>
    %c0_7 = arith.constant 0 : index
    %c0_8 = arith.constant 0 : index
    %15 = vector.load %arg20[%c0_7, %c0_8] : memref<112x128xf32, #tpu.memory_space<vmem>>, vector<112x64xf32>
    tpu.vector_store %arg20[%c0_7, %c0_8], %14 {strides = array<i32>} : memref<112x128xf32, #tpu.memory_space<vmem>>, vector<112x64xf32>,
    %cst = arith.constant 0.000000e+00 : f32
    %16 = vector.broadcast %cst : f32 to vector<16x64xf32>
    %cst_9 = arith.constant 0.000000e+00 : f32
    %17 = vector.broadcast %cst_9 : f32 to vector<16x64xf32>
    %18 = vector.extract_strided_slice %11 {offsets = [0, 0], sizes = [16, 1], strides = [1, 1]} : vector<16x7xf32> to vector<16x1xf32>
    %c0_10 = arith.constant 0 : index
    %c0_11 = arith.constant 0 : index
    %c0_12 = arith.constant 0 : index
    %c0_13 = arith.constant 0 : index
    %19 = vector.load %arg4[%c0_10, %c0_11, %c0_12, %c0_13] : memref<16x7x7x64xf32, #tpu.memory_space<vmem>>, vector<16x1x1x64xf32>
    %20 = vector.shape_cast %19 : vector<16x1x1x64xf32> to vector<16x64xf32>
    %21 = vector.broadcast %18 : vector<16x1xf32> to vector<16x64xf32>
    %22 = arith.mulf %21, %20 : vector<16x64xf32>
    %23 = arith.addf %16, %22 : vector<16x64xf32>
    %24 = vector.extract_strided_slice %6 {offsets = [0, 0], sizes = [16, 1], strides = [1, 1]} : vector<16x7xf32> to vector<16x1xf32>
    %c0_14 = arith.constant 0 : index
    %c0_15 = arith.constant 0 : index
    %c0_16 = arith.constant 0 : index
    %c0_17 = arith.constant 0 : index
    %25 = vector.load %arg4[%c0_14, %c0_15, %c0_16, %c0_17] : memref<16x7x7x64xf32, #tpu.memory_space<vmem>>, vector<16x1x1x64xf32>
    %26 = vector.shape_cast %25 : vector<16x1x1x64xf32> to vector<16x64xf32>
    %27 = vector.broadcast %24 : vector<16x1xf32> to vector<16x64xf32>
    %28 = arith.mulf %27, %26 : vector<16x64xf32>
    %29 = arith.addf %17, %28 : vector<16x64xf32>
    %30 = vector.extract_strided_slice %11 {offsets = [0, 1], sizes = [16, 1], strides = [1, 1]} : vector<16x7xf32> to vector<16x1xf32>
    %c0_18 = arith.constant 0 : index
    %c0_19 = arith.constant 0 : index
    %c1 = arith.constant 1 : index
    %c0_20 = arith.constant 0 : index
    %31 = vector.load %arg4[%c0_18, %c0_19, %c1, %c0_20] : memref<16x7x7x64xf32, #tpu.memory_space<vmem>>, vector<16x1x1x64xf32>
    %32 = vector.shape_cast %31 : vector<16x1x1x64xf32> to vector<16x64xf32>
    %33 = vector.broadcast %30 : vector<16x1xf32> to vector<16x64xf32>
    %34 = arith.mulf %33, %32 : vector<16x64xf32>
    %35 = arith.addf %23, %34 : vector<16x64xf32>
    %36 = vector.extract_strided_slice %6 {offsets = [0, 1], sizes = [16, 1], strides = [1, 1]} : vector<16x7xf32> to vector<16x1xf32>
    %c0_21 = arith.constant 0 : index
    %c1_22 = arith.constant 1 : index
    %c0_23 = arith.constant 0 : index
    %c0_24 = arith.constant 0 : index
    %37 = vector.load %arg4[%c0_21, %c1_22, %c0_23, %c0_24] : memref<16x7x7x64xf32, #tpu.memory_space<vmem>>, vector<16x1x1x64xf32>
    %38 = vector.shape_cast %37 : vector<16x1x1x64xf32> to vector<16x64xf32>
    %39 = vector.broadcast %36 : vector<16x1xf32> to vector<16x64xf32>
    %40 = arith.mulf %39, %38 : vector<16x64xf32>
    %41 = arith.addf %29, %40 : vector<16x64xf32>
    %42 = vector.extract_strided_slice %11 {offsets = [0, 2], sizes = [16, 1], strides = [1, 1]} : vector<16x7xf32> to vector<16x1xf32>
    %c0_25 = arith.constant 0 : index
    %c0_26 = arith.constant 0 : index
    %c2 = arith.constant 2 : index
    %c0_27 = arith.constant 0 : index
    %43 = vector.load %arg4[%c0_25, %c0_26, %c2, %c0_27] : memref<16x7x7x64xf32, #tpu.memory_space<vmem>>, vector<16x1x1x64xf32>
    %44 = vector.shape_cast %43 : vector<16x1x1x64xf32> to vector<16x64xf32>
    %45 = vector.broadcast %42 : vector<16x1xf32> to vector<16x64xf32>
    %46 = arith.mulf %45, %44 : vector<16x64xf32>
    %47 = arith.addf %35, %46 : vector<16x64xf32>
    %48 = vector.extract_strided_slice %6 {offsets = [0, 2], sizes = [16, 1], strides = [1, 1]} : vector<16x7xf32> to vector<16x1xf32>
    %c0_28 = arith.constant 0 : index
    %c2_29 = arith.constant 2 : index
    %c0_30 = arith.constant 0 : index
    %c0_31 = arith.constant 0 : index
    %49 = vector.load %arg4[%c0_28, %c2_29, %c0_30, %c0_31] : memref<16x7x7x64xf32, #tpu.memory_space<vmem>>, vector<16x1x1x64xf32>
    %50 = vector.shape_cast %49 : vector<16x1x1x64xf32> to vector<16x64xf32>
    %51 = vector.broadcast %48 : vector<16x1xf32> to vector<16x64xf32>
    %52 = arith.mulf %51, %50 : vector<16x64xf32>
    %53 = arith.addf %41, %52 : vector<16x64xf32>
    %54 = vector.extract_strided_slice %11 {offsets = [0, 3], sizes = [16, 1], strides = [1, 1]} : vector<16x7xf32> to vector<16x1xf32>
    %c0_32 = arith.constant 0 : index
    %c0_33 = arith.constant 0 : index
    %c3 = arith.constant 3 : index
    %c0_34 = arith.constant 0 : index
    %55 = vector.load %arg4[%c0_32, %c0_33, %c3, %c0_34] : memref<16x7x7x64xf32, #tpu.memory_space<vmem>>, vector<16x1x1x64xf32>
    %56 = vector.shape_cast %55 : vector<16x1x1x64xf32> to vector<16x64xf32>
    %57 = vector.broadcast %54 : vector<16x1xf32> to vector<16x64xf32>
    %58 = arith.mulf %57, %56 : vector<16x64xf32>
    %59 = arith.addf %47, %58 : vector<16x64xf32>
    %60 = vector.extract_strided_slice %6 {offsets = [0, 3], sizes = [16, 1], strides = [1, 1]} : vector<16x7xf32> to vector<16x1xf32>
    %c0_35 = arith.constant 0 : index
    %c3_36 = arith.constant 3 : index
    %c0_37 = arith.constant 0 : index
    %c0_38 = arith.constant 0 : index
    %61 = vector.load %arg4[%c0_35, %c3_36, %c0_37, %c0_38] : memref<16x7x7x64xf32, #tpu.memory_space<vmem>>, vector<16x1x1x64xf32>
    %62 = vector.shape_cast %61 : vector<16x1x1x64xf32> to vector<16x64xf32>
    %63 = vector.broadcast %60 : vector<16x1xf32> to vector<16x64xf32>
    %64 = arith.mulf %63, %62 : vector<16x64xf32>
    %65 = arith.addf %53, %64 : vector<16x64xf32>
    %66 = vector.extract_strided_slice %11 {offsets = [0, 4], sizes = [16, 1], strides = [1, 1]} : vector<16x7xf32> to vector<16x1xf32>
    %c0_39 = arith.constant 0 : index
    %c0_40 = arith.constant 0 : index
    %c4 = arith.constant 4 : index
    %c0_41 = arith.constant 0 : index
    %67 = vector.load %arg4[%c0_39, %c0_40, %c4, %c0_41] : memref<16x7x7x64xf32, #tpu.memory_space<vmem>>, vector<16x1x1x64xf32>
    %68 = vector.shape_cast %67 : vector<16x1x1x64xf32> to vector<16x64xf32>
    %69 = vector.broadcast %66 : vector<16x1xf32> to vector<16x64xf32>
    %70 = arith.mulf %69, %68 : vector<16x64xf32>
    %71 = arith.addf %59, %70 : vector<16x64xf32>
    %72 = vector.extract_strided_slice %6 {offsets = [0, 4], sizes = [16, 1], strides = [1, 1]} : vector<16x7xf32> to vector<16x1xf32>
    %c0_42 = arith.constant 0 : index
    %c4_43 = arith.constant 4 : index
    %c0_44 = arith.constant 0 : index
    %c0_45 = arith.constant 0 : index
    %73 = vector.load %arg4[%c0_42, %c4_43, %c0_44, %c0_45] : memref<16x7x7x64xf32, #tpu.memory_space<vmem>>, vector<16x1x1x64xf32>
    %74 = vector.shape_cast %73 : vector<16x1x1x64xf32> to vector<16x64xf32>
    %75 = vector.broadcast %72 : vector<16x1xf32> to vector<16x64xf32>
    %76 = arith.mulf %75, %74 : vector<16x64xf32>
    %77 = arith.addf %65, %76 : vector<16x64xf32>
    %78 = vector.extract_strided_slice %11 {offsets = [0, 5], sizes = [16, 1], strides = [1, 1]} : vector<16x7xf32> to vector<16x1xf32>
    %c0_46 = arith.constant 0 : index
    %c0_47 = arith.constant 0 : index
    %c5 = arith.constant 5 : index
    %c0_48 = arith.constant 0 : index
    %79 = vector.load %arg4[%c0_46, %c0_47, %c5, %c0_48] : memref<16x7x7x64xf32, #tpu.memory_space<vmem>>, vector<16x1x1x64xf32>
    %80 = vector.shape_cast %79 : vector<16x1x1x64xf32> to vector<16x64xf32>
    %81 = vector.broadcast %78 : vector<16x1xf32> to vector<16x64xf32>
    %82 = arith.mulf %81, %80 : vector<16x64xf32>
    %83 = arith.addf %71, %82 : vector<16x64xf32>
    %84 = vector.extract_strided_slice %6 {offsets = [0, 5], sizes = [16, 1], strides = [1, 1]} : vector<16x7xf32> to vector<16x1xf32>
    %c0_49 = arith.constant 0 : index
    %c5_50 = arith.constant 5 : index
    %c0_51 = arith.constant 0 : index
    %c0_52 = arith.constant 0 : index
    %85 = vector.load %arg4[%c0_49, %c5_50, %c0_51, %c0_52] : memref<16x7x7x64xf32, #tpu.memory_space<vmem>>, vector<16x1x1x64xf32>
    %86 = vector.shape_cast %85 : vector<16x1x1x64xf32> to vector<16x64xf32>
    %87 = vector.broadcast %84 : vector<16x1xf32> to vector<16x64xf32>
    %88 = arith.mulf %87, %86 : vector<16x64xf32>
    %89 = arith.addf %77, %88 : vector<16x64xf32>
    %90 = vector.extract_strided_slice %11 {offsets = [0, 6], sizes = [16, 1], strides = [1, 1]} : vector<16x7xf32> to vector<16x1xf32>
    %c0_53 = arith.constant 0 : index
    %c0_54 = arith.constant 0 : index
    %c6 = arith.constant 6 : index
    %c0_55 = arith.constant 0 : index
    %91 = vector.load %arg4[%c0_53, %c0_54, %c6, %c0_55] : memref<16x7x7x64xf32, #tpu.memory_space<vmem>>, vector<16x1x1x64xf32>
    %92 = vector.shape_cast %91 : vector<16x1x1x64xf32> to vector<16x64xf32>
    %93 = vector.broadcast %90 : vector<16x1xf32> to vector<16x64xf32>
    %94 = arith.mulf %93, %92 : vector<16x64xf32>
    %95 = arith.addf %83, %94 : vector<16x64xf32>
    %96 = vector.extract_strided_slice %6 {offsets = [0, 6], sizes = [16, 1], strides = [1, 1]} : vector<16x7xf32> to vector<16x1xf32>
    %c0_56 = arith.constant 0 : index
    %c6_57 = arith.constant 6 : index
    %c0_58 = arith.constant 0 : index
    %c0_59 = arith.constant 0 : index
    %97 = vector.load %arg4[%c0_56, %c6_57, %c0_58, %c0_59] : memref<16x7x7x64xf32, #tpu.memory_space<vmem>>, vector<16x1x1x64xf32>
    %98 = vector.shape_cast %97 : vector<16x1x1x64xf32> to vector<16x64xf32>
    %99 = vector.broadcast %96 : vector<16x1xf32> to vector<16x64xf32>
    %100 = arith.mulf %99, %98 : vector<16x64xf32>
    %101 = arith.addf %89, %100 : vector<16x64xf32>
    %c0_60 = arith.constant 0 : index
    %c64 = arith.constant 64 : index
    %102 = vector.load %arg19[%c0_60, %c64] : memref<112x128xf32, #tpu.memory_space<vmem>>, vector<16x64xf32>
    tpu.vector_store %arg19[%c0_60, %c64], %95 {strides = array<i32>} : memref<112x128xf32, #tpu.memory_space<vmem>>, vector<16x64xf32>,
    %c0_61 = arith.constant 0 : index
    %c64_62 = arith.constant 64 : index
    %103 = vector.load %arg20[%c0_61, %c64_62] : memref<112x128xf32, #tpu.memory_space<vmem>>, vector<16x64xf32>
    tpu.vector_store %arg20[%c0_61, %c64_62], %101 {strides = array<i32>} : memref<112x128xf32, #tpu.memory_space<vmem>>, vector<16x64xf32>,
    %cst_63 = arith.constant 0.000000e+00 : f32
    %104 = vector.broadcast %cst_63 : f32 to vector<16x64xf32>
    %cst_64 = arith.constant 0.000000e+00 : f32
    %105 = vector.broadcast %cst_64 : f32 to vector<16x64xf32>
    %106 = vector.extract_strided_slice %11 {offsets = [0, 0], sizes = [16, 1], strides = [1, 1]} : vector<16x7xf32> to vector<16x1xf32>
    %c0_65 = arith.constant 0 : index
    %c1_66 = arith.constant 1 : index
    %c0_67 = arith.constant 0 : index
    %c0_68 = arith.constant 0 : index
    %107 = vector.load %arg4[%c0_65, %c1_66, %c0_67, %c0_68] : memref<16x7x7x64xf32, #tpu.memory_space<vmem>>, vector<16x1x1x64xf32>
    %108 = vector.shape_cast %107 : vector<16x1x1x64xf32> to vector<16x64xf32>
    %109 = vector.broadcast %106 : vector<16x1xf32> to vector<16x64xf32>
    %110 = arith.mulf %109, %108 : vector<16x64xf32>
    %111 = arith.addf %104, %110 : vector<16x64xf32>
    %112 = vector.extract_strided_slice %6 {offsets = [0, 0], sizes = [16, 1], strides = [1, 1]} : vector<16x7xf32> to vector<16x1xf32>
    %c0_69 = arith.constant 0 : index
    %c0_70 = arith.constant 0 : index
    %c1_71 = arith.constant 1 : index
    %c0_72 = arith.constant 0 : index
    %113 = vector.load %arg4[%c0_69, %c0_70, %c1_71, %c0_72] : memref<16x7x7x64xf32, #tpu.memory_space<vmem>>, vector<16x1x1x64xf32>
    %114 = vector.shape_cast %113 : vector<16x1x1x64xf32> to vector<16x64xf32>
    %115 = vector.broadcast %112 : vector<16x1xf32> to vector<16x64xf32>
    %116 = arith.mulf %115, %114 : vector<16x64xf32>
    %117 = arith.addf %105, %116 : vector<16x64xf32>
    %118 = vector.extract_strided_slice %11 {offsets = [0, 1], sizes = [16, 1], strides = [1, 1]} : vector<16x7xf32> to vector<16x1xf32>
    %c0_73 = arith.constant 0 : index
    %c1_74 = arith.constant 1 : index
    %c1_75 = arith.constant 1 : index
    %c0_76 = arith.constant 0 : index
    %119 = vector.load %arg4[%c0_73, %c1_74, %c1_75, %c0_76] : memref<16x7x7x64xf32, #tpu.memory_space<vmem>>, vector<16x1x1x64xf32>
    %120 = vector.shape_cast %119 : vector<16x1x1x64xf32> to vector<16x64xf32>
    %121 = vector.broadcast %118 : vector<16x1xf32> to vector<16x64xf32>
    %122 = arith.mulf %121, %120 : vector<16x64xf32>
    %123 = arith.addf %111, %122 : vector<16x64xf32>
    %124 = vector.extract_strided_slice %6 {offsets = [0, 1], sizes = [16, 1], strides = [1, 1]} : vector<16x7xf32> to vector<16x1xf32>
    %c0_77 = arith.constant 0 : index
    %c1_78 = arith.constant 1 : index
    %c1_79 = arith.constant 1 : index
    %c0_80 = arith.constant 0 : index
    %125 = vector.load %arg4[%c0_77, %c1_78, %c1_79, %c0_80] : memref<16x7x7x64xf32, #tpu.memory_space<vmem>>, vector<16x1x1x64xf32>
    %126 = vector.shape_cast %125 : vector<16x1x1x64xf32> to vector<16x64xf32>
    %127 = vector.broadcast %124 : vector<16x1xf32> to vector<16x64xf32>
    %128 = arith.mulf %127, %126 : vector<16x64xf32>
    %129 = arith.addf %117, %128 : vector<16x64xf32>
    %130 = vector.extract_strided_slice %11 {offsets = [0, 2], sizes = [16, 1], strides = [1, 1]} : vector<16x7xf32> to vector<16x1xf32>
    %c0_81 = arith.constant 0 : index
    %c1_82 = arith.constant 1 : index
    %c2_83 = arith.constant 2 : index
    %c0_84 = arith.constant 0 : index
    %131 = vector.load %arg4[%c0_81, %c1_82, %c2_83, %c0_84] : memref<16x7x7x64xf32, #tpu.memory_space<vmem>>, vector<16x1x1x64xf32>
    %132 = vector.shape_cast %131 : vector<16x1x1x64xf32> to vector<16x64xf32>
    %133 = vector.broadcast %130 : vector<16x1xf32> to vector<16x64xf32>
    %134 = arith.mulf %133, %132 : vector<16x64xf32>
    %135 = arith.addf %123, %134 : vector<16x64xf32>
    %136 = vector.extract_strided_slice %6 {offsets = [0, 2], sizes = [16, 1], strides = [1, 1]} : vector<16x7xf32> to vector<16x1xf32>
    %c0_85 = arith.constant 0 : index
    %c2_86 = arith.constant 2 : index
    %c1_87 = arith.constant 1 : index
    %c0_88 = arith.constant 0 : index
    %137 = vector.load %arg4[%c0_85, %c2_86, %c1_87, %c0_88] : memref<16x7x7x64xf32, #tpu.memory_space<vmem>>, vector<16x1x1x64xf32>
    %138 = vector.shape_cast %137 : vector<16x1x1x64xf32> to vector<16x64xf32>
    %139 = vector.broadcast %136 : vector<16x1xf32> to vector<16x64xf32>
    %140 = arith.mulf %139, %138 : vector<16x64xf32>
    %141 = arith.addf %129, %140 : vector<16x64xf32>
    %142 = vector.extract_strided_slice %11 {offsets = [0, 3], sizes = [16, 1], strides = [1, 1]} : vector<16x7xf32> to vector<16x1xf32>
    %c0_89 = arith.constant 0 : index
    %c1_90 = arith.constant 1 : index
    %c3_91 = arith.constant 3 : index
    %c0_92 = arith.constant 0 : index
    %143 = vector.load %arg4[%c0_89, %c1_90, %c3_91, %c0_92] : memref<16x7x7x64xf32, #tpu.memory_space<vmem>>, vector<16x1x1x64xf32>
    %144 = vector.shape_cast %143 : vector<16x1x1x64xf32> to vector<16x64xf32>
    %145 = vector.broadcast %142 : vector<16x1xf32> to vector<16x64xf32>
    %146 = arith.mulf %145, %144 : vector<16x64xf32>
    %147 = arith.addf %135, %146 : vector<16x64xf32>
    %148 = vector.extract_strided_slice %6 {offsets = [0, 3], sizes = [16, 1], strides = [1, 1]} : vector<16x7xf32> to vector<16x1xf32>
    %c0_93 = arith.constant 0 : index
    %c3_94 = arith.constant 3 : index
    %c1_95 = arith.constant 1 : index
    %c0_96 = arith.constant 0 : index
    %149 = vector.load %arg4[%c0_93, %c3_94, %c1_95, %c0_96] : memref<16x7x7x64xf32, #tpu.memory_space<vmem>>, vector<16x1x1x64xf32>
    %150 = vector.shape_cast %149 : vector<16x1x1x64xf32> to vector<16x64xf32>
    %151 = vector.broadcast %148 : vector<16x1xf32> to vector<16x64xf32>
    %152 = arith.mulf %151, %150 : vector<16x64xf32>
    %153 = arith.addf %141, %152 : vector<16x64xf32>
    %154 = vector.extract_strided_slice %11 {offsets = [0, 4], sizes = [16, 1], strides = [1, 1]} : vector<16x7xf32> to vector<16x1xf32>
    %c0_97 = arith.constant 0 : index
    %c1_98 = arith.constant 1 : index
    %c4_99 = arith.constant 4 : index
    %c0_100 = arith.constant 0 : index
    %155 = vector.load %arg4[%c0_97, %c1_98, %c4_99, %c0_100] : memref<16x7x7x64xf32, #tpu.memory_space<vmem>>, vector<16x1x1x64xf32>
    %156 = vector.shape_cast %155 : vector<16x1x1x64xf32> to vector<16x64xf32>
    %157 = vector.broadcast %154 : vector<16x1xf32> to vector<16x64xf32>
    %158 = arith.mulf %157, %156 : vector<16x64xf32>
    %159 = arith.addf %147, %158 : vector<16x64xf32>
    %160 = vector.extract_strided_slice %6 {offsets = [0, 4], sizes = [16, 1], strides = [1, 1]} : vector<16x7xf32> to vector<16x1xf32>
    %c0_101 = arith.constant 0 : index
    %c4_102 = arith.constant 4 : index
    %c1_103 = arith.constant 1 : index
    %c0_104 = arith.constant 0 : index
    %161 = vector.load %arg4[%c0_101, %c4_102, %c1_103, %c0_104] : memref<16x7x7x64xf32, #tpu.memory_space<vmem>>, vector<16x1x1x64xf32>
    %162 = vector.shape_cast %161 : vector<16x1x1x64xf32> to vector<16x64xf32>
    %163 = vector.broadcast %160 : vector<16x1xf32> to vector<16x64xf32>
    %164 = arith.mulf %163, %162 : vector<16x64xf32>
    %165 = arith.addf %153, %164 : vector<16x64xf32>
    %166 = vector.extract_strided_slice %11 {offsets = [0, 5], sizes = [16, 1], strides = [1, 1]} : vector<16x7xf32> to vector<16x1xf32>
    %c0_105 = arith.constant 0 : index
    %c1_106 = arith.constant 1 : index
    %c5_107 = arith.constant 5 : index
    %c0_108 = arith.constant 0 : index
    %167 = vector.load %arg4[%c0_105, %c1_106, %c5_107, %c0_108] : memref<16x7x7x64xf32, #tpu.memory_space<vmem>>, vector<16x1x1x64xf32>
    %168 = vector.shape_cast %167 : vector<16x1x1x64xf32> to vector<16x64xf32>
    %169 = vector.broadcast %166 : vector<16x1xf32> to vector<16x64xf32>
    %170 = arith.mulf %169, %168 : vector<16x64xf32>
    %171 = arith.addf %159, %170 : vector<16x64xf32>
    %172 = vector.extract_strided_slice %6 {offsets = [0, 5], sizes = [16, 1], strides = [1, 1]} : vector<16x7xf32> to vector<16x1xf32>
    %c0_109 = arith.constant 0 : index
    %c5_110 = arith.constant 5 : index
    %c1_111 = arith.constant 1 : index
    %c0_112 = arith.constant 0 : index
    %173 = vector.load %arg4[%c0_109, %c5_110, %c1_111, %c0_112] : memref<16x7x7x64xf32, #tpu.memory_space<vmem>>, vector<16x1x1x64xf32>
    %174 = vector.shape_cast %173 : vector<16x1x1x64xf32> to vector<16x64xf32>
    %175 = vector.broadcast %172 : vector<16x1xf32> to vector<16x64xf32>
    %176 = arith.mulf %175, %174 : vector<16x64xf32>
    %177 = arith.addf %165, %176 : vector<16x64xf32>
    %178 = vector.extract_strided_slice %11 {offsets = [0, 6], sizes = [16, 1], strides = [1, 1]} : vector<16x7xf32> to vector<16x1xf32>
    %c0_113 = arith.constant 0 : index
    %c1_114 = arith.constant 1 : index
    %c6_115 = arith.constant 6 : index
    %c0_116 = arith.constant 0 : index
    %179 = vector.load %arg4[%c0_113, %c1_114, %c6_115, %c0_116] : memref<16x7x7x64xf32, #tpu.memory_space<vmem>>, vector<16x1x1x64xf32>
    %180 = vector.shape_cast %179 : vector<16x1x1x64xf32> to vector<16x64xf32>
    %181 = vector.broadcast %178 : vector<16x1xf32> to vector<16x64xf32>
    %182 = arith.mulf %181, %180 : vector<16x64xf32>
    %183 = arith.addf %171, %182 : vector<16x64xf32>
    %184 = vector.extract_strided_slice %6 {offsets = [0, 6], sizes = [16, 1], strides = [1, 1]} : vector<16x7xf32> to vector<16x1xf32>
    %c0_117 = arith.constant 0 : index
    %c6_118 = arith.constant 6 : index
    %c1_119 = arith.constant 1 : index
    %c0_120 = arith.constant 0 : index
    %185 = vector.load %arg4[%c0_117, %c6_118, %c1_119, %c0_120] : memref<16x7x7x64xf32, #tpu.memory_space<vmem>>, vector<16x1x1x64xf32>
    %186 = vector.shape_cast %185 : vector<16x1x1x64xf32> to vector<16x64xf32>
    %187 = vector.broadcast %184 : vector<16x1xf32> to vector<16x64xf32>
    %188 = arith.mulf %187, %186 : vector<16x64xf32>
    %189 = arith.addf %177, %188 : vector<16x64xf32>
    %c16 = arith.constant 16 : index
    %c64_121 = arith.constant 64 : index
    %190 = vector.load %arg19[%c16, %c64_121] : memref<112x128xf32, #tpu.memory_space<vmem>>, vector<16x64xf32>
    tpu.vector_store %arg19[%c16, %c64_121], %183 {strides = array<i32>} : memref<112x128xf32, #tpu.memory_space<vmem>>, vector<16x64xf32>,
    %c16_122 = arith.constant 16 : index
    %c64_123 = arith.constant 64 : index
    %191 = vector.load %arg20[%c16_122, %c64_123] : memref<112x128xf32, #tpu.memory_space<vmem>>, vector<16x64xf32>
    tpu.vector_store %arg20[%c16_122, %c64_123], %189 {strides = array<i32>} : memref<112x128xf32, #tpu.memory_space<vmem>>, vector<16x64xf32>,
    %cst_124 = arith.constant 0.000000e+00 : f32
    %192 = vector.broadcast %cst_124 : f32 to vector<16x64xf32>
    %cst_125 = arith.constant 0.000000e+00 : f32
    %193 = vector.broadcast %cst_125 : f32 to vector<16x64xf32>
    %194 = vector.extract_strided_slice %11 {offsets = [0, 0], sizes = [16, 1], strides = [1, 1]} : vector<16x7xf32> to vector<16x1xf32>
    %c0_126 = arith.constant 0 : index
    %c2_127 = arith.constant 2 : index
    %c0_128 = arith.constant 0 : index
    %c0_129 = arith.constant 0 : index
    %195 = vector.load %arg4[%c0_126, %c2_127, %c0_128, %c0_129] : memref<16x7x7x64xf32, #tpu.memory_space<vmem>>, vector<16x1x1x64xf32>
    %196 = vector.shape_cast %195 : vector<16x1x1x64xf32> to vector<16x64xf32>
    %197 = vector.broadcast %194 : vector<16x1xf32> to vector<16x64xf32>
    %198 = arith.mulf %197, %196 : vector<16x64xf32>
    %199 = arith.addf %192, %198 : vector<16x64xf32>
    %200 = vector.extract_strided_slice %6 {offsets = [0, 0], sizes = [16, 1], strides = [1, 1]} : vector<16x7xf32> to vector<16x1xf32>
    %c0_130 = arith.constant 0 : index
    %c0_131 = arith.constant 0 : index
    %c2_132 = arith.constant 2 : index
    %c0_133 = arith.constant 0 : index
    %201 = vector.load %arg4[%c0_130, %c0_131, %c2_132, %c0_133] : memref<16x7x7x64xf32, #tpu.memory_space<vmem>>, vector<16x1x1x64xf32>
    %202 = vector.shape_cast %201 : vector<16x1x1x64xf32> to vector<16x64xf32>
    %203 = vector.broadcast %200 : vector<16x1xf32> to vector<16x64xf32>
    %204 = arith.mulf %203, %202 : vector<16x64xf32>
    %205 = arith.addf %193, %204 : vector<16x64xf32>
    %206 = vector.extract_strided_slice %11 {offsets = [0, 1], sizes = [16, 1], strides = [1, 1]} : vector<16x7xf32> to vector<16x1xf32>
    %c0_134 = arith.constant 0 : index
    %c2_135 = arith.constant 2 : index
    %c1_136 = arith.constant 1 : index
    %c0_137 = arith.constant 0 : index
    %207 = vector.load %arg4[%c0_134, %c2_135, %c1_136, %c0_137] : memref<16x7x7x64xf32, #tpu.memory_space<vmem>>, vector<16x1x1x64xf32>
    %208 = vector.shape_cast %207 : vector<16x1x1x64xf32> to vector<16x64xf32>
    %209 = vector.broadcast %206 : vector<16x1xf32> to vector<16x64xf32>
    %210 = arith.mulf %209, %208 : vector<16x64xf32>
    %211 = arith.addf %199, %210 : vector<16x64xf32>
    %212 = vector.extract_strided_slice %6 {offsets = [0, 1], sizes = [16, 1], strides = [1, 1]} : vector<16x7xf32> to vector<16x1xf32>
    %c0_138 = arith.constant 0 : index
    %c1_139 = arith.constant 1 : index
    %c2_140 = arith.constant 2 : index
    %c0_141 = arith.constant 0 : index
    %213 = vector.load %arg4[%c0_138, %c1_139, %c2_140, %c0_141] : memref<16x7x7x64xf32, #tpu.memory_space<vmem>>, vector<16x1x1x64xf32>
    %214 = vector.shape_cast %213 : vector<16x1x1x64xf32> to vector<16x64xf32>
    %215 = vector.broadcast %212 : vector<16x1xf32> to vector<16x64xf32>
    %216 = arith.mulf %215, %214 : vector<16x64xf32>
    %217 = arith.addf %205, %216 : vector<16x64xf32>
    %218 = vector.extract_strided_slice %11 {offsets = [0, 2], sizes = [16, 1], strides = [1, 1]} : vector<16x7xf32> to vector<16x1xf32>
    %c0_142 = arith.constant 0 : index
    %c2_143 = arith.constant 2 : index
    %c2_144 = arith.constant 2 : index
    %c0_145 = arith.constant 0 : index
    %219 = vector.load %arg4[%c0_142, %c2_143, %c2_144, %c0_145] : memref<16x7x7x64xf32, #tpu.memory_space<vmem>>, vector<16x1x1x64xf32>
    %220 = vector.shape_cast %219 : vector<16x1x1x64xf32> to vector<16x64xf32>
    %221 = vector.broadcast %218 : vector<16x1xf32> to vector<16x64xf32>
    %222 = arith.mulf %221, %220 : vector<16x64xf32>
    %223 = arith.addf %211, %222 : vector<16x64xf32>
    %224 = vector.extract_strided_slice %6 {offsets = [0, 2], sizes = [16, 1], strides = [1, 1]} : vector<16x7xf32> to vector<16x1xf32>
    %c0_146 = arith.constant 0 : index
    %c2_147 = arith.constant 2 : index
    %c2_148 = arith.constant 2 : index
    %c0_149 = arith.constant 0 : index
    %225 = vector.load %arg4[%c0_146, %c2_147, %c2_148, %c0_149] : memref<16x7x7x64xf32, #tpu.memory_space<vmem>>, vector<16x1x1x64xf32>
    %226 = vector.shape_cast %225 : vector<16x1x1x64xf32> to vector<16x64xf32>
    %227 = vector.broadcast %224 : vector<16x1xf32> to vector<16x64xf32>
    %228 = arith.mulf %227, %226 : vector<16x64xf32>
    %229 = arith.addf %217, %228 : vector<16x64xf32>
    %230 = vector.extract_strided_slice %11 {offsets = [0, 3], sizes = [16, 1], strides = [1, 1]} : vector<16x7xf32> to vector<16x1xf32>
    %c0_150 = arith.constant 0 : index
    %c2_151 = arith.constant 2 : index
    %c3_152 = arith.constant 3 : index
    %c0_153 = arith.constant 0 : index
    %231 = vector.load %arg4[%c0_150, %c2_151, %c3_152, %c0_153] : memref<16x7x7x64xf32, #tpu.memory_space<vmem>>, vector<16x1x1x64xf32>
    %232 = vector.shape_cast %231 : vector<16x1x1x64xf32> to vector<16x64xf32>
    %233 = vector.broadcast %230 : vector<16x1xf32> to vector<16x64xf32>
    %234 = arith.mulf %233, %232 : vector<16x64xf32>
    %235 = arith.addf %223, %234 : vector<16x64xf32>
    %236 = vector.extract_strided_slice %6 {offsets = [0, 3], sizes = [16, 1], strides = [1, 1]} : vector<16x7xf32> to vector<16x1xf32>
    %c0_154 = arith.constant 0 : index
    %c3_155 = arith.constant 3 : index
    %c2_156 = arith.constant 2 : index
    %c0_157 = arith.constant 0 : index
    %237 = vector.load %arg4[%c0_154, %c3_155, %c2_156, %c0_157] : memref<16x7x7x64xf32, #tpu.memory_space<vmem>>, vector<16x1x1x64xf32>
    %238 = vector.shape_cast %237 : vector<16x1x1x64xf32> to vector<16x64xf32>
    %239 = vector.broadcast %236 : vector<16x1xf32> to vector<16x64xf32>
    %240 = arith.mulf %239, %238 : vector<16x64xf32>
    %241 = arith.addf %229, %240 : vector<16x64xf32>
    %242 = vector.extract_strided_slice %11 {offsets = [0, 4], sizes = [16, 1], strides = [1, 1]} : vector<16x7xf32> to vector<16x1xf32>
    %c0_158 = arith.constant 0 : index
    %c2_159 = arith.constant 2 : index
    %c4_160 = arith.constant 4 : index
    %c0_161 = arith.constant 0 : index
    %243 = vector.load %arg4[%c0_158, %c2_159, %c4_160, %c0_161] : memref<16x7x7x64xf32, #tpu.memory_space<vmem>>, vector<16x1x1x64xf32>
    %244 = vector.shape_cast %243 : vector<16x1x1x64xf32> to vector<16x64xf32>
    %245 = vector.broadcast %242 : vector<16x1xf32> to vector<16x64xf32>
    %246 = arith.mulf %245, %244 : vector<16x64xf32>
    %247 = arith.addf %235, %246 : vector<16x64xf32>
    %248 = vector.extract_strided_slice %6 {offsets = [0, 4], sizes = [16, 1], strides = [1, 1]} : vector<16x7xf32> to vector<16x1xf32>
    %c0_162 = arith.constant 0 : index
    %c4_163 = arith.constant 4 : index
    %c2_164 = arith.constant 2 : index
    %c0_165 = arith.constant 0 : index
    %249 = vector.load %arg4[%c0_162, %c4_163, %c2_164, %c0_165] : memref<16x7x7x64xf32, #tpu.memory_space<vmem>>, vector<16x1x1x64xf32>
    %250 = vector.shape_cast %249 : vector<16x1x1x64xf32> to vector<16x64xf32>
    %251 = vector.broadcast %248 : vector<16x1xf32> to vector<16x64xf32>
    %252 = arith.mulf %251, %250 : vector<16x64xf32>
    %253 = arith.addf %241, %252 : vector<16x64xf32>
    %254 = vector.extract_strided_slice %11 {offsets = [0, 5], sizes = [16, 1], strides = [1, 1]} : vector<16x7xf32> to vector<16x1xf32>
    %c0_166 = arith.constant 0 : index
    %c2_167 = arith.constant 2 : index
    %c5_168 = arith.constant 5 : index
    %c0_169 = arith.constant 0 : index
    %255 = vector.load %arg4[%c0_166, %c2_167, %c5_168, %c0_169] : memref<16x7x7x64xf32, #tpu.memory_space<vmem>>, vector<16x1x1x64xf32>
    %256 = vector.shape_cast %255 : vector<16x1x1x64xf32> to vector<16x64xf32>
    %257 = vector.broadcast %254 : vector<16x1xf32> to vector<16x64xf32>
    %258 = arith.mulf %257, %256 : vector<16x64xf32>
    %259 = arith.addf %247, %258 : vector<16x64xf32>
    %260 = vector.extract_strided_slice %6 {offsets = [0, 5], sizes = [16, 1], strides = [1, 1]} : vector<16x7xf32> to vector<16x1xf32>
    %c0_170 = arith.constant 0 : index
    %c5_171 = arith.constant 5 : index
    %c2_172 = arith.constant 2 : index
    %c0_173 = arith.constant 0 : index
    %261 = vector.load %arg4[%c0_170, %c5_171, %c2_172, %c0_173] : memref<16x7x7x64xf32, #tpu.memory_space<vmem>>, vector<16x1x1x64xf32>
    %262 = vector.shape_cast %261 : vector<16x1x1x64xf32> to vector<16x64xf32>
    %263 = vector.broadcast %260 : vector<16x1xf32> to vector<16x64xf32>
    %264 = arith.mulf %263, %262 : vector<16x64xf32>
    %265 = arith.addf %253, %264 : vector<16x64xf32>
    %266 = vector.extract_strided_slice %11 {offsets = [0, 6], sizes = [16, 1], strides = [1, 1]} : vector<16x7xf32> to vector<16x1xf32>
    %c0_174 = arith.constant 0 : index
    %c2_175 = arith.constant 2 : index
    %c6_176 = arith.constant 6 : index
    %c0_177 = arith.constant 0 : index
    %267 = vector.load %arg4[%c0_174, %c2_175, %c6_176, %c0_177] : memref<16x7x7x64xf32, #tpu.memory_space<vmem>>, vector<16x1x1x64xf32>
    %268 = vector.shape_cast %267 : vector<16x1x1x64xf32> to vector<16x64xf32>
    %269 = vector.broadcast %266 : vector<16x1xf32> to vector<16x64xf32>
    %270 = arith.mulf %269, %268 : vector<16x64xf32>
    %271 = arith.addf %259, %270 : vector<16x64xf32>
    %272 = vector.extract_strided_slice %6 {offsets = [0, 6], sizes = [16, 1], strides = [1, 1]} : vector<16x7xf32> to vector<16x1xf32>
    %c0_178 = arith.constant 0 : index
    %c6_179 = arith.constant 6 : index
    %c2_180 = arith.constant 2 : index
    %c0_181 = arith.constant 0 : index
    %273 = vector.load %arg4[%c0_178, %c6_179, %c2_180, %c0_181] : memref<16x7x7x64xf32, #tpu.memory_space<vmem>>, vector<16x1x1x64xf32>
    %274 = vector.shape_cast %273 : vector<16x1x1x64xf32> to vector<16x64xf32>
    %275 = vector.broadcast %272 : vector<16x1xf32> to vector<16x64xf32>
    %276 = arith.mulf %275, %274 : vector<16x64xf32>
    %277 = arith.addf %265, %276 : vector<16x64xf32>
    %c32 = arith.constant 32 : index
    %c64_182 = arith.constant 64 : index
    %278 = vector.load %arg19[%c32, %c64_182] : memref<112x128xf32, #tpu.memory_space<vmem>>, vector<16x64xf32>
    tpu.vector_store %arg19[%c32, %c64_182], %271 {strides = array<i32>} : memref<112x128xf32, #tpu.memory_space<vmem>>, vector<16x64xf32>,
    %c32_183 = arith.constant 32 : index
    %c64_184 = arith.constant 64 : index
    %279 = vector.load %arg20[%c32_183, %c64_184] : memref<112x128xf32, #tpu.memory_space<vmem>>, vector<16x64xf32>
    tpu.vector_store %arg20[%c32_183, %c64_184], %277 {strides = array<i32>} : memref<112x128xf32, #tpu.memory_space<vmem>>, vector<16x64xf32>,
    %cst_185 = arith.constant 0.000000e+00 : f32
    %280 = vector.broadcast %cst_185 : f32 to vector<16x64xf32>
    %cst_186 = arith.constant 0.000000e+00 : f32
    %281 = vector.broadcast %cst_186 : f32 to vector<16x64xf32>
    %282 = vector.extract_strided_slice %11 {offsets = [0, 0], sizes = [16, 1], strides = [1, 1]} : vector<16x7xf32> to vector<16x1xf32>
    %c0_187 = arith.constant 0 : index
    %c3_188 = arith.constant 3 : index
    %c0_189 = arith.constant 0 : index
    %c0_190 = arith.constant 0 : index
    %283 = vector.load %arg4[%c0_187, %c3_188, %c0_189, %c0_190] : memref<16x7x7x64xf32, #tpu.memory_space<vmem>>, vector<16x1x1x64xf32>
    %284 = vector.shape_cast %283 : vector<16x1x1x64xf32> to vector<16x64xf32>
    %285 = vector.broadcast %282 : vector<16x1xf32> to vector<16x64xf32>
    %286 = arith.mulf %285, %284 : vector<16x64xf32>
    %287 = arith.addf %280, %286 : vector<16x64xf32>
    %288 = vector.extract_strided_slice %6 {offsets = [0, 0], sizes = [16, 1], strides = [1, 1]} : vector<16x7xf32> to vector<16x1xf32>
    %c0_191 = arith.constant 0 : index
    %c0_192 = arith.constant 0 : index
    %c3_193 = arith.constant 3 : index
    %c0_194 = arith.constant 0 : index
    %289 = vector.load %arg4[%c0_191, %c0_192, %c3_193, %c0_194] : memref<16x7x7x64xf32, #tpu.memory_space<vmem>>, vector<16x1x1x64xf32>
    %290 = vector.shape_cast %289 : vector<16x1x1x64xf32> to vector<16x64xf32>
    %291 = vector.broadcast %288 : vector<16x1xf32> to vector<16x64xf32>
    %292 = arith.mulf %291, %290 : vector<16x64xf32>
    %293 = arith.addf %281, %292 : vector<16x64xf32>
    %294 = vector.extract_strided_slice %11 {offsets = [0, 1], sizes = [16, 1], strides = [1, 1]} : vector<16x7xf32> to vector<16x1xf32>
    %c0_195 = arith.constant 0 : index
    %c3_196 = arith.constant 3 : index
    %c1_197 = arith.constant 1 : index
    %c0_198 = arith.constant 0 : index
    %295 = vector.load %arg4[%c0_195, %c3_196, %c1_197, %c0_198] : memref<16x7x7x64xf32, #tpu.memory_space<vmem>>, vector<16x1x1x64xf32>
    %296 = vector.shape_cast %295 : vector<16x1x1x64xf32> to vector<16x64xf32>
    %297 = vector.broadcast %294 : vector<16x1xf32> to vector<16x64xf32>
    %298 = arith.mulf %297, %296 : vector<16x64xf32>
    %299 = arith.addf %287, %298 : vector<16x64xf32>
    %300 = vector.extract_strided_slice %6 {offsets = [0, 1], sizes = [16, 1], strides = [1, 1]} : vector<16x7xf32> to vector<16x1xf32>
    %c0_199 = arith.constant 0 : index
    %c1_200 = arith.constant 1 : index
    %c3_201 = arith.constant 3 : index
    %c0_202 = arith.constant 0 : index
    %301 = vector.load %arg4[%c0_199, %c1_200, %c3_201, %c0_202] : memref<16x7x7x64xf32, #tpu.memory_space<vmem>>, vector<16x1x1x64xf32>
    %302 = vector.shape_cast %301 : vector<16x1x1x64xf32> to vector<16x64xf32>
    %303 = vector.broadcast %300 : vector<16x1xf32> to vector<16x64xf32>
    %304 = arith.mulf %303, %302 : vector<16x64xf32>
    %305 = arith.addf %293, %304 : vector<16x64xf32>
    %306 = vector.extract_strided_slice %11 {offsets = [0, 2], sizes = [16, 1], strides = [1, 1]} : vector<16x7xf32> to vector<16x1xf32>
    %c0_203 = arith.constant 0 : index
    %c3_204 = arith.constant 3 : index
    %c2_205 = arith.constant 2 : index
    %c0_206 = arith.constant 0 : index
    %307 = vector.load %arg4[%c0_203, %c3_204, %c2_205, %c0_206] : memref<16x7x7x64xf32, #tpu.memory_space<vmem>>, vector<16x1x1x64xf32>
    %308 = vector.shape_cast %307 : vector<16x1x1x64xf32> to vector<16x64xf32>
    %309 = vector.broadcast %306 : vector<16x1xf32> to vector<16x64xf32>
    %310 = arith.mulf %309, %308 : vector<16x64xf32>
    %311 = arith.addf %299, %310 : vector<16x64xf32>
    %312 = vector.extract_strided_slice %6 {offsets = [0, 2], sizes = [16, 1], strides = [1, 1]} : vector<16x7xf32> to vector<16x1xf32>
    %c0_207 = arith.constant 0 : index
    %c2_208 = arith.constant 2 : index
    %c3_209 = arith.constant 3 : index
    %c0_210 = arith.constant 0 : index
    %313 = vector.load %arg4[%c0_207, %c2_208, %c3_209, %c0_210] : memref<16x7x7x64xf32, #tpu.memory_space<vmem>>, vector<16x1x1x64xf32>
    %314 = vector.shape_cast %313 : vector<16x1x1x64xf32> to vector<16x64xf32>
    %315 = vector.broadcast %312 : vector<16x1xf32> to vector<16x64xf32>
    %316 = arith.mulf %315, %314 : vector<16x64xf32>
    %317 = arith.addf %305, %316 : vector<16x64xf32>
    %318 = vector.extract_strided_slice %11 {offsets = [0, 3], sizes = [16, 1], strides = [1, 1]} : vector<16x7xf32> to vector<16x1xf32>
    %c0_211 = arith.constant 0 : index
    %c3_212 = arith.constant 3 : index
    %c3_213 = arith.constant 3 : index
    %c0_214 = arith.constant 0 : index
    %319 = vector.load %arg4[%c0_211, %c3_212, %c3_213, %c0_214] : memref<16x7x7x64xf32, #tpu.memory_space<vmem>>, vector<16x1x1x64xf32>
    %320 = vector.shape_cast %319 : vector<16x1x1x64xf32> to vector<16x64xf32>
    %321 = vector.broadcast %318 : vector<16x1xf32> to vector<16x64xf32>
    %322 = arith.mulf %321, %320 : vector<16x64xf32>
    %323 = arith.addf %311, %322 : vector<16x64xf32>
    %324 = vector.extract_strided_slice %6 {offsets = [0, 3], sizes = [16, 1], strides = [1, 1]} : vector<16x7xf32> to vector<16x1xf32>
    %c0_215 = arith.constant 0 : index
    %c3_216 = arith.constant 3 : index
    %c3_217 = arith.constant 3 : index
    %c0_218 = arith.constant 0 : index
    %325 = vector.load %arg4[%c0_215, %c3_216, %c3_217, %c0_218] : memref<16x7x7x64xf32, #tpu.memory_space<vmem>>, vector<16x1x1x64xf32>
    %326 = vector.shape_cast %325 : vector<16x1x1x64xf32> to vector<16x64xf32>
    %327 = vector.broadcast %324 : vector<16x1xf32> to vector<16x64xf32>
    %328 = arith.mulf %327, %326 : vector<16x64xf32>
    %329 = arith.addf %317, %328 : vector<16x64xf32>
    %330 = vector.extract_strided_slice %11 {offsets = [0, 4], sizes = [16, 1], strides = [1, 1]} : vector<16x7xf32> to vector<16x1xf32>
    %c0_219 = arith.constant 0 : index
    %c3_220 = arith.constant 3 : index
    %c4_221 = arith.constant 4 : index
    %c0_222 = arith.constant 0 : index
    %331 = vector.load %arg4[%c0_219, %c3_220, %c4_221, %c0_222] : memref<16x7x7x64xf32, #tpu.memory_space<vmem>>, vector<16x1x1x64xf32>
    %332 = vector.shape_cast %331 : vector<16x1x1x64xf32> to vector<16x64xf32>
    %333 = vector.broadcast %330 : vector<16x1xf32> to vector<16x64xf32>
    %334 = arith.mulf %333, %332 : vector<16x64xf32>
    %335 = arith.addf %323, %334 : vector<16x64xf32>
    %336 = vector.extract_strided_slice %6 {offsets = [0, 4], sizes = [16, 1], strides = [1, 1]} : vector<16x7xf32> to vector<16x1xf32>
    %c0_223 = arith.constant 0 : index
    %c4_224 = arith.constant 4 : index
    %c3_225 = arith.constant 3 : index
    %c0_226 = arith.constant 0 : index
    %337 = vector.load %arg4[%c0_223, %c4_224, %c3_225, %c0_226] : memref<16x7x7x64xf32, #tpu.memory_space<vmem>>, vector<16x1x1x64xf32>
    %338 = vector.shape_cast %337 : vector<16x1x1x64xf32> to vector<16x64xf32>
    %339 = vector.broadcast %336 : vector<16x1xf32> to vector<16x64xf32>
    %340 = arith.mulf %339, %338 : vector<16x64xf32>
    %341 = arith.addf %329, %340 : vector<16x64xf32>
    %342 = vector.extract_strided_slice %11 {offsets = [0, 5], sizes = [16, 1], strides = [1, 1]} : vector<16x7xf32> to vector<16x1xf32>
    %c0_227 = arith.constant 0 : index
    %c3_228 = arith.constant 3 : index
    %c5_229 = arith.constant 5 : index
    %c0_230 = arith.constant 0 : index
    %343 = vector.load %arg4[%c0_227, %c3_228, %c5_229, %c0_230] : memref<16x7x7x64xf32, #tpu.memory_space<vmem>>, vector<16x1x1x64xf32>
    %344 = vector.shape_cast %343 : vector<16x1x1x64xf32> to vector<16x64xf32>
    %345 = vector.broadcast %342 : vector<16x1xf32> to vector<16x64xf32>
    %346 = arith.mulf %345, %344 : vector<16x64xf32>
    %347 = arith.addf %335, %346 : vector<16x64xf32>
    %348 = vector.extract_strided_slice %6 {offsets = [0, 5], sizes = [16, 1], strides = [1, 1]} : vector<16x7xf32> to vector<16x1xf32>
    %c0_231 = arith.constant 0 : index
    %c5_232 = arith.constant 5 : index
    %c3_233 = arith.constant 3 : index
    %c0_234 = arith.constant 0 : index
    %349 = vector.load %arg4[%c0_231, %c5_232, %c3_233, %c0_234] : memref<16x7x7x64xf32, #tpu.memory_space<vmem>>, vector<16x1x1x64xf32>
    %350 = vector.shape_cast %349 : vector<16x1x1x64xf32> to vector<16x64xf32>
    %351 = vector.broadcast %348 : vector<16x1xf32> to vector<16x64xf32>
    %352 = arith.mulf %351, %350 : vector<16x64xf32>
    %353 = arith.addf %341, %352 : vector<16x64xf32>
    %354 = vector.extract_strided_slice %11 {offsets = [0, 6], sizes = [16, 1], strides = [1, 1]} : vector<16x7xf32> to vector<16x1xf32>
    %c0_235 = arith.constant 0 : index
    %c3_236 = arith.constant 3 : index
    %c6_237 = arith.constant 6 : index
    %c0_238 = arith.constant 0 : index
    %355 = vector.load %arg4[%c0_235, %c3_236, %c6_237, %c0_238] : memref<16x7x7x64xf32, #tpu.memory_space<vmem>>, vector<16x1x1x64xf32>
    %356 = vector.shape_cast %355 : vector<16x1x1x64xf32> to vector<16x64xf32>
    %357 = vector.broadcast %354 : vector<16x1xf32> to vector<16x64xf32>
    %358 = arith.mulf %357, %356 : vector<16x64xf32>
    %359 = arith.addf %347, %358 : vector<16x64xf32>
    %360 = vector.extract_strided_slice %6 {offsets = [0, 6], sizes = [16, 1], strides = [1, 1]} : vector<16x7xf32> to vector<16x1xf32>
    %c0_239 = arith.constant 0 : index
    %c6_240 = arith.constant 6 : index
    %c3_241 = arith.constant 3 : index
    %c0_242 = arith.constant 0 : index
    %361 = vector.load %arg4[%c0_239, %c6_240, %c3_241, %c0_242] : memref<16x7x7x64xf32, #tpu.memory_space<vmem>>, vector<16x1x1x64xf32>
    %362 = vector.shape_cast %361 : vector<16x1x1x64xf32> to vector<16x64xf32>
    %363 = vector.broadcast %360 : vector<16x1xf32> to vector<16x64xf32>
    %364 = arith.mulf %363, %362 : vector<16x64xf32>
    %365 = arith.addf %353, %364 : vector<16x64xf32>
    %c48 = arith.constant 48 : index
    %c64_243 = arith.constant 64 : index
    %366 = vector.load %arg19[%c48, %c64_243] : memref<112x128xf32, #tpu.memory_space<vmem>>, vector<16x64xf32>
    tpu.vector_store %arg19[%c48, %c64_243], %359 {strides = array<i32>} : memref<112x128xf32, #tpu.memory_space<vmem>>, vector<16x64xf32>,
    %c48_244 = arith.constant 48 : index
    %c64_245 = arith.constant 64 : index
    %367 = vector.load %arg20[%c48_244, %c64_245] : memref<112x128xf32, #tpu.memory_space<vmem>>, vector<16x64xf32>
    tpu.vector_store %arg20[%c48_244, %c64_245], %365 {strides = array<i32>} : memref<112x128xf32, #tpu.memory_space<vmem>>, vector<16x64xf32>,
    %cst_246 = arith.constant 0.000000e+00 : f32
    %368 = vector.broadcast %cst_246 : f32 to vector<16x64xf32>
    %cst_247 = arith.constant 0.000000e+00 : f32
    %369 = vector.broadcast %cst_247 : f32 to vector<16x64xf32>
    %370 = vector.extract_strided_slice %11 {offsets = [0, 0], sizes = [16, 1], strides = [1, 1]} : vector<16x7xf32> to vector<16x1xf32>
    %c0_248 = arith.constant 0 : index
    %c4_249 = arith.constant 4 : index
    %c0_250 = arith.constant 0 : index
    %c0_251 = arith.constant 0 : index
    %371 = vector.load %arg4[%c0_248, %c4_249, %c0_250, %c0_251] : memref<16x7x7x64xf32, #tpu.memory_space<vmem>>, vector<16x1x1x64xf32>
    %372 = vector.shape_cast %371 : vector<16x1x1x64xf32> to vector<16x64xf32>
    %373 = vector.broadcast %370 : vector<16x1xf32> to vector<16x64xf32>
    %374 = arith.mulf %373, %372 : vector<16x64xf32>
    %375 = arith.addf %368, %374 : vector<16x64xf32>
    %376 = vector.extract_strided_slice %6 {offsets = [0, 0], sizes = [16, 1], strides = [1, 1]} : vector<16x7xf32> to vector<16x1xf32>
    %c0_252 = arith.constant 0 : index
    %c0_253 = arith.constant 0 : index
    %c4_254 = arith.constant 4 : index
    %c0_255 = arith.constant 0 : index
    %377 = vector.load %arg4[%c0_252, %c0_253, %c4_254, %c0_255] : memref<16x7x7x64xf32, #tpu.memory_space<vmem>>, vector<16x1x1x64xf32>
    %378 = vector.shape_cast %377 : vector<16x1x1x64xf32> to vector<16x64xf32>
    %379 = vector.broadcast %376 : vector<16x1xf32> to vector<16x64xf32>
    %380 = arith.mulf %379, %378 : vector<16x64xf32>
    %381 = arith.addf %369, %380 : vector<16x64xf32>
    %382 = vector.extract_strided_slice %11 {offsets = [0, 1], sizes = [16, 1], strides = [1, 1]} : vector<16x7xf32> to vector<16x1xf32>
    %c0_256 = arith.constant 0 : index
    %c4_257 = arith.constant 4 : index
    %c1_258 = arith.constant 1 : index
    %c0_259 = arith.constant 0 : index
    %383 = vector.load %arg4[%c0_256, %c4_257, %c1_258, %c0_259] : memref<16x7x7x64xf32, #tpu.memory_space<vmem>>, vector<16x1x1x64xf32>
    %384 = vector.shape_cast %383 : vector<16x1x1x64xf32> to vector<16x64xf32>
    %385 = vector.broadcast %382 : vector<16x1xf32> to vector<16x64xf32>
    %386 = arith.mulf %385, %384 : vector<16x64xf32>
    %387 = arith.addf %375, %386 : vector<16x64xf32>
    %388 = vector.extract_strided_slice %6 {offsets = [0, 1], sizes = [16, 1], strides = [1, 1]} : vector<16x7xf32> to vector<16x1xf32>
    %c0_260 = arith.constant 0 : index
    %c1_261 = arith.constant 1 : index
    %c4_262 = arith.constant 4 : index
    %c0_263 = arith.constant 0 : index
    %389 = vector.load %arg4[%c0_260, %c1_261, %c4_262, %c0_263] : memref<16x7x7x64xf32, #tpu.memory_space<vmem>>, vector<16x1x1x64xf32>
    %390 = vector.shape_cast %389 : vector<16x1x1x64xf32> to vector<16x64xf32>
    %391 = vector.broadcast %388 : vector<16x1xf32> to vector<16x64xf32>
    %392 = arith.mulf %391, %390 : vector<16x64xf32>
    %393 = arith.addf %381, %392 : vector<16x64xf32>
    %394 = vector.extract_strided_slice %11 {offsets = [0, 2], sizes = [16, 1], strides = [1, 1]} : vector<16x7xf32> to vector<16x1xf32>
    %c0_264 = arith.constant 0 : index
    %c4_265 = arith.constant 4 : index
    %c2_266 = arith.constant 2 : index
    %c0_267 = arith.constant 0 : index
    %395 = vector.load %arg4[%c0_264, %c4_265, %c2_266, %c0_267] : memref<16x7x7x64xf32, #tpu.memory_space<vmem>>, vector<16x1x1x64xf32>
    %396 = vector.shape_cast %395 : vector<16x1x1x64xf32> to vector<16x64xf32>
    %397 = vector.broadcast %394 : vector<16x1xf32> to vector<16x64xf32>
    %398 = arith.mulf %397, %396 : vector<16x64xf32>
    %399 = arith.addf %387, %398 : vector<16x64xf32>
    %400 = vector.extract_strided_slice %6 {offsets = [0, 2], sizes = [16, 1], strides = [1, 1]} : vector<16x7xf32> to vector<16x1xf32>
    %c0_268 = arith.constant 0 : index
    %c2_269 = arith.constant 2 : index
    %c4_270 = arith.constant 4 : index
    %c0_271 = arith.constant 0 : index
    %401 = vector.load %arg4[%c0_268, %c2_269, %c4_270, %c0_271] : memref<16x7x7x64xf32, #tpu.memory_space<vmem>>, vector<16x1x1x64xf32>
    %402 = vector.shape_cast %401 : vector<16x1x1x64xf32> to vector<16x64xf32>
    %403 = vector.broadcast %400 : vector<16x1xf32> to vector<16x64xf32>
    %404 = arith.mulf %403, %402 : vector<16x64xf32>
    %405 = arith.addf %393, %404 : vector<16x64xf32>
    %406 = vector.extract_strided_slice %11 {offsets = [0, 3], sizes = [16, 1], strides = [1, 1]} : vector<16x7xf32> to vector<16x1xf32>
    %c0_272 = arith.constant 0 : index
    %c4_273 = arith.constant 4 : index
    %c3_274 = arith.constant 3 : index
    %c0_275 = arith.constant 0 : index
    %407 = vector.load %arg4[%c0_272, %c4_273, %c3_274, %c0_275] : memref<16x7x7x64xf32, #tpu.memory_space<vmem>>, vector<16x1x1x64xf32>
    %408 = vector.shape_cast %407 : vector<16x1x1x64xf32> to vector<16x64xf32>
    %409 = vector.broadcast %406 : vector<16x1xf32> to vector<16x64xf32>
    %410 = arith.mulf %409, %408 : vector<16x64xf32>
    %411 = arith.addf %399, %410 : vector<16x64xf32>
    %412 = vector.extract_strided_slice %6 {offsets = [0, 3], sizes = [16, 1], strides = [1, 1]} : vector<16x7xf32> to vector<16x1xf32>
    %c0_276 = arith.constant 0 : index
    %c3_277 = arith.constant 3 : index
    %c4_278 = arith.constant 4 : index
    %c0_279 = arith.constant 0 : index
    %413 = vector.load %arg4[%c0_276, %c3_277, %c4_278, %c0_279] : memref<16x7x7x64xf32, #tpu.memory_space<vmem>>, vector<16x1x1x64xf32>
    %414 = vector.shape_cast %413 : vector<16x1x1x64xf32> to vector<16x64xf32>
    %415 = vector.broadcast %412 : vector<16x1xf32> to vector<16x64xf32>
    %416 = arith.mulf %415, %414 : vector<16x64xf32>
    %417 = arith.addf %405, %416 : vector<16x64xf32>
    %418 = vector.extract_strided_slice %11 {offsets = [0, 4], sizes = [16, 1], strides = [1, 1]} : vector<16x7xf32> to vector<16x1xf32>
    %c0_280 = arith.constant 0 : index
    %c4_281 = arith.constant 4 : index
    %c4_282 = arith.constant 4 : index
    %c0_283 = arith.constant 0 : index
    %419 = vector.load %arg4[%c0_280, %c4_281, %c4_282, %c0_283] : memref<16x7x7x64xf32, #tpu.memory_space<vmem>>, vector<16x1x1x64xf32>
    %420 = vector.shape_cast %419 : vector<16x1x1x64xf32> to vector<16x64xf32>
    %421 = vector.broadcast %418 : vector<16x1xf32> to vector<16x64xf32>
    %422 = arith.mulf %421, %420 : vector<16x64xf32>
    %423 = arith.addf %411, %422 : vector<16x64xf32>
    %424 = vector.extract_strided_slice %6 {offsets = [0, 4], sizes = [16, 1], strides = [1, 1]} : vector<16x7xf32> to vector<16x1xf32>
    %c0_284 = arith.constant 0 : index
    %c4_285 = arith.constant 4 : index
    %c4_286 = arith.constant 4 : index
    %c0_287 = arith.constant 0 : index
    %425 = vector.load %arg4[%c0_284, %c4_285, %c4_286, %c0_287] : memref<16x7x7x64xf32, #tpu.memory_space<vmem>>, vector<16x1x1x64xf32>
    %426 = vector.shape_cast %425 : vector<16x1x1x64xf32> to vector<16x64xf32>
    %427 = vector.broadcast %424 : vector<16x1xf32> to vector<16x64xf32>
    %428 = arith.mulf %427, %426 : vector<16x64xf32>
    %429 = arith.addf %417, %428 : vector<16x64xf32>
    %430 = vector.extract_strided_slice %11 {offsets = [0, 5], sizes = [16, 1], strides = [1, 1]} : vector<16x7xf32> to vector<16x1xf32>
    %c0_288 = arith.constant 0 : index
    %c4_289 = arith.constant 4 : index
    %c5_290 = arith.constant 5 : index
    %c0_291 = arith.constant 0 : index
    %431 = vector.load %arg4[%c0_288, %c4_289, %c5_290, %c0_291] : memref<16x7x7x64xf32, #tpu.memory_space<vmem>>, vector<16x1x1x64xf32>
    %432 = vector.shape_cast %431 : vector<16x1x1x64xf32> to vector<16x64xf32>
    %433 = vector.broadcast %430 : vector<16x1xf32> to vector<16x64xf32>
    %434 = arith.mulf %433, %432 : vector<16x64xf32>
    %435 = arith.addf %423, %434 : vector<16x64xf32>
    %436 = vector.extract_strided_slice %6 {offsets = [0, 5], sizes = [16, 1], strides = [1, 1]} : vector<16x7xf32> to vector<16x1xf32>
    %c0_292 = arith.constant 0 : index
    %c5_293 = arith.constant 5 : index
    %c4_294 = arith.constant 4 : index
    %c0_295 = arith.constant 0 : index
    %437 = vector.load %arg4[%c0_292, %c5_293, %c4_294, %c0_295] : memref<16x7x7x64xf32, #tpu.memory_space<vmem>>, vector<16x1x1x64xf32>
    %438 = vector.shape_cast %437 : vector<16x1x1x64xf32> to vector<16x64xf32>
    %439 = vector.broadcast %436 : vector<16x1xf32> to vector<16x64xf32>
    %440 = arith.mulf %439, %438 : vector<16x64xf32>
    %441 = arith.addf %429, %440 : vector<16x64xf32>
    %442 = vector.extract_strided_slice %11 {offsets = [0, 6], sizes = [16, 1], strides = [1, 1]} : vector<16x7xf32> to vector<16x1xf32>
    %c0_296 = arith.constant 0 : index
    %c4_297 = arith.constant 4 : index
    %c6_298 = arith.constant 6 : index
    %c0_299 = arith.constant 0 : index
    %443 = vector.load %arg4[%c0_296, %c4_297, %c6_298, %c0_299] : memref<16x7x7x64xf32, #tpu.memory_space<vmem>>, vector<16x1x1x64xf32>
    %444 = vector.shape_cast %443 : vector<16x1x1x64xf32> to vector<16x64xf32>
    %445 = vector.broadcast %442 : vector<16x1xf32> to vector<16x64xf32>
    %446 = arith.mulf %445, %444 : vector<16x64xf32>
    %447 = arith.addf %435, %446 : vector<16x64xf32>
    %448 = vector.extract_strided_slice %6 {offsets = [0, 6], sizes = [16, 1], strides = [1, 1]} : vector<16x7xf32> to vector<16x1xf32>
    %c0_300 = arith.constant 0 : index
    %c6_301 = arith.constant 6 : index
    %c4_302 = arith.constant 4 : index
    %c0_303 = arith.constant 0 : index
    %449 = vector.load %arg4[%c0_300, %c6_301, %c4_302, %c0_303] : memref<16x7x7x64xf32, #tpu.memory_space<vmem>>, vector<16x1x1x64xf32>
    %450 = vector.shape_cast %449 : vector<16x1x1x64xf32> to vector<16x64xf32>
    %451 = vector.broadcast %448 : vector<16x1xf32> to vector<16x64xf32>
    %452 = arith.mulf %451, %450 : vector<16x64xf32>
    %453 = arith.addf %441, %452 : vector<16x64xf32>
    %c64_304 = arith.constant 64 : index
    %c64_305 = arith.constant 64 : index
    %454 = vector.load %arg19[%c64_304, %c64_305] : memref<112x128xf32, #tpu.memory_space<vmem>>, vector<16x64xf32>
    tpu.vector_store %arg19[%c64_304, %c64_305], %447 {strides = array<i32>} : memref<112x128xf32, #tpu.memory_space<vmem>>, vector<16x64xf32>,
    %c64_306 = arith.constant 64 : index
    %c64_307 = arith.constant 64 : index
    %455 = vector.load %arg20[%c64_306, %c64_307] : memref<112x128xf32, #tpu.memory_space<vmem>>, vector<16x64xf32>
    tpu.vector_store %arg20[%c64_306, %c64_307], %453 {strides = array<i32>} : memref<112x128xf32, #tpu.memory_space<vmem>>, vector<16x64xf32>,
    %cst_308 = arith.constant 0.000000e+00 : f32
    %456 = vector.broadcast %cst_308 : f32 to vector<16x64xf32>
    %cst_309 = arith.constant 0.000000e+00 : f32
    %457 = vector.broadcast %cst_309 : f32 to vector<16x64xf32>
    %458 = vector.extract_strided_slice %11 {offsets = [0, 0], sizes = [16, 1], strides = [1, 1]} : vector<16x7xf32> to vector<16x1xf32>
    %c0_310 = arith.constant 0 : index
    %c5_311 = arith.constant 5 : index
    %c0_312 = arith.constant 0 : index
    %c0_313 = arith.constant 0 : index
    %459 = vector.load %arg4[%c0_310, %c5_311, %c0_312, %c0_313] : memref<16x7x7x64xf32, #tpu.memory_space<vmem>>, vector<16x1x1x64xf32>
    %460 = vector.shape_cast %459 : vector<16x1x1x64xf32> to vector<16x64xf32>
    %461 = vector.broadcast %458 : vector<16x1xf32> to vector<16x64xf32>
    %462 = arith.mulf %461, %460 : vector<16x64xf32>
    %463 = arith.addf %456, %462 : vector<16x64xf32>
    %464 = vector.extract_strided_slice %6 {offsets = [0, 0], sizes = [16, 1], strides = [1, 1]} : vector<16x7xf32> to vector<16x1xf32>
    %c0_314 = arith.constant 0 : index
    %c0_315 = arith.constant 0 : index
    %c5_316 = arith.constant 5 : index
    %c0_317 = arith.constant 0 : index
    %465 = vector.load %arg4[%c0_314, %c0_315, %c5_316, %c0_317] : memref<16x7x7x64xf32, #tpu.memory_space<vmem>>, vector<16x1x1x64xf32>
    %466 = vector.shape_cast %465 : vector<16x1x1x64xf32> to vector<16x64xf32>
    %467 = vector.broadcast %464 : vector<16x1xf32> to vector<16x64xf32>
    %468 = arith.mulf %467, %466 : vector<16x64xf32>
    %469 = arith.addf %457, %468 : vector<16x64xf32>
    %470 = vector.extract_strided_slice %11 {offsets = [0, 1], sizes = [16, 1], strides = [1, 1]} : vector<16x7xf32> to vector<16x1xf32>
    %c0_318 = arith.constant 0 : index
    %c5_319 = arith.constant 5 : index
    %c1_320 = arith.constant 1 : index
    %c0_321 = arith.constant 0 : index
    %471 = vector.load %arg4[%c0_318, %c5_319, %c1_320, %c0_321] : memref<16x7x7x64xf32, #tpu.memory_space<vmem>>, vector<16x1x1x64xf32>
    %472 = vector.shape_cast %471 : vector<16x1x1x64xf32> to vector<16x64xf32>
    %473 = vector.broadcast %470 : vector<16x1xf32> to vector<16x64xf32>
    %474 = arith.mulf %473, %472 : vector<16x64xf32>
    %475 = arith.addf %463, %474 : vector<16x64xf32>
    %476 = vector.extract_strided_slice %6 {offsets = [0, 1], sizes = [16, 1], strides = [1, 1]} : vector<16x7xf32> to vector<16x1xf32>
    %c0_322 = arith.constant 0 : index
    %c1_323 = arith.constant 1 : index
    %c5_324 = arith.constant 5 : index
    %c0_325 = arith.constant 0 : index
    %477 = vector.load %arg4[%c0_322, %c1_323, %c5_324, %c0_325] : memref<16x7x7x64xf32, #tpu.memory_space<vmem>>, vector<16x1x1x64xf32>
    %478 = vector.shape_cast %477 : vector<16x1x1x64xf32> to vector<16x64xf32>
    %479 = vector.broadcast %476 : vector<16x1xf32> to vector<16x64xf32>
    %480 = arith.mulf %479, %478 : vector<16x64xf32>
    %481 = arith.addf %469, %480 : vector<16x64xf32>
    %482 = vector.extract_strided_slice %11 {offsets = [0, 2], sizes = [16, 1], strides = [1, 1]} : vector<16x7xf32> to vector<16x1xf32>
    %c0_326 = arith.constant 0 : index
    %c5_327 = arith.constant 5 : index
    %c2_328 = arith.constant 2 : index
    %c0_329 = arith.constant 0 : index
    %483 = vector.load %arg4[%c0_326, %c5_327, %c2_328, %c0_329] : memref<16x7x7x64xf32, #tpu.memory_space<vmem>>, vector<16x1x1x64xf32>
    %484 = vector.shape_cast %483 : vector<16x1x1x64xf32> to vector<16x64xf32>
    %485 = vector.broadcast %482 : vector<16x1xf32> to vector<16x64xf32>
    %486 = arith.mulf %485, %484 : vector<16x64xf32>
    %487 = arith.addf %475, %486 : vector<16x64xf32>
    %488 = vector.extract_strided_slice %6 {offsets = [0, 2], sizes = [16, 1], strides = [1, 1]} : vector<16x7xf32> to vector<16x1xf32>
    %c0_330 = arith.constant 0 : index
    %c2_331 = arith.constant 2 : index
    %c5_332 = arith.constant 5 : index
    %c0_333 = arith.constant 0 : index
    %489 = vector.load %arg4[%c0_330, %c2_331, %c5_332, %c0_333] : memref<16x7x7x64xf32, #tpu.memory_space<vmem>>, vector<16x1x1x64xf32>
    %490 = vector.shape_cast %489 : vector<16x1x1x64xf32> to vector<16x64xf32>
    %491 = vector.broadcast %488 : vector<16x1xf32> to vector<16x64xf32>
    %492 = arith.mulf %491, %490 : vector<16x64xf32>
    %493 = arith.addf %481, %492 : vector<16x64xf32>
    %494 = vector.extract_strided_slice %11 {offsets = [0, 3], sizes = [16, 1], strides = [1, 1]} : vector<16x7xf32> to vector<16x1xf32>
    %c0_334 = arith.constant 0 : index
    %c5_335 = arith.constant 5 : index
    %c3_336 = arith.constant 3 : index
    %c0_337 = arith.constant 0 : index
    %495 = vector.load %arg4[%c0_334, %c5_335, %c3_336, %c0_337] : memref<16x7x7x64xf32, #tpu.memory_space<vmem>>, vector<16x1x1x64xf32>
    %496 = vector.shape_cast %495 : vector<16x1x1x64xf32> to vector<16x64xf32>
    %497 = vector.broadcast %494 : vector<16x1xf32> to vector<16x64xf32>
    %498 = arith.mulf %497, %496 : vector<16x64xf32>
    %499 = arith.addf %487, %498 : vector<16x64xf32>
    %500 = vector.extract_strided_slice %6 {offsets = [0, 3], sizes = [16, 1], strides = [1, 1]} : vector<16x7xf32> to vector<16x1xf32>
    %c0_338 = arith.constant 0 : index
    %c3_339 = arith.constant 3 : index
    %c5_340 = arith.constant 5 : index
    %c0_341 = arith.constant 0 : index
    %501 = vector.load %arg4[%c0_338, %c3_339, %c5_340, %c0_341] : memref<16x7x7x64xf32, #tpu.memory_space<vmem>>, vector<16x1x1x64xf32>
    %502 = vector.shape_cast %501 : vector<16x1x1x64xf32> to vector<16x64xf32>
    %503 = vector.broadcast %500 : vector<16x1xf32> to vector<16x64xf32>
    %504 = arith.mulf %503, %502 : vector<16x64xf32>
    %505 = arith.addf %493, %504 : vector<16x64xf32>
    %506 = vector.extract_strided_slice %11 {offsets = [0, 4], sizes = [16, 1], strides = [1, 1]} : vector<16x7xf32> to vector<16x1xf32>
    %c0_342 = arith.constant 0 : index
    %c5_343 = arith.constant 5 : index
    %c4_344 = arith.constant 4 : index
    %c0_345 = arith.constant 0 : index
    %507 = vector.load %arg4[%c0_342, %c5_343, %c4_344, %c0_345] : memref<16x7x7x64xf32, #tpu.memory_space<vmem>>, vector<16x1x1x64xf32>
    %508 = vector.shape_cast %507 : vector<16x1x1x64xf32> to vector<16x64xf32>
    %509 = vector.broadcast %506 : vector<16x1xf32> to vector<16x64xf32>
    %510 = arith.mulf %509, %508 : vector<16x64xf32>
    %511 = arith.addf %499, %510 : vector<16x64xf32>
    %512 = vector.extract_strided_slice %6 {offsets = [0, 4], sizes = [16, 1], strides = [1, 1]} : vector<16x7xf32> to vector<16x1xf32>
    %c0_346 = arith.constant 0 : index
    %c4_347 = arith.constant 4 : index
    %c5_348 = arith.constant 5 : index
    %c0_349 = arith.constant 0 : index
    %513 = vector.load %arg4[%c0_346, %c4_347, %c5_348, %c0_349] : memref<16x7x7x64xf32, #tpu.memory_space<vmem>>, vector<16x1x1x64xf32>
    %514 = vector.shape_cast %513 : vector<16x1x1x64xf32> to vector<16x64xf32>
    %515 = vector.broadcast %512 : vector<16x1xf32> to vector<16x64xf32>
    %516 = arith.mulf %515, %514 : vector<16x64xf32>
    %517 = arith.addf %505, %516 : vector<16x64xf32>
    %518 = vector.extract_strided_slice %11 {offsets = [0, 5], sizes = [16, 1], strides = [1, 1]} : vector<16x7xf32> to vector<16x1xf32>
    %c0_350 = arith.constant 0 : index
    %c5_351 = arith.constant 5 : index
    %c5_352 = arith.constant 5 : index
    %c0_353 = arith.constant 0 : index
    %519 = vector.load %arg4[%c0_350, %c5_351, %c5_352, %c0_353] : memref<16x7x7x64xf32, #tpu.memory_space<vmem>>, vector<16x1x1x64xf32>
    %520 = vector.shape_cast %519 : vector<16x1x1x64xf32> to vector<16x64xf32>
    %521 = vector.broadcast %518 : vector<16x1xf32> to vector<16x64xf32>
    %522 = arith.mulf %521, %520 : vector<16x64xf32>
    %523 = arith.addf %511, %522 : vector<16x64xf32>
    %524 = vector.extract_strided_slice %6 {offsets = [0, 5], sizes = [16, 1], strides = [1, 1]} : vector<16x7xf32> to vector<16x1xf32>
    %c0_354 = arith.constant 0 : index
    %c5_355 = arith.constant 5 : index
    %c5_356 = arith.constant 5 : index
    %c0_357 = arith.constant 0 : index
    %525 = vector.load %arg4[%c0_354, %c5_355, %c5_356, %c0_357] : memref<16x7x7x64xf32, #tpu.memory_space<vmem>>, vector<16x1x1x64xf32>
    %526 = vector.shape_cast %525 : vector<16x1x1x64xf32> to vector<16x64xf32>
    %527 = vector.broadcast %524 : vector<16x1xf32> to vector<16x64xf32>
    %528 = arith.mulf %527, %526 : vector<16x64xf32>
    %529 = arith.addf %517, %528 : vector<16x64xf32>
    %530 = vector.extract_strided_slice %11 {offsets = [0, 6], sizes = [16, 1], strides = [1, 1]} : vector<16x7xf32> to vector<16x1xf32>
    %c0_358 = arith.constant 0 : index
    %c5_359 = arith.constant 5 : index
    %c6_360 = arith.constant 6 : index
    %c0_361 = arith.constant 0 : index
    %531 = vector.load %arg4[%c0_358, %c5_359, %c6_360, %c0_361] : memref<16x7x7x64xf32, #tpu.memory_space<vmem>>, vector<16x1x1x64xf32>
    %532 = vector.shape_cast %531 : vector<16x1x1x64xf32> to vector<16x64xf32>
    %533 = vector.broadcast %530 : vector<16x1xf32> to vector<16x64xf32>
    %534 = arith.mulf %533, %532 : vector<16x64xf32>
    %535 = arith.addf %523, %534 : vector<16x64xf32>
    %536 = vector.extract_strided_slice %6 {offsets = [0, 6], sizes = [16, 1], strides = [1, 1]} : vector<16x7xf32> to vector<16x1xf32>
    %c0_362 = arith.constant 0 : index
    %c6_363 = arith.constant 6 : index
    %c5_364 = arith.constant 5 : index
    %c0_365 = arith.constant 0 : index
    %537 = vector.load %arg4[%c0_362, %c6_363, %c5_364, %c0_365] : memref<16x7x7x64xf32, #tpu.memory_space<vmem>>, vector<16x1x1x64xf32>
    %538 = vector.shape_cast %537 : vector<16x1x1x64xf32> to vector<16x64xf32>
    %539 = vector.broadcast %536 : vector<16x1xf32> to vector<16x64xf32>
    %540 = arith.mulf %539, %538 : vector<16x64xf32>
    %541 = arith.addf %529, %540 : vector<16x64xf32>
    %c80 = arith.constant 80 : index
    %c64_366 = arith.constant 64 : index
    %542 = vector.load %arg19[%c80, %c64_366] : memref<112x128xf32, #tpu.memory_space<vmem>>, vector<16x64xf32>
    tpu.vector_store %arg19[%c80, %c64_366], %535 {strides = array<i32>} : memref<112x128xf32, #tpu.memory_space<vmem>>, vector<16x64xf32>,
    %c80_367 = arith.constant 80 : index
    %c64_368 = arith.constant 64 : index
    %543 = vector.load %arg20[%c80_367, %c64_368] : memref<112x128xf32, #tpu.memory_space<vmem>>, vector<16x64xf32>
    tpu.vector_store %arg20[%c80_367, %c64_368], %541 {strides = array<i32>} : memref<112x128xf32, #tpu.memory_space<vmem>>, vector<16x64xf32>,
    %cst_369 = arith.constant 0.000000e+00 : f32
    %544 = vector.broadcast %cst_369 : f32 to vector<16x64xf32>
    %cst_370 = arith.constant 0.000000e+00 : f32
    %545 = vector.broadcast %cst_370 : f32 to vector<16x64xf32>
    %546 = vector.extract_strided_slice %11 {offsets = [0, 0], sizes = [16, 1], strides = [1, 1]} : vector<16x7xf32> to vector<16x1xf32>
    %c0_371 = arith.constant 0 : index
    %c6_372 = arith.constant 6 : index
    %c0_373 = arith.constant 0 : index
    %c0_374 = arith.constant 0 : index
    %547 = vector.load %arg4[%c0_371, %c6_372, %c0_373, %c0_374] : memref<16x7x7x64xf32, #tpu.memory_space<vmem>>, vector<16x1x1x64xf32>
    %548 = vector.shape_cast %547 : vector<16x1x1x64xf32> to vector<16x64xf32>
    %549 = vector.broadcast %546 : vector<16x1xf32> to vector<16x64xf32>
    %550 = arith.mulf %549, %548 : vector<16x64xf32>
    %551 = arith.addf %544, %550 : vector<16x64xf32>
    %552 = vector.extract_strided_slice %6 {offsets = [0, 0], sizes = [16, 1], strides = [1, 1]} : vector<16x7xf32> to vector<16x1xf32>
    %c0_375 = arith.constant 0 : index
    %c0_376 = arith.constant 0 : index
    %c6_377 = arith.constant 6 : index
    %c0_378 = arith.constant 0 : index
    %553 = vector.load %arg4[%c0_375, %c0_376, %c6_377, %c0_378] : memref<16x7x7x64xf32, #tpu.memory_space<vmem>>, vector<16x1x1x64xf32>
    %554 = vector.shape_cast %553 : vector<16x1x1x64xf32> to vector<16x64xf32>
    %555 = vector.broadcast %552 : vector<16x1xf32> to vector<16x64xf32>
    %556 = arith.mulf %555, %554 : vector<16x64xf32>
    %557 = arith.addf %545, %556 : vector<16x64xf32>
    %558 = vector.extract_strided_slice %11 {offsets = [0, 1], sizes = [16, 1], strides = [1, 1]} : vector<16x7xf32> to vector<16x1xf32>
    %c0_379 = arith.constant 0 : index
    %c6_380 = arith.constant 6 : index
    %c1_381 = arith.constant 1 : index
    %c0_382 = arith.constant 0 : index
    %559 = vector.load %arg4[%c0_379, %c6_380, %c1_381, %c0_382] : memref<16x7x7x64xf32, #tpu.memory_space<vmem>>, vector<16x1x1x64xf32>
    %560 = vector.shape_cast %559 : vector<16x1x1x64xf32> to vector<16x64xf32>
    %561 = vector.broadcast %558 : vector<16x1xf32> to vector<16x64xf32>
    %562 = arith.mulf %561, %560 : vector<16x64xf32>
    %563 = arith.addf %551, %562 : vector<16x64xf32>
    %564 = vector.extract_strided_slice %6 {offsets = [0, 1], sizes = [16, 1], strides = [1, 1]} : vector<16x7xf32> to vector<16x1xf32>
    %c0_383 = arith.constant 0 : index
    %c1_384 = arith.constant 1 : index
    %c6_385 = arith.constant 6 : index
    %c0_386 = arith.constant 0 : index
    %565 = vector.load %arg4[%c0_383, %c1_384, %c6_385, %c0_386] : memref<16x7x7x64xf32, #tpu.memory_space<vmem>>, vector<16x1x1x64xf32>
    %566 = vector.shape_cast %565 : vector<16x1x1x64xf32> to vector<16x64xf32>
    %567 = vector.broadcast %564 : vector<16x1xf32> to vector<16x64xf32>
    %568 = arith.mulf %567, %566 : vector<16x64xf32>
    %569 = arith.addf %557, %568 : vector<16x64xf32>
    %570 = vector.extract_strided_slice %11 {offsets = [0, 2], sizes = [16, 1], strides = [1, 1]} : vector<16x7xf32> to vector<16x1xf32>
    %c0_387 = arith.constant 0 : index
    %c6_388 = arith.constant 6 : index
    %c2_389 = arith.constant 2 : index
    %c0_390 = arith.constant 0 : index
    %571 = vector.load %arg4[%c0_387, %c6_388, %c2_389, %c0_390] : memref<16x7x7x64xf32, #tpu.memory_space<vmem>>, vector<16x1x1x64xf32>
    %572 = vector.shape_cast %571 : vector<16x1x1x64xf32> to vector<16x64xf32>
    %573 = vector.broadcast %570 : vector<16x1xf32> to vector<16x64xf32>
    %574 = arith.mulf %573, %572 : vector<16x64xf32>
    %575 = arith.addf %563, %574 : vector<16x64xf32>
    %576 = vector.extract_strided_slice %6 {offsets = [0, 2], sizes = [16, 1], strides = [1, 1]} : vector<16x7xf32> to vector<16x1xf32>
    %c0_391 = arith.constant 0 : index
    %c2_392 = arith.constant 2 : index
    %c6_393 = arith.constant 6 : index
    %c0_394 = arith.constant 0 : index
    %577 = vector.load %arg4[%c0_391, %c2_392, %c6_393, %c0_394] : memref<16x7x7x64xf32, #tpu.memory_space<vmem>>, vector<16x1x1x64xf32>
    %578 = vector.shape_cast %577 : vector<16x1x1x64xf32> to vector<16x64xf32>
    %579 = vector.broadcast %576 : vector<16x1xf32> to vector<16x64xf32>
    %580 = arith.mulf %579, %578 : vector<16x64xf32>
    %581 = arith.addf %569, %580 : vector<16x64xf32>
    %582 = vector.extract_strided_slice %11 {offsets = [0, 3], sizes = [16, 1], strides = [1, 1]} : vector<16x7xf32> to vector<16x1xf32>
    %c0_395 = arith.constant 0 : index
    %c6_396 = arith.constant 6 : index
    %c3_397 = arith.constant 3 : index
    %c0_398 = arith.constant 0 : index
    %583 = vector.load %arg4[%c0_395, %c6_396, %c3_397, %c0_398] : memref<16x7x7x64xf32, #tpu.memory_space<vmem>>, vector<16x1x1x64xf32>
    %584 = vector.shape_cast %583 : vector<16x1x1x64xf32> to vector<16x64xf32>
    %585 = vector.broadcast %582 : vector<16x1xf32> to vector<16x64xf32>
    %586 = arith.mulf %585, %584 : vector<16x64xf32>
    %587 = arith.addf %575, %586 : vector<16x64xf32>
    %588 = vector.extract_strided_slice %6 {offsets = [0, 3], sizes = [16, 1], strides = [1, 1]} : vector<16x7xf32> to vector<16x1xf32>
    %c0_399 = arith.constant 0 : index
    %c3_400 = arith.constant 3 : index
    %c6_401 = arith.constant 6 : index
    %c0_402 = arith.constant 0 : index
    %589 = vector.load %arg4[%c0_399, %c3_400, %c6_401, %c0_402] : memref<16x7x7x64xf32, #tpu.memory_space<vmem>>, vector<16x1x1x64xf32>
    %590 = vector.shape_cast %589 : vector<16x1x1x64xf32> to vector<16x64xf32>
    %591 = vector.broadcast %588 : vector<16x1xf32> to vector<16x64xf32>
    %592 = arith.mulf %591, %590 : vector<16x64xf32>
    %593 = arith.addf %581, %592 : vector<16x64xf32>
    %594 = vector.extract_strided_slice %11 {offsets = [0, 4], sizes = [16, 1], strides = [1, 1]} : vector<16x7xf32> to vector<16x1xf32>
    %c0_403 = arith.constant 0 : index
    %c6_404 = arith.constant 6 : index
    %c4_405 = arith.constant 4 : index
    %c0_406 = arith.constant 0 : index
    %595 = vector.load %arg4[%c0_403, %c6_404, %c4_405, %c0_406] : memref<16x7x7x64xf32, #tpu.memory_space<vmem>>, vector<16x1x1x64xf32>
    %596 = vector.shape_cast %595 : vector<16x1x1x64xf32> to vector<16x64xf32>
    %597 = vector.broadcast %594 : vector<16x1xf32> to vector<16x64xf32>
    %598 = arith.mulf %597, %596 : vector<16x64xf32>
    %599 = arith.addf %587, %598 : vector<16x64xf32>
    %600 = vector.extract_strided_slice %6 {offsets = [0, 4], sizes = [16, 1], strides = [1, 1]} : vector<16x7xf32> to vector<16x1xf32>
    %c0_407 = arith.constant 0 : index
    %c4_408 = arith.constant 4 : index
    %c6_409 = arith.constant 6 : index
    %c0_410 = arith.constant 0 : index
    %601 = vector.load %arg4[%c0_407, %c4_408, %c6_409, %c0_410] : memref<16x7x7x64xf32, #tpu.memory_space<vmem>>, vector<16x1x1x64xf32>
    %602 = vector.shape_cast %601 : vector<16x1x1x64xf32> to vector<16x64xf32>
    %603 = vector.broadcast %600 : vector<16x1xf32> to vector<16x64xf32>
    %604 = arith.mulf %603, %602 : vector<16x64xf32>
    %605 = arith.addf %593, %604 : vector<16x64xf32>
    %606 = vector.extract_strided_slice %11 {offsets = [0, 5], sizes = [16, 1], strides = [1, 1]} : vector<16x7xf32> to vector<16x1xf32>
    %c0_411 = arith.constant 0 : index
    %c6_412 = arith.constant 6 : index
    %c5_413 = arith.constant 5 : index
    %c0_414 = arith.constant 0 : index
    %607 = vector.load %arg4[%c0_411, %c6_412, %c5_413, %c0_414] : memref<16x7x7x64xf32, #tpu.memory_space<vmem>>, vector<16x1x1x64xf32>
    %608 = vector.shape_cast %607 : vector<16x1x1x64xf32> to vector<16x64xf32>
    %609 = vector.broadcast %606 : vector<16x1xf32> to vector<16x64xf32>
    %610 = arith.mulf %609, %608 : vector<16x64xf32>
    %611 = arith.addf %599, %610 : vector<16x64xf32>
    %612 = vector.extract_strided_slice %6 {offsets = [0, 5], sizes = [16, 1], strides = [1, 1]} : vector<16x7xf32> to vector<16x1xf32>
    %c0_415 = arith.constant 0 : index
    %c5_416 = arith.constant 5 : index
    %c6_417 = arith.constant 6 : index
    %c0_418 = arith.constant 0 : index
    %613 = vector.load %arg4[%c0_415, %c5_416, %c6_417, %c0_418] : memref<16x7x7x64xf32, #tpu.memory_space<vmem>>, vector<16x1x1x64xf32>
    %614 = vector.shape_cast %613 : vector<16x1x1x64xf32> to vector<16x64xf32>
    %615 = vector.broadcast %612 : vector<16x1xf32> to vector<16x64xf32>
    %616 = arith.mulf %615, %614 : vector<16x64xf32>
    %617 = arith.addf %605, %616 : vector<16x64xf32>
    %618 = vector.extract_strided_slice %11 {offsets = [0, 6], sizes = [16, 1], strides = [1, 1]} : vector<16x7xf32> to vector<16x1xf32>
    %c0_419 = arith.constant 0 : index
    %c6_420 = arith.constant 6 : index
    %c6_421 = arith.constant 6 : index
    %c0_422 = arith.constant 0 : index
    %619 = vector.load %arg4[%c0_419, %c6_420, %c6_421, %c0_422] : memref<16x7x7x64xf32, #tpu.memory_space<vmem>>, vector<16x1x1x64xf32>
    %620 = vector.shape_cast %619 : vector<16x1x1x64xf32> to vector<16x64xf32>
    %621 = vector.broadcast %618 : vector<16x1xf32> to vector<16x64xf32>
    %622 = arith.mulf %621, %620 : vector<16x64xf32>
    %623 = arith.addf %611, %622 : vector<16x64xf32>
    %624 = vector.extract_strided_slice %6 {offsets = [0, 6], sizes = [16, 1], strides = [1, 1]} : vector<16x7xf32> to vector<16x1xf32>
    %c0_423 = arith.constant 0 : index
    %c6_424 = arith.constant 6 : index
    %c6_425 = arith.constant 6 : index
    %c0_426 = arith.constant 0 : index
    %625 = vector.load %arg4[%c0_423, %c6_424, %c6_425, %c0_426] : memref<16x7x7x64xf32, #tpu.memory_space<vmem>>, vector<16x1x1x64xf32>
    %626 = vector.shape_cast %625 : vector<16x1x1x64xf32> to vector<16x64xf32>
    %627 = vector.broadcast %624 : vector<16x1xf32> to vector<16x64xf32>
    %628 = arith.mulf %627, %626 : vector<16x64xf32>
    %629 = arith.addf %617, %628 : vector<16x64xf32>
    %c96 = arith.constant 96 : index
    %c64_427 = arith.constant 64 : index
    %630 = vector.load %arg19[%c96, %c64_427] : memref<112x128xf32, #tpu.memory_space<vmem>>, vector<16x64xf32>
    tpu.vector_store %arg19[%c96, %c64_427], %623 {strides = array<i32>} : memref<112x128xf32, #tpu.memory_space<vmem>>, vector<16x64xf32>,
    %c96_428 = arith.constant 96 : index
    %c64_429 = arith.constant 64 : index
    %631 = vector.load %arg20[%c96_428, %c64_429] : memref<112x128xf32, #tpu.memory_space<vmem>>, vector<16x64xf32>
    tpu.vector_store %arg20[%c96_428, %c64_429], %629 {strides = array<i32>} : memref<112x128xf32, #tpu.memory_space<vmem>>, vector<16x64xf32>,
    %c0_430 = arith.constant 0 : index
    %c0_431 = arith.constant 0 : index
    %632 = vector.load %arg19[%c0_430, %c0_431] : memref<112x128xf32, #tpu.memory_space<vmem>>, vector<112x128xf32>
    %c0_432 = arith.constant 0 : index
    %c0_433 = arith.constant 0 : index
    %633 = vector.load %arg5[%c0_432, %c0_433] : memref<128x64xf32, #tpu.memory_space<vmem>>, vector<128x64xf32>
    %cst_434 = arith.constant dense<0.000000e+00> : vector<112x64xf32>
    %634 = tpu.matmul %632, %633, %cst_434 {dimension_numbers = #tpu.dot_dimension_numbers<[1], [0], [0], [1], [0, 0, 1, 1], [], []>} : vector<112x128xf32>, vector<128x64xf32>, vector<112x64xf32> -> vector<112x64xf32>
    %c0_435 = arith.constant 0 : index
    %c0_436 = arith.constant 0 : index
    %635 = vector.load %arg6[%c0_435, %c0_436] : memref<1x64xf32, #tpu.memory_space<vmem>>, vector<1x64xf32>
    %636 = vector.broadcast %635 : vector<1x64xf32> to vector<112x64xf32>
    %637 = arith.addf %634, %636 : vector<112x64xf32>
    %638 = math.tanh %637 : vector<112x64xf32>
    %c0_437 = arith.constant 0 : index
    %c0_438 = arith.constant 0 : index
    %639 = vector.load %arg20[%c0_437, %c0_438] : memref<112x128xf32, #tpu.memory_space<vmem>>, vector<112x128xf32>
    %c0_439 = arith.constant 0 : index
    %c0_440 = arith.constant 0 : index
    %640 = vector.load %arg7[%c0_439, %c0_440] : memref<128x64xf32, #tpu.memory_space<vmem>>, vector<128x64xf32>
    %cst_441 = arith.constant dense<0.000000e+00> : vector<112x64xf32>
    %641 = tpu.matmul %639, %640, %cst_441 {dimension_numbers = #tpu.dot_dimension_numbers<[1], [0], [0], [1], [0, 0, 1, 1], [], []>} : vector<112x128xf32>, vector<128x64xf32>, vector<112x64xf32> -> vector<112x64xf32>
    %c0_442 = arith.constant 0 : index
    %c0_443 = arith.constant 0 : index
    %642 = vector.load %arg8[%c0_442, %c0_443] : memref<1x64xf32, #tpu.memory_space<vmem>>, vector<1x64xf32>
    %643 = vector.broadcast %642 : vector<1x64xf32> to vector<112x64xf32>
    %644 = arith.addf %641, %643 : vector<112x64xf32>
    %645 = math.tanh %644 : vector<112x64xf32>
    %646 = tpu.iota {dimensions = array<i32: 1>} : vector<16x128xi32>
    %cst_444 = arith.constant 0.000000e+00 : f32
    %647 = vector.broadcast %cst_444 : f32 to vector<16x128xf32>
    %cst_445 = arith.constant 0.000000e+00 : f32
    %648 = vector.broadcast %cst_445 : f32 to vector<16x128xf32>
    %cst_446 = arith.constant 0.000000e+00 : f32
    %649 = vector.broadcast %cst_446 : f32 to vector<16x64xf32>
    %cst_447 = arith.constant 0.000000e+00 : f32
    %650 = vector.broadcast %cst_447 : f32 to vector<16x64xf32>
    %651 = vector.extract_strided_slice %638 {offsets = [0, 0], sizes = [16, 64], strides = [1, 1]} : vector<112x64xf32> to vector<16x64xf32>
    %652 = vector.extract_strided_slice %645 {offsets = [0, 0], sizes = [16, 64], strides = [1, 1]} : vector<112x64xf32> to vector<16x64xf32>
    %c0_448 = arith.constant 0 : index
    %c0_449 = arith.constant 0 : index
    %653 = vector.load %arg9[%c0_448, %c0_449] : memref<7x64xf32, #tpu.memory_space<vmem>>, vector<1x64xf32>
    %c0_i32 = arith.constant 0 : i32
    %654 = vector.broadcast %c0_i32 : i32 to vector<16x128xi32>
    %655 = arith.cmpi eq, %646, %654 : vector<16x128xi32>
    %656 = vector.broadcast %653 : vector<1x64xf32> to vector<16x64xf32>
    %657 = arith.mulf %651, %656 : vector<16x64xf32>
    %cst_450 = arith.constant dense<0.000000e+00> : vector<16xf32>
    %658 = vector.multi_reduction <add>, %657, %cst_450 [1] : vector<16x64xf32> to vector<16xf32>
    %659 = vector.shape_cast %658 : vector<16xf32> to vector<16x1xf32>
    %cst_451 = arith.constant 0.000000e+00 : f32
    %660 = vector.shape_cast %659 : vector<16x1xf32> to vector<16x1xf32>
    %661 = vector.broadcast %660 : vector<16x1xf32> to vector<16x128xf32>
    %662 = vector.broadcast %cst_451 : f32 to vector<16x128xf32>
    %663 = arith.select %655, %661, %662 : vector<16x128xi1>, vector<16x128xf32>
    %664 = arith.addf %647, %663 : vector<16x128xf32>
    %c0_i32_452 = arith.constant 0 : i32
    %665 = vector.broadcast %c0_i32_452 : i32 to vector<16x128xi32>
    %666 = arith.cmpi eq, %646, %665 : vector<16x128xi32>
    %667 = vector.broadcast %653 : vector<1x64xf32> to vector<16x64xf32>
    %668 = arith.mulf %652, %667 : vector<16x64xf32>
    %cst_453 = arith.constant dense<0.000000e+00> : vector<16xf32>
    %669 = vector.multi_reduction <add>, %668, %cst_453 [1] : vector<16x64xf32> to vector<16xf32>
    %670 = vector.shape_cast %669 : vector<16xf32> to vector<16x1xf32>
    %cst_454 = arith.constant 0.000000e+00 : f32
    %671 = vector.shape_cast %670 : vector<16x1xf32> to vector<16x1xf32>
    %672 = vector.broadcast %671 : vector<16x1xf32> to vector<16x128xf32>
    %673 = vector.broadcast %cst_454 : f32 to vector<16x128xf32>
    %674 = arith.select %666, %672, %673 : vector<16x128xi1>, vector<16x128xf32>
    %675 = arith.addf %648, %674 : vector<16x128xf32>
    %676 = vector.extract_strided_slice %6 {offsets = [0, 0], sizes = [16, 1], strides = [1, 1]} : vector<16x7xf32> to vector<16x1xf32>
    %677 = vector.broadcast %676 : vector<16x1xf32> to vector<16x64xf32>
    %678 = arith.mulf %677, %651 : vector<16x64xf32>
    %679 = arith.addf %649, %678 : vector<16x64xf32>
    %680 = vector.extract_strided_slice %11 {offsets = [0, 0], sizes = [16, 1], strides = [1, 1]} : vector<16x7xf32> to vector<16x1xf32>
    %681 = vector.broadcast %680 : vector<16x1xf32> to vector<16x64xf32>
    %682 = arith.mulf %681, %652 : vector<16x64xf32>
    %683 = arith.addf %650, %682 : vector<16x64xf32>
    %684 = vector.extract_strided_slice %638 {offsets = [16, 0], sizes = [16, 64], strides = [1, 1]} : vector<112x64xf32> to vector<16x64xf32>
    %685 = vector.extract_strided_slice %645 {offsets = [16, 0], sizes = [16, 64], strides = [1, 1]} : vector<112x64xf32> to vector<16x64xf32>
    %c1_455 = arith.constant 1 : index
    %c0_456 = arith.constant 0 : index
    %686 = vector.load %arg9[%c1_455, %c0_456] : memref<7x64xf32, #tpu.memory_space<vmem>>, vector<1x64xf32>
    %c1_i32 = arith.constant 1 : i32
    %687 = vector.broadcast %c1_i32 : i32 to vector<16x128xi32>
    %688 = arith.cmpi eq, %646, %687 : vector<16x128xi32>
    %689 = vector.broadcast %686 : vector<1x64xf32> to vector<16x64xf32>
    %690 = arith.mulf %684, %689 : vector<16x64xf32>
    %cst_457 = arith.constant dense<0.000000e+00> : vector<16xf32>
    %691 = vector.multi_reduction <add>, %690, %cst_457 [1] : vector<16x64xf32> to vector<16xf32>
    %692 = vector.shape_cast %691 : vector<16xf32> to vector<16x1xf32>
    %cst_458 = arith.constant 0.000000e+00 : f32
    %693 = vector.shape_cast %692 : vector<16x1xf32> to vector<16x1xf32>
    %694 = vector.broadcast %693 : vector<16x1xf32> to vector<16x128xf32>
    %695 = vector.broadcast %cst_458 : f32 to vector<16x128xf32>
    %696 = arith.select %688, %694, %695 : vector<16x128xi1>, vector<16x128xf32>
    %697 = arith.addf %664, %696 : vector<16x128xf32>
    %c1_i32_459 = arith.constant 1 : i32
    %698 = vector.broadcast %c1_i32_459 : i32 to vector<16x128xi32>
    %699 = arith.cmpi eq, %646, %698 : vector<16x128xi32>
    %700 = vector.broadcast %686 : vector<1x64xf32> to vector<16x64xf32>
    %701 = arith.mulf %685, %700 : vector<16x64xf32>
    %cst_460 = arith.constant dense<0.000000e+00> : vector<16xf32>
    %702 = vector.multi_reduction <add>, %701, %cst_460 [1] : vector<16x64xf32> to vector<16xf32>
    %703 = vector.shape_cast %702 : vector<16xf32> to vector<16x1xf32>
    %cst_461 = arith.constant 0.000000e+00 : f32
    %704 = vector.shape_cast %703 : vector<16x1xf32> to vector<16x1xf32>
    %705 = vector.broadcast %704 : vector<16x1xf32> to vector<16x128xf32>
    %706 = vector.broadcast %cst_461 : f32 to vector<16x128xf32>
    %707 = arith.select %699, %705, %706 : vector<16x128xi1>, vector<16x128xf32>
    %708 = arith.addf %675, %707 : vector<16x128xf32>
    %709 = vector.extract_strided_slice %6 {offsets = [0, 1], sizes = [16, 1], strides = [1, 1]} : vector<16x7xf32> to vector<16x1xf32>
    %710 = vector.broadcast %709 : vector<16x1xf32> to vector<16x64xf32>
    %711 = arith.mulf %710, %684 : vector<16x64xf32>
    %712 = arith.addf %679, %711 : vector<16x64xf32>
    %713 = vector.extract_strided_slice %11 {offsets = [0, 1], sizes = [16, 1], strides = [1, 1]} : vector<16x7xf32> to vector<16x1xf32>
    %714 = vector.broadcast %713 : vector<16x1xf32> to vector<16x64xf32>
    %715 = arith.mulf %714, %685 : vector<16x64xf32>
    %716 = arith.addf %683, %715 : vector<16x64xf32>
    %717 = vector.extract_strided_slice %638 {offsets = [32, 0], sizes = [16, 64], strides = [1, 1]} : vector<112x64xf32> to vector<16x64xf32>
    %718 = vector.extract_strided_slice %645 {offsets = [32, 0], sizes = [16, 64], strides = [1, 1]} : vector<112x64xf32> to vector<16x64xf32>
    %c2_462 = arith.constant 2 : index
    %c0_463 = arith.constant 0 : index
    %719 = vector.load %arg9[%c2_462, %c0_463] : memref<7x64xf32, #tpu.memory_space<vmem>>, vector<1x64xf32>
    %c2_i32 = arith.constant 2 : i32
    %720 = vector.broadcast %c2_i32 : i32 to vector<16x128xi32>
    %721 = arith.cmpi eq, %646, %720 : vector<16x128xi32>
    %722 = vector.broadcast %719 : vector<1x64xf32> to vector<16x64xf32>
    %723 = arith.mulf %717, %722 : vector<16x64xf32>
    %cst_464 = arith.constant dense<0.000000e+00> : vector<16xf32>
    %724 = vector.multi_reduction <add>, %723, %cst_464 [1] : vector<16x64xf32> to vector<16xf32>
    %725 = vector.shape_cast %724 : vector<16xf32> to vector<16x1xf32>
    %cst_465 = arith.constant 0.000000e+00 : f32
    %726 = vector.shape_cast %725 : vector<16x1xf32> to vector<16x1xf32>
    %727 = vector.broadcast %726 : vector<16x1xf32> to vector<16x128xf32>
    %728 = vector.broadcast %cst_465 : f32 to vector<16x128xf32>
    %729 = arith.select %721, %727, %728 : vector<16x128xi1>, vector<16x128xf32>
    %730 = arith.addf %697, %729 : vector<16x128xf32>
    %c2_i32_466 = arith.constant 2 : i32
    %731 = vector.broadcast %c2_i32_466 : i32 to vector<16x128xi32>
    %732 = arith.cmpi eq, %646, %731 : vector<16x128xi32>
    %733 = vector.broadcast %719 : vector<1x64xf32> to vector<16x64xf32>
    %734 = arith.mulf %718, %733 : vector<16x64xf32>
    %cst_467 = arith.constant dense<0.000000e+00> : vector<16xf32>
    %735 = vector.multi_reduction <add>, %734, %cst_467 [1] : vector<16x64xf32> to vector<16xf32>
    %736 = vector.shape_cast %735 : vector<16xf32> to vector<16x1xf32>
    %cst_468 = arith.constant 0.000000e+00 : f32
    %737 = vector.shape_cast %736 : vector<16x1xf32> to vector<16x1xf32>
    %738 = vector.broadcast %737 : vector<16x1xf32> to vector<16x128xf32>
    %739 = vector.broadcast %cst_468 : f32 to vector<16x128xf32>
    %740 = arith.select %732, %738, %739 : vector<16x128xi1>, vector<16x128xf32>
    %741 = arith.addf %708, %740 : vector<16x128xf32>
    %742 = vector.extract_strided_slice %6 {offsets = [0, 2], sizes = [16, 1], strides = [1, 1]} : vector<16x7xf32> to vector<16x1xf32>
    %743 = vector.broadcast %742 : vector<16x1xf32> to vector<16x64xf32>
    %744 = arith.mulf %743, %717 : vector<16x64xf32>
    %745 = arith.addf %712, %744 : vector<16x64xf32>
    %746 = vector.extract_strided_slice %11 {offsets = [0, 2], sizes = [16, 1], strides = [1, 1]} : vector<16x7xf32> to vector<16x1xf32>
    %747 = vector.broadcast %746 : vector<16x1xf32> to vector<16x64xf32>
    %748 = arith.mulf %747, %718 : vector<16x64xf32>
    %749 = arith.addf %716, %748 : vector<16x64xf32>
    %750 = vector.extract_strided_slice %638 {offsets = [48, 0], sizes = [16, 64], strides = [1, 1]} : vector<112x64xf32> to vector<16x64xf32>
    %751 = vector.extract_strided_slice %645 {offsets = [48, 0], sizes = [16, 64], strides = [1, 1]} : vector<112x64xf32> to vector<16x64xf32>
    %c3_469 = arith.constant 3 : index
    %c0_470 = arith.constant 0 : index
    %752 = vector.load %arg9[%c3_469, %c0_470] : memref<7x64xf32, #tpu.memory_space<vmem>>, vector<1x64xf32>
    %c3_i32 = arith.constant 3 : i32
    %753 = vector.broadcast %c3_i32 : i32 to vector<16x128xi32>
    %754 = arith.cmpi eq, %646, %753 : vector<16x128xi32>
    %755 = vector.broadcast %752 : vector<1x64xf32> to vector<16x64xf32>
    %756 = arith.mulf %750, %755 : vector<16x64xf32>
    %cst_471 = arith.constant dense<0.000000e+00> : vector<16xf32>
    %757 = vector.multi_reduction <add>, %756, %cst_471 [1] : vector<16x64xf32> to vector<16xf32>
    %758 = vector.shape_cast %757 : vector<16xf32> to vector<16x1xf32>
    %cst_472 = arith.constant 0.000000e+00 : f32
    %759 = vector.shape_cast %758 : vector<16x1xf32> to vector<16x1xf32>
    %760 = vector.broadcast %759 : vector<16x1xf32> to vector<16x128xf32>
    %761 = vector.broadcast %cst_472 : f32 to vector<16x128xf32>
    %762 = arith.select %754, %760, %761 : vector<16x128xi1>, vector<16x128xf32>
    %763 = arith.addf %730, %762 : vector<16x128xf32>
    %c3_i32_473 = arith.constant 3 : i32
    %764 = vector.broadcast %c3_i32_473 : i32 to vector<16x128xi32>
    %765 = arith.cmpi eq, %646, %764 : vector<16x128xi32>
    %766 = vector.broadcast %752 : vector<1x64xf32> to vector<16x64xf32>
    %767 = arith.mulf %751, %766 : vector<16x64xf32>
    %cst_474 = arith.constant dense<0.000000e+00> : vector<16xf32>
    %768 = vector.multi_reduction <add>, %767, %cst_474 [1] : vector<16x64xf32> to vector<16xf32>
    %769 = vector.shape_cast %768 : vector<16xf32> to vector<16x1xf32>
    %cst_475 = arith.constant 0.000000e+00 : f32
    %770 = vector.shape_cast %769 : vector<16x1xf32> to vector<16x1xf32>
    %771 = vector.broadcast %770 : vector<16x1xf32> to vector<16x128xf32>
    %772 = vector.broadcast %cst_475 : f32 to vector<16x128xf32>
    %773 = arith.select %765, %771, %772 : vector<16x128xi1>, vector<16x128xf32>
    %774 = arith.addf %741, %773 : vector<16x128xf32>
    %775 = vector.extract_strided_slice %6 {offsets = [0, 3], sizes = [16, 1], strides = [1, 1]} : vector<16x7xf32> to vector<16x1xf32>
    %776 = vector.broadcast %775 : vector<16x1xf32> to vector<16x64xf32>
    %777 = arith.mulf %776, %750 : vector<16x64xf32>
    %778 = arith.addf %745, %777 : vector<16x64xf32>
    %779 = vector.extract_strided_slice %11 {offsets = [0, 3], sizes = [16, 1], strides = [1, 1]} : vector<16x7xf32> to vector<16x1xf32>
    %780 = vector.broadcast %779 : vector<16x1xf32> to vector<16x64xf32>
    %781 = arith.mulf %780, %751 : vector<16x64xf32>
    %782 = arith.addf %749, %781 : vector<16x64xf32>
    %783 = vector.extract_strided_slice %638 {offsets = [64, 0], sizes = [16, 64], strides = [1, 1]} : vector<112x64xf32> to vector<16x64xf32>
    %784 = vector.extract_strided_slice %645 {offsets = [64, 0], sizes = [16, 64], strides = [1, 1]} : vector<112x64xf32> to vector<16x64xf32>
    %c4_476 = arith.constant 4 : index
    %c0_477 = arith.constant 0 : index
    %785 = vector.load %arg9[%c4_476, %c0_477] : memref<7x64xf32, #tpu.memory_space<vmem>>, vector<1x64xf32>
    %c4_i32 = arith.constant 4 : i32
    %786 = vector.broadcast %c4_i32 : i32 to vector<16x128xi32>
    %787 = arith.cmpi eq, %646, %786 : vector<16x128xi32>
    %788 = vector.broadcast %785 : vector<1x64xf32> to vector<16x64xf32>
    %789 = arith.mulf %783, %788 : vector<16x64xf32>
    %cst_478 = arith.constant dense<0.000000e+00> : vector<16xf32>
    %790 = vector.multi_reduction <add>, %789, %cst_478 [1] : vector<16x64xf32> to vector<16xf32>
    %791 = vector.shape_cast %790 : vector<16xf32> to vector<16x1xf32>
    %cst_479 = arith.constant 0.000000e+00 : f32
    %792 = vector.shape_cast %791 : vector<16x1xf32> to vector<16x1xf32>
    %793 = vector.broadcast %792 : vector<16x1xf32> to vector<16x128xf32>
    %794 = vector.broadcast %cst_479 : f32 to vector<16x128xf32>
    %795 = arith.select %787, %793, %794 : vector<16x128xi1>, vector<16x128xf32>
    %796 = arith.addf %763, %795 : vector<16x128xf32>
    %c4_i32_480 = arith.constant 4 : i32
    %797 = vector.broadcast %c4_i32_480 : i32 to vector<16x128xi32>
    %798 = arith.cmpi eq, %646, %797 : vector<16x128xi32>
    %799 = vector.broadcast %785 : vector<1x64xf32> to vector<16x64xf32>
    %800 = arith.mulf %784, %799 : vector<16x64xf32>
    %cst_481 = arith.constant dense<0.000000e+00> : vector<16xf32>
    %801 = vector.multi_reduction <add>, %800, %cst_481 [1] : vector<16x64xf32> to vector<16xf32>
    %802 = vector.shape_cast %801 : vector<16xf32> to vector<16x1xf32>
    %cst_482 = arith.constant 0.000000e+00 : f32
    %803 = vector.shape_cast %802 : vector<16x1xf32> to vector<16x1xf32>
    %804 = vector.broadcast %803 : vector<16x1xf32> to vector<16x128xf32>
    %805 = vector.broadcast %cst_482 : f32 to vector<16x128xf32>
    %806 = arith.select %798, %804, %805 : vector<16x128xi1>, vector<16x128xf32>
    %807 = arith.addf %774, %806 : vector<16x128xf32>
    %808 = vector.extract_strided_slice %6 {offsets = [0, 4], sizes = [16, 1], strides = [1, 1]} : vector<16x7xf32> to vector<16x1xf32>
    %809 = vector.broadcast %808 : vector<16x1xf32> to vector<16x64xf32>
    %810 = arith.mulf %809, %783 : vector<16x64xf32>
    %811 = arith.addf %778, %810 : vector<16x64xf32>
    %812 = vector.extract_strided_slice %11 {offsets = [0, 4], sizes = [16, 1], strides = [1, 1]} : vector<16x7xf32> to vector<16x1xf32>
    %813 = vector.broadcast %812 : vector<16x1xf32> to vector<16x64xf32>
    %814 = arith.mulf %813, %784 : vector<16x64xf32>
    %815 = arith.addf %782, %814 : vector<16x64xf32>
    %816 = vector.extract_strided_slice %638 {offsets = [80, 0], sizes = [16, 64], strides = [1, 1]} : vector<112x64xf32> to vector<16x64xf32>
    %817 = vector.extract_strided_slice %645 {offsets = [80, 0], sizes = [16, 64], strides = [1, 1]} : vector<112x64xf32> to vector<16x64xf32>
    %c5_483 = arith.constant 5 : index
    %c0_484 = arith.constant 0 : index
    %818 = vector.load %arg9[%c5_483, %c0_484] : memref<7x64xf32, #tpu.memory_space<vmem>>, vector<1x64xf32>
    %c5_i32 = arith.constant 5 : i32
    %819 = vector.broadcast %c5_i32 : i32 to vector<16x128xi32>
    %820 = arith.cmpi eq, %646, %819 : vector<16x128xi32>
    %821 = vector.broadcast %818 : vector<1x64xf32> to vector<16x64xf32>
    %822 = arith.mulf %816, %821 : vector<16x64xf32>
    %cst_485 = arith.constant dense<0.000000e+00> : vector<16xf32>
    %823 = vector.multi_reduction <add>, %822, %cst_485 [1] : vector<16x64xf32> to vector<16xf32>
    %824 = vector.shape_cast %823 : vector<16xf32> to vector<16x1xf32>
    %cst_486 = arith.constant 0.000000e+00 : f32
    %825 = vector.shape_cast %824 : vector<16x1xf32> to vector<16x1xf32>
    %826 = vector.broadcast %825 : vector<16x1xf32> to vector<16x128xf32>
    %827 = vector.broadcast %cst_486 : f32 to vector<16x128xf32>
    %828 = arith.select %820, %826, %827 : vector<16x128xi1>, vector<16x128xf32>
    %829 = arith.addf %796, %828 : vector<16x128xf32>
    %c5_i32_487 = arith.constant 5 : i32
    %830 = vector.broadcast %c5_i32_487 : i32 to vector<16x128xi32>
    %831 = arith.cmpi eq, %646, %830 : vector<16x128xi32>
    %832 = vector.broadcast %818 : vector<1x64xf32> to vector<16x64xf32>
    %833 = arith.mulf %817, %832 : vector<16x64xf32>
    %cst_488 = arith.constant dense<0.000000e+00> : vector<16xf32>
    %834 = vector.multi_reduction <add>, %833, %cst_488 [1] : vector<16x64xf32> to vector<16xf32>
    %835 = vector.shape_cast %834 : vector<16xf32> to vector<16x1xf32>
    %cst_489 = arith.constant 0.000000e+00 : f32
    %836 = vector.shape_cast %835 : vector<16x1xf32> to vector<16x1xf32>
    %837 = vector.broadcast %836 : vector<16x1xf32> to vector<16x128xf32>
    %838 = vector.broadcast %cst_489 : f32 to vector<16x128xf32>
    %839 = arith.select %831, %837, %838 : vector<16x128xi1>, vector<16x128xf32>
    %840 = arith.addf %807, %839 : vector<16x128xf32>
    %841 = vector.extract_strided_slice %6 {offsets = [0, 5], sizes = [16, 1], strides = [1, 1]} : vector<16x7xf32> to vector<16x1xf32>
    %842 = vector.broadcast %841 : vector<16x1xf32> to vector<16x64xf32>
    %843 = arith.mulf %842, %816 : vector<16x64xf32>
    %844 = arith.addf %811, %843 : vector<16x64xf32>
    %845 = vector.extract_strided_slice %11 {offsets = [0, 5], sizes = [16, 1], strides = [1, 1]} : vector<16x7xf32> to vector<16x1xf32>
    %846 = vector.broadcast %845 : vector<16x1xf32> to vector<16x64xf32>
    %847 = arith.mulf %846, %817 : vector<16x64xf32>
    %848 = arith.addf %815, %847 : vector<16x64xf32>
    %849 = vector.extract_strided_slice %638 {offsets = [96, 0], sizes = [16, 64], strides = [1, 1]} : vector<112x64xf32> to vector<16x64xf32>
    %850 = vector.extract_strided_slice %645 {offsets = [96, 0], sizes = [16, 64], strides = [1, 1]} : vector<112x64xf32> to vector<16x64xf32>
    %c6_490 = arith.constant 6 : index
    %c0_491 = arith.constant 0 : index
    %851 = vector.load %arg9[%c6_490, %c0_491] : memref<7x64xf32, #tpu.memory_space<vmem>>, vector<1x64xf32>
    %c6_i32 = arith.constant 6 : i32
    %852 = vector.broadcast %c6_i32 : i32 to vector<16x128xi32>
    %853 = arith.cmpi eq, %646, %852 : vector<16x128xi32>
    %854 = vector.broadcast %851 : vector<1x64xf32> to vector<16x64xf32>
    %855 = arith.mulf %849, %854 : vector<16x64xf32>
    %cst_492 = arith.constant dense<0.000000e+00> : vector<16xf32>
    %856 = vector.multi_reduction <add>, %855, %cst_492 [1] : vector<16x64xf32> to vector<16xf32>
    %857 = vector.shape_cast %856 : vector<16xf32> to vector<16x1xf32>
    %cst_493 = arith.constant 0.000000e+00 : f32
    %858 = vector.shape_cast %857 : vector<16x1xf32> to vector<16x1xf32>
    %859 = vector.broadcast %858 : vector<16x1xf32> to vector<16x128xf32>
    %860 = vector.broadcast %cst_493 : f32 to vector<16x128xf32>
    %861 = arith.select %853, %859, %860 : vector<16x128xi1>, vector<16x128xf32>
    %862 = arith.addf %829, %861 : vector<16x128xf32>
    %c6_i32_494 = arith.constant 6 : i32
    %863 = vector.broadcast %c6_i32_494 : i32 to vector<16x128xi32>
    %864 = arith.cmpi eq, %646, %863 : vector<16x128xi32>
    %865 = vector.broadcast %851 : vector<1x64xf32> to vector<16x64xf32>
    %866 = arith.mulf %850, %865 : vector<16x64xf32>
    %cst_495 = arith.constant dense<0.000000e+00> : vector<16xf32>
    %867 = vector.multi_reduction <add>, %866, %cst_495 [1] : vector<16x64xf32> to vector<16xf32>
    %868 = vector.shape_cast %867 : vector<16xf32> to vector<16x1xf32>
    %cst_496 = arith.constant 0.000000e+00 : f32
    %869 = vector.shape_cast %868 : vector<16x1xf32> to vector<16x1xf32>
    %870 = vector.broadcast %869 : vector<16x1xf32> to vector<16x128xf32>
    %871 = vector.broadcast %cst_496 : f32 to vector<16x128xf32>
    %872 = arith.select %864, %870, %871 : vector<16x128xi1>, vector<16x128xf32>
    %873 = arith.addf %840, %872 : vector<16x128xf32>
    %874 = vector.extract_strided_slice %6 {offsets = [0, 6], sizes = [16, 1], strides = [1, 1]} : vector<16x7xf32> to vector<16x1xf32>
    %875 = vector.broadcast %874 : vector<16x1xf32> to vector<16x64xf32>
    %876 = arith.mulf %875, %849 : vector<16x64xf32>
    %877 = arith.addf %844, %876 : vector<16x64xf32>
    %878 = vector.extract_strided_slice %11 {offsets = [0, 6], sizes = [16, 1], strides = [1, 1]} : vector<16x7xf32> to vector<16x1xf32>
    %879 = vector.broadcast %878 : vector<16x1xf32> to vector<16x64xf32>
    %880 = arith.mulf %879, %850 : vector<16x64xf32>
    %881 = arith.addf %848, %880 : vector<16x64xf32>
    %882 = tpu.concatenate %862, %873 in 0 : vector<16x128xf32>, vector<16x128xf32> -> vector<32x128xf32>
    %c0_497 = arith.constant 0 : index
    %c0_498 = arith.constant 0 : index
    %883 = vector.load %arg10[%c0_497, %c0_498] : memref<1x128xf32, #tpu.memory_space<vmem>>, vector<1x128xf32>
    %884 = vector.broadcast %883 : vector<1x128xf32> to vector<32x128xf32>
    %885 = arith.addf %882, %884 : vector<32x128xf32>
    %c0_499 = arith.constant 0 : index
    %c0_500 = arith.constant 0 : index
    %886 = vector.load %arg17[%c0_499, %c0_500] : memref<32x128xf32, #tpu.memory_space<vmem>>, vector<32x128xf32>
    tpu.vector_store %arg17[%c0_499, %c0_500], %885 {strides = array<i32>} : memref<32x128xf32, #tpu.memory_space<vmem>>, vector<32x128xf32>,
    %c0_501 = arith.constant 0 : index
    %c0_502 = arith.constant 0 : index
    %887 = vector.load %arg11[%c0_501, %c0_502] : memref<64x512xf32, #tpu.memory_space<vmem>>, vector<64x512xf32>
    %cst_503 = arith.constant dense<0.000000e+00> : vector<16x512xf32>
    %888 = tpu.matmul %877, %887, %cst_503 {dimension_numbers = #tpu.dot_dimension_numbers<[1], [0], [0], [1], [0, 0, 1, 1], [], []>} : vector<16x64xf32>, vector<64x512xf32>, vector<16x512xf32> -> vector<16x512xf32>
    %c0_504 = arith.constant 0 : index
    %c0_505 = arith.constant 0 : index
    %889 = vector.load %arg12[%c0_504, %c0_505] : memref<64x512xf32, #tpu.memory_space<vmem>>, vector<64x512xf32>
    %cst_506 = arith.constant dense<0.000000e+00> : vector<16x512xf32>
    %890 = tpu.matmul %881, %889, %cst_506 {dimension_numbers = #tpu.dot_dimension_numbers<[1], [0], [0], [1], [0, 0, 1, 1], [], []>} : vector<16x64xf32>, vector<64x512xf32>, vector<16x512xf32> -> vector<16x512xf32>
    %891 = arith.mulf %888, %890 : vector<16x512xf32>
    %c0_507 = arith.constant 0 : index
    %c0_508 = arith.constant 0 : index
    %892 = vector.load %arg18[%c0_507, %c0_508] : memref<16x512xf32, #tpu.memory_space<vmem>>, vector<16x512xf32>
    tpu.vector_store %arg18[%c0_507, %c0_508], %891 {strides = array<i32>} : memref<16x512xf32, #tpu.memory_space<vmem>>, vector<16x512xf32>,
    %c0_509 = arith.constant 0 : index
    %c0_510 = arith.constant 0 : index
    %893 = vector.load %arg13[%c0_509, %c0_510] : memref<512x128xf32, #tpu.memory_space<vmem>>, vector<512x128xf32>
    %cst_511 = arith.constant dense<0.000000e+00> : vector<16x128xf32>
    %894 = tpu.matmul %891, %893, %cst_511 {dimension_numbers = #tpu.dot_dimension_numbers<[1], [0], [0], [1], [0, 0, 1, 1], [], []>} : vector<16x512xf32>, vector<512x128xf32>, vector<16x128xf32> -> vector<16x128xf32>
    %c0_512 = arith.constant 0 : index
    %c0_513 = arith.constant 0 : index
    %895 = vector.load %arg14[%c0_512, %c0_513] : memref<1x128xf32, #tpu.memory_space<vmem>>, vector<1x128xf32>
    %896 = vector.broadcast %895 : vector<1x128xf32> to vector<16x128xf32>
    %897 = arith.addf %894, %896 : vector<16x128xf32>
    %c0_514 = arith.constant 0 : index
    %c0_515 = arith.constant 0 : index
    %898 = vector.load %arg15[%c0_514, %c0_515] : memref<16x128xf32, #tpu.memory_space<vmem>>, vector<16x128xf32>
    tpu.vector_store %arg15[%c0_514, %c0_515], %897 {strides = array<i32>} : memref<16x128xf32, #tpu.memory_space<vmem>>, vector<16x128xf32>,
    %899 = vector.extract_strided_slice %897 {offsets = [0, 0], sizes = [16, 1], strides = [1, 1]} : vector<16x128xf32> to vector<16x1xf32>
    %900 = vector.broadcast %899 : vector<16x1xf32> to vector<16x128xf32>
    %901 = arith.cmpf ogt, %897, %900 : vector<16x128xf32>
    %c1_i32_516 = arith.constant 1 : i32
    %902 = vector.broadcast %c1_i32_516 : i32 to vector<16x128xi32>
    %903 = arith.cmpi sge, %646, %902 : vector<16x128xi32>
    %904 = arith.andi %901, %903 : vector<16x128xi1>
    %c4_i32_517 = arith.constant 4 : i32
    %905 = vector.broadcast %c4_i32_517 : i32 to vector<16x128xi32>
    %906 = arith.cmpi slt, %646, %905 : vector<16x128xi32>
    %907 = arith.andi %904, %906 : vector<16x128xi1>
    %908 = arith.extui %907 : vector<16x128xi1> to vector<16x128xi32>
    %909 = arith.sitofp %908 : vector<16x128xi32> to vector<16x128xf32>
    %cst_518 = arith.constant dense<0.000000e+00> : vector<16xf32>
    %910 = vector.multi_reduction <add>, %909, %cst_518 [1] : vector<16x128xf32> to vector<16xf32>
    %911 = vector.shape_cast %910 : vector<16xf32> to vector<16x1xf32>
    %cst_519 = arith.constant 0.000000e+00 : f32
    %912 = vector.broadcast %cst_519 : f32 to vector<16x1xf32>
    %913 = arith.cmpf ogt, %911, %912 : vector<16x1xf32>
    %c0_i32_520 = arith.constant 0 : i32
    %914 = vector.broadcast %c0_i32_520 : i32 to vector<16x128xi32>
    %915 = arith.cmpi eq, %646, %914 : vector<16x128xi32>
    %cst_521 = arith.constant 0.000000e+00 : f32
    %cst_522 = arith.constant 1.000000e+00 : f32
    %916 = vector.broadcast %cst_521 : f32 to vector<16x1xf32>
    %917 = vector.broadcast %cst_522 : f32 to vector<16x1xf32>
    %918 = arith.select %913, %916, %917 : vector<16x1xi1>, vector<16x1xf32>
    %919 = vector.shape_cast %918 : vector<16x1xf32> to vector<16x1xf32>
    %920 = vector.broadcast %919 : vector<16x1xf32> to vector<16x128xf32>
    %921 = arith.select %915, %920, %909 : vector<16x128xi1>, vector<16x128xf32>
    %c0_523 = arith.constant 0 : index
    %c0_524 = arith.constant 0 : index
    %922 = vector.load %arg16[%c0_523, %c0_524] : memref<16x128xf32, #tpu.memory_space<vmem>>, vector<16x128xf32>
    tpu.vector_store %arg16[%c0_523, %c0_524], %921 {strides = array<i32>} : memref<16x128xf32, #tpu.memory_space<vmem>>, vector<16x128xf32>,
    return
  }
  func.func @transform_0(%arg0: i32) -> (i32, i32) {
    %c0_i32 = arith.constant 0 : i32
    %c0_i32_0 = arith.constant 0 : i32
    %c0_i32_1 = arith.constant 0 : i32
    return %c0_i32, %c0_i32_0 : i32, i32
  }
  func.func @transform_1(%arg0: i32) -> (i32, i32) {
    %c0_i32 = arith.constant 0 : i32
    %c0_i32_0 = arith.constant 0 : i32
    %c0_i32_1 = arith.constant 0 : i32
    return %c0_i32, %c0_i32_0 : i32, i32
  }
  func.func @transform_2(%arg0: i32) -> (i32, i32) {
    %c0_i32 = arith.constant 0 : i32
    %c0_i32_0 = arith.constant 0 : i32
    %c0_i32_1 = arith.constant 0 : i32
    return %c0_i32, %c0_i32_0 : i32, i32
  }
  func.func @transform_3(%arg0: i32) -> (i32, i32, i32, i32) {
    %c0_i32 = arith.constant 0 : i32
    %c0_i32_0 = arith.constant 0 : i32
    %c0_i32_1 = arith.constant 0 : i32
    %c0_i32_2 = arith.constant 0 : i32
    %c0_i32_3 = arith.constant 0 : i32
    return %c0_i32, %c0_i32_0, %c0_i32_1, %c0_i32_2 : i32, i32, i32, i32
  }
  func.func @transform_4(%arg0: i32) -> (i32, i32) {
    %c0_i32 = arith.constant 0 : i32
    %c0_i32_0 = arith.constant 0 : i32
    %c0_i32_1 = arith.constant 0 : i32
    return %c0_i32, %c0_i32_0 : i32, i32
  }
  func.func @transform_5(%arg0: i32) -> (i32, i32) {
    %c0_i32 = arith.constant 0 : i32
    %c0_i32_0 = arith.constant 0 : i32
    %c0_i32_1 = arith.constant 0 : i32
    return %c0_i32, %c0_i32_0 : i32, i32
  }
  func.func @transform_6(%arg0: i32) -> (i32, i32) {
    %c0_i32 = arith.constant 0 : i32
    %c0_i32_0 = arith.constant 0 : i32
    %c0_i32_1 = arith.constant 0 : i32
    return %c0_i32, %c0_i32_0 : i32, i32
  }
  func.func @transform_7(%arg0: i32) -> (i32, i32) {
    %c0_i32 = arith.constant 0 : i32
    %c0_i32_0 = arith.constant 0 : i32
    %c0_i32_1 = arith.constant 0 : i32
    return %c0_i32, %c0_i32_0 : i32, i32
  }
  func.func @transform_8(%arg0: i32) -> (i32, i32) {
    %c0_i32 = arith.constant 0 : i32
    %c0_i32_0 = arith.constant 0 : i32
    %c0_i32_1 = arith.constant 0 : i32
    return %c0_i32, %c0_i32_0 : i32, i32
  }
  func.func @transform_9(%arg0: i32) -> (i32, i32) {
    %c0_i32 = arith.constant 0 : i32
    %c0_i32_0 = arith.constant 0 : i32
    %c0_i32_1 = arith.constant 0 : i32
    return %c0_i32, %c0_i32_0 : i32, i32
  }
  func.func @transform_10(%arg0: i32) -> (i32, i32) {
    %c0_i32 = arith.constant 0 : i32
    %c0_i32_0 = arith.constant 0 : i32
    %c0_i32_1 = arith.constant 0 : i32
    return %c0_i32, %c0_i32_0 : i32, i32
  }
  func.func @transform_11(%arg0: i32) -> (i32, i32) {
    %c0_i32 = arith.constant 0 : i32
    %c0_i32_0 = arith.constant 0 : i32
    %c0_i32_1 = arith.constant 0 : i32
    return %c0_i32, %c0_i32_0 : i32, i32
  }
  func.func @transform_12(%arg0: i32) -> (i32, i32) {
    %c0_i32 = arith.constant 0 : i32
    %c0_i32_0 = arith.constant 0 : i32
    %c0_i32_1 = arith.constant 0 : i32
    return %c0_i32, %c0_i32_0 : i32, i32
  }
  func.func @transform_13(%arg0: i32) -> (i32, i32) {
    %c0_i32 = arith.constant 0 : i32
    %c0_i32_0 = arith.constant 0 : i32
    %c0_i32_1 = arith.constant 0 : i32
    return %c0_i32, %c0_i32_0 : i32, i32
  }
  func.func @transform_14(%arg0: i32) -> (i32, i32) {
    %c0_i32 = arith.constant 0 : i32
    %c0_i32_0 = arith.constant 0 : i32
    %c0_i32_1 = arith.constant 0 : i32
    return %c0_i32, %c0_i32_0 : i32, i32
  }
  func.func @transform_15(%arg0: i32) -> (i32, i32) {
    %c0_i32 = arith.constant 0 : i32
    %c0_i32_0 = arith.constant 0 : i32
    %c0_i32_1 = arith.constant 0 : i32
    return %c0_i32, %c0_i32_0 : i32, i32
  }
  func.func @transform_16(%arg0: i32) -> (i32, i32) {
    %c0_i32 = arith.constant 0 : i32
    %c0_i32_0 = arith.constant 0 : i32
    %c0_i32_1 = arith.constant 0 : i32
    return %c0_i32, %c0_i32_0 : i32, i32
  }
  func.func @transform_17(%arg0: i32) -> (i32, i32) {
    %c0_i32 = arith.constant 0 : i32
    %c0_i32_0 = arith.constant 0 : i32
    %c0_i32_1 = arith.constant 0 : i32
    return %c0_i32, %c0_i32_0 : i32, i32
  }
}

</mosaic_0001>

<llo_original>
// kernel: docre_forward.1
$region0: #{docre_forward.1}
  #allocation0 [shape = 'u32[]', space=smem, size = 0x4, offset = 0x4, fixed_abs, tag = 'smem constant byte address 0x4 - core index']
  #allocation1 [shape = 'u32[144,128]{1,0:T(1,128)}', space=vmem, size = 0x12000, scoped, tag = 'internal scratch']
  #allocation2 [shape = 'f32[112,128]{1,0:T(8,128)}', space=vmem, size = 0xe000, scoped, tag = 'scratch operand']
  #allocation3 [shape = 'f32[112,128]{1,0:T(8,128)}', space=vmem, size = 0xe000, scoped, tag = 'scratch operand']
  %s0 = inlined_call_operand.vmem [shape: s32[16,2], index: 0, kind: input, shape index: {}]
  %s1 = inlined_call_operand.vmem [shape: f32[112,64], index: 1, kind: input, shape index: {}]
  %s2 = inlined_call_operand.vmem [shape: f32[112,64], index: 2, kind: input, shape index: {}]
  %s3 = inlined_call_operand.vmem [shape: f32[16,7,7,64], index: 3, kind: input, shape index: {}]
  %s4 = inlined_call_operand.vmem [shape: f32[128,64], index: 4, kind: input, shape index: {}]
  %s5 = inlined_call_operand.vmem [shape: f32[1,64], index: 5, kind: input, shape index: {}]
  %s6 = inlined_call_operand.vmem [shape: f32[128,64], index: 6, kind: input, shape index: {}]
  %s7 = inlined_call_operand.vmem [shape: f32[1,64], index: 7, kind: input, shape index: {}]
  %s8 = inlined_call_operand.vmem [shape: f32[7,64], index: 8, kind: input, shape index: {}]
  %s9 = inlined_call_operand.vmem [shape: f32[1,128], index: 9, kind: input, shape index: {}]
  %s10 = inlined_call_operand.vmem [shape: f32[64,512], index: 10, kind: input, shape index: {}]
  %s11 = inlined_call_operand.vmem [shape: f32[64,512], index: 11, kind: input, shape index: {}]
  %s12 = inlined_call_operand.vmem [shape: f32[512,128], index: 12, kind: input, shape index: {}]
  %s13 = inlined_call_operand.vmem [shape: f32[1,128], index: 13, kind: input, shape index: {}]
  %s14 = inlined_call_operand.vmem [shape: f32[16,128], index: 14, kind: output, shape index: {0}]
  %s15 = inlined_call_operand.vmem [shape: f32[16,128], index: 15, kind: output, shape index: {1}]
  %s16 = inlined_call_operand.vmem [shape: f32[32,128], index: 16, kind: output, shape index: {2}]
  %s17 = inlined_call_operand.hbm [shape: f32[16,512], index: 17, kind: output, shape index: {3}]
  %18 = xla_tuple %s14, %s15, %s16, %s17
  %s19 = sld [smem:[#allocation0]]
  $region90: #{docre_forward.1} parent=0
    _
  %s21 = ssub.s32 1, %s19
  %s22 = scalar_select 0, %s21, %s19
  $region1: #{docre_forward.1} parent=0
    #allocation4 [shape = 'u8[32768]{0}', space=vmem, size = 0x8000, scoped, tag = 'output window, operand 3, single buffered']
    #allocation5 [shape = 's32[1]{0}', space=sflag, size = 0x4, scoped, tag = 'scoped memory for docre_forward.1']
    %23 = vsyncpa [#allocation5], 0
    // Predicated region
    $region2: #{docre_forward.1} parent=1 // pred_check
      _
    $region3: #{docre_forward.1} parent=1 // pred_check_branch
      %25 = sbr.rel (0) target = $region5
    $region4: #{docre_forward.1} parent=1 // pred_region
      _
    $region5: #{docre_forward.1} parent=1 // pred_fallthru
      _
    // Predicated region
    $region6: #{docre_forward.1} parent=1 // pred_check
      _
    $region7: #{docre_forward.1} parent=1 // pred_check_branch
      %27 = sbr.rel (0) target = $region9
    $region8: #{docre_forward.1} parent=1 // pred_region
      _
    $region9: #{docre_forward.1} parent=1 // pred_fallthru
      _
    // Predicated region
    $region10: #{docre_forward.1} parent=1 // pred_check
      _
    $region11: #{docre_forward.1} parent=1 // pred_check_branch
      %29 = sbr.rel (0) target = $region13
    $region12: #{docre_forward.1} parent=1 // pred_region
      _
    $region13: #{docre_forward.1} parent=1 // pred_fallthru
      _
    // Predicated region
    $region14: #{docre_forward.1} parent=1 // pred_check
      _
    $region15: #{docre_forward.1} parent=1 // pred_check_branch
      %31 = sbr.rel (0) target = $region17
    $region16: #{docre_forward.1} parent=1 // pred_region
      _
    $region17: #{docre_forward.1} parent=1 // pred_fallthru
      _
    // Predicated region
    $region18: #{docre_forward.1} parent=1 // pred_check
      _
    $region19: #{docre_forward.1} parent=1 // pred_check_branch
      %33 = sbr.rel (0) target = $region21
    $region20: #{docre_forward.1} parent=1 // pred_region
      _
    $region21: #{docre_forward.1} parent=1 // pred_fallthru
      _
    // Predicated region
    $region22: #{docre_forward.1} parent=1 // pred_check
      _
    $region23: #{docre_forward.1} parent=1 // pred_check_branch
      %35 = sbr.rel (0) target = $region25
    $region24: #{docre_forward.1} parent=1 // pred_region
      _
    $region25: #{docre_forward.1} parent=1 // pred_fallthru
      _
    // Predicated region
    $region26: #{docre_forward.1} parent=1 // pred_check
      _
    $region27: #{docre_forward.1} parent=1 // pred_check_branch
      %37 = sbr.rel (0) target = $region29
    $region28: #{docre_forward.1} parent=1 // pred_region
      _
    $region29: #{docre_forward.1} parent=1 // pred_fallthru
      _
    // Predicated region
    $region30: #{docre_forward.1} parent=1 // pred_check
      _
    $region31: #{docre_forward.1} parent=1 // pred_check_branch
      %39 = sbr.rel (0) target = $region33
    $region32: #{docre_forward.1} parent=1 // pred_region
      _
    $region33: #{docre_forward.1} parent=1 // pred_fallthru
      _
    // Predicated region
    $region34: #{docre_forward.1} parent=1 // pred_check
      _
    $region35: #{docre_forward.1} parent=1 // pred_check_branch
      %41 = sbr.rel (0) target = $region37
    $region36: #{docre_forward.1} parent=1 // pred_region
      _
    $region37: #{docre_forward.1} parent=1 // pred_fallthru
      _
    // Predicated region
    $region38: #{docre_forward.1} parent=1 // pred_check
      _
    $region39: #{docre_forward.1} parent=1 // pred_check_branch
      %43 = sbr.rel (0) target = $region41
    $region40: #{docre_forward.1} parent=1 // pred_region
      _
    $region41: #{docre_forward.1} parent=1 // pred_fallthru
      _
    // Predicated region
    $region42: #{docre_forward.1} parent=1 // pred_check
      _
    $region43: #{docre_forward.1} parent=1 // pred_check_branch
      %45 = sbr.rel (0) target = $region45
    $region44: #{docre_forward.1} parent=1 // pred_region
      _
    $region45: #{docre_forward.1} parent=1 // pred_fallthru
      _
    // Predicated region
    $region46: #{docre_forward.1} parent=1 // pred_check
      _
    $region47: #{docre_forward.1} parent=1 // pred_check_branch
      %47 = sbr.rel (0) target = $region49
    $region48: #{docre_forward.1} parent=1 // pred_region
      _
    $region49: #{docre_forward.1} parent=1 // pred_fallthru
      _
    // Predicated region
    $region50: #{docre_forward.1} parent=1 // pred_check
      _
    $region51: #{docre_forward.1} parent=1 // pred_check_branch
      %49 = sbr.rel (0) target = $region53
    $region52: #{docre_forward.1} parent=1 // pred_region
      _
    $region53: #{docre_forward.1} parent=1 // pred_fallthru
      _
    // Predicated region
    $region54: #{docre_forward.1} parent=1 // pred_check
      _
    $region55: #{docre_forward.1} parent=1 // pred_check_branch
      %51 = sbr.rel (0) target = $region57
    $region56: #{docre_forward.1} parent=1 // pred_region
      _
    $region57: #{docre_forward.1} parent=1 // pred_fallthru
      _
    %v52 = vld [vmem:[%s0] sm:$0xff]
    %v53 = vld [vmem:[%s0 + $0x8] sm:$0xff]
    %v54 = vlaneseq
    %v55 = vand.u32 %v54, 127
    %56 = vset.pattern.permute.xlu0 0
    %57 = vperm.xlu0 %56, %v52
    %v58 = vpop.permute.xlu0 %57
    %59 = vset.pattern.permute.xlu0 0
    %60 = vperm.xlu0 %59, %v53
    %v61 = vpop.permute.xlu0 %60
    %vm62 = vcmp.eq.s32.totalorder %v55, %v58
    %vm63 = vcmp.eq.s32.totalorder %v55, %v61
    %v64 = vsel %vm62, 1, 0
    %v65 = vsel %vm63, 1, 0
    %v66 = vcvt.s32.f32 %v64
    %v67 = vcvt.s32.f32 %v65
    %68 = vset.pattern.permute.xlu0 1
    %69 = vperm.xlu0 %68, %v52
    %v70 = vpop.permute.xlu0 %69
    %71 = vset.pattern.permute.xlu0 1
    %72 = vperm.xlu0 %71, %v53
    %v73 = vpop.permute.xlu0 %72
    %vm74 = vcmp.eq.s32.totalorder %v55, %v70
    %vm75 = vcmp.eq.s32.totalorder %v55, %v73
    %v76 = vsel %vm74, 1, 0
    %v77 = vsel %vm75, 1, 0
    %v78 = vcvt.s32.f32 %v76
    %v79 = vcvt.s32.f32 %v77
    %v80 = vld [vmem:[%s1] sm:$0xff]
    %v81 = vld [vmem:[%s1 + $0x8] sm:$0xff]
    %v82 = vld [vmem:[%s1 + $0x10] sm:$0xff]
    %v83 = vld [vmem:[%s1 + $0x18] sm:$0xff]
    %v84 = vld [vmem:[%s1 + $0x20] sm:$0xff]
    %v85 = vld [vmem:[%s1 + $0x28] sm:$0xff]
    %v86 = vld [vmem:[%s1 + $0x30] sm:$0xff]
    %v87 = vld [vmem:[%s1 + $0x38] sm:$0xff]
    %v88 = vld [vmem:[%s1 + $0x40] sm:$0xff]
    %v89 = vld [vmem:[%s1 + $0x48] sm:$0xff]
    %v90 = vld [vmem:[%s1 + $0x50] sm:$0xff]
    %v91 = vld [vmem:[%s1 + $0x58] sm:$0xff]
    %v92 = vld [vmem:[%s1 + $0x60] sm:$0xff]
    %v93 = vld [vmem:[%s1 + $0x68] sm:$0xff]
    %vm94 = vcmask 523264
    %95 = vst.msk [vmem:[#allocation2] sm:$0xff] %vm94, %v80
    %96 = vst.msk [vmem:[#allocation2 + $0x8] sm:$0xff] %vm94, %v81
    %97 = vst.msk [vmem:[#allocation2 + $0x10] sm:$0xff] %vm94, %v82
    %98 = vst.msk [vmem:[#allocation2 + $0x18] sm:$0xff] %vm94, %v83
    %99 = vst.msk [vmem:[#allocation2 + $0x20] sm:$0xff] %vm94, %v84
    %100 = vst.msk [vmem:[#allocation2 + $0x28] sm:$0xff] %vm94, %v85
    %101 = vst.msk [vmem:[#allocation2 + $0x30] sm:$0xff] %vm94, %v86
    %102 = vst.msk [vmem:[#allocation2 + $0x38] sm:$0xff] %vm94, %v87
    %103 = vst.msk [vmem:[#allocation2 + $0x40] sm:$0xff] %vm94, %v88
    %104 = vst.msk [vmem:[#allocation2 + $0x48] sm:$0xff] %vm94, %v89
    %105 = vst.msk [vmem:[#allocation2 + $0x50] sm:$0xff] %vm94, %v90
    %106 = vst.msk [vmem:[#allocation2 + $0x58] sm:$0xff] %vm94, %v91
    %107 = vst.msk [vmem:[#allocation2 + $0x60] sm:$0xff] %vm94, %v92
    %108 = vst.msk [vmem:[#allocation2 + $0x68] sm:$0xff] %vm94, %v93
    %v109 = vld [vmem:[%s2] sm:$0xff]
    %v110 = vld [vmem:[%s2 + $0x8] sm:$0xff]
    %v111 = vld [vmem:[%s2 + $0x10] sm:$0xff]
    %v112 = vld [vmem:[%s2 + $0x18] sm:$0xff]
    %v113 = vld [vmem:[%s2 + $0x20] sm:$0xff]
    %v114 = vld [vmem:[%s2 + $0x28] sm:$0xff]
    %v115 = vld [vmem:[%s2 + $0x30] sm:$0xff]
    %v116 = vld [vmem:[%s2 + $0x38] sm:$0xff]
    %v117 = vld [vmem:[%s2 + $0x40] sm:$0xff]
    %v118 = vld [vmem:[%s2 + $0x48] sm:$0xff]
    %v119 = vld [vmem:[%s2 + $0x50] sm:$0xff]
    %v120 = vld [vmem:[%s2 + $0x58] sm:$0xff]
    %v121 = vld [vmem:[%s2 + $0x60] sm:$0xff]
    %v122 = vld [vmem:[%s2 + $0x68] sm:$0xff]
    %123 = vst.msk [vmem:[#allocation3] sm:$0xff] %vm94, %v109
    %124 = vst.msk [vmem:[#allocation3 + $0x8] sm:$0xff] %vm94, %v110
    %125 = vst.msk [vmem:[#allocation3 + $0x10] sm:$0xff] %vm94, %v111
    %126 = vst.msk [vmem:[#allocation3 + $0x18] sm:$0xff] %vm94, %v112
    %127 = vst.msk [vmem:[#allocation3 + $0x20] sm:$0xff] %vm94, %v113
    %128 = vst.msk [vmem:[#allocation3 + $0x28] sm:$0xff] %vm94, %v114
    %129 = vst.msk [vmem:[#allocation3 + $0x30] sm:$0xff] %vm94, %v115
    %130 = vst.msk [vmem:[#allocation3 + $0x38] sm:$0xff] %vm94, %v116
    %131 = vst.msk [vmem:[#allocation3 + $0x40] sm:$0xff] %vm94, %v117
    %132 = vst.msk [vmem:[#allocation3 + $0x48] sm:$0xff] %vm94, %v118
    %133 = vst.msk [vmem:[#allocation3 + $0x50] sm:$0xff] %vm94, %v119
    %134 = vst.msk [vmem:[#allocation3 + $0x58] sm:$0xff] %vm94, %v120
    %135 = vst.msk [vmem:[#allocation3 + $0x60] sm:$0xff] %vm94, %v121
    %136 = vst.msk [vmem:[#allocation3 + $0x68] sm:$0xff] %vm94, %v122
    %v137 = vld [vmem:[%s3] sm:$0x1]
    %v138 = vld [vmem:[%s3 + $0x38] sm:$0x1]
    %v139 = vld [vmem:[%s3 + $0x70] sm:$0x1]
    %v140 = vld [vmem:[%s3 + $0xa8] sm:$0x1]
    %v141 = vld [vmem:[%s3 + $0xe0] sm:$0x1]
    %v142 = vld [vmem:[%s3 + $0x118] sm:$0x1]
    %v143 = vld [vmem:[%s3 + $0x150] sm:$0x1]
    %v144 = vld [vmem:[%s3 + $0x188] sm:$0x1]
    %v145 = vld [vmem:[%s3 + $0x1c0] sm:$0x1]
    %v146 = vld [vmem:[%s3 + $0x1f8] sm:$0x1]
    %v147 = vld [vmem:[%s3 + $0x230] sm:$0x1]
    %v148 = vld [vmem:[%s3 + $0x268] sm:$0x1]
    %v149 = vld [vmem:[%s3 + $0x2a0] sm:$0x1]
    %v150 = vld [vmem:[%s3 + $0x2d8] sm:$0x1]
    %v151 = vld [vmem:[%s3 + $0x310] sm:$0x1]
    %v152 = vld [vmem:[%s3 + $0x348] sm:$0x1]
    %154 = vset.pattern.permute.xlu0 0
    %155 = vperm.xlu0 %154, %v78
    %v156 = vpop.permute.xlu0 %155
    %159 = vset.pattern.permute.xlu0 0
    %160 = vperm.xlu0 %159, %v79
    %v161 = vpop.permute.xlu0 %160
    %v179 = vrot.slane %v138, 7
    %vm180 = vcmask 1041409
    %v181 = vsel %vm180, %v179, %v137
    %v182 = vrot.slane %v139, 6
    %vm183 = vcmask 1042434
    %v184 = vsel %vm183, %v182, %v181
    %v185 = vrot.slane %v140, 5
    %vm186 = vcmask 1043459
    %v187 = vsel %vm186, %v185, %v184
    %v188 = vrot.slane %v141, 4
    %vm189 = vcmask 1044484
    %v190 = vsel %vm189, %v188, %v187
    %v191 = vrot.slane %v142, 3
    %vm192 = vcmask 1045509
    %v193 = vsel %vm192, %v191, %v190
    %v194 = vrot.slane %v143, 2
    %vm195 = vcmask 1046534
    %v196 = vsel %vm195, %v194, %v193
    %v197 = vrot.slane %v144, 1
    %vm198 = vcmask 1047559
    %v199 = vsel %vm198, %v197, %v196
    %v200 = vrot.slane %v146, 7
    %v201 = vsel %vm180, %v200, %v145
    %v202 = vrot.slane %v147, 6
    %v203 = vsel %vm183, %v202, %v201
    %v204 = vrot.slane %v148, 5
    %v205 = vsel %vm186, %v204, %v203
    %v206 = vrot.slane %v149, 4
    %v207 = vsel %vm189, %v206, %v205
    %v208 = vrot.slane %v150, 3
    %v209 = vsel %vm192, %v208, %v207
    %v210 = vrot.slane %v151, 2
    %v211 = vsel %vm195, %v210, %v209
    %v212 = vrot.slane %v152, 1
    %v213 = vsel %vm198, %v212, %v211
    %v216 = vmul.f32 %v156, %v199
    %v217 = vmul.f32 %v161, %v213
    %v218 = vadd.f32 %v216, 0.0
    %v219 = vadd.f32 %v217, 0.0
    %221 = vset.pattern.permute.xlu0 0
    %222 = vperm.xlu0 %221, %v66
    %v223 = vpop.permute.xlu0 %222
    %226 = vset.pattern.permute.xlu0 0
    %227 = vperm.xlu0 %226, %v67
    %v228 = vpop.permute.xlu0 %227
    %v230 = vmul.f32 %v223, %v199
    %v231 = vmul.f32 %v228, %v213
    %v232 = vadd.f32 %v230, 0.0
    %v233 = vadd.f32 %v231, 0.0
    %v234 = vld [vmem:[%s3 + $0x1] sm:$0x1]
    %v235 = vld [vmem:[%s3 + $0x39] sm:$0x1]
    %v236 = vld [vmem:[%s3 + $0x71] sm:$0x1]
    %v237 = vld [vmem:[%s3 + $0xa9] sm:$0x1]
    %v238 = vld [vmem:[%s3 + $0xe1] sm:$0x1]
    %v239 = vld [vmem:[%s3 + $0x119] sm:$0x1]
    %v240 = vld [vmem:[%s3 + $0x151] sm:$0x1]
    %v241 = vld [vmem:[%s3 + $0x189] sm:$0x1]
    %v242 = vld [vmem:[%s3 + $0x1c1] sm:$0x1]
    %v243 = vld [vmem:[%s3 + $0x1f9] sm:$0x1]
    %v244 = vld [vmem:[%s3 + $0x231] sm:$0x1]
    %v245 = vld [vmem:[%s3 + $0x269] sm:$0x1]
    %v246 = vld [vmem:[%s3 + $0x2a1] sm:$0x1]
    %v247 = vld [vmem:[%s3 + $0x2d9] sm:$0x1]
    %v248 = vld [vmem:[%s3 + $0x311] sm:$0x1]
    %v249 = vld [vmem:[%s3 + $0x349] sm:$0x1]
    %250 = vset.pattern.permute.xlu0 1
    %251 = vperm.xlu0 %250, %v78
    %v252 = vpop.permute.xlu0 %251
    %254 = vset.pattern.permute.xlu0 1
    %255 = vperm.xlu0 %254, %v79
    %v256 = vpop.permute.xlu0 %255
    %v274 = vrot.slane %v235, 7
    %v275 = vsel %vm180, %v274, %v234
    %v276 = vrot.slane %v236, 6
    %v277 = vsel %vm183, %v276, %v275
    %v278 = vrot.slane %v237, 5
    %v279 = vsel %vm186, %v278, %v277
    %v280 = vrot.slane %v238, 4
    %v281 = vsel %vm189, %v280, %v279
    %v282 = vrot.slane %v239, 3
    %v283 = vsel %vm192, %v282, %v281
    %v284 = vrot.slane %v240, 2
    %v285 = vsel %vm195, %v284, %v283
    %v286 = vrot.slane %v241, 1
    %v287 = vsel %vm198, %v286, %v285
    %v288 = vrot.slane %v243, 7
    %v289 = vsel %vm180, %v288, %v242
    %v290 = vrot.slane %v244, 6
    %v291 = vsel %vm183, %v290, %v289
    %v292 = vrot.slane %v245, 5
    %v293 = vsel %vm186, %v292, %v291
    %v294 = vrot.slane %v246, 4
    %v295 = vsel %vm189, %v294, %v293
    %v296 = vrot.slane %v247, 3
    %v297 = vsel %vm192, %v296, %v295
    %v298 = vrot.slane %v248, 2
    %v299 = vsel %vm195, %v298, %v297
    %v300 = vrot.slane %v249, 1
    %v301 = vsel %vm198, %v300, %v299
    %v304 = vmul.f32 %v252, %v287
    %v305 = vmul.f32 %v256, %v301
    %v306 = vadd.f32 %v218, %v304
    %v307 = vadd.f32 %v219, %v305
    %s308 = scalar_lea.vmem %s3, 8
    %v309 = vld [vmem:[%s308] sm:$0x1]
    %v310 = vld [vmem:[%s308 + $0x38] sm:$0x1]
    %v311 = vld [vmem:[%s308 + $0x70] sm:$0x1]
    %v312 = vld [vmem:[%s308 + $0xa8] sm:$0x1]
    %v313 = vld [vmem:[%s308 + $0xe0] sm:$0x1]
    %v314 = vld [vmem:[%s308 + $0x118] sm:$0x1]
    %v315 = vld [vmem:[%s308 + $0x150] sm:$0x1]
    %v316 = vld [vmem:[%s308 + $0x188] sm:$0x1]
    %v317 = vld [vmem:[%s308 + $0x1c0] sm:$0x1]
    %v318 = vld [vmem:[%s308 + $0x1f8] sm:$0x1]
    %v319 = vld [vmem:[%s308 + $0x230] sm:$0x1]
    %v320 = vld [vmem:[%s308 + $0x268] sm:$0x1]
    %v321 = vld [vmem:[%s308 + $0x2a0] sm:$0x1]
    %v322 = vld [vmem:[%s308 + $0x2d8] sm:$0x1]
    %v323 = vld [vmem:[%s308 + $0x310] sm:$0x1]
    %v324 = vld [vmem:[%s308 + $0x348] sm:$0x1]
    %325 = vset.pattern.permute.xlu0 1
    %326 = vperm.xlu0 %325, %v66
    %v327 = vpop.permute.xlu0 %326
    %329 = vset.pattern.permute.xlu0 1
    %330 = vperm.xlu0 %329, %v67
    %v331 = vpop.permute.xlu0 %330
    %v349 = vrot.slane %v310, 7
    %v350 = vsel %vm180, %v349, %v309
    %v351 = vrot.slane %v311, 6
    %v352 = vsel %vm183, %v351, %v350
    %v353 = vrot.slane %v312, 5
    %v354 = vsel %vm186, %v353, %v352
    %v355 = vrot.slane %v313, 4
    %v356 = vsel %vm189, %v355, %v354
    %v357 = vrot.slane %v314, 3
    %v358 = vsel %vm192, %v357, %v356
    %v359 = vrot.slane %v315, 2
    %v360 = vsel %vm195, %v359, %v358
    %v361 = vrot.slane %v316, 1
    %v362 = vsel %vm198, %v361, %v360
    %v363 = vrot.slane %v318, 7
    %v364 = vsel %vm180, %v363, %v317
    %v365 = vrot.slane %v319, 6
    %v366 = vsel %vm183, %v365, %v364
    %v367 = vrot.slane %v320, 5
    %v368 = vsel %vm186, %v367, %v366
    %v369 = vrot.slane %v321, 4
    %v370 = vsel %vm189, %v369, %v368
    %v371 = vrot.slane %v322, 3
    %v372 = vsel %vm192, %v371, %v370
    %v373 = vrot.slane %v323, 2
    %v374 = vsel %vm195, %v373, %v372
    %v375 = vrot.slane %v324, 1
    %v376 = vsel %vm198, %v375, %v374
    %v379 = vmul.f32 %v327, %v362
    %v380 = vmul.f32 %v331, %v376
    %v381 = vadd.f32 %v232, %v379
    %v382 = vadd.f32 %v233, %v380
    %v383 = vld [vmem:[%s3 + $0x2] sm:$0x1]
    %v384 = vld [vmem:[%s3 + $0x3a] sm:$0x1]
    %v385 = vld [vmem:[%s3 + $0x72] sm:$0x1]
    %v386 = vld [vmem:[%s3 + $0xaa] sm:$0x1]
    %v387 = vld [vmem:[%s3 + $0xe2] sm:$0x1]
    %v388 = vld [vmem:[%s3 + $0x11a] sm:$0x1]
    %v389 = vld [vmem:[%s3 + $0x152] sm:$0x1]
    %v390 = vld [vmem:[%s3 + $0x18a] sm:$0x1]
    %v391 = vld [vmem:[%s3 + $0x1c2] sm:$0x1]
    %v392 = vld [vmem:[%s3 + $0x1fa] sm:$0x1]
    %v393 = vld [vmem:[%s3 + $0x232] sm:$0x1]
    %v394 = vld [vmem:[%s3 + $0x26a] sm:$0x1]
    %v395 = vld [vmem:[%s3 + $0x2a2] sm:$0x1]
    %v396 = vld [vmem:[%s3 + $0x2da] sm:$0x1]
    %v397 = vld [vmem:[%s3 + $0x312] sm:$0x1]
    %v398 = vld [vmem:[%s3 + $0x34a] sm:$0x1]
    %399 = vset.pattern.permute.xlu0 2
    %400 = vperm.xlu0 %399, %v78
    %v401 = vpop.permute.xlu0 %400
    %403 = vset.pattern.permute.xlu0 2
    %404 = vperm.xlu0 %403, %v79
    %v405 = vpop.permute.xlu0 %404
    %v423 = vrot.slane %v384, 7
    %v424 = vsel %vm180, %v423, %v383
    %v425 = vrot.slane %v385, 6
    %v426 = vsel %vm183, %v425, %v424
    %v427 = vrot.slane %v386, 5
    %v428 = vsel %vm186, %v427, %v426
    %v429 = vrot.slane %v387, 4
    %v430 = vsel %vm189, %v429, %v428
    %v431 = vrot.slane %v388, 3
    %v432 = vsel %vm192, %v431, %v430
    %v433 = vrot.slane %v389, 2
    %v434 = vsel %vm195, %v433, %v432
    %v435 = vrot.slane %v390, 1
    %v436 = vsel %vm198, %v435, %v434
    %v437 = vrot.slane %v392, 7
    %v438 = vsel %vm180, %v437, %v391
    %v439 = vrot.slane %v393, 6
    %v440 = vsel %vm183, %v439, %v438
    %v441 = vrot.slane %v394, 5
    %v442 = vsel %vm186, %v441, %v440
    %v443 = vrot.slane %v395, 4
    %v444 = vsel %vm189, %v443, %v442
    %v445 = vrot.slane %v396, 3
    %v446 = vsel %vm192, %v445, %v444
    %v447 = vrot.slane %v397, 2
    %v448 = vsel %vm195, %v447, %v446
    %v449 = vrot.slane %v398, 1
    %v450 = vsel %vm198, %v449, %v448
    %v453 = vmul.f32 %v401, %v436
    %v454 = vmul.f32 %v405, %v450
    %v455 = vadd.f32 %v306, %v453
    %v456 = vadd.f32 %v307, %v454
    %s457 = scalar_lea.vmem %s3, 16
    %v458 = vld [vmem:[%s457] sm:$0x1]
    %v459 = vld [vmem:[%s457 + $0x38] sm:$0x1]
    %v460 = vld [vmem:[%s457 + $0x70] sm:$0x1]
    %v461 = vld [vmem:[%s457 + $0xa8] sm:$0x1]
    %v462 = vld [vmem:[%s457 + $0xe0] sm:$0x1]
    %v463 = vld [vmem:[%s457 + $0x118] sm:$0x1]
    %v464 = vld [vmem:[%s457 + $0x150] sm:$0x1]
    %v465 = vld [vmem:[%s457 + $0x188] sm:$0x1]
    %v466 = vld [vmem:[%s457 + $0x1c0] sm:$0x1]
    %v467 = vld [vmem:[%s457 + $0x1f8] sm:$0x1]
    %v468 = vld [vmem:[%s457 + $0x230] sm:$0x1]
    %v469 = vld [vmem:[%s457 + $0x268] sm:$0x1]
    %v470 = vld [vmem:[%s457 + $0x2a0] sm:$0x1]
    %v471 = vld [vmem:[%s457 + $0x2d8] sm:$0x1]
    %v472 = vld [vmem:[%s457 + $0x310] sm:$0x1]
    %v473 = vld [vmem:[%s457 + $0x348] sm:$0x1]
    %474 = vset.pattern.permute.xlu0 2
    %475 = vperm.xlu0 %474, %v66
    %v476 = vpop.permute.xlu0 %475
    %478 = vset.pattern.permute.xlu0 2
    %479 = vperm.xlu0 %478, %v67
    %v480 = vpop.permute.xlu0 %479
    %v498 = vrot.slane %v459, 7
    %v499 = vsel %vm180, %v498, %v458
    %v500 = vrot.slane %v460, 6
    %v501 = vsel %vm183, %v500, %v499
    %v502 = vrot.slane %v461, 5
    %v503 = vsel %vm186, %v502, %v501
    %v504 = vrot.slane %v462, 4
    %v505 = vsel %vm189, %v504, %v503
    %v506 = vrot.slane %v463, 3
    %v507 = vsel %vm192, %v506, %v505
    %v508 = vrot.slane %v464, 2
    %v509 = vsel %vm195, %v508, %v507
    %v510 = vrot.slane %v465, 1
    %v511 = vsel %vm198, %v510, %v509
    %v512 = vrot.slane %v467, 7
    %v513 = vsel %vm180, %v512, %v466
    %v514 = vrot.slane %v468, 6
    %v515 = vsel %vm183, %v514, %v513
    %v516 = vrot.slane %v469, 5
    %v517 = vsel %vm186, %v516, %v515
    %v518 = vrot.slane %v470, 4
    %v519 = vsel %vm189, %v518, %v517
    %v520 = vrot.slane %v471, 3
    %v521 = vsel %vm192, %v520, %v519
    %v522 = vrot.slane %v472, 2
    %v523 = vsel %vm195, %v522, %v521
    %v524 = vrot.slane %v473, 1
    %v525 = vsel %vm198, %v524, %v523
    %v528 = vmul.f32 %v476, %v511
    %v529 = vmul.f32 %v480, %v525
    %v530 = vadd.f32 %v381, %v528
    %v531 = vadd.f32 %v382, %v529
    %v532 = vld [vmem:[%s3 + $0x3] sm:$0x1]
    %v533 = vld [vmem:[%s3 + $0x3b] sm:$0x1]
    %v534 = vld [vmem:[%s3 + $0x73] sm:$0x1]
    %v535 = vld [vmem:[%s3 + $0xab] sm:$0x1]
    %v536 = vld [vmem:[%s3 + $0xe3] sm:$0x1]
    %v537 = vld [vmem:[%s3 + $0x11b] sm:$0x1]
    %v538 = vld [vmem:[%s3 + $0x153] sm:$0x1]
    %v539 = vld [vmem:[%s3 + $0x18b] sm:$0x1]
    %v540 = vld [vmem:[%s3 + $0x1c3] sm:$0x1]
    %v541 = vld [vmem:[%s3 + $0x1fb] sm:$0x1]
    %v542 = vld [vmem:[%s3 + $0x233] sm:$0x1]
    %v543 = vld [vmem:[%s3 + $0x26b] sm:$0x1]
    %v544 = vld [vmem:[%s3 + $0x2a3] sm:$0x1]
    %v545 = vld [vmem:[%s3 + $0x2db] sm:$0x1]
    %v546 = vld [vmem:[%s3 + $0x313] sm:$0x1]
    %v547 = vld [vmem:[%s3 + $0x34b] sm:$0x1]
    %548 = vset.pattern.permute.xlu0 3
    %549 = vperm.xlu0 %548, %v78
    %v550 = vpop.permute.xlu0 %549
    %552 = vset.pattern.permute.xlu0 3
    %553 = vperm.xlu0 %552, %v79
    %v554 = vpop.permute.xlu0 %553
    %v572 = vrot.slane %v533, 7
    %v573 = vsel %vm180, %v572, %v532
    %v574 = vrot.slane %v534, 6
    %v575 = vsel %vm183, %v574, %v573
    %v576 = vrot.slane %v535, 5
    %v577 = vsel %vm186, %v576, %v575
    %v578 = vrot.slane %v536, 4
    %v579 = vsel %vm189, %v578, %v577
    %v580 = vrot.slane %v537, 3
    %v581 = vsel %vm192, %v580, %v579
    %v582 = vrot.slane %v538, 2
    %v583 = vsel %vm195, %v582, %v581
    %v584 = vrot.slane %v539, 1
    %v585 = vsel %vm198, %v584, %v583
    %v586 = vrot.slane %v541, 7
    %v587 = vsel %vm180, %v586, %v540
    %v588 = vrot.slane %v542, 6
    %v589 = vsel %vm183, %v588, %v587
    %v590 = vrot.slane %v543, 5
    %v591 = vsel %vm186, %v590, %v589
    %v592 = vrot.slane %v544, 4
    %v593 = vsel %vm189, %v592, %v591
    %v594 = vrot.slane %v545, 3
    %v595 = vsel %vm192, %v594, %v593
    %v596 = vrot.slane %v546, 2
    %v597 = vsel %vm195, %v596, %v595
    %v598 = vrot.slane %v547, 1
    %v599 = vsel %vm198, %v598, %v597
    %v602 = vmul.f32 %v550, %v585
    %v603 = vmul.f32 %v554, %v599
    %v604 = vadd.f32 %v455, %v602
    %v605 = vadd.f32 %v456, %v603
    %s606 = scalar_lea.vmem %s3, 24
    %v607 = vld [vmem:[%s606] sm:$0x1]
    %v608 = vld [vmem:[%s606 + $0x38] sm:$0x1]
    %v609 = vld [vmem:[%s606 + $0x70] sm:$0x1]
    %v610 = vld [vmem:[%s606 + $0xa8] sm:$0x1]
    %v611 = vld [vmem:[%s606 + $0xe0] sm:$0x1]
    %v612 = vld [vmem:[%s606 + $0x118] sm:$0x1]
    %v613 = vld [vmem:[%s606 + $0x150] sm:$0x1]
    %v614 = vld [vmem:[%s606 + $0x188] sm:$0x1]
    %v615 = vld [vmem:[%s606 + $0x1c0] sm:$0x1]
    %v616 = vld [vmem:[%s606 + $0x1f8] sm:$0x1]
    %v617 = vld [vmem:[%s606 + $0x230] sm:$0x1]
    %v618 = vld [vmem:[%s606 + $0x268] sm:$0x1]
    %v619 = vld [vmem:[%s606 + $0x2a0] sm:$0x1]
    %v620 = vld [vmem:[%s606 + $0x2d8] sm:$0x1]
    %v621 = vld [vmem:[%s606 + $0x310] sm:$0x1]
    %v622 = vld [vmem:[%s606 + $0x348] sm:$0x1]
    %623 = vset.pattern.permute.xlu0 3
    %624 = vperm.xlu0 %623, %v66
    %v625 = vpop.permute.xlu0 %624
    %627 = vset.pattern.permute.xlu0 3
    %628 = vperm.xlu0 %627, %v67
    %v629 = vpop.permute.xlu0 %628
    %v647 = vrot.slane %v608, 7
    %v648 = vsel %vm180, %v647, %v607
    %v649 = vrot.slane %v609, 6
    %v650 = vsel %vm183, %v649, %v648
    %v651 = vrot.slane %v610, 5
    %v652 = vsel %vm186, %v651, %v650
    %v653 = vrot.slane %v611, 4
    %v654 = vsel %vm189, %v653, %v652
    %v655 = vrot.slane %v612, 3
    %v656 = vsel %vm192, %v655, %v654
    %v657 = vrot.slane %v613, 2
    %v658 = vsel %vm195, %v657, %v656
    %v659 = vrot.slane %v614, 1
    %v660 = vsel %vm198, %v659, %v658
    %v661 = vrot.slane %v616, 7
    %v662 = vsel %vm180, %v661, %v615
    %v663 = vrot.slane %v617, 6
    %v664 = vsel %vm183, %v663, %v662
    %v665 = vrot.slane %v618, 5
    %v666 = vsel %vm186, %v665, %v664
    %v667 = vrot.slane %v619, 4
    %v668 = vsel %vm189, %v667, %v666
    %v669 = vrot.slane %v620, 3
    %v670 = vsel %vm192, %v669, %v668
    %v671 = vrot.slane %v621, 2
    %v672 = vsel %vm195, %v671, %v670
    %v673 = vrot.slane %v622, 1
    %v674 = vsel %vm198, %v673, %v672
    %v677 = vmul.f32 %v625, %v660
    %v678 = vmul.f32 %v629, %v674
    %v679 = vadd.f32 %v530, %v677
    %v680 = vadd.f32 %v531, %v678
    %v681 = vld [vmem:[%s3 + $0x4] sm:$0x1]
    %v682 = vld [vmem:[%s3 + $0x3c] sm:$0x1]
    %v683 = vld [vmem:[%s3 + $0x74] sm:$0x1]
    %v684 = vld [vmem:[%s3 + $0xac] sm:$0x1]
    %v685 = vld [vmem:[%s3 + $0xe4] sm:$0x1]
    %v686 = vld [vmem:[%s3 + $0x11c] sm:$0x1]
    %v687 = vld [vmem:[%s3 + $0x154] sm:$0x1]
    %v688 = vld [vmem:[%s3 + $0x18c] sm:$0x1]
    %v689 = vld [vmem:[%s3 + $0x1c4] sm:$0x1]
    %v690 = vld [vmem:[%s3 + $0x1fc] sm:$0x1]
    %v691 = vld [vmem:[%s3 + $0x234] sm:$0x1]
    %v692 = vld [vmem:[%s3 + $0x26c] sm:$0x1]
    %v693 = vld [vmem:[%s3 + $0x2a4] sm:$0x1]
    %v694 = vld [vmem:[%s3 + $0x2dc] sm:$0x1]
    %v695 = vld [vmem:[%s3 + $0x314] sm:$0x1]
    %v696 = vld [vmem:[%s3 + $0x34c] sm:$0x1]
    %697 = vset.pattern.permute.xlu0 4
    %698 = vperm.xlu0 %697, %v78
    %v699 = vpop.permute.xlu0 %698
    %701 = vset.pattern.permute.xlu0 4
    %702 = vperm.xlu0 %701, %v79
    %v703 = vpop.permute.xlu0 %702
    %v721 = vrot.slane %v682, 7
    %v722 = vsel %vm180, %v721, %v681
    %v723 = vrot.slane %v683, 6
    %v724 = vsel %vm183, %v723, %v722
    %v725 = vrot.slane %v684, 5
    %v726 = vsel %vm186, %v725, %v724
    %v727 = vrot.slane %v685, 4
    %v728 = vsel %vm189, %v727, %v726
    %v729 = vrot.slane %v686, 3
    %v730 = vsel %vm192, %v729, %v728
    %v731 = vrot.slane %v687, 2
    %v732 = vsel %vm195, %v731, %v730
    %v733 = vrot.slane %v688, 1
    %v734 = vsel %vm198, %v733, %v732
    %v735 = vrot.slane %v690, 7
    %v736 = vsel %vm180, %v735, %v689
    %v737 = vrot.slane %v691, 6
    %v738 = vsel %vm183, %v737, %v736
    %v739 = vrot.slane %v692, 5
    %v740 = vsel %vm186, %v739, %v738
    %v741 = vrot.slane %v693, 4
    %v742 = vsel %vm189, %v741, %v740
    %v743 = vrot.slane %v694, 3
    %v744 = vsel %vm192, %v743, %v742
    %v745 = vrot.slane %v695, 2
    %v746 = vsel %vm195, %v745, %v744
    %v747 = vrot.slane %v696, 1
    %v748 = vsel %vm198, %v747, %v746
    %v751 = vmul.f32 %v699, %v734
    %v752 = vmul.f32 %v703, %v748
    %v753 = vadd.f32 %v604, %v751
    %v754 = vadd.f32 %v605, %v752
    %s755 = scalar_lea.vmem %s3, 32
    %v756 = vld [vmem:[%s755] sm:$0x1]
    %v757 = vld [vmem:[%s755 + $0x38] sm:$0x1]
    %v758 = vld [vmem:[%s755 + $0x70] sm:$0x1]
    %v759 = vld [vmem:[%s755 + $0xa8] sm:$0x1]
    %v760 = vld [vmem:[%s755 + $0xe0] sm:$0x1]
    %v761 = vld [vmem:[%s755 + $0x118] sm:$0x1]
    %v762 = vld [vmem:[%s755 + $0x150] sm:$0x1]
    %v763 = vld [vmem:[%s755 + $0x188] sm:$0x1]
    %v764 = vld [vmem:[%s755 + $0x1c0] sm:$0x1]
    %v765 = vld [vmem:[%s755 + $0x1f8] sm:$0x1]
    %v766 = vld [vmem:[%s755 + $0x230] sm:$0x1]
    %v767 = vld [vmem:[%s755 + $0x268] sm:$0x1]
    %v768 = vld [vmem:[%s755 + $0x2a0] sm:$0x1]
    %v769 = vld [vmem:[%s755 + $0x2d8] sm:$0x1]
    %v770 = vld [vmem:[%s755 + $0x310] sm:$0x1]
    %v771 = vld [vmem:[%s755 + $0x348] sm:$0x1]
    %772 = vset.pattern.permute.xlu0 4
    %773 = vperm.xlu0 %772, %v66
    %v774 = vpop.permute.xlu0 %773
    %776 = vset.pattern.permute.xlu0 4
    %777 = vperm.xlu0 %776, %v67
    %v778 = vpop.permute.xlu0 %777
    %v796 = vrot.slane %v757, 7
    %v797 = vsel %vm180, %v796, %v756
    %v798 = vrot.slane %v758, 6
    %v799 = vsel %vm183, %v798, %v797
    %v800 = vrot.slane %v759, 5
    %v801 = vsel %vm186, %v800, %v799
    %v802 = vrot.slane %v760, 4
    %v803 = vsel %vm189, %v802, %v801
    %v804 = vrot.slane %v761, 3
    %v805 = vsel %vm192, %v804, %v803
    %v806 = vrot.slane %v762, 2
    %v807 = vsel %vm195, %v806, %v805
    %v808 = vrot.slane %v763, 1
    %v809 = vsel %vm198, %v808, %v807
    %v810 = vrot.slane %v765, 7
    %v811 = vsel %vm180, %v810, %v764
    %v812 = vrot.slane %v766, 6
    %v813 = vsel %vm183, %v812, %v811
    %v814 = vrot.slane %v767, 5
    %v815 = vsel %vm186, %v814, %v813
    %v816 = vrot.slane %v768, 4
    %v817 = vsel %vm189, %v816, %v815
    %v818 = vrot.slane %v769, 3
    %v819 = vsel %vm192, %v818, %v817
    %v820 = vrot.slane %v770, 2
    %v821 = vsel %vm195, %v820, %v819
    %v822 = vrot.slane %v771, 1
    %v823 = vsel %vm198, %v822, %v821
    %v826 = vmul.f32 %v774, %v809
    %v827 = vmul.f32 %v778, %v823
    %v828 = vadd.f32 %v679, %v826
    %v829 = vadd.f32 %v680, %v827
    %v830 = vld [vmem:[%s3 + $0x5] sm:$0x1]
    %v831 = vld [vmem:[%s3 + $0x3d] sm:$0x1]
    %v832 = vld [vmem:[%s3 + $0x75] sm:$0x1]
    %v833 = vld [vmem:[%s3 + $0xad] sm:$0x1]
    %v834 = vld [vmem:[%s3 + $0xe5] sm:$0x1]
    %v835 = vld [vmem:[%s3 + $0x11d] sm:$0x1]
    %v836 = vld [vmem:[%s3 + $0x155] sm:$0x1]
    %v837 = vld [vmem:[%s3 + $0x18d] sm:$0x1]
    %v838 = vld [vmem:[%s3 + $0x1c5] sm:$0x1]
    %v839 = vld [vmem:[%s3 + $0x1fd] sm:$0x1]
    %v840 = vld [vmem:[%s3 + $0x235] sm:$0x1]
    %v841 = vld [vmem:[%s3 + $0x26d] sm:$0x1]
    %v842 = vld [vmem:[%s3 + $0x2a5] sm:$0x1]
    %v843 = vld [vmem:[%s3 + $0x2dd] sm:$0x1]
    %v844 = vld [vmem:[%s3 + $0x315] sm:$0x1]
    %v845 = vld [vmem:[%s3 + $0x34d] sm:$0x1]
    %846 = vset.pattern.permute.xlu0 5
    %847 = vperm.xlu0 %846, %v78
    %v848 = vpop.permute.xlu0 %847
    %850 = vset.pattern.permute.xlu0 5
    %851 = vperm.xlu0 %850, %v79
    %v852 = vpop.permute.xlu0 %851
    %v870 = vrot.slane %v831, 7
    %v871 = vsel %vm180, %v870, %v830
    %v872 = vrot.slane %v832, 6
    %v873 = vsel %vm183, %v872, %v871
    %v874 = vrot.slane %v833, 5
    %v875 = vsel %vm186, %v874, %v873
    %v876 = vrot.slane %v834, 4
    %v877 = vsel %vm189, %v876, %v875
    %v878 = vrot.slane %v835, 3
    %v879 = vsel %vm192, %v878, %v877
    %v880 = vrot.slane %v836, 2
    %v881 = vsel %vm195, %v880, %v879
    %v882 = vrot.slane %v837, 1
    %v883 = vsel %vm198, %v882, %v881
    %v884 = vrot.slane %v839, 7
    %v885 = vsel %vm180, %v884, %v838
    %v886 = vrot.slane %v840, 6
    %v887 = vsel %vm183, %v886, %v885
    %v888 = vrot.slane %v841, 5
    %v889 = vsel %vm186, %v888, %v887
    %v890 = vrot.slane %v842, 4
    %v891 = vsel %vm189, %v890, %v889
    %v892 = vrot.slane %v843, 3
    %v893 = vsel %vm192, %v892, %v891
    %v894 = vrot.slane %v844, 2
    %v895 = vsel %vm195, %v894, %v893
    %v896 = vrot.slane %v845, 1
    %v897 = vsel %vm198, %v896, %v895
    %v900 = vmul.f32 %v848, %v883
    %v901 = vmul.f32 %v852, %v897
    %v902 = vadd.f32 %v753, %v900
    %v903 = vadd.f32 %v754, %v901
    %s904 = scalar_lea.vmem %s3, 40
    %v905 = vld [vmem:[%s904] sm:$0x1]
    %v906 = vld [vmem:[%s904 + $0x38] sm:$0x1]
    %v907 = vld [vmem:[%s904 + $0x70] sm:$0x1]
    %v908 = vld [vmem:[%s904 + $0xa8] sm:$0x1]
    %v909 = vld [vmem:[%s904 + $0xe0] sm:$0x1]
    %v910 = vld [vmem:[%s904 + $0x118] sm:$0x1]
    %v911 = vld [vmem:[%s904 + $0x150] sm:$0x1]
    %v912 = vld [vmem:[%s904 + $0x188] sm:$0x1]
    %v913 = vld [vmem:[%s904 + $0x1c0] sm:$0x1]
    %v914 = vld [vmem:[%s904 + $0x1f8] sm:$0x1]
    %v915 = vld [vmem:[%s904 + $0x230] sm:$0x1]
    %v916 = vld [vmem:[%s904 + $0x268] sm:$0x1]
    %v917 = vld [vmem:[%s904 + $0x2a0] sm:$0x1]
    %v918 = vld [vmem:[%s904 + $0x2d8] sm:$0x1]
    %v919 = vld [vmem:[%s904 + $0x310] sm:$0x1]
    %v920 = vld [vmem:[%s904 + $0x348] sm:$0x1]
    %921 = vset.pattern.permute.xlu0 5
    %922 = vperm.xlu0 %921, %v66
    %v923 = vpop.permute.xlu0 %922
    %925 = vset.pattern.permute.xlu0 5
    %926 = vperm.xlu0 %925, %v67
    %v927 = vpop.permute.xlu0 %926
    %v945 = vrot.slane %v906, 7
    %v946 = vsel %vm180, %v945, %v905
    %v947 = vrot.slane %v907, 6
    %v948 = vsel %vm183, %v947, %v946
    %v949 = vrot.slane %v908, 5
    %v950 = vsel %vm186, %v949, %v948
    %v951 = vrot.slane %v909, 4
    %v952 = vsel %vm189, %v951, %v950
    %v953 = vrot.slane %v910, 3
    %v954 = vsel %vm192, %v953, %v952
    %v955 = vrot.slane %v911, 2
    %v956 = vsel %vm195, %v955, %v954
    %v957 = vrot.slane %v912, 1
    %v958 = vsel %vm198, %v957, %v956
    %v959 = vrot.slane %v914, 7
    %v960 = vsel %vm180, %v959, %v913
    %v961 = vrot.slane %v915, 6
    %v962 = vsel %vm183, %v961, %v960
    %v963 = vrot.slane %v916, 5
    %v964 = vsel %vm186, %v963, %v962
    %v965 = vrot.slane %v917, 4
    %v966 = vsel %vm189, %v965, %v964
    %v967 = vrot.slane %v918, 3
    %v968 = vsel %vm192, %v967, %v966
    %v969 = vrot.slane %v919, 2
    %v970 = vsel %vm195, %v969, %v968
    %v971 = vrot.slane %v920, 1
    %v972 = vsel %vm198, %v971, %v970
    %v975 = vmul.f32 %v923, %v958
    %v976 = vmul.f32 %v927, %v972
    %v977 = vadd.f32 %v828, %v975
    %v978 = vadd.f32 %v829, %v976
    %v979 = vld [vmem:[%s3 + $0x6] sm:$0x1]
    %v980 = vld [vmem:[%s3 + $0x3e] sm:$0x1]
    %v981 = vld [vmem:[%s3 + $0x76] sm:$0x1]
    %v982 = vld [vmem:[%s3 + $0xae] sm:$0x1]
    %v983 = vld [vmem:[%s3 + $0xe6] sm:$0x1]
    %v984 = vld [vmem:[%s3 + $0x11e] sm:$0x1]
    %v985 = vld [vmem:[%s3 + $0x156] sm:$0x1]
    %v986 = vld [vmem:[%s3 + $0x18e] sm:$0x1]
    %v987 = vld [vmem:[%s3 + $0x1c6] sm:$0x1]
    %v988 = vld [vmem:[%s3 + $0x1fe] sm:$0x1]
    %v989 = vld [vmem:[%s3 + $0x236] sm:$0x1]
    %v990 = vld [vmem:[%s3 + $0x26e] sm:$0x1]
    %v991 = vld [vmem:[%s3 + $0x2a6] sm:$0x1]
    %v992 = vld [vmem:[%s3 + $0x2de] sm:$0x1]
    %v993 = vld [vmem:[%s3 + $0x316] sm:$0x1]
    %v994 = vld [vmem:[%s3 + $0x34e] sm:$0x1]
    %995 = vset.pattern.permute.xlu0 6
    %996 = vperm.xlu0 %995, %v78
    %v997 = vpop.permute.xlu0 %996
    %999 = vset.pattern.permute.xlu0 6
    %1000 = vperm.xlu0 %999, %v79
    %v1001 = vpop.permute.xlu0 %1000
    %v1019 = vrot.slane %v980, 7
    %v1020 = vsel %vm180, %v1019, %v979
    %v1021 = vrot.slane %v981, 6
    %v1022 = vsel %vm183, %v1021, %v1020
    %v1023 = vrot.slane %v982, 5
    %v1024 = vsel %vm186, %v1023, %v1022
    %v1025 = vrot.slane %v983, 4
    %v1026 = vsel %vm189, %v1025, %v1024
    %v1027 = vrot.slane %v984, 3
    %v1028 = vsel %vm192, %v1027, %v1026
    %v1029 = vrot.slane %v985, 2
    %v1030 = vsel %vm195, %v1029, %v1028
    %v1031 = vrot.slane %v986, 1
    %v1032 = vsel %vm198, %v1031, %v1030
    %v1033 = vrot.slane %v988, 7
    %v1034 = vsel %vm180, %v1033, %v987
    %v1035 = vrot.slane %v989, 6
    %v1036 = vsel %vm183, %v1035, %v1034
    %v1037 = vrot.slane %v990, 5
    %v1038 = vsel %vm186, %v1037, %v1036
    %v1039 = vrot.slane %v991, 4
    %v1040 = vsel %vm189, %v1039, %v1038
    %v1041 = vrot.slane %v992, 3
    %v1042 = vsel %vm192, %v1041, %v1040
    %v1043 = vrot.slane %v993, 2
    %v1044 = vsel %vm195, %v1043, %v1042
    %v1045 = vrot.slane %v994, 1
    %v1046 = vsel %vm198, %v1045, %v1044
    %v1049 = vmul.f32 %v997, %v1032
    %v1050 = vmul.f32 %v1001, %v1046
    %v1051 = vadd.f32 %v902, %v1049
    %v1052 = vadd.f32 %v903, %v1050
    %s1053 = scalar_lea.vmem %s3, 48
    %v1054 = vld [vmem:[%s1053] sm:$0x1]
    %v1055 = vld [vmem:[%s1053 + $0x38] sm:$0x1]
    %v1056 = vld [vmem:[%s1053 + $0x70] sm:$0x1]
    %v1057 = vld [vmem:[%s1053 + $0xa8] sm:$0x1]
    %v1058 = vld [vmem:[%s1053 + $0xe0] sm:$0x1]
    %v1059 = vld [vmem:[%s1053 + $0x118] sm:$0x1]
    %v1060 = vld [vmem:[%s1053 + $0x150] sm:$0x1]
    %v1061 = vld [vmem:[%s1053 + $0x188] sm:$0x1]
    %v1062 = vld [vmem:[%s1053 + $0x1c0] sm:$0x1]
    %v1063 = vld [vmem:[%s1053 + $0x1f8] sm:$0x1]
    %v1064 = vld [vmem:[%s1053 + $0x230] sm:$0x1]
    %v1065 = vld [vmem:[%s1053 + $0x268] sm:$0x1]
    %v1066 = vld [vmem:[%s1053 + $0x2a0] sm:$0x1]
    %v1067 = vld [vmem:[%s1053 + $0x2d8] sm:$0x1]
    %v1068 = vld [vmem:[%s1053 + $0x310] sm:$0x1]
    %v1069 = vld [vmem:[%s1053 + $0x348] sm:$0x1]
    %1070 = vset.pattern.permute.xlu0 6
    %1071 = vperm.xlu0 %1070, %v66
    %v1072 = vpop.permute.xlu0 %1071
    %1074 = vset.pattern.permute.xlu0 6
    %1075 = vperm.xlu0 %1074, %v67
    %v1076 = vpop.permute.xlu0 %1075
    %v1094 = vrot.slane %v1055, 7
    %v1095 = vsel %vm180, %v1094, %v1054
    %v1096 = vrot.slane %v1056, 6
    %v1097 = vsel %vm183, %v1096, %v1095
    %v1098 = vrot.slane %v1057, 5
    %v1099 = vsel %vm186, %v1098, %v1097
    %v1100 = vrot.slane %v1058, 4
    %v1101 = vsel %vm189, %v1100, %v1099
    %v1102 = vrot.slane %v1059, 3
    %v1103 = vsel %vm192, %v1102, %v1101
    %v1104 = vrot.slane %v1060, 2
    %v1105 = vsel %vm195, %v1104, %v1103
    %v1106 = vrot.slane %v1061, 1
    %v1107 = vsel %vm198, %v1106, %v1105
    %v1108 = vrot.slane %v1063, 7
    %v1109 = vsel %vm180, %v1108, %v1062
    %v1110 = vrot.slane %v1064, 6
    %v1111 = vsel %vm183, %v1110, %v1109
    %v1112 = vrot.slane %v1065, 5
    %v1113 = vsel %vm186, %v1112, %v1111
    %v1114 = vrot.slane %v1066, 4
    %v1115 = vsel %vm189, %v1114, %v1113
    %v1116 = vrot.slane %v1067, 3
    %v1117 = vsel %vm192, %v1116, %v1115
    %v1118 = vrot.slane %v1068, 2
    %v1119 = vsel %vm195, %v1118, %v1117
    %v1120 = vrot.slane %v1069, 1
    %v1121 = vsel %vm198, %v1120, %v1119
    %v1124 = vmul.f32 %v1072, %v1107
    %v1125 = vmul.f32 %v1076, %v1121
    %v1126 = vadd.f32 %v977, %v1124
    %v1127 = vadd.f32 %v978, %v1125
    %1130 = vrot.lane.b32.xlu0 %v1051, 64
    %v1131 = vpop.permute.xlu0 %1130
    %1132 = vrot.lane.b32.xlu0 %v1052, 64
    %v1133 = vpop.permute.xlu0 %1132
    %vm1136 = vcmask 1048064
    %1137 = vst.msk [vmem:[#allocation2] sm:$0xff] %vm1136, %v1131
    %1138 = vst.msk [vmem:[#allocation2 + $0x8] sm:$0xff] %vm1136, %v1133
    %1141 = vrot.lane.b32.xlu0 %v1126, 64
    %v1142 = vpop.permute.xlu0 %1141
    %1143 = vrot.lane.b32.xlu0 %v1127, 64
    %v1144 = vpop.permute.xlu0 %1143
    %1147 = vst.msk [vmem:[#allocation3] sm:$0xff] %vm1136, %v1142
    %1148 = vst.msk [vmem:[#allocation3 + $0x8] sm:$0xff] %vm1136, %v1144
    %v1149 = vld [vmem:[%s308] sm:$0x1]
    %v1150 = vld [vmem:[%s308 + $0x38] sm:$0x1]
    %v1151 = vld [vmem:[%s308 + $0x70] sm:$0x1]
    %v1152 = vld [vmem:[%s308 + $0xa8] sm:$0x1]
    %v1153 = vld [vmem:[%s308 + $0xe0] sm:$0x1]
    %v1154 = vld [vmem:[%s308 + $0x118] sm:$0x1]
    %v1155 = vld [vmem:[%s308 + $0x150] sm:$0x1]
    %v1156 = vld [vmem:[%s308 + $0x188] sm:$0x1]
    %v1157 = vld [vmem:[%s308 + $0x1c0] sm:$0x1]
    %v1158 = vld [vmem:[%s308 + $0x1f8] sm:$0x1]
    %v1159 = vld [vmem:[%s308 + $0x230] sm:$0x1]
    %v1160 = vld [vmem:[%s308 + $0x268] sm:$0x1]
    %v1161 = vld [vmem:[%s308 + $0x2a0] sm:$0x1]
    %v1162 = vld [vmem:[%s308 + $0x2d8] sm:$0x1]
    %v1163 = vld [vmem:[%s308 + $0x310] sm:$0x1]
    %v1164 = vld [vmem:[%s308 + $0x348] sm:$0x1]
    %v1181 = vrot.slane %v1150, 7
    %v1182 = vsel %vm180, %v1181, %v1149
    %v1183 = vrot.slane %v1151, 6
    %v1184 = vsel %vm183, %v1183, %v1182
    %v1185 = vrot.slane %v1152, 5
    %v1186 = vsel %vm186, %v1185, %v1184
    %v1187 = vrot.slane %v1153, 4
    %v1188 = vsel %vm189, %v1187, %v1186
    %v1189 = vrot.slane %v1154, 3
    %v1190 = vsel %vm192, %v1189, %v1188
    %v1191 = vrot.slane %v1155, 2
    %v1192 = vsel %vm195, %v1191, %v1190
    %v1193 = vrot.slane %v1156, 1
    %v1194 = vsel %vm198, %v1193, %v1192
    %v1195 = vrot.slane %v1158, 7
    %v1196 = vsel %vm180, %v1195, %v1157
    %v1197 = vrot.slane %v1159, 6
    %v1198 = vsel %vm183, %v1197, %v1196
    %v1199 = vrot.slane %v1160, 5
    %v1200 = vsel %vm186, %v1199, %v1198
    %v1201 = vrot.slane %v1161, 4
    %v1202 = vsel %vm189, %v1201, %v1200
    %v1203 = vrot.slane %v1162, 3
    %v1204 = vsel %vm192, %v1203, %v1202
    %v1205 = vrot.slane %v1163, 2
    %v1206 = vsel %vm195, %v1205, %v1204
    %v1207 = vrot.slane %v1164, 1
    %v1208 = vsel %vm198, %v1207, %v1206
    %v1211 = vmul.f32 %v156, %v1194
    %v1212 = vmul.f32 %v161, %v1208
    %v1213 = vadd.f32 %v1211, 0.0
    %v1214 = vadd.f32 %v1212, 0.0
    %v1215 = vld [vmem:[%s3 + $0x1] sm:$0x1]
    %v1216 = vld [vmem:[%s3 + $0x39] sm:$0x1]
    %v1217 = vld [vmem:[%s3 + $0x71] sm:$0x1]
    %v1218 = vld [vmem:[%s3 + $0xa9] sm:$0x1]
    %v1219 = vld [vmem:[%s3 + $0xe1] sm:$0x1]
    %v1220 = vld [vmem:[%s3 + $0x119] sm:$0x1]
    %v1221 = vld [vmem:[%s3 + $0x151] sm:$0x1]
    %v1222 = vld [vmem:[%s3 + $0x189] sm:$0x1]
    %v1223 = vld [vmem:[%s3 + $0x1c1] sm:$0x1]
    %v1224 = vld [vmem:[%s3 + $0x1f9] sm:$0x1]
    %v1225 = vld [vmem:[%s3 + $0x231] sm:$0x1]
    %v1226 = vld [vmem:[%s3 + $0x269] sm:$0x1]
    %v1227 = vld [vmem:[%s3 + $0x2a1] sm:$0x1]
    %v1228 = vld [vmem:[%s3 + $0x2d9] sm:$0x1]
    %v1229 = vld [vmem:[%s3 + $0x311] sm:$0x1]
    %v1230 = vld [vmem:[%s3 + $0x349] sm:$0x1]
    %v1247 = vrot.slane %v1216, 7
    %v1248 = vsel %vm180, %v1247, %v1215
    %v1249 = vrot.slane %v1217, 6
    %v1250 = vsel %vm183, %v1249, %v1248
    %v1251 = vrot.slane %v1218, 5
    %v1252 = vsel %vm186, %v1251, %v1250
    %v1253 = vrot.slane %v1219, 4
    %v1254 = vsel %vm189, %v1253, %v1252
    %v1255 = vrot.slane %v1220, 3
    %v1256 = vsel %vm192, %v1255, %v1254
    %v1257 = vrot.slane %v1221, 2
    %v1258 = vsel %vm195, %v1257, %v1256
    %v1259 = vrot.slane %v1222, 1
    %v1260 = vsel %vm198, %v1259, %v1258
    %v1261 = vrot.slane %v1224, 7
    %v1262 = vsel %vm180, %v1261, %v1223
    %v1263 = vrot.slane %v1225, 6
    %v1264 = vsel %vm183, %v1263, %v1262
    %v1265 = vrot.slane %v1226, 5
    %v1266 = vsel %vm186, %v1265, %v1264
    %v1267 = vrot.slane %v1227, 4
    %v1268 = vsel %vm189, %v1267, %v1266
    %v1269 = vrot.slane %v1228, 3
    %v1270 = vsel %vm192, %v1269, %v1268
    %v1271 = vrot.slane %v1229, 2
    %v1272 = vsel %vm195, %v1271, %v1270
    %v1273 = vrot.slane %v1230, 1
    %v1274 = vsel %vm198, %v1273, %v1272
    %v1277 = vmul.f32 %v223, %v1260
    %v1278 = vmul.f32 %v228, %v1274
    %v1279 = vadd.f32 %v1277, 0.0
    %v1280 = vadd.f32 %v1278, 0.0
    %v1281 = vld [vmem:[%s308 + $0x1] sm:$0x1]
    %v1282 = vld [vmem:[%s308 + $0x39] sm:$0x1]
    %v1283 = vld [vmem:[%s308 + $0x71] sm:$0x1]
    %v1284 = vld [vmem:[%s308 + $0xa9] sm:$0x1]
    %v1285 = vld [vmem:[%s308 + $0xe1] sm:$0x1]
    %v1286 = vld [vmem:[%s308 + $0x119] sm:$0x1]
    %v1287 = vld [vmem:[%s308 + $0x151] sm:$0x1]
    %v1288 = vld [vmem:[%s308 + $0x189] sm:$0x1]
    %v1289 = vld [vmem:[%s308 + $0x1c1] sm:$0x1]
    %v1290 = vld [vmem:[%s308 + $0x1f9] sm:$0x1]
    %v1291 = vld [vmem:[%s308 + $0x231] sm:$0x1]
    %v1292 = vld [vmem:[%s308 + $0x269] sm:$0x1]
    %v1293 = vld [vmem:[%s308 + $0x2a1] sm:$0x1]
    %v1294 = vld [vmem:[%s308 + $0x2d9] sm:$0x1]
    %v1295 = vld [vmem:[%s308 + $0x311] sm:$0x1]
    %v1296 = vld [vmem:[%s308 + $0x349] sm:$0x1]
    %v1313 = vrot.slane %v1282, 7
    %v1314 = vsel %vm180, %v1313, %v1281
    %v1315 = vrot.slane %v1283, 6
    %v1316 = vsel %vm183, %v1315, %v1314
    %v1317 = vrot.slane %v1284, 5
    %v1318 = vsel %vm186, %v1317, %v1316
    %v1319 = vrot.slane %v1285, 4
    %v1320 = vsel %vm189, %v1319, %v1318
    %v1321 = vrot.slane %v1286, 3
    %v1322 = vsel %vm192, %v1321, %v1320
    %v1323 = vrot.slane %v1287, 2
    %v1324 = vsel %vm195, %v1323, %v1322
    %v1325 = vrot.slane %v1288, 1
    %v1326 = vsel %vm198, %v1325, %v1324
    %v1327 = vrot.slane %v1290, 7
    %v1328 = vsel %vm180, %v1327, %v1289
    %v1329 = vrot.slane %v1291, 6
    %v1330 = vsel %vm183, %v1329, %v1328
    %v1331 = vrot.slane %v1292, 5
    %v1332 = vsel %vm186, %v1331, %v1330
    %v1333 = vrot.slane %v1293, 4
    %v1334 = vsel %vm189, %v1333, %v1332
    %v1335 = vrot.slane %v1294, 3
    %v1336 = vsel %vm192, %v1335, %v1334
    %v1337 = vrot.slane %v1295, 2
    %v1338 = vsel %vm195, %v1337, %v1336
    %v1339 = vrot.slane %v1296, 1
    %v1340 = vsel %vm198, %v1339, %v1338
    %v1343 = vmul.f32 %v252, %v1326
    %v1344 = vmul.f32 %v256, %v1340
    %v1345 = vadd.f32 %v1213, %v1343
    %v1346 = vadd.f32 %v1214, %v1344
    %v1347 = vmul.f32 %v327, %v1326
    %v1348 = vmul.f32 %v331, %v1340
    %v1349 = vadd.f32 %v1279, %v1347
    %v1350 = vadd.f32 %v1280, %v1348
    %v1351 = vld [vmem:[%s308 + $0x2] sm:$0x1]
    %v1352 = vld [vmem:[%s308 + $0x3a] sm:$0x1]
    %v1353 = vld [vmem:[%s308 + $0x72] sm:$0x1]
    %v1354 = vld [vmem:[%s308 + $0xaa] sm:$0x1]
    %v1355 = vld [vmem:[%s308 + $0xe2] sm:$0x1]
    %v1356 = vld [vmem:[%s308 + $0x11a] sm:$0x1]
    %v1357 = vld [vmem:[%s308 + $0x152] sm:$0x1]
    %v1358 = vld [vmem:[%s308 + $0x18a] sm:$0x1]
    %v1359 = vld [vmem:[%s308 + $0x1c2] sm:$0x1]
    %v1360 = vld [vmem:[%s308 + $0x1fa] sm:$0x1]
    %v1361 = vld [vmem:[%s308 + $0x232] sm:$0x1]
    %v1362 = vld [vmem:[%s308 + $0x26a] sm:$0x1]
    %v1363 = vld [vmem:[%s308 + $0x2a2] sm:$0x1]
    %v1364 = vld [vmem:[%s308 + $0x2da] sm:$0x1]
    %v1365 = vld [vmem:[%s308 + $0x312] sm:$0x1]
    %v1366 = vld [vmem:[%s308 + $0x34a] sm:$0x1]
    %v1383 = vrot.slane %v1352, 7
    %v1384 = vsel %vm180, %v1383, %v1351
    %v1385 = vrot.slane %v1353, 6
    %v1386 = vsel %vm183, %v1385, %v1384
    %v1387 = vrot.slane %v1354, 5
    %v1388 = vsel %vm186, %v1387, %v1386
    %v1389 = vrot.slane %v1355, 4
    %v1390 = vsel %vm189, %v1389, %v1388
    %v1391 = vrot.slane %v1356, 3
    %v1392 = vsel %vm192, %v1391, %v1390
    %v1393 = vrot.slane %v1357, 2
    %v1394 = vsel %vm195, %v1393, %v1392
    %v1395 = vrot.slane %v1358, 1
    %v1396 = vsel %vm198, %v1395, %v1394
    %v1397 = vrot.slane %v1360, 7
    %v1398 = vsel %vm180, %v1397, %v1359
    %v1399 = vrot.slane %v1361, 6
    %v1400 = vsel %vm183, %v1399, %v1398
    %v1401 = vrot.slane %v1362, 5
    %v1402 = vsel %vm186, %v1401, %v1400
    %v1403 = vrot.slane %v1363, 4
    %v1404 = vsel %vm189, %v1403, %v1402
    %v1405 = vrot.slane %v1364, 3
    %v1406 = vsel %vm192, %v1405, %v1404
    %v1407 = vrot.slane %v1365, 2
    %v1408 = vsel %vm195, %v1407, %v1406
    %v1409 = vrot.slane %v1366, 1
    %v1410 = vsel %vm198, %v1409, %v1408
    %v1413 = vmul.f32 %v401, %v1396
    %v1414 = vmul.f32 %v405, %v1410
    %v1415 = vadd.f32 %v1345, %v1413
    %v1416 = vadd.f32 %v1346, %v1414
    %v1417 = vld [vmem:[%s457 + $0x1] sm:$0x1]
    %v1418 = vld [vmem:[%s457 + $0x39] sm:$0x1]
    %v1419 = vld [vmem:[%s457 + $0x71] sm:$0x1]
    %v1420 = vld [vmem:[%s457 + $0xa9] sm:$0x1]
    %v1421 = vld [vmem:[%s457 + $0xe1] sm:$0x1]
    %v1422 = vld [vmem:[%s457 + $0x119] sm:$0x1]
    %v1423 = vld [vmem:[%s457 + $0x151] sm:$0x1]
    %v1424 = vld [vmem:[%s457 + $0x189] sm:$0x1]
    %v1425 = vld [vmem:[%s457 + $0x1c1] sm:$0x1]
    %v1426 = vld [vmem:[%s457 + $0x1f9] sm:$0x1]
    %v1427 = vld [vmem:[%s457 + $0x231] sm:$0x1]
    %v1428 = vld [vmem:[%s457 + $0x269] sm:$0x1]
    %v1429 = vld [vmem:[%s457 + $0x2a1] sm:$0x1]
    %v1430 = vld [vmem:[%s457 + $0x2d9] sm:$0x1]
    %v1431 = vld [vmem:[%s457 + $0x311] sm:$0x1]
    %v1432 = vld [vmem:[%s457 + $0x349] sm:$0x1]
    %v1449 = vrot.slane %v1418, 7
    %v1450 = vsel %vm180, %v1449, %v1417
    %v1451 = vrot.slane %v1419, 6
    %v1452 = vsel %vm183, %v1451, %v1450
    %v1453 = vrot.slane %v1420, 5
    %v1454 = vsel %vm186, %v1453, %v1452
    %v1455 = vrot.slane %v1421, 4
    %v1456 = vsel %vm189, %v1455, %v1454
    %v1457 = vrot.slane %v1422, 3
    %v1458 = vsel %vm192, %v1457, %v1456
    %v1459 = vrot.slane %v1423, 2
    %v1460 = vsel %vm195, %v1459, %v1458
    %v1461 = vrot.slane %v1424, 1
    %v1462 = vsel %vm198, %v1461, %v1460
    %v1463 = vrot.slane %v1426, 7
    %v1464 = vsel %vm180, %v1463, %v1425
    %v1465 = vrot.slane %v1427, 6
    %v1466 = vsel %vm183, %v1465, %v1464
    %v1467 = vrot.slane %v1428, 5
    %v1468 = vsel %vm186, %v1467, %v1466
    %v1469 = vrot.slane %v1429, 4
    %v1470 = vsel %vm189, %v1469, %v1468
    %v1471 = vrot.slane %v1430, 3
    %v1472 = vsel %vm192, %v1471, %v1470
    %v1473 = vrot.slane %v1431, 2
    %v1474 = vsel %vm195, %v1473, %v1472
    %v1475 = vrot.slane %v1432, 1
    %v1476 = vsel %vm198, %v1475, %v1474
    %v1479 = vmul.f32 %v476, %v1462
    %v1480 = vmul.f32 %v480, %v1476
    %v1481 = vadd.f32 %v1349, %v1479
    %v1482 = vadd.f32 %v1350, %v1480
    %v1483 = vld [vmem:[%s308 + $0x3] sm:$0x1]
    %v1484 = vld [vmem:[%s308 + $0x3b] sm:$0x1]
    %v1485 = vld [vmem:[%s308 + $0x73] sm:$0x1]
    %v1486 = vld [vmem:[%s308 + $0xab] sm:$0x1]
    %v1487 = vld [vmem:[%s308 + $0xe3] sm:$0x1]
    %v1488 = vld [vmem:[%s308 + $0x11b] sm:$0x1]
    %v1489 = vld [vmem:[%s308 + $0x153] sm:$0x1]
    %v1490 = vld [vmem:[%s308 + $0x18b] sm:$0x1]
    %v1491 = vld [vmem:[%s308 + $0x1c3] sm:$0x1]
    %v1492 = vld [vmem:[%s308 + $0x1fb] sm:$0x1]
    %v1493 = vld [vmem:[%s308 + $0x233] sm:$0x1]
    %v1494 = vld [vmem:[%s308 + $0x26b] sm:$0x1]
    %v1495 = vld [vmem:[%s308 + $0x2a3] sm:$0x1]
    %v1496 = vld [vmem:[%s308 + $0x2db] sm:$0x1]
    %v1497 = vld [vmem:[%s308 + $0x313] sm:$0x1]
    %v1498 = vld [vmem:[%s308 + $0x34b] sm:$0x1]
    %v1515 = vrot.slane %v1484, 7
    %v1516 = vsel %vm180, %v1515, %v1483
    %v1517 = vrot.slane %v1485, 6
    %v1518 = vsel %vm183, %v1517, %v1516
    %v1519 = vrot.slane %v1486, 5
    %v1520 = vsel %vm186, %v1519, %v1518
    %v1521 = vrot.slane %v1487, 4
    %v1522 = vsel %vm189, %v1521, %v1520
    %v1523 = vrot.slane %v1488, 3
    %v1524 = vsel %vm192, %v1523, %v1522
    %v1525 = vrot.slane %v1489, 2
    %v1526 = vsel %vm195, %v1525, %v1524
    %v1527 = vrot.slane %v1490, 1
    %v1528 = vsel %vm198, %v1527, %v1526
    %v1529 = vrot.slane %v1492, 7
    %v1530 = vsel %vm180, %v1529, %v1491
    %v1531 = vrot.slane %v1493, 6
    %v1532 = vsel %vm183, %v1531, %v1530
    %v1533 = vrot.slane %v1494, 5
    %v1534 = vsel %vm186, %v1533, %v1532
    %v1535 = vrot.slane %v1495, 4
    %v1536 = vsel %vm189, %v1535, %v1534
    %v1537 = vrot.slane %v1496, 3
    %v1538 = vsel %vm192, %v1537, %v1536
    %v1539 = vrot.slane %v1497, 2
    %v1540 = vsel %vm195, %v1539, %v1538
    %v1541 = vrot.slane %v1498, 1
    %v1542 = vsel %vm198, %v1541, %v1540
    %v1545 = vmul.f32 %v550, %v1528
    %v1546 = vmul.f32 %v554, %v1542
    %v1547 = vadd.f32 %v1415, %v1545
    %v1548 = vadd.f32 %v1416, %v1546
    %v1549 = vld [vmem:[%s606 + $0x1] sm:$0x1]
    %v1550 = vld [vmem:[%s606 + $0x39] sm:$0x1]
    %v1551 = vld [vmem:[%s606 + $0x71] sm:$0x1]
    %v1552 = vld [vmem:[%s606 + $0xa9] sm:$0x1]
    %v1553 = vld [vmem:[%s606 + $0xe1] sm:$0x1]
    %v1554 = vld [vmem:[%s606 + $0x119] sm:$0x1]
    %v1555 = vld [vmem:[%s606 + $0x151] sm:$0x1]
    %v1556 = vld [vmem:[%s606 + $0x189] sm:$0x1]
    %v1557 = vld [vmem:[%s606 + $0x1c1] sm:$0x1]
    %v1558 = vld [vmem:[%s606 + $0x1f9] sm:$0x1]
    %v1559 = vld [vmem:[%s606 + $0x231] sm:$0x1]
    %v1560 = vld [vmem:[%s606 + $0x269] sm:$0x1]
    %v1561 = vld [vmem:[%s606 + $0x2a1] sm:$0x1]
    %v1562 = vld [vmem:[%s606 + $0x2d9] sm:$0x1]
    %v1563 = vld [vmem:[%s606 + $0x311] sm:$0x1]
    %v1564 = vld [vmem:[%s606 + $0x349] sm:$0x1]
    %v1581 = vrot.slane %v1550, 7
    %v1582 = vsel %vm180, %v1581, %v1549
    %v1583 = vrot.slane %v1551, 6
    %v1584 = vsel %vm183, %v1583, %v1582
    %v1585 = vrot.slane %v1552, 5
    %v1586 = vsel %vm186, %v1585, %v1584
    %v1587 = vrot.slane %v1553, 4
    %v1588 = vsel %vm189, %v1587, %v1586
    %v1589 = vrot.slane %v1554, 3
    %v1590 = vsel %vm192, %v1589, %v1588
    %v1591 = vrot.slane %v1555, 2
    %v1592 = vsel %vm195, %v1591, %v1590
    %v1593 = vrot.slane %v1556, 1
    %v1594 = vsel %vm198, %v1593, %v1592
    %v1595 = vrot.slane %v1558, 7
    %v1596 = vsel %vm180, %v1595, %v1557
    %v1597 = vrot.slane %v1559, 6
    %v1598 = vsel %vm183, %v1597, %v1596
    %v1599 = vrot.slane %v1560, 5
    %v1600 = vsel %vm186, %v1599, %v1598
    %v1601 = vrot.slane %v1561, 4
    %v1602 = vsel %vm189, %v1601, %v1600
    %v1603 = vrot.slane %v1562, 3
    %v1604 = vsel %vm192, %v1603, %v1602
    %v1605 = vrot.slane %v1563, 2
    %v1606 = vsel %vm195, %v1605, %v1604
    %v1607 = vrot.slane %v1564, 1
    %v1608 = vsel %vm198, %v1607, %v1606
    %v1611 = vmul.f32 %v625, %v1594
    %v1612 = vmul.f32 %v629, %v1608
    %v1613 = vadd.f32 %v1481, %v1611
    %v1614 = vadd.f32 %v1482, %v1612
    %v1615 = vld [vmem:[%s308 + $0x4] sm:$0x1]
    %v1616 = vld [vmem:[%s308 + $0x3c] sm:$0x1]
    %v1617 = vld [vmem:[%s308 + $0x74] sm:$0x1]
    %v1618 = vld [vmem:[%s308 + $0xac] sm:$0x1]
    %v1619 = vld [vmem:[%s308 + $0xe4] sm:$0x1]
    %v1620 = vld [vmem:[%s308 + $0x11c] sm:$0x1]
    %v1621 = vld [vmem:[%s308 + $0x154] sm:$0x1]
    %v1622 = vld [vmem:[%s308 + $0x18c] sm:$0x1]
    %v1623 = vld [vmem:[%s308 + $0x1c4] sm:$0x1]
    %v1624 = vld [vmem:[%s308 + $0x1fc] sm:$0x1]
    %v1625 = vld [vmem:[%s308 + $0x234] sm:$0x1]
    %v1626 = vld [vmem:[%s308 + $0x26c] sm:$0x1]
    %v1627 = vld [vmem:[%s308 + $0x2a4] sm:$0x1]
    %v1628 = vld [vmem:[%s308 + $0x2dc] sm:$0x1]
    %v1629 = vld [vmem:[%s308 + $0x314] sm:$0x1]
    %v1630 = vld [vmem:[%s308 + $0x34c] sm:$0x1]
    %v1647 = vrot.slane %v1616, 7
    %v1648 = vsel %vm180, %v1647, %v1615
    %v1649 = vrot.slane %v1617, 6
    %v1650 = vsel %vm183, %v1649, %v1648
    %v1651 = vrot.slane %v1618, 5
    %v1652 = vsel %vm186, %v1651, %v1650
    %v1653 = vrot.slane %v1619, 4
    %v1654 = vsel %vm189, %v1653, %v1652
    %v1655 = vrot.slane %v1620, 3
    %v1656 = vsel %vm192, %v1655, %v1654
    %v1657 = vrot.slane %v1621, 2
    %v1658 = vsel %vm195, %v1657, %v1656
    %v1659 = vrot.slane %v1622, 1
    %v1660 = vsel %vm198, %v1659, %v1658
    %v1661 = vrot.slane %v1624, 7
    %v1662 = vsel %vm180, %v1661, %v1623
    %v1663 = vrot.slane %v1625, 6
    %v1664 = vsel %vm183, %v1663, %v1662
    %v1665 = vrot.slane %v1626, 5
    %v1666 = vsel %vm186, %v1665, %v1664
    %v1667 = vrot.slane %v1627, 4
    %v1668 = vsel %vm189, %v1667, %v1666
    %v1669 = vrot.slane %v1628, 3
    %v1670 = vsel %vm192, %v1669, %v1668
    %v1671 = vrot.slane %v1629, 2
    %v1672 = vsel %vm195, %v1671, %v1670
    %v1673 = vrot.slane %v1630, 1
    %v1674 = vsel %vm198, %v1673, %v1672
    %v1677 = vmul.f32 %v699, %v1660
    %v1678 = vmul.f32 %v703, %v1674
    %v1679 = vadd.f32 %v1547, %v1677
    %v1680 = vadd.f32 %v1548, %v1678
    %v1681 = vld [vmem:[%s755 + $0x1] sm:$0x1]
    %v1682 = vld [vmem:[%s755 + $0x39] sm:$0x1]
    %v1683 = vld [vmem:[%s755 + $0x71] sm:$0x1]
    %v1684 = vld [vmem:[%s755 + $0xa9] sm:$0x1]
    %v1685 = vld [vmem:[%s755 + $0xe1] sm:$0x1]
    %v1686 = vld [vmem:[%s755 + $0x119] sm:$0x1]
    %v1687 = vld [vmem:[%s755 + $0x151] sm:$0x1]
    %v1688 = vld [vmem:[%s755 + $0x189] sm:$0x1]
    %v1689 = vld [vmem:[%s755 + $0x1c1] sm:$0x1]
    %v1690 = vld [vmem:[%s755 + $0x1f9] sm:$0x1]
    %v1691 = vld [vmem:[%s755 + $0x231] sm:$0x1]
    %v1692 = vld [vmem:[%s755 + $0x269] sm:$0x1]
    %v1693 = vld [vmem:[%s755 + $0x2a1] sm:$0x1]
    %v1694 = vld [vmem:[%s755 + $0x2d9] sm:$0x1]
    %v1695 = vld [vmem:[%s755 + $0x311] sm:$0x1]
    %v1696 = vld [vmem:[%s755 + $0x349] sm:$0x1]
    %v1713 = vrot.slane %v1682, 7
    %v1714 = vsel %vm180, %v1713, %v1681
    %v1715 = vrot.slane %v1683, 6
    %v1716 = vsel %vm183, %v1715, %v1714
    %v1717 = vrot.slane %v1684, 5
    %v1718 = vsel %vm186, %v1717, %v1716
    %v1719 = vrot.slane %v1685, 4
    %v1720 = vsel %vm189, %v1719, %v1718
    %v1721 = vrot.slane %v1686, 3
    %v1722 = vsel %vm192, %v1721, %v1720
    %v1723 = vrot.slane %v1687, 2
    %v1724 = vsel %vm195, %v1723, %v1722
    %v1725 = vrot.slane %v1688, 1
    %v1726 = vsel %vm198, %v1725, %v1724
    %v1727 = vrot.slane %v1690, 7
    %v1728 = vsel %vm180, %v1727, %v1689
    %v1729 = vrot.slane %v1691, 6
    %v1730 = vsel %vm183, %v1729, %v1728
    %v1731 = vrot.slane %v1692, 5
    %v1732 = vsel %vm186, %v1731, %v1730
    %v1733 = vrot.slane %v1693, 4
    %v1734 = vsel %vm189, %v1733, %v1732
    %v1735 = vrot.slane %v1694, 3
    %v1736 = vsel %vm192, %v1735, %v1734
    %v1737 = vrot.slane %v1695, 2
    %v1738 = vsel %vm195, %v1737, %v1736
    %v1739 = vrot.slane %v1696, 1
    %v1740 = vsel %vm198, %v1739, %v1738
    %v1743 = vmul.f32 %v774, %v1726
    %v1744 = vmul.f32 %v778, %v1740
    %v1745 = vadd.f32 %v1613, %v1743
    %v1746 = vadd.f32 %v1614, %v1744
    %v1747 = vld [vmem:[%s308 + $0x5] sm:$0x1]
    %v1748 = vld [vmem:[%s308 + $0x3d] sm:$0x1]
    %v1749 = vld [vmem:[%s308 + $0x75] sm:$0x1]
    %v1750 = vld [vmem:[%s308 + $0xad] sm:$0x1]
    %v1751 = vld [vmem:[%s308 + $0xe5] sm:$0x1]
    %v1752 = vld [vmem:[%s308 + $0x11d] sm:$0x1]
    %v1753 = vld [vmem:[%s308 + $0x155] sm:$0x1]
    %v1754 = vld [vmem:[%s308 + $0x18d] sm:$0x1]
    %v1755 = vld [vmem:[%s308 + $0x1c5] sm:$0x1]
    %v1756 = vld [vmem:[%s308 + $0x1fd] sm:$0x1]
    %v1757 = vld [vmem:[%s308 + $0x235] sm:$0x1]
    %v1758 = vld [vmem:[%s308 + $0x26d] sm:$0x1]
    %v1759 = vld [vmem:[%s308 + $0x2a5] sm:$0x1]
    %v1760 = vld [vmem:[%s308 + $0x2dd] sm:$0x1]
    %v1761 = vld [vmem:[%s308 + $0x315] sm:$0x1]
    %v1762 = vld [vmem:[%s308 + $0x34d] sm:$0x1]
    %v1779 = vrot.slane %v1748, 7
    %v1780 = vsel %vm180, %v1779, %v1747
    %v1781 = vrot.slane %v1749, 6
    %v1782 = vsel %vm183, %v1781, %v1780
    %v1783 = vrot.slane %v1750, 5
    %v1784 = vsel %vm186, %v1783, %v1782
    %v1785 = vrot.slane %v1751, 4
    %v1786 = vsel %vm189, %v1785, %v1784
    %v1787 = vrot.slane %v1752, 3
    %v1788 = vsel %vm192, %v1787, %v1786
    %v1789 = vrot.slane %v1753, 2
    %v1790 = vsel %vm195, %v1789, %v1788
    %v1791 = vrot.slane %v1754, 1
    %v1792 = vsel %vm198, %v1791, %v1790
    %v1793 = vrot.slane %v1756, 7
    %v1794 = vsel %vm180, %v1793, %v1755
    %v1795 = vrot.slane %v1757, 6
    %v1796 = vsel %vm183, %v1795, %v1794
    %v1797 = vrot.slane %v1758, 5
    %v1798 = vsel %vm186, %v1797, %v1796
    %v1799 = vrot.slane %v1759, 4
    %v1800 = vsel %vm189, %v1799, %v1798
    %v1801 = vrot.slane %v1760, 3
    %v1802 = vsel %vm192, %v1801, %v1800
    %v1803 = vrot.slane %v1761, 2
    %v1804 = vsel %vm195, %v1803, %v1802
    %v1805 = vrot.slane %v1762, 1
    %v1806 = vsel %vm198, %v1805, %v1804
    %v1809 = vmul.f32 %v848, %v1792
    %v1810 = vmul.f32 %v852, %v1806
    %v1811 = vadd.f32 %v1679, %v1809
    %v1812 = vadd.f32 %v1680, %v1810
    %v1813 = vld [vmem:[%s904 + $0x1] sm:$0x1]
    %v1814 = vld [vmem:[%s904 + $0x39] sm:$0x1]
    %v1815 = vld [vmem:[%s904 + $0x71] sm:$0x1]
    %v1816 = vld [vmem:[%s904 + $0xa9] sm:$0x1]
    %v1817 = vld [vmem:[%s904 + $0xe1] sm:$0x1]
    %v1818 = vld [vmem:[%s904 + $0x119] sm:$0x1]
    %v1819 = vld [vmem:[%s904 + $0x151] sm:$0x1]
    %v1820 = vld [vmem:[%s904 + $0x189] sm:$0x1]
    %v1821 = vld [vmem:[%s904 + $0x1c1] sm:$0x1]
    %v1822 = vld [vmem:[%s904 + $0x1f9] sm:$0x1]
    %v1823 = vld [vmem:[%s904 + $0x231] sm:$0x1]
    %v1824 = vld [vmem:[%s904 + $0x269] sm:$0x1]
    %v1825 = vld [vmem:[%s904 + $0x2a1] sm:$0x1]
    %v1826 = vld [vmem:[%s904 + $0x2d9] sm:$0x1]
    %v1827 = vld [vmem:[%s904 + $0x311] sm:$0x1]
    %v1828 = vld [vmem:[%s904 + $0x349] sm:$0x1]
    %v1845 = vrot.slane %v1814, 7
    %v1846 = vsel %vm180, %v1845, %v1813
    %v1847 = vrot.slane %v1815, 6
    %v1848 = vsel %vm183, %v1847, %v1846
    %v1849 = vrot.slane %v1816, 5
    %v1850 = vsel %vm186, %v1849, %v1848
    %v1851 = vrot.slane %v1817, 4
    %v1852 = vsel %vm189, %v1851, %v1850
    %v1853 = vrot.slane %v1818, 3
    %v1854 = vsel %vm192, %v1853, %v1852
    %v1855 = vrot.slane %v1819, 2
    %v1856 = vsel %vm195, %v1855, %v1854
    %v1857 = vrot.slane %v1820, 1
    %v1858 = vsel %vm198, %v1857, %v1856
    %v1859 = vrot.slane %v1822, 7
    %v1860 = vsel %vm180, %v1859, %v1821
    %v1861 = vrot.slane %v1823, 6
    %v1862 = vsel %vm183, %v1861, %v1860
    %v1863 = vrot.slane %v1824, 5
    %v1864 = vsel %vm186, %v1863, %v1862
    %v1865 = vrot.slane %v1825, 4
    %v1866 = vsel %vm189, %v1865, %v1864
    %v1867 = vrot.slane %v1826, 3
    %v1868 = vsel %vm192, %v1867, %v1866
    %v1869 = vrot.slane %v1827, 2
    %v1870 = vsel %vm195, %v1869, %v1868
    %v1871 = vrot.slane %v1828, 1
    %v1872 = vsel %vm198, %v1871, %v1870
    %v1875 = vmul.f32 %v923, %v1858
    %v1876 = vmul.f32 %v927, %v1872
    %v1877 = vadd.f32 %v1745, %v1875
    %v1878 = vadd.f32 %v1746, %v1876
    %v1879 = vld [vmem:[%s308 + $0x6] sm:$0x1]
    %v1880 = vld [vmem:[%s308 + $0x3e] sm:$0x1]
    %v1881 = vld [vmem:[%s308 + $0x76] sm:$0x1]
    %v1882 = vld [vmem:[%s308 + $0xae] sm:$0x1]
    %v1883 = vld [vmem:[%s308 + $0xe6] sm:$0x1]
    %v1884 = vld [vmem:[%s308 + $0x11e] sm:$0x1]
    %v1885 = vld [vmem:[%s308 + $0x156] sm:$0x1]
    %v1886 = vld [vmem:[%s308 + $0x18e] sm:$0x1]
    %v1887 = vld [vmem:[%s308 + $0x1c6] sm:$0x1]
    %v1888 = vld [vmem:[%s308 + $0x1fe] sm:$0x1]
    %v1889 = vld [vmem:[%s308 + $0x236] sm:$0x1]
    %v1890 = vld [vmem:[%s308 + $0x26e] sm:$0x1]
    %v1891 = vld [vmem:[%s308 + $0x2a6] sm:$0x1]
    %v1892 = vld [vmem:[%s308 + $0x2de] sm:$0x1]
    %v1893 = vld [vmem:[%s308 + $0x316] sm:$0x1]
    %v1894 = vld [vmem:[%s308 + $0x34e] sm:$0x1]
    %v1911 = vrot.slane %v1880, 7
    %v1912 = vsel %vm180, %v1911, %v1879
    %v1913 = vrot.slane %v1881, 6
    %v1914 = vsel %vm183, %v1913, %v1912
    %v1915 = vrot.slane %v1882, 5
    %v1916 = vsel %vm186, %v1915, %v1914
    %v1917 = vrot.slane %v1883, 4
    %v1918 = vsel %vm189, %v1917, %v1916
    %v1919 = vrot.slane %v1884, 3
    %v1920 = vsel %vm192, %v1919, %v1918
    %v1921 = vrot.slane %v1885, 2
    %v1922 = vsel %vm195, %v1921, %v1920
    %v1923 = vrot.slane %v1886, 1
    %v1924 = vsel %vm198, %v1923, %v1922
    %v1925 = vrot.slane %v1888, 7
    %v1926 = vsel %vm180, %v1925, %v1887
    %v1927 = vrot.slane %v1889, 6
    %v1928 = vsel %vm183, %v1927, %v1926
    %v1929 = vrot.slane %v1890, 5
    %v1930 = vsel %vm186, %v1929, %v1928
    %v1931 = vrot.slane %v1891, 4
    %v1932 = vsel %vm189, %v1931, %v1930
    %v1933 = vrot.slane %v1892, 3
    %v1934 = vsel %vm192, %v1933, %v1932
    %v1935 = vrot.slane %v1893, 2
    %v1936 = vsel %vm195, %v1935, %v1934
    %v1937 = vrot.slane %v1894, 1
    %v1938 = vsel %vm198, %v1937, %v1936
    %v1941 = vmul.f32 %v997, %v1924
    %v1942 = vmul.f32 %v1001, %v1938
    %v1943 = vadd.f32 %v1811, %v1941
    %v1944 = vadd.f32 %v1812, %v1942
    %v1945 = vld [vmem:[%s1053 + $0x1] sm:$0x1]
    %v1946 = vld [vmem:[%s1053 + $0x39] sm:$0x1]
    %v1947 = vld [vmem:[%s1053 + $0x71] sm:$0x1]
    %v1948 = vld [vmem:[%s1053 + $0xa9] sm:$0x1]
    %v1949 = vld [vmem:[%s1053 + $0xe1] sm:$0x1]
    %v1950 = vld [vmem:[%s1053 + $0x119] sm:$0x1]
    %v1951 = vld [vmem:[%s1053 + $0x151] sm:$0x1]
    %v1952 = vld [vmem:[%s1053 + $0x189] sm:$0x1]
    %v1953 = vld [vmem:[%s1053 + $0x1c1] sm:$0x1]
    %v1954 = vld [vmem:[%s1053 + $0x1f9] sm:$0x1]
    %v1955 = vld [vmem:[%s1053 + $0x231] sm:$0x1]
    %v1956 = vld [vmem:[%s1053 + $0x269] sm:$0x1]
    %v1957 = vld [vmem:[%s1053 + $0x2a1] sm:$0x1]
    %v1958 = vld [vmem:[%s1053 + $0x2d9] sm:$0x1]
    %v1959 = vld [vmem:[%s1053 + $0x311] sm:$0x1]
    %v1960 = vld [vmem:[%s1053 + $0x349] sm:$0x1]
    %v1977 = vrot.slane %v1946, 7
    %v1978 = vsel %vm180, %v1977, %v1945
    %v1979 = vrot.slane %v1947, 6
    %v1980 = vsel %vm183, %v1979, %v1978
    %v1981 = vrot.slane %v1948, 5
    %v1982 = vsel %vm186, %v1981, %v1980
    %v1983 = vrot.slane %v1949, 4
    %v1984 = vsel %vm189, %v1983, %v1982
    %v1985 = vrot.slane %v1950, 3
    %v1986 = vsel %vm192, %v1985, %v1984
    %v1987 = vrot.slane %v1951, 2
    %v1988 = vsel %vm195, %v1987, %v1986
    %v1989 = vrot.slane %v1952, 1
    %v1990 = vsel %vm198, %v1989, %v1988
    %v1991 = vrot.slane %v1954, 7
    %v1992 = vsel %vm180, %v1991, %v1953
    %v1993 = vrot.slane %v1955, 6
    %v1994 = vsel %vm183, %v1993, %v1992
    %v1995 = vrot.slane %v1956, 5
    %v1996 = vsel %vm186, %v1995, %v1994
    %v1997 = vrot.slane %v1957, 4
    %v1998 = vsel %vm189, %v1997, %v1996
    %v1999 = vrot.slane %v1958, 3
    %v2000 = vsel %vm192, %v1999, %v1998
    %v2001 = vrot.slane %v1959, 2
    %v2002 = vsel %vm195, %v2001, %v2000
    %v2003 = vrot.slane %v1960, 1
    %v2004 = vsel %vm198, %v2003, %v2002
    %v2007 = vmul.f32 %v1072, %v1990
    %v2008 = vmul.f32 %v1076, %v2004
    %v2009 = vadd.f32 %v1877, %v2007
    %v2010 = vadd.f32 %v1878, %v2008
    %2013 = vrot.lane.b32.xlu0 %v1943, 64
    %v2014 = vpop.permute.xlu0 %2013
    %2015 = vrot.lane.b32.xlu0 %v1944, 64
    %v2016 = vpop.permute.xlu0 %2015
    %2019 = vst.msk [vmem:[#allocation2 + $0x10] sm:$0xff] %vm1136, %v2014
    %2020 = vst.msk [vmem:[#allocation2 + $0x18] sm:$0xff] %vm1136, %v2016
    %2023 = vrot.lane.b32.xlu0 %v2009, 64
    %v2024 = vpop.permute.xlu0 %2023
    %2025 = vrot.lane.b32.xlu0 %v2010, 64
    %v2026 = vpop.permute.xlu0 %2025
    %2029 = vst.msk [vmem:[#allocation3 + $0x10] sm:$0xff] %vm1136, %v2024
    %2030 = vst.msk [vmem:[#allocation3 + $0x18] sm:$0xff] %vm1136, %v2026
    %v2031 = vld [vmem:[%s457] sm:$0x1]
    %v2032 = vld [vmem:[%s457 + $0x38] sm:$0x1]
    %v2033 = vld [vmem:[%s457 + $0x70] sm:$0x1]
    %v2034 = vld [vmem:[%s457 + $0xa8] sm:$0x1]
    %v2035 = vld [vmem:[%s457 + $0xe0] sm:$0x1]
    %v2036 = vld [vmem:[%s457 + $0x118] sm:$0x1]
    %v2037 = vld [vmem:[%s457 + $0x150] sm:$0x1]
    %v2038 = vld [vmem:[%s457 + $0x188] sm:$0x1]
    %v2039 = vld [vmem:[%s457 + $0x1c0] sm:$0x1]
    %v2040 = vld [vmem:[%s457 + $0x1f8] sm:$0x1]
    %v2041 = vld [vmem:[%s457 + $0x230] sm:$0x1]
    %v2042 = vld [vmem:[%s457 + $0x268] sm:$0x1]
    %v2043 = vld [vmem:[%s457 + $0x2a0] sm:$0x1]
    %v2044 = vld [vmem:[%s457 + $0x2d8] sm:$0x1]
    %v2045 = vld [vmem:[%s457 + $0x310] sm:$0x1]
    %v2046 = vld [vmem:[%s457 + $0x348] sm:$0x1]
    %v2063 = vrot.slane %v2032, 7
    %v2064 = vsel %vm180, %v2063, %v2031
    %v2065 = vrot.slane %v2033, 6
    %v2066 = vsel %vm183, %v2065, %v2064
    %v2067 = vrot.slane %v2034, 5
    %v2068 = vsel %vm186, %v2067, %v2066
    %v2069 = vrot.slane %v2035, 4
    %v2070 = vsel %vm189, %v2069, %v2068
    %v2071 = vrot.slane %v2036, 3
    %v2072 = vsel %vm192, %v2071, %v2070
    %v2073 = vrot.slane %v2037, 2
    %v2074 = vsel %vm195, %v2073, %v2072
    %v2075 = vrot.slane %v2038, 1
    %v2076 = vsel %vm198, %v2075, %v2074
    %v2077 = vrot.slane %v2040, 7
    %v2078 = vsel %vm180, %v2077, %v2039
    %v2079 = vrot.slane %v2041, 6
    %v2080 = vsel %vm183, %v2079, %v2078
    %v2081 = vrot.slane %v2042, 5
    %v2082 = vsel %vm186, %v2081, %v2080
    %v2083 = vrot.slane %v2043, 4
    %v2084 = vsel %vm189, %v2083, %v2082
    %v2085 = vrot.slane %v2044, 3
    %v2086 = vsel %vm192, %v2085, %v2084
    %v2087 = vrot.slane %v2045, 2
    %v2088 = vsel %vm195, %v2087, %v2086
    %v2089 = vrot.slane %v2046, 1
    %v2090 = vsel %vm198, %v2089, %v2088
    %v2093 = vmul.f32 %v156, %v2076
    %v2094 = vmul.f32 %v161, %v2090
    %v2095 = vadd.f32 %v2093, 0.0
    %v2096 = vadd.f32 %v2094, 0.0
    %v2097 = vld [vmem:[%s3 + $0x2] sm:$0x1]
    %v2098 = vld [vmem:[%s3 + $0x3a] sm:$0x1]
    %v2099 = vld [vmem:[%s3 + $0x72] sm:$0x1]
    %v2100 = vld [vmem:[%s3 + $0xaa] sm:$0x1]
    %v2101 = vld [vmem:[%s3 + $0xe2] sm:$0x1]
    %v2102 = vld [vmem:[%s3 + $0x11a] sm:$0x1]
    %v2103 = vld [vmem:[%s3 + $0x152] sm:$0x1]
    %v2104 = vld [vmem:[%s3 + $0x18a] sm:$0x1]
    %v2105 = vld [vmem:[%s3 + $0x1c2] sm:$0x1]
    %v2106 = vld [vmem:[%s3 + $0x1fa] sm:$0x1]
    %v2107 = vld [vmem:[%s3 + $0x232] sm:$0x1]
    %v2108 = vld [vmem:[%s3 + $0x26a] sm:$0x1]
    %v2109 = vld [vmem:[%s3 + $0x2a2] sm:$0x1]
    %v2110 = vld [vmem:[%s3 + $0x2da] sm:$0x1]
    %v2111 = vld [vmem:[%s3 + $0x312] sm:$0x1]
    %v2112 = vld [vmem:[%s3 + $0x34a] sm:$0x1]
    %v2129 = vrot.slane %v2098, 7
    %v2130 = vsel %vm180, %v2129, %v2097
    %v2131 = vrot.slane %v2099, 6
    %v2132 = vsel %vm183, %v2131, %v2130
    %v2133 = vrot.slane %v2100, 5
    %v2134 = vsel %vm186, %v2133, %v2132
    %v2135 = vrot.slane %v2101, 4
    %v2136 = vsel %vm189, %v2135, %v2134
    %v2137 = vrot.slane %v2102, 3
    %v2138 = vsel %vm192, %v2137, %v2136
    %v2139 = vrot.slane %v2103, 2
    %v2140 = vsel %vm195, %v2139, %v2138
    %v2141 = vrot.slane %v2104, 1
    %v2142 = vsel %vm198, %v2141, %v2140
    %v2143 = vrot.slane %v2106, 7
    %v2144 = vsel %vm180, %v2143, %v2105
    %v2145 = vrot.slane %v2107, 6
    %v2146 = vsel %vm183, %v2145, %v2144
    %v2147 = vrot.slane %v2108, 5
    %v2148 = vsel %vm186, %v2147, %v2146
    %v2149 = vrot.slane %v2109, 4
    %v2150 = vsel %vm189, %v2149, %v2148
    %v2151 = vrot.slane %v2110, 3
    %v2152 = vsel %vm192, %v2151, %v2150
    %v2153 = vrot.slane %v2111, 2
    %v2154 = vsel %vm195, %v2153, %v2152
    %v2155 = vrot.slane %v2112, 1
    %v2156 = vsel %vm198, %v2155, %v2154
    %v2159 = vmul.f32 %v223, %v2142
    %v2160 = vmul.f32 %v228, %v2156
    %v2161 = vadd.f32 %v2159, 0.0
    %v2162 = vadd.f32 %v2160, 0.0
    %v2163 = vld [vmem:[%s457 + $0x1] sm:$0x1]
    %v2164 = vld [vmem:[%s457 + $0x39] sm:$0x1]
    %v2165 = vld [vmem:[%s457 + $0x71] sm:$0x1]
    %v2166 = vld [vmem:[%s457 + $0xa9] sm:$0x1]
    %v2167 = vld [vmem:[%s457 + $0xe1] sm:$0x1]
    %v2168 = vld [vmem:[%s457 + $0x119] sm:$0x1]
    %v2169 = vld [vmem:[%s457 + $0x151] sm:$0x1]
    %v2170 = vld [vmem:[%s457 + $0x189] sm:$0x1]
    %v2171 = vld [vmem:[%s457 + $0x1c1] sm:$0x1]
    %v2172 = vld [vmem:[%s457 + $0x1f9] sm:$0x1]
    %v2173 = vld [vmem:[%s457 + $0x231] sm:$0x1]
    %v2174 = vld [vmem:[%s457 + $0x269] sm:$0x1]
    %v2175 = vld [vmem:[%s457 + $0x2a1] sm:$0x1]
    %v2176 = vld [vmem:[%s457 + $0x2d9] sm:$0x1]
    %v2177 = vld [vmem:[%s457 + $0x311] sm:$0x1]
    %v2178 = vld [vmem:[%s457 + $0x349] sm:$0x1]
    %v2195 = vrot.slane %v2164, 7
    %v2196 = vsel %vm180, %v2195, %v2163
    %v2197 = vrot.slane %v2165, 6
    %v2198 = vsel %vm183, %v2197, %v2196
    %v2199 = vrot.slane %v2166, 5
    %v2200 = vsel %vm186, %v2199, %v2198
    %v2201 = vrot.slane %v2167, 4
    %v2202 = vsel %vm189, %v2201, %v2200
    %v2203 = vrot.slane %v2168, 3
    %v2204 = vsel %vm192, %v2203, %v2202
    %v2205 = vrot.slane %v2169, 2
    %v2206 = vsel %vm195, %v2205, %v2204
    %v2207 = vrot.slane %v2170, 1
    %v2208 = vsel %vm198, %v2207, %v2206
    %v2209 = vrot.slane %v2172, 7
    %v2210 = vsel %vm180, %v2209, %v2171
    %v2211 = vrot.slane %v2173, 6
    %v2212 = vsel %vm183, %v2211, %v2210
    %v2213 = vrot.slane %v2174, 5
    %v2214 = vsel %vm186, %v2213, %v2212
    %v2215 = vrot.slane %v2175, 4
    %v2216 = vsel %vm189, %v2215, %v2214
    %v2217 = vrot.slane %v2176, 3
    %v2218 = vsel %vm192, %v2217, %v2216
    %v2219 = vrot.slane %v2177, 2
    %v2220 = vsel %vm195, %v2219, %v2218
    %v2221 = vrot.slane %v2178, 1
    %v2222 = vsel %vm198, %v2221, %v2220
    %v2225 = vmul.f32 %v252, %v2208
    %v2226 = vmul.f32 %v256, %v2222
    %v2227 = vadd.f32 %v2095, %v2225
    %v2228 = vadd.f32 %v2096, %v2226
    %v2229 = vld [vmem:[%s308 + $0x2] sm:$0x1]
    %v2230 = vld [vmem:[%s308 + $0x3a] sm:$0x1]
    %v2231 = vld [vmem:[%s308 + $0x72] sm:$0x1]
    %v2232 = vld [vmem:[%s308 + $0xaa] sm:$0x1]
    %v2233 = vld [vmem:[%s308 + $0xe2] sm:$0x1]
    %v2234 = vld [vmem:[%s308 + $0x11a] sm:$0x1]
    %v2235 = vld [vmem:[%s308 + $0x152] sm:$0x1]
    %v2236 = vld [vmem:[%s308 + $0x18a] sm:$0x1]
    %v2237 = vld [vmem:[%s308 + $0x1c2] sm:$0x1]
    %v2238 = vld [vmem:[%s308 + $0x1fa] sm:$0x1]
    %v2239 = vld [vmem:[%s308 + $0x232] sm:$0x1]
    %v2240 = vld [vmem:[%s308 + $0x26a] sm:$0x1]
    %v2241 = vld [vmem:[%s308 + $0x2a2] sm:$0x1]
    %v2242 = vld [vmem:[%s308 + $0x2da] sm:$0x1]
    %v2243 = vld [vmem:[%s308 + $0x312] sm:$0x1]
    %v2244 = vld [vmem:[%s308 + $0x34a] sm:$0x1]
    %v2261 = vrot.slane %v2230, 7
    %v2262 = vsel %vm180, %v2261, %v2229
    %v2263 = vrot.slane %v2231, 6
    %v2264 = vsel %vm183, %v2263, %v2262
    %v2265 = vrot.slane %v2232, 5
    %v2266 = vsel %vm186, %v2265, %v2264
    %v2267 = vrot.slane %v2233, 4
    %v2268 = vsel %vm189, %v2267, %v2266
    %v2269 = vrot.slane %v2234, 3
    %v2270 = vsel %vm192, %v2269, %v2268
    %v2271 = vrot.slane %v2235, 2
    %v2272 = vsel %vm195, %v2271, %v2270
    %v2273 = vrot.slane %v2236, 1
    %v2274 = vsel %vm198, %v2273, %v2272
    %v2275 = vrot.slane %v2238, 7
    %v2276 = vsel %vm180, %v2275, %v2237
    %v2277 = vrot.slane %v2239, 6
    %v2278 = vsel %vm183, %v2277, %v2276
    %v2279 = vrot.slane %v2240, 5
    %v2280 = vsel %vm186, %v2279, %v2278
    %v2281 = vrot.slane %v2241, 4
    %v2282 = vsel %vm189, %v2281, %v2280
    %v2283 = vrot.slane %v2242, 3
    %v2284 = vsel %vm192, %v2283, %v2282
    %v2285 = vrot.slane %v2243, 2
    %v2286 = vsel %vm195, %v2285, %v2284
    %v2287 = vrot.slane %v2244, 1
    %v2288 = vsel %vm198, %v2287, %v2286
    %v2291 = vmul.f32 %v327, %v2274
    %v2292 = vmul.f32 %v331, %v2288
    %v2293 = vadd.f32 %v2161, %v2291
    %v2294 = vadd.f32 %v2162, %v2292
    %v2295 = vld [vmem:[%s457 + $0x2] sm:$0x1]
    %v2296 = vld [vmem:[%s457 + $0x3a] sm:$0x1]
    %v2297 = vld [vmem:[%s457 + $0x72] sm:$0x1]
    %v2298 = vld [vmem:[%s457 + $0xaa] sm:$0x1]
    %v2299 = vld [vmem:[%s457 + $0xe2] sm:$0x1]
    %v2300 = vld [vmem:[%s457 + $0x11a] sm:$0x1]
    %v2301 = vld [vmem:[%s457 + $0x152] sm:$0x1]
    %v2302 = vld [vmem:[%s457 + $0x18a] sm:$0x1]
    %v2303 = vld [vmem:[%s457 + $0x1c2] sm:$0x1]
    %v2304 = vld [vmem:[%s457 + $0x1fa] sm:$0x1]
    %v2305 = vld [vmem:[%s457 + $0x232] sm:$0x1]
    %v2306 = vld [vmem:[%s457 + $0x26a] sm:$0x1]
    %v2307 = vld [vmem:[%s457 + $0x2a2] sm:$0x1]
    %v2308 = vld [vmem:[%s457 + $0x2da] sm:$0x1]
    %v2309 = vld [vmem:[%s457 + $0x312] sm:$0x1]
    %v2310 = vld [vmem:[%s457 + $0x34a] sm:$0x1]
    %v2327 = vrot.slane %v2296, 7
    %v2328 = vsel %vm180, %v2327, %v2295
    %v2329 = vrot.slane %v2297, 6
    %v2330 = vsel %vm183, %v2329, %v2328
    %v2331 = vrot.slane %v2298, 5
    %v2332 = vsel %vm186, %v2331, %v2330
    %v2333 = vrot.slane %v2299, 4
    %v2334 = vsel %vm189, %v2333, %v2332
    %v2335 = vrot.slane %v2300, 3
    %v2336 = vsel %vm192, %v2335, %v2334
    %v2337 = vrot.slane %v2301, 2
    %v2338 = vsel %vm195, %v2337, %v2336
    %v2339 = vrot.slane %v2302, 1
    %v2340 = vsel %vm198, %v2339, %v2338
    %v2341 = vrot.slane %v2304, 7
    %v2342 = vsel %vm180, %v2341, %v2303
    %v2343 = vrot.slane %v2305, 6
    %v2344 = vsel %vm183, %v2343, %v2342
    %v2345 = vrot.slane %v2306, 5
    %v2346 = vsel %vm186, %v2345, %v2344
    %v2347 = vrot.slane %v2307, 4
    %v2348 = vsel %vm189, %v2347, %v2346
    %v2349 = vrot.slane %v2308, 3
    %v2350 = vsel %vm192, %v2349, %v2348
    %v2351 = vrot.slane %v2309, 2
    %v2352 = vsel %vm195, %v2351, %v2350
    %v2353 = vrot.slane %v2310, 1
    %v2354 = vsel %vm198, %v2353, %v2352
    %v2357 = vmul.f32 %v401, %v2340
    %v2358 = vmul.f32 %v405, %v2354
    %v2359 = vadd.f32 %v2227, %v2357
    %v2360 = vadd.f32 %v2228, %v2358
    %v2361 = vmul.f32 %v476, %v2340
    %v2362 = vmul.f32 %v480, %v2354
    %v2363 = vadd.f32 %v2293, %v2361
    %v2364 = vadd.f32 %v2294, %v2362
    %v2365 = vld [vmem:[%s457 + $0x3] sm:$0x1]
    %v2366 = vld [vmem:[%s457 + $0x3b] sm:$0x1]
    %v2367 = vld [vmem:[%s457 + $0x73] sm:$0x1]
    %v2368 = vld [vmem:[%s457 + $0xab] sm:$0x1]
    %v2369 = vld [vmem:[%s457 + $0xe3] sm:$0x1]
    %v2370 = vld [vmem:[%s457 + $0x11b] sm:$0x1]
    %v2371 = vld [vmem:[%s457 + $0x153] sm:$0x1]
    %v2372 = vld [vmem:[%s457 + $0x18b] sm:$0x1]
    %v2373 = vld [vmem:[%s457 + $0x1c3] sm:$0x1]
    %v2374 = vld [vmem:[%s457 + $0x1fb] sm:$0x1]
    %v2375 = vld [vmem:[%s457 + $0x233] sm:$0x1]
    %v2376 = vld [vmem:[%s457 + $0x26b] sm:$0x1]
    %v2377 = vld [vmem:[%s457 + $0x2a3] sm:$0x1]
    %v2378 = vld [vmem:[%s457 + $0x2db] sm:$0x1]
    %v2379 = vld [vmem:[%s457 + $0x313] sm:$0x1]
    %v2380 = vld [vmem:[%s457 + $0x34b] sm:$0x1]
    %v2397 = vrot.slane %v2366, 7
    %v2398 = vsel %vm180, %v2397, %v2365
    %v2399 = vrot.slane %v2367, 6
    %v2400 = vsel %vm183, %v2399, %v2398
    %v2401 = vrot.slane %v2368, 5
    %v2402 = vsel %vm186, %v2401, %v2400
    %v2403 = vrot.slane %v2369, 4
    %v2404 = vsel %vm189, %v2403, %v2402
    %v2405 = vrot.slane %v2370, 3
    %v2406 = vsel %vm192, %v2405, %v2404
    %v2407 = vrot.slane %v2371, 2
    %v2408 = vsel %vm195, %v2407, %v2406
    %v2409 = vrot.slane %v2372, 1
    %v2410 = vsel %vm198, %v2409, %v2408
    %v2411 = vrot.slane %v2374, 7
    %v2412 = vsel %vm180, %v2411, %v2373
    %v2413 = vrot.slane %v2375, 6
    %v2414 = vsel %vm183, %v2413, %v2412
    %v2415 = vrot.slane %v2376, 5
    %v2416 = vsel %vm186, %v2415, %v2414
    %v2417 = vrot.slane %v2377, 4
    %v2418 = vsel %vm189, %v2417, %v2416
    %v2419 = vrot.slane %v2378, 3
    %v2420 = vsel %vm192, %v2419, %v2418
    %v2421 = vrot.slane %v2379, 2
    %v2422 = vsel %vm195, %v2421, %v2420
    %v2423 = vrot.slane %v2380, 1
    %v2424 = vsel %vm198, %v2423, %v2422
    %v2427 = vmul.f32 %v550, %v2410
    %v2428 = vmul.f32 %v554, %v2424
    %v2429 = vadd.f32 %v2359, %v2427
    %v2430 = vadd.f32 %v2360, %v2428
    %v2431 = vld [vmem:[%s606 + $0x2] sm:$0x1]
    %v2432 = vld [vmem:[%s606 + $0x3a] sm:$0x1]
    %v2433 = vld [vmem:[%s606 + $0x72] sm:$0x1]
    %v2434 = vld [vmem:[%s606 + $0xaa] sm:$0x1]
    %v2435 = vld [vmem:[%s606 + $0xe2] sm:$0x1]
    %v2436 = vld [vmem:[%s606 + $0x11a] sm:$0x1]
    %v2437 = vld [vmem:[%s606 + $0x152] sm:$0x1]
    %v2438 = vld [vmem:[%s606 + $0x18a] sm:$0x1]
    %v2439 = vld [vmem:[%s606 + $0x1c2] sm:$0x1]
    %v2440 = vld [vmem:[%s606 + $0x1fa] sm:$0x1]
    %v2441 = vld [vmem:[%s606 + $0x232] sm:$0x1]
    %v2442 = vld [vmem:[%s606 + $0x26a] sm:$0x1]
    %v2443 = vld [vmem:[%s606 + $0x2a2] sm:$0x1]
    %v2444 = vld [vmem:[%s606 + $0x2da] sm:$0x1]
    %v2445 = vld [vmem:[%s606 + $0x312] sm:$0x1]
    %v2446 = vld [vmem:[%s606 + $0x34a] sm:$0x1]
    %v2463 = vrot.slane %v2432, 7
    %v2464 = vsel %vm180, %v2463, %v2431
    %v2465 = vrot.slane %v2433, 6
    %v2466 = vsel %vm183, %v2465, %v2464
    %v2467 = vrot.slane %v2434, 5
    %v2468 = vsel %vm186, %v2467, %v2466
    %v2469 = vrot.slane %v2435, 4
    %v2470 = vsel %vm189, %v2469, %v2468
    %v2471 = vrot.slane %v2436, 3
    %v2472 = vsel %vm192, %v2471, %v2470
    %v2473 = vrot.slane %v2437, 2
    %v2474 = vsel %vm195, %v2473, %v2472
    %v2475 = vrot.slane %v2438, 1
    %v2476 = vsel %vm198, %v2475, %v2474
    %v2477 = vrot.slane %v2440, 7
    %v2478 = vsel %vm180, %v2477, %v2439
    %v2479 = vrot.slane %v2441, 6
    %v2480 = vsel %vm183, %v2479, %v2478
    %v2481 = vrot.slane %v2442, 5
    %v2482 = vsel %vm186, %v2481, %v2480
    %v2483 = vrot.slane %v2443, 4
    %v2484 = vsel %vm189, %v2483, %v2482
    %v2485 = vrot.slane %v2444, 3
    %v2486 = vsel %vm192, %v2485, %v2484
    %v2487 = vrot.slane %v2445, 2
    %v2488 = vsel %vm195, %v2487, %v2486
    %v2489 = vrot.slane %v2446, 1
    %v2490 = vsel %vm198, %v2489, %v2488
    %v2493 = vmul.f32 %v625, %v2476
    %v2494 = vmul.f32 %v629, %v2490
    %v2495 = vadd.f32 %v2363, %v2493
    %v2496 = vadd.f32 %v2364, %v2494
    %v2497 = vld [vmem:[%s457 + $0x4] sm:$0x1]
    %v2498 = vld [vmem:[%s457 + $0x3c] sm:$0x1]
    %v2499 = vld [vmem:[%s457 + $0x74] sm:$0x1]
    %v2500 = vld [vmem:[%s457 + $0xac] sm:$0x1]
    %v2501 = vld [vmem:[%s457 + $0xe4] sm:$0x1]
    %v2502 = vld [vmem:[%s457 + $0x11c] sm:$0x1]
    %v2503 = vld [vmem:[%s457 + $0x154] sm:$0x1]
    %v2504 = vld [vmem:[%s457 + $0x18c] sm:$0x1]
    %v2505 = vld [vmem:[%s457 + $0x1c4] sm:$0x1]
    %v2506 = vld [vmem:[%s457 + $0x1fc] sm:$0x1]
    %v2507 = vld [vmem:[%s457 + $0x234] sm:$0x1]
    %v2508 = vld [vmem:[%s457 + $0x26c] sm:$0x1]
    %v2509 = vld [vmem:[%s457 + $0x2a4] sm:$0x1]
    %v2510 = vld [vmem:[%s457 + $0x2dc] sm:$0x1]
    %v2511 = vld [vmem:[%s457 + $0x314] sm:$0x1]
    %v2512 = vld [vmem:[%s457 + $0x34c] sm:$0x1]
    %v2529 = vrot.slane %v2498, 7
    %v2530 = vsel %vm180, %v2529, %v2497
    %v2531 = vrot.slane %v2499, 6
    %v2532 = vsel %vm183, %v2531, %v2530
    %v2533 = vrot.slane %v2500, 5
    %v2534 = vsel %vm186, %v2533, %v2532
    %v2535 = vrot.slane %v2501, 4
    %v2536 = vsel %vm189, %v2535, %v2534
    %v2537 = vrot.slane %v2502, 3
    %v2538 = vsel %vm192, %v2537, %v2536
    %v2539 = vrot.slane %v2503, 2
    %v2540 = vsel %vm195, %v2539, %v2538
    %v2541 = vrot.slane %v2504, 1
    %v2542 = vsel %vm198, %v2541, %v2540
    %v2543 = vrot.slane %v2506, 7
    %v2544 = vsel %vm180, %v2543, %v2505
    %v2545 = vrot.slane %v2507, 6
    %v2546 = vsel %vm183, %v2545, %v2544
    %v2547 = vrot.slane %v2508, 5
    %v2548 = vsel %vm186, %v2547, %v2546
    %v2549 = vrot.slane %v2509, 4
    %v2550 = vsel %vm189, %v2549, %v2548
    %v2551 = vrot.slane %v2510, 3
    %v2552 = vsel %vm192, %v2551, %v2550
    %v2553 = vrot.slane %v2511, 2
    %v2554 = vsel %vm195, %v2553, %v2552
    %v2555 = vrot.slane %v2512, 1
    %v2556 = vsel %vm198, %v2555, %v2554
    %v2559 = vmul.f32 %v699, %v2542
    %v2560 = vmul.f32 %v703, %v2556
    %v2561 = vadd.f32 %v2429, %v2559
    %v2562 = vadd.f32 %v2430, %v2560
    %v2563 = vld [vmem:[%s755 + $0x2] sm:$0x1]
    %v2564 = vld [vmem:[%s755 + $0x3a] sm:$0x1]
    %v2565 = vld [vmem:[%s755 + $0x72] sm:$0x1]
    %v2566 = vld [vmem:[%s755 + $0xaa] sm:$0x1]
    %v2567 = vld [vmem:[%s755 + $0xe2] sm:$0x1]
    %v2568 = vld [vmem:[%s755 + $0x11a] sm:$0x1]
    %v2569 = vld [vmem:[%s755 + $0x152] sm:$0x1]
    %v2570 = vld [vmem:[%s755 + $0x18a] sm:$0x1]
    %v2571 = vld [vmem:[%s755 + $0x1c2] sm:$0x1]
    %v2572 = vld [vmem:[%s755 + $0x1fa] sm:$0x1]
    %v2573 = vld [vmem:[%s755 + $0x232] sm:$0x1]
    %v2574 = vld [vmem:[%s755 + $0x26a] sm:$0x1]
    %v2575 = vld [vmem:[%s755 + $0x2a2] sm:$0x1]
    %v2576 = vld [vmem:[%s755 + $0x2da] sm:$0x1]
    %v2577 = vld [vmem:[%s755 + $0x312] sm:$0x1]
    %v2578 = vld [vmem:[%s755 + $0x34a] sm:$0x1]
    %v2595 = vrot.slane %v2564, 7
    %v2596 = vsel %vm180, %v2595, %v2563
    %v2597 = vrot.slane %v2565, 6
    %v2598 = vsel %vm183, %v2597, %v2596
    %v2599 = vrot.slane %v2566, 5
    %v2600 = vsel %vm186, %v2599, %v2598
    %v2601 = vrot.slane %v2567, 4
    %v2602 = vsel %vm189, %v2601, %v2600
    %v2603 = vrot.slane %v2568, 3
    %v2604 = vsel %vm192, %v2603, %v2602
    %v2605 = vrot.slane %v2569, 2
    %v2606 = vsel %vm195, %v2605, %v2604
    %v2607 = vrot.slane %v2570, 1
    %v2608 = vsel %vm198, %v2607, %v2606
    %v2609 = vrot.slane %v2572, 7
    %v2610 = vsel %vm180, %v2609, %v2571
    %v2611 = vrot.slane %v2573, 6
    %v2612 = vsel %vm183, %v2611, %v2610
    %v2613 = vrot.slane %v2574, 5
    %v2614 = vsel %vm186, %v2613, %v2612
    %v2615 = vrot.slane %v2575, 4
    %v2616 = vsel %vm189, %v2615, %v2614
    %v2617 = vrot.slane %v2576, 3
    %v2618 = vsel %vm192, %v2617, %v2616
    %v2619 = vrot.slane %v2577, 2
    %v2620 = vsel %vm195, %v2619, %v2618
    %v2621 = vrot.slane %v2578, 1
    %v2622 = vsel %vm198, %v2621, %v2620
    %v2625 = vmul.f32 %v774, %v2608
    %v2626 = vmul.f32 %v778, %v2622
    %v2627 = vadd.f32 %v2495, %v2625
    %v2628 = vadd.f32 %v2496, %v2626
    %v2629 = vld [vmem:[%s457 + $0x5] sm:$0x1]
    %v2630 = vld [vmem:[%s457 + $0x3d] sm:$0x1]
    %v2631 = vld [vmem:[%s457 + $0x75] sm:$0x1]
    %v2632 = vld [vmem:[%s457 + $0xad] sm:$0x1]
    %v2633 = vld [vmem:[%s457 + $0xe5] sm:$0x1]
    %v2634 = vld [vmem:[%s457 + $0x11d] sm:$0x1]
    %v2635 = vld [vmem:[%s457 + $0x155] sm:$0x1]
    %v2636 = vld [vmem:[%s457 + $0x18d] sm:$0x1]
    %v2637 = vld [vmem:[%s457 + $0x1c5] sm:$0x1]
    %v2638 = vld [vmem:[%s457 + $0x1fd] sm:$0x1]
    %v2639 = vld [vmem:[%s457 + $0x235] sm:$0x1]
    %v2640 = vld [vmem:[%s457 + $0x26d] sm:$0x1]
    %v2641 = vld [vmem:[%s457 + $0x2a5] sm:$0x1]
    %v2642 = vld [vmem:[%s457 + $0x2dd] sm:$0x1]
    %v2643 = vld [vmem:[%s457 + $0x315] sm:$0x1]
    %v2644 = vld [vmem:[%s457 + $0x34d] sm:$0x1]
    %v2661 = vrot.slane %v2630, 7
    %v2662 = vsel %vm180, %v2661, %v2629
    %v2663 = vrot.slane %v2631, 6
    %v2664 = vsel %vm183, %v2663, %v2662
    %v2665 = vrot.slane %v2632, 5
    %v2666 = vsel %vm186, %v2665, %v2664
    %v2667 = vrot.slane %v2633, 4
    %v2668 = vsel %vm189, %v2667, %v2666
    %v2669 = vrot.slane %v2634, 3
    %v2670 = vsel %vm192, %v2669, %v2668
    %v2671 = vrot.slane %v2635, 2
    %v2672 = vsel %vm195, %v2671, %v2670
    %v2673 = vrot.slane %v2636, 1
    %v2674 = vsel %vm198, %v2673, %v2672
    %v2675 = vrot.slane %v2638, 7
    %v2676 = vsel %vm180, %v2675, %v2637
    %v2677 = vrot.slane %v2639, 6
    %v2678 = vsel %vm183, %v2677, %v2676
    %v2679 = vrot.slane %v2640, 5
    %v2680 = vsel %vm186, %v2679, %v2678
    %v2681 = vrot.slane %v2641, 4
    %v2682 = vsel %vm189, %v2681, %v2680
    %v2683 = vrot.slane %v2642, 3
    %v2684 = vsel %vm192, %v2683, %v2682
    %v2685 = vrot.slane %v2643, 2
    %v2686 = vsel %vm195, %v2685, %v2684
    %v2687 = vrot.slane %v2644, 1
    %v2688 = vsel %vm198, %v2687, %v2686
    %v2691 = vmul.f32 %v848, %v2674
    %v2692 = vmul.f32 %v852, %v2688
    %v2693 = vadd.f32 %v2561, %v2691
    %v2694 = vadd.f32 %v2562, %v2692
    %v2695 = vld [vmem:[%s904 + $0x2] sm:$0x1]
    %v2696 = vld [vmem:[%s904 + $0x3a] sm:$0x1]
    %v2697 = vld [vmem:[%s904 + $0x72] sm:$0x1]
    %v2698 = vld [vmem:[%s904 + $0xaa] sm:$0x1]
    %v2699 = vld [vmem:[%s904 + $0xe2] sm:$0x1]
    %v2700 = vld [vmem:[%s904 + $0x11a] sm:$0x1]
    %v2701 = vld [vmem:[%s904 + $0x152] sm:$0x1]
    %v2702 = vld [vmem:[%s904 + $0x18a] sm:$0x1]
    %v2703 = vld [vmem:[%s904 + $0x1c2] sm:$0x1]
    %v2704 = vld [vmem:[%s904 + $0x1fa] sm:$0x1]
    %v2705 = vld [vmem:[%s904 + $0x232] sm:$0x1]
    %v2706 = vld [vmem:[%s904 + $0x26a] sm:$0x1]
    %v2707 = vld [vmem:[%s904 + $0x2a2] sm:$0x1]
    %v2708 = vld [vmem:[%s904 + $0x2da] sm:$0x1]
    %v2709 = vld [vmem:[%s904 + $0x312] sm:$0x1]
    %v2710 = vld [vmem:[%s904 + $0x34a] sm:$0x1]
    %v2727 = vrot.slane %v2696, 7
    %v2728 = vsel %vm180, %v2727, %v2695
    %v2729 = vrot.slane %v2697, 6
    %v2730 = vsel %vm183, %v2729, %v2728
    %v2731 = vrot.slane %v2698, 5
    %v2732 = vsel %vm186, %v2731, %v2730
    %v2733 = vrot.slane %v2699, 4
    %v2734 = vsel %vm189, %v2733, %v2732
    %v2735 = vrot.slane %v2700, 3
    %v2736 = vsel %vm192, %v2735, %v2734
    %v2737 = vrot.slane %v2701, 2
    %v2738 = vsel %vm195, %v2737, %v2736
    %v2739 = vrot.slane %v2702, 1
    %v2740 = vsel %vm198, %v2739, %v2738
    %v2741 = vrot.slane %v2704, 7
    %v2742 = vsel %vm180, %v2741, %v2703
    %v2743 = vrot.slane %v2705, 6
    %v2744 = vsel %vm183, %v2743, %v2742
    %v2745 = vrot.slane %v2706, 5
    %v2746 = vsel %vm186, %v2745, %v2744
    %v2747 = vrot.slane %v2707, 4
    %v2748 = vsel %vm189, %v2747, %v2746
    %v2749 = vrot.slane %v2708, 3
    %v2750 = vsel %vm192, %v2749, %v2748
    %v2751 = vrot.slane %v2709, 2
    %v2752 = vsel %vm195, %v2751, %v2750
    %v2753 = vrot.slane %v2710, 1
    %v2754 = vsel %vm198, %v2753, %v2752
    %v2757 = vmul.f32 %v923, %v2740
    %v2758 = vmul.f32 %v927, %v2754
    %v2759 = vadd.f32 %v2627, %v2757
    %v2760 = vadd.f32 %v2628, %v2758
    %v2761 = vld [vmem:[%s457 + $0x6] sm:$0x1]
    %v2762 = vld [vmem:[%s457 + $0x3e] sm:$0x1]
    %v2763 = vld [vmem:[%s457 + $0x76] sm:$0x1]
    %v2764 = vld [vmem:[%s457 + $0xae] sm:$0x1]
    %v2765 = vld [vmem:[%s457 + $0xe6] sm:$0x1]
    %v2766 = vld [vmem:[%s457 + $0x11e] sm:$0x1]
    %v2767 = vld [vmem:[%s457 + $0x156] sm:$0x1]
    %v2768 = vld [vmem:[%s457 + $0x18e] sm:$0x1]
    %v2769 = vld [vmem:[%s457 + $0x1c6] sm:$0x1]
    %v2770 = vld [vmem:[%s457 + $0x1fe] sm:$0x1]
    %v2771 = vld [vmem:[%s457 + $0x236] sm:$0x1]
    %v2772 = vld [vmem:[%s457 + $0x26e] sm:$0x1]
    %v2773 = vld [vmem:[%s457 + $0x2a6] sm:$0x1]
    %v2774 = vld [vmem:[%s457 + $0x2de] sm:$0x1]
    %v2775 = vld [vmem:[%s457 + $0x316] sm:$0x1]
    %v2776 = vld [vmem:[%s457 + $0x34e] sm:$0x1]
    %v2793 = vrot.slane %v2762, 7
    %v2794 = vsel %vm180, %v2793, %v2761
    %v2795 = vrot.slane %v2763, 6
    %v2796 = vsel %vm183, %v2795, %v2794
    %v2797 = vrot.slane %v2764, 5
    %v2798 = vsel %vm186, %v2797, %v2796
    %v2799 = vrot.slane %v2765, 4
    %v2800 = vsel %vm189, %v2799, %v2798
    %v2801 = vrot.slane %v2766, 3
    %v2802 = vsel %vm192, %v2801, %v2800
    %v2803 = vrot.slane %v2767, 2
    %v2804 = vsel %vm195, %v2803, %v2802
    %v2805 = vrot.slane %v2768, 1
    %v2806 = vsel %vm198, %v2805, %v2804
    %v2807 = vrot.slane %v2770, 7
    %v2808 = vsel %vm180, %v2807, %v2769
    %v2809 = vrot.slane %v2771, 6
    %v2810 = vsel %vm183, %v2809, %v2808
    %v2811 = vrot.slane %v2772, 5
    %v2812 = vsel %vm186, %v2811, %v2810
    %v2813 = vrot.slane %v2773, 4
    %v2814 = vsel %vm189, %v2813, %v2812
    %v2815 = vrot.slane %v2774, 3
    %v2816 = vsel %vm192, %v2815, %v2814
    %v2817 = vrot.slane %v2775, 2
    %v2818 = vsel %vm195, %v2817, %v2816
    %v2819 = vrot.slane %v2776, 1
    %v2820 = vsel %vm198, %v2819, %v2818
    %v2823 = vmul.f32 %v997, %v2806
    %v2824 = vmul.f32 %v1001, %v2820
    %v2825 = vadd.f32 %v2693, %v2823
    %v2826 = vadd.f32 %v2694, %v2824
    %v2827 = vld [vmem:[%s1053 + $0x2] sm:$0x1]
    %v2828 = vld [vmem:[%s1053 + $0x3a] sm:$0x1]
    %v2829 = vld [vmem:[%s1053 + $0x72] sm:$0x1]
    %v2830 = vld [vmem:[%s1053 + $0xaa] sm:$0x1]
    %v2831 = vld [vmem:[%s1053 + $0xe2] sm:$0x1]
    %v2832 = vld [vmem:[%s1053 + $0x11a] sm:$0x1]
    %v2833 = vld [vmem:[%s1053 + $0x152] sm:$0x1]
    %v2834 = vld [vmem:[%s1053 + $0x18a] sm:$0x1]
    %v2835 = vld [vmem:[%s1053 + $0x1c2] sm:$0x1]
    %v2836 = vld [vmem:[%s1053 + $0x1fa] sm:$0x1]
    %v2837 = vld [vmem:[%s1053 + $0x232] sm:$0x1]
    %v2838 = vld [vmem:[%s1053 + $0x26a] sm:$0x1]
    %v2839 = vld [vmem:[%s1053 + $0x2a2] sm:$0x1]
    %v2840 = vld [vmem:[%s1053 + $0x2da] sm:$0x1]
    %v2841 = vld [vmem:[%s1053 + $0x312] sm:$0x1]
    %v2842 = vld [vmem:[%s1053 + $0x34a] sm:$0x1]
    %v2859 = vrot.slane %v2828, 7
    %v2860 = vsel %vm180, %v2859, %v2827
    %v2861 = vrot.slane %v2829, 6
    %v2862 = vsel %vm183, %v2861, %v2860
    %v2863 = vrot.slane %v2830, 5
    %v2864 = vsel %vm186, %v2863, %v2862
    %v2865 = vrot.slane %v2831, 4
    %v2866 = vsel %vm189, %v2865, %v2864
    %v2867 = vrot.slane %v2832, 3
    %v2868 = vsel %vm192, %v2867, %v2866
    %v2869 = vrot.slane %v2833, 2
    %v2870 = vsel %vm195, %v2869, %v2868
    %v2871 = vrot.slane %v2834, 1
    %v2872 = vsel %vm198, %v2871, %v2870
    %v2873 = vrot.slane %v2836, 7
    %v2874 = vsel %vm180, %v2873, %v2835
    %v2875 = vrot.slane %v2837, 6
    %v2876 = vsel %vm183, %v2875, %v2874
    %v2877 = vrot.slane %v2838, 5
    %v2878 = vsel %vm186, %v2877, %v2876
    %v2879 = vrot.slane %v2839, 4
    %v2880 = vsel %vm189, %v2879, %v2878
    %v2881 = vrot.slane %v2840, 3
    %v2882 = vsel %vm192, %v2881, %v2880
    %v2883 = vrot.slane %v2841, 2
    %v2884 = vsel %vm195, %v2883, %v2882
    %v2885 = vrot.slane %v2842, 1
    %v2886 = vsel %vm198, %v2885, %v2884
    %v2889 = vmul.f32 %v1072, %v2872
    %v2890 = vmul.f32 %v1076, %v2886
    %v2891 = vadd.f32 %v2759, %v2889
    %v2892 = vadd.f32 %v2760, %v2890
    %2895 = vrot.lane.b32.xlu0 %v2825, 64
    %v2896 = vpop.permute.xlu0 %2895
    %2897 = vrot.lane.b32.xlu0 %v2826, 64
    %v2898 = vpop.permute.xlu0 %2897
    %2901 = vst.msk [vmem:[#allocation2 + $0x20] sm:$0xff] %vm1136, %v2896
    %2902 = vst.msk [vmem:[#allocation2 + $0x28] sm:$0xff] %vm1136, %v2898
    %2905 = vrot.lane.b32.xlu0 %v2891, 64
    %v2906 = vpop.permute.xlu0 %2905
    %2907 = vrot.lane.b32.xlu0 %v2892, 64
    %v2908 = vpop.permute.xlu0 %2907
    %2911 = vst.msk [vmem:[#allocation3 + $0x20] sm:$0xff] %vm1136, %v2906
    %2912 = vst.msk [vmem:[#allocation3 + $0x28] sm:$0xff] %vm1136, %v2908
    %v2913 = vld [vmem:[%s606] sm:$0x1]
    %v2914 = vld [vmem:[%s606 + $0x38] sm:$0x1]
    %v2915 = vld [vmem:[%s606 + $0x70] sm:$0x1]
    %v2916 = vld [vmem:[%s606 + $0xa8] sm:$0x1]
    %v2917 = vld [vmem:[%s606 + $0xe0] sm:$0x1]
    %v2918 = vld [vmem:[%s606 + $0x118] sm:$0x1]
    %v2919 = vld [vmem:[%s606 + $0x150] sm:$0x1]
    %v2920 = vld [vmem:[%s606 + $0x188] sm:$0x1]
    %v2921 = vld [vmem:[%s606 + $0x1c0] sm:$0x1]
    %v2922 = vld [vmem:[%s606 + $0x1f8] sm:$0x1]
    %v2923 = vld [vmem:[%s606 + $0x230] sm:$0x1]
    %v2924 = vld [vmem:[%s606 + $0x268] sm:$0x1]
    %v2925 = vld [vmem:[%s606 + $0x2a0] sm:$0x1]
    %v2926 = vld [vmem:[%s606 + $0x2d8] sm:$0x1]
    %v2927 = vld [vmem:[%s606 + $0x310] sm:$0x1]
    %v2928 = vld [vmem:[%s606 + $0x348] sm:$0x1]
    %v2945 = vrot.slane %v2914, 7
    %v2946 = vsel %vm180, %v2945, %v2913
    %v2947 = vrot.slane %v2915, 6
    %v2948 = vsel %vm183, %v2947, %v2946
    %v2949 = vrot.slane %v2916, 5
    %v2950 = vsel %vm186, %v2949, %v2948
    %v2951 = vrot.slane %v2917, 4
    %v2952 = vsel %vm189, %v2951, %v2950
    %v2953 = vrot.slane %v2918, 3
    %v2954 = vsel %vm192, %v2953, %v2952
    %v2955 = vrot.slane %v2919, 2
    %v2956 = vsel %vm195, %v2955, %v2954
    %v2957 = vrot.slane %v2920, 1
    %v2958 = vsel %vm198, %v2957, %v2956
    %v2959 = vrot.slane %v2922, 7
    %v2960 = vsel %vm180, %v2959, %v2921
    %v2961 = vrot.slane %v2923, 6
    %v2962 = vsel %vm183, %v2961, %v2960
    %v2963 = vrot.slane %v2924, 5
    %v2964 = vsel %vm186, %v2963, %v2962
    %v2965 = vrot.slane %v2925, 4
    %v2966 = vsel %vm189, %v2965, %v2964
    %v2967 = vrot.slane %v2926, 3
    %v2968 = vsel %vm192, %v2967, %v2966
    %v2969 = vrot.slane %v2927, 2
    %v2970 = vsel %vm195, %v2969, %v2968
    %v2971 = vrot.slane %v2928, 1
    %v2972 = vsel %vm198, %v2971, %v2970
    %v2975 = vmul.f32 %v156, %v2958
    %v2976 = vmul.f32 %v161, %v2972
    %v2977 = vadd.f32 %v2975, 0.0
    %v2978 = vadd.f32 %v2976, 0.0
    %v2979 = vld [vmem:[%s3 + $0x3] sm:$0x1]
    %v2980 = vld [vmem:[%s3 + $0x3b] sm:$0x1]
    %v2981 = vld [vmem:[%s3 + $0x73] sm:$0x1]
    %v2982 = vld [vmem:[%s3 + $0xab] sm:$0x1]
    %v2983 = vld [vmem:[%s3 + $0xe3] sm:$0x1]
    %v2984 = vld [vmem:[%s3 + $0x11b] sm:$0x1]
    %v2985 = vld [vmem:[%s3 + $0x153] sm:$0x1]
    %v2986 = vld [vmem:[%s3 + $0x18b] sm:$0x1]
    %v2987 = vld [vmem:[%s3 + $0x1c3] sm:$0x1]
    %v2988 = vld [vmem:[%s3 + $0x1fb] sm:$0x1]
    %v2989 = vld [vmem:[%s3 + $0x233] sm:$0x1]
    %v2990 = vld [vmem:[%s3 + $0x26b] sm:$0x1]
    %v2991 = vld [vmem:[%s3 + $0x2a3] sm:$0x1]
    %v2992 = vld [vmem:[%s3 + $0x2db] sm:$0x1]
    %v2993 = vld [vmem:[%s3 + $0x313] sm:$0x1]
    %v2994 = vld [vmem:[%s3 + $0x34b] sm:$0x1]
    %v3011 = vrot.slane %v2980, 7
    %v3012 = vsel %vm180, %v3011, %v2979
    %v3013 = vrot.slane %v2981, 6
    %v3014 = vsel %vm183, %v3013, %v3012
    %v3015 = vrot.slane %v2982, 5
    %v3016 = vsel %vm186, %v3015, %v3014
    %v3017 = vrot.slane %v2983, 4
    %v3018 = vsel %vm189, %v3017, %v3016
    %v3019 = vrot.slane %v2984, 3
    %v3020 = vsel %vm192, %v3019, %v3018
    %v3021 = vrot.slane %v2985, 2
    %v3022 = vsel %vm195, %v3021, %v3020
    %v3023 = vrot.slane %v2986, 1
    %v3024 = vsel %vm198, %v3023, %v3022
    %v3025 = vrot.slane %v2988, 7
    %v3026 = vsel %vm180, %v3025, %v2987
    %v3027 = vrot.slane %v2989, 6
    %v3028 = vsel %vm183, %v3027, %v3026
    %v3029 = vrot.slane %v2990, 5
    %v3030 = vsel %vm186, %v3029, %v3028
    %v3031 = vrot.slane %v2991, 4
    %v3032 = vsel %vm189, %v3031, %v3030
    %v3033 = vrot.slane %v2992, 3
    %v3034 = vsel %vm192, %v3033, %v3032
    %v3035 = vrot.slane %v2993, 2
    %v3036 = vsel %vm195, %v3035, %v3034
    %v3037 = vrot.slane %v2994, 1
    %v3038 = vsel %vm198, %v3037, %v3036
    %v3041 = vmul.f32 %v223, %v3024
    %v3042 = vmul.f32 %v228, %v3038
    %v3043 = vadd.f32 %v3041, 0.0
    %v3044 = vadd.f32 %v3042, 0.0
    %v3045 = vld [vmem:[%s606 + $0x1] sm:$0x1]
    %v3046 = vld [vmem:[%s606 + $0x39] sm:$0x1]
    %v3047 = vld [vmem:[%s606 + $0x71] sm:$0x1]
    %v3048 = vld [vmem:[%s606 + $0xa9] sm:$0x1]
    %v3049 = vld [vmem:[%s606 + $0xe1] sm:$0x1]
    %v3050 = vld [vmem:[%s606 + $0x119] sm:$0x1]
    %v3051 = vld [vmem:[%s606 + $0x151] sm:$0x1]
    %v3052 = vld [vmem:[%s606 + $0x189] sm:$0x1]
    %v3053 = vld [vmem:[%s606 + $0x1c1] sm:$0x1]
    %v3054 = vld [vmem:[%s606 + $0x1f9] sm:$0x1]
    %v3055 = vld [vmem:[%s606 + $0x231] sm:$0x1]
    %v3056 = vld [vmem:[%s606 + $0x269] sm:$0x1]
    %v3057 = vld [vmem:[%s606 + $0x2a1] sm:$0x1]
    %v3058 = vld [vmem:[%s606 + $0x2d9] sm:$0x1]
    %v3059 = vld [vmem:[%s606 + $0x311] sm:$0x1]
    %v3060 = vld [vmem:[%s606 + $0x349] sm:$0x1]
    %v3077 = vrot.slane %v3046, 7
    %v3078 = vsel %vm180, %v3077, %v3045
    %v3079 = vrot.slane %v3047, 6
    %v3080 = vsel %vm183, %v3079, %v3078
    %v3081 = vrot.slane %v3048, 5
    %v3082 = vsel %vm186, %v3081, %v3080
    %v3083 = vrot.slane %v3049, 4
    %v3084 = vsel %vm189, %v3083, %v3082
    %v3085 = vrot.slane %v3050, 3
    %v3086 = vsel %vm192, %v3085, %v3084
    %v3087 = vrot.slane %v3051, 2
    %v3088 = vsel %vm195, %v3087, %v3086
    %v3089 = vrot.slane %v3052, 1
    %v3090 = vsel %vm198, %v3089, %v3088
    %v3091 = vrot.slane %v3054, 7
    %v3092 = vsel %vm180, %v3091, %v3053
    %v3093 = vrot.slane %v3055, 6
    %v3094 = vsel %vm183, %v3093, %v3092
    %v3095 = vrot.slane %v3056, 5
    %v3096 = vsel %vm186, %v3095, %v3094
    %v3097 = vrot.slane %v3057, 4
    %v3098 = vsel %vm189, %v3097, %v3096
    %v3099 = vrot.slane %v3058, 3
    %v3100 = vsel %vm192, %v3099, %v3098
    %v3101 = vrot.slane %v3059, 2
    %v3102 = vsel %vm195, %v3101, %v3100
    %v3103 = vrot.slane %v3060, 1
    %v3104 = vsel %vm198, %v3103, %v3102
    %v3107 = vmul.f32 %v252, %v3090
    %v3108 = vmul.f32 %v256, %v3104
    %v3109 = vadd.f32 %v2977, %v3107
    %v3110 = vadd.f32 %v2978, %v3108
    %v3111 = vld [vmem:[%s308 + $0x3] sm:$0x1]
    %v3112 = vld [vmem:[%s308 + $0x3b] sm:$0x1]
    %v3113 = vld [vmem:[%s308 + $0x73] sm:$0x1]
    %v3114 = vld [vmem:[%s308 + $0xab] sm:$0x1]
    %v3115 = vld [vmem:[%s308 + $0xe3] sm:$0x1]
    %v3116 = vld [vmem:[%s308 + $0x11b] sm:$0x1]
    %v3117 = vld [vmem:[%s308 + $0x153] sm:$0x1]
    %v3118 = vld [vmem:[%s308 + $0x18b] sm:$0x1]
    %v3119 = vld [vmem:[%s308 + $0x1c3] sm:$0x1]
    %v3120 = vld [vmem:[%s308 + $0x1fb] sm:$0x1]
    %v3121 = vld [vmem:[%s308 + $0x233] sm:$0x1]
    %v3122 = vld [vmem:[%s308 + $0x26b] sm:$0x1]
    %v3123 = vld [vmem:[%s308 + $0x2a3] sm:$0x1]
    %v3124 = vld [vmem:[%s308 + $0x2db] sm:$0x1]
    %v3125 = vld [vmem:[%s308 + $0x313] sm:$0x1]
    %v3126 = vld [vmem:[%s308 + $0x34b] sm:$0x1]
    %v3143 = vrot.slane %v3112, 7
    %v3144 = vsel %vm180, %v3143, %v3111
    %v3145 = vrot.slane %v3113, 6
    %v3146 = vsel %vm183, %v3145, %v3144
    %v3147 = vrot.slane %v3114, 5
    %v3148 = vsel %vm186, %v3147, %v3146
    %v3149 = vrot.slane %v3115, 4
    %v3150 = vsel %vm189, %v3149, %v3148
    %v3151 = vrot.slane %v3116, 3
    %v3152 = vsel %vm192, %v3151, %v3150
    %v3153 = vrot.slane %v3117, 2
    %v3154 = vsel %vm195, %v3153, %v3152
    %v3155 = vrot.slane %v3118, 1
    %v3156 = vsel %vm198, %v3155, %v3154
    %v3157 = vrot.slane %v3120, 7
    %v3158 = vsel %vm180, %v3157, %v3119
    %v3159 = vrot.slane %v3121, 6
    %v3160 = vsel %vm183, %v3159, %v3158
    %v3161 = vrot.slane %v3122, 5
    %v3162 = vsel %vm186, %v3161, %v3160
    %v3163 = vrot.slane %v3123, 4
    %v3164 = vsel %vm189, %v3163, %v3162
    %v3165 = vrot.slane %v3124, 3
    %v3166 = vsel %vm192, %v3165, %v3164
    %v3167 = vrot.slane %v3125, 2
    %v3168 = vsel %vm195, %v3167, %v3166
    %v3169 = vrot.slane %v3126, 1
    %v3170 = vsel %vm198, %v3169, %v3168
    %v3173 = vmul.f32 %v327, %v3156
    %v3174 = vmul.f32 %v331, %v3170
    %v3175 = vadd.f32 %v3043, %v3173
    %v3176 = vadd.f32 %v3044, %v3174
    %v3177 = vld [vmem:[%s606 + $0x2] sm:$0x1]
    %v3178 = vld [vmem:[%s606 + $0x3a] sm:$0x1]
    %v3179 = vld [vmem:[%s606 + $0x72] sm:$0x1]
    %v3180 = vld [vmem:[%s606 + $0xaa] sm:$0x1]
    %v3181 = vld [vmem:[%s606 + $0xe2] sm:$0x1]
    %v3182 = vld [vmem:[%s606 + $0x11a] sm:$0x1]
    %v3183 = vld [vmem:[%s606 + $0x152] sm:$0x1]
    %v3184 = vld [vmem:[%s606 + $0x18a] sm:$0x1]
    %v3185 = vld [vmem:[%s606 + $0x1c2] sm:$0x1]
    %v3186 = vld [vmem:[%s606 + $0x1fa] sm:$0x1]
    %v3187 = vld [vmem:[%s606 + $0x232] sm:$0x1]
    %v3188 = vld [vmem:[%s606 + $0x26a] sm:$0x1]
    %v3189 = vld [vmem:[%s606 + $0x2a2] sm:$0x1]
    %v3190 = vld [vmem:[%s606 + $0x2da] sm:$0x1]
    %v3191 = vld [vmem:[%s606 + $0x312] sm:$0x1]
    %v3192 = vld [vmem:[%s606 + $0x34a] sm:$0x1]
    %v3209 = vrot.slane %v3178, 7
    %v3210 = vsel %vm180, %v3209, %v3177
    %v3211 = vrot.slane %v3179, 6
    %v3212 = vsel %vm183, %v3211, %v3210
    %v3213 = vrot.slane %v3180, 5
    %v3214 = vsel %vm186, %v3213, %v3212
    %v3215 = vrot.slane %v3181, 4
    %v3216 = vsel %vm189, %v3215, %v3214
    %v3217 = vrot.slane %v3182, 3
    %v3218 = vsel %vm192, %v3217, %v3216
    %v3219 = vrot.slane %v3183, 2
    %v3220 = vsel %vm195, %v3219, %v3218
    %v3221 = vrot.slane %v3184, 1
    %v3222 = vsel %vm198, %v3221, %v3220
    %v3223 = vrot.slane %v3186, 7
    %v3224 = vsel %vm180, %v3223, %v3185
    %v3225 = vrot.slane %v3187, 6
    %v3226 = vsel %vm183, %v3225, %v3224
    %v3227 = vrot.slane %v3188, 5
    %v3228 = vsel %vm186, %v3227, %v3226
    %v3229 = vrot.slane %v3189, 4
    %v3230 = vsel %vm189, %v3229, %v3228
    %v3231 = vrot.slane %v3190, 3
    %v3232 = vsel %vm192, %v3231, %v3230
    %v3233 = vrot.slane %v3191, 2
    %v3234 = vsel %vm195, %v3233, %v3232
    %v3235 = vrot.slane %v3192, 1
    %v3236 = vsel %vm198, %v3235, %v3234
    %v3239 = vmul.f32 %v401, %v3222
    %v3240 = vmul.f32 %v405, %v3236
    %v3241 = vadd.f32 %v3109, %v3239
    %v3242 = vadd.f32 %v3110, %v3240
    %v3243 = vld [vmem:[%s457 + $0x3] sm:$0x1]
    %v3244 = vld [vmem:[%s457 + $0x3b] sm:$0x1]
    %v3245 = vld [vmem:[%s457 + $0x73] sm:$0x1]
    %v3246 = vld [vmem:[%s457 + $0xab] sm:$0x1]
    %v3247 = vld [vmem:[%s457 + $0xe3] sm:$0x1]
    %v3248 = vld [vmem:[%s457 + $0x11b] sm:$0x1]
    %v3249 = vld [vmem:[%s457 + $0x153] sm:$0x1]
    %v3250 = vld [vmem:[%s457 + $0x18b] sm:$0x1]
    %v3251 = vld [vmem:[%s457 + $0x1c3] sm:$0x1]
    %v3252 = vld [vmem:[%s457 + $0x1fb] sm:$0x1]
    %v3253 = vld [vmem:[%s457 + $0x233] sm:$0x1]
    %v3254 = vld [vmem:[%s457 + $0x26b] sm:$0x1]
    %v3255 = vld [vmem:[%s457 + $0x2a3] sm:$0x1]
    %v3256 = vld [vmem:[%s457 + $0x2db] sm:$0x1]
    %v3257 = vld [vmem:[%s457 + $0x313] sm:$0x1]
    %v3258 = vld [vmem:[%s457 + $0x34b] sm:$0x1]
    %v3275 = vrot.slane %v3244, 7
    %v3276 = vsel %vm180, %v3275, %v3243
    %v3277 = vrot.slane %v3245, 6
    %v3278 = vsel %vm183, %v3277, %v3276
    %v3279 = vrot.slane %v3246, 5
    %v3280 = vsel %vm186, %v3279, %v3278
    %v3281 = vrot.slane %v3247, 4
    %v3282 = vsel %vm189, %v3281, %v3280
    %v3283 = vrot.slane %v3248, 3
    %v3284 = vsel %vm192, %v3283, %v3282
    %v3285 = vrot.slane %v3249, 2
    %v3286 = vsel %vm195, %v3285, %v3284
    %v3287 = vrot.slane %v3250, 1
    %v3288 = vsel %vm198, %v3287, %v3286
    %v3289 = vrot.slane %v3252, 7
    %v3290 = vsel %vm180, %v3289, %v3251
    %v3291 = vrot.slane %v3253, 6
    %v3292 = vsel %vm183, %v3291, %v3290
    %v3293 = vrot.slane %v3254, 5
    %v3294 = vsel %vm186, %v3293, %v3292
    %v3295 = vrot.slane %v3255, 4
    %v3296 = vsel %vm189, %v3295, %v3294
    %v3297 = vrot.slane %v3256, 3
    %v3298 = vsel %vm192, %v3297, %v3296
    %v3299 = vrot.slane %v3257, 2
    %v3300 = vsel %vm195, %v3299, %v3298
    %v3301 = vrot.slane %v3258, 1
    %v3302 = vsel %vm198, %v3301, %v3300
    %v3305 = vmul.f32 %v476, %v3288
    %v3306 = vmul.f32 %v480, %v3302
    %v3307 = vadd.f32 %v3175, %v3305
    %v3308 = vadd.f32 %v3176, %v3306
    %v3309 = vld [vmem:[%s606 + $0x3] sm:$0x1]
    %v3310 = vld [vmem:[%s606 + $0x3b] sm:$0x1]
    %v3311 = vld [vmem:[%s606 + $0x73] sm:$0x1]
    %v3312 = vld [vmem:[%s606 + $0xab] sm:$0x1]
    %v3313 = vld [vmem:[%s606 + $0xe3] sm:$0x1]
    %v3314 = vld [vmem:[%s606 + $0x11b] sm:$0x1]
    %v3315 = vld [vmem:[%s606 + $0x153] sm:$0x1]
    %v3316 = vld [vmem:[%s606 + $0x18b] sm:$0x1]
    %v3317 = vld [vmem:[%s606 + $0x1c3] sm:$0x1]
    %v3318 = vld [vmem:[%s606 + $0x1fb] sm:$0x1]
    %v3319 = vld [vmem:[%s606 + $0x233] sm:$0x1]
    %v3320 = vld [vmem:[%s606 + $0x26b] sm:$0x1]
    %v3321 = vld [vmem:[%s606 + $0x2a3] sm:$0x1]
    %v3322 = vld [vmem:[%s606 + $0x2db] sm:$0x1]
    %v3323 = vld [vmem:[%s606 + $0x313] sm:$0x1]
    %v3324 = vld [vmem:[%s606 + $0x34b] sm:$0x1]
    %v3341 = vrot.slane %v3310, 7
    %v3342 = vsel %vm180, %v3341, %v3309
    %v3343 = vrot.slane %v3311, 6
    %v3344 = vsel %vm183, %v3343, %v3342
    %v3345 = vrot.slane %v3312, 5
    %v3346 = vsel %vm186, %v3345, %v3344
    %v3347 = vrot.slane %v3313, 4
    %v3348 = vsel %vm189, %v3347, %v3346
    %v3349 = vrot.slane %v3314, 3
    %v3350 = vsel %vm192, %v3349, %v3348
    %v3351 = vrot.slane %v3315, 2
    %v3352 = vsel %vm195, %v3351, %v3350
    %v3353 = vrot.slane %v3316, 1
    %v3354 = vsel %vm198, %v3353, %v3352
    %v3355 = vrot.slane %v3318, 7
    %v3356 = vsel %vm180, %v3355, %v3317
    %v3357 = vrot.slane %v3319, 6
    %v3358 = vsel %vm183, %v3357, %v3356
    %v3359 = vrot.slane %v3320, 5
    %v3360 = vsel %vm186, %v3359, %v3358
    %v3361 = vrot.slane %v3321, 4
    %v3362 = vsel %vm189, %v3361, %v3360
    %v3363 = vrot.slane %v3322, 3
    %v3364 = vsel %vm192, %v3363, %v3362
    %v3365 = vrot.slane %v3323, 2
    %v3366 = vsel %vm195, %v3365, %v3364
    %v3367 = vrot.slane %v3324, 1
    %v3368 = vsel %vm198, %v3367, %v3366
    %v3371 = vmul.f32 %v550, %v3354
    %v3372 = vmul.f32 %v554, %v3368
    %v3373 = vadd.f32 %v3241, %v3371
    %v3374 = vadd.f32 %v3242, %v3372
    %v3375 = vmul.f32 %v625, %v3354
    %v3376 = vmul.f32 %v629, %v3368
    %v3377 = vadd.f32 %v3307, %v3375
    %v3378 = vadd.f32 %v3308, %v3376
    %v3379 = vld [vmem:[%s606 + $0x4] sm:$0x1]
    %v3380 = vld [vmem:[%s606 + $0x3c] sm:$0x1]
    %v3381 = vld [vmem:[%s606 + $0x74] sm:$0x1]
    %v3382 = vld [vmem:[%s606 + $0xac] sm:$0x1]
    %v3383 = vld [vmem:[%s606 + $0xe4] sm:$0x1]
    %v3384 = vld [vmem:[%s606 + $0x11c] sm:$0x1]
    %v3385 = vld [vmem:[%s606 + $0x154] sm:$0x1]
    %v3386 = vld [vmem:[%s606 + $0x18c] sm:$0x1]
    %v3387 = vld [vmem:[%s606 + $0x1c4] sm:$0x1]
    %v3388 = vld [vmem:[%s606 + $0x1fc] sm:$0x1]
    %v3389 = vld [vmem:[%s606 + $0x234] sm:$0x1]
    %v3390 = vld [vmem:[%s606 + $0x26c] sm:$0x1]
    %v3391 = vld [vmem:[%s606 + $0x2a4] sm:$0x1]
    %v3392 = vld [vmem:[%s606 + $0x2dc] sm:$0x1]
    %v3393 = vld [vmem:[%s606 + $0x314] sm:$0x1]
    %v3394 = vld [vmem:[%s606 + $0x34c] sm:$0x1]
    %v3411 = vrot.slane %v3380, 7
    %v3412 = vsel %vm180, %v3411, %v3379
    %v3413 = vrot.slane %v3381, 6
    %v3414 = vsel %vm183, %v3413, %v3412
    %v3415 = vrot.slane %v3382, 5
    %v3416 = vsel %vm186, %v3415, %v3414
    %v3417 = vrot.slane %v3383, 4
    %v3418 = vsel %vm189, %v3417, %v3416
    %v3419 = vrot.slane %v3384, 3
    %v3420 = vsel %vm192, %v3419, %v3418
    %v3421 = vrot.slane %v3385, 2
    %v3422 = vsel %vm195, %v3421, %v3420
    %v3423 = vrot.slane %v3386, 1
    %v3424 = vsel %vm198, %v3423, %v3422
    %v3425 = vrot.slane %v3388, 7
    %v3426 = vsel %vm180, %v3425, %v3387
    %v3427 = vrot.slane %v3389, 6
    %v3428 = vsel %vm183, %v3427, %v3426
    %v3429 = vrot.slane %v3390, 5
    %v3430 = vsel %vm186, %v3429, %v3428
    %v3431 = vrot.slane %v3391, 4
    %v3432 = vsel %vm189, %v3431, %v3430
    %v3433 = vrot.slane %v3392, 3
    %v3434 = vsel %vm192, %v3433, %v3432
    %v3435 = vrot.slane %v3393, 2
    %v3436 = vsel %vm195, %v3435, %v3434
    %v3437 = vrot.slane %v3394, 1
    %v3438 = vsel %vm198, %v3437, %v3436
    %v3441 = vmul.f32 %v699, %v3424
    %v3442 = vmul.f32 %v703, %v3438
    %v3443 = vadd.f32 %v3373, %v3441
    %v3444 = vadd.f32 %v3374, %v3442
    %v3445 = vld [vmem:[%s755 + $0x3] sm:$0x1]
    %v3446 = vld [vmem:[%s755 + $0x3b] sm:$0x1]
    %v3447 = vld [vmem:[%s755 + $0x73] sm:$0x1]
    %v3448 = vld [vmem:[%s755 + $0xab] sm:$0x1]
    %v3449 = vld [vmem:[%s755 + $0xe3] sm:$0x1]
    %v3450 = vld [vmem:[%s755 + $0x11b] sm:$0x1]
    %v3451 = vld [vmem:[%s755 + $0x153] sm:$0x1]
    %v3452 = vld [vmem:[%s755 + $0x18b] sm:$0x1]
    %v3453 = vld [vmem:[%s755 + $0x1c3] sm:$0x1]
    %v3454 = vld [vmem:[%s755 + $0x1fb] sm:$0x1]
    %v3455 = vld [vmem:[%s755 + $0x233] sm:$0x1]
    %v3456 = vld [vmem:[%s755 + $0x26b] sm:$0x1]
    %v3457 = vld [vmem:[%s755 + $0x2a3] sm:$0x1]
    %v3458 = vld [vmem:[%s755 + $0x2db] sm:$0x1]
    %v3459 = vld [vmem:[%s755 + $0x313] sm:$0x1]
    %v3460 = vld [vmem:[%s755 + $0x34b] sm:$0x1]
    %v3477 = vrot.slane %v3446, 7
    %v3478 = vsel %vm180, %v3477, %v3445
    %v3479 = vrot.slane %v3447, 6
    %v3480 = vsel %vm183, %v3479, %v3478
    %v3481 = vrot.slane %v3448, 5
    %v3482 = vsel %vm186, %v3481, %v3480
    %v3483 = vrot.slane %v3449, 4
    %v3484 = vsel %vm189, %v3483, %v3482
    %v3485 = vrot.slane %v3450, 3
    %v3486 = vsel %vm192, %v3485, %v3484
    %v3487 = vrot.slane %v3451, 2
    %v3488 = vsel %vm195, %v3487, %v3486
    %v3489 = vrot.slane %v3452, 1
    %v3490 = vsel %vm198, %v3489, %v3488
    %v3491 = vrot.slane %v3454, 7
    %v3492 = vsel %vm180, %v3491, %v3453
    %v3493 = vrot.slane %v3455, 6
    %v3494 = vsel %vm183, %v3493, %v3492
    %v3495 = vrot.slane %v3456, 5
    %v3496 = vsel %vm186, %v3495, %v3494
    %v3497 = vrot.slane %v3457, 4
    %v3498 = vsel %vm189, %v3497, %v3496
    %v3499 = vrot.slane %v3458, 3
    %v3500 = vsel %vm192, %v3499, %v3498
    %v3501 = vrot.slane %v3459, 2
    %v3502 = vsel %vm195, %v3501, %v3500
    %v3503 = vrot.slane %v3460, 1
    %v3504 = vsel %vm198, %v3503, %v3502
    %v3507 = vmul.f32 %v774, %v3490
    %v3508 = vmul.f32 %v778, %v3504
    %v3509 = vadd.f32 %v3377, %v3507
    %v3510 = vadd.f32 %v3378, %v3508
    %v3511 = vld [vmem:[%s606 + $0x5] sm:$0x1]
    %v3512 = vld [vmem:[%s606 + $0x3d] sm:$0x1]
    %v3513 = vld [vmem:[%s606 + $0x75] sm:$0x1]
    %v3514 = vld [vmem:[%s606 + $0xad] sm:$0x1]
    %v3515 = vld [vmem:[%s606 + $0xe5] sm:$0x1]
    %v3516 = vld [vmem:[%s606 + $0x11d] sm:$0x1]
    %v3517 = vld [vmem:[%s606 + $0x155] sm:$0x1]
    %v3518 = vld [vmem:[%s606 + $0x18d] sm:$0x1]
    %v3519 = vld [vmem:[%s606 + $0x1c5] sm:$0x1]
    %v3520 = vld [vmem:[%s606 + $0x1fd] sm:$0x1]
    %v3521 = vld [vmem:[%s606 + $0x235] sm:$0x1]
    %v3522 = vld [vmem:[%s606 + $0x26d] sm:$0x1]
    %v3523 = vld [vmem:[%s606 + $0x2a5] sm:$0x1]
    %v3524 = vld [vmem:[%s606 + $0x2dd] sm:$0x1]
    %v3525 = vld [vmem:[%s606 + $0x315] sm:$0x1]
    %v3526 = vld [vmem:[%s606 + $0x34d] sm:$0x1]
    %v3543 = vrot.slane %v3512, 7
    %v3544 = vsel %vm180, %v3543, %v3511
    %v3545 = vrot.slane %v3513, 6
    %v3546 = vsel %vm183, %v3545, %v3544
    %v3547 = vrot.slane %v3514, 5
    %v3548 = vsel %vm186, %v3547, %v3546
    %v3549 = vrot.slane %v3515, 4
    %v3550 = vsel %vm189, %v3549, %v3548
    %v3551 = vrot.slane %v3516, 3
    %v3552 = vsel %vm192, %v3551, %v3550
    %v3553 = vrot.slane %v3517, 2
    %v3554 = vsel %vm195, %v3553, %v3552
    %v3555 = vrot.slane %v3518, 1
    %v3556 = vsel %vm198, %v3555, %v3554
    %v3557 = vrot.slane %v3520, 7
    %v3558 = vsel %vm180, %v3557, %v3519
    %v3559 = vrot.slane %v3521, 6
    %v3560 = vsel %vm183, %v3559, %v3558
    %v3561 = vrot.slane %v3522, 5
    %v3562 = vsel %vm186, %v3561, %v3560
    %v3563 = vrot.slane %v3523, 4
    %v3564 = vsel %vm189, %v3563, %v3562
    %v3565 = vrot.slane %v3524, 3
    %v3566 = vsel %vm192, %v3565, %v3564
    %v3567 = vrot.slane %v3525, 2
    %v3568 = vsel %vm195, %v3567, %v3566
    %v3569 = vrot.slane %v3526, 1
    %v3570 = vsel %vm198, %v3569, %v3568
    %v3573 = vmul.f32 %v848, %v3556
    %v3574 = vmul.f32 %v852, %v3570
    %v3575 = vadd.f32 %v3443, %v3573
    %v3576 = vadd.f32 %v3444, %v3574
    %v3577 = vld [vmem:[%s904 + $0x3] sm:$0x1]
    %v3578 = vld [vmem:[%s904 + $0x3b] sm:$0x1]
    %v3579 = vld [vmem:[%s904 + $0x73] sm:$0x1]
    %v3580 = vld [vmem:[%s904 + $0xab] sm:$0x1]
    %v3581 = vld [vmem:[%s904 + $0xe3] sm:$0x1]
    %v3582 = vld [vmem:[%s904 + $0x11b] sm:$0x1]
    %v3583 = vld [vmem:[%s904 + $0x153] sm:$0x1]
    %v3584 = vld [vmem:[%s904 + $0x18b] sm:$0x1]
    %v3585 = vld [vmem:[%s904 + $0x1c3] sm:$0x1]
    %v3586 = vld [vmem:[%s904 + $0x1fb] sm:$0x1]
    %v3587 = vld [vmem:[%s904 + $0x233] sm:$0x1]
    %v3588 = vld [vmem:[%s904 + $0x26b] sm:$0x1]
    %v3589 = vld [vmem:[%s904 + $0x2a3] sm:$0x1]
    %v3590 = vld [vmem:[%s904 + $0x2db] sm:$0x1]
    %v3591 = vld [vmem:[%s904 + $0x313] sm:$0x1]
    %v3592 = vld [vmem:[%s904 + $0x34b] sm:$0x1]
    %v3609 = vrot.slane %v3578, 7
    %v3610 = vsel %vm180, %v3609, %v3577
    %v3611 = vrot.slane %v3579, 6
    %v3612 = vsel %vm183, %v3611, %v3610
    %v3613 = vrot.slane %v3580, 5
    %v3614 = vsel %vm186, %v3613, %v3612
    %v3615 = vrot.slane %v3581, 4
    %v3616 = vsel %vm189, %v3615, %v3614
    %v3617 = vrot.slane %v3582, 3
    %v3618 = vsel %vm192, %v3617, %v3616
    %v3619 = vrot.slane %v3583, 2
    %v3620 = vsel %vm195, %v3619, %v3618
    %v3621 = vrot.slane %v3584, 1
    %v3622 = vsel %vm198, %v3621, %v3620
    %v3623 = vrot.slane %v3586, 7
    %v3624 = vsel %vm180, %v3623, %v3585
    %v3625 = vrot.slane %v3587, 6
    %v3626 = vsel %vm183, %v3625, %v3624
    %v3627 = vrot.slane %v3588, 5
    %v3628 = vsel %vm186, %v3627, %v3626
    %v3629 = vrot.slane %v3589, 4
    %v3630 = vsel %vm189, %v3629, %v3628
    %v3631 = vrot.slane %v3590, 3
    %v3632 = vsel %vm192, %v3631, %v3630
    %v3633 = vrot.slane %v3591, 2
    %v3634 = vsel %vm195, %v3633, %v3632
    %v3635 = vrot.slane %v3592, 1
    %v3636 = vsel %vm198, %v3635, %v3634
    %v3639 = vmul.f32 %v923, %v3622
    %v3640 = vmul.f32 %v927, %v3636
    %v3641 = vadd.f32 %v3509, %v3639
    %v3642 = vadd.f32 %v3510, %v3640
    %v3643 = vld [vmem:[%s606 + $0x6] sm:$0x1]
    %v3644 = vld [vmem:[%s606 + $0x3e] sm:$0x1]
    %v3645 = vld [vmem:[%s606 + $0x76] sm:$0x1]
    %v3646 = vld [vmem:[%s606 + $0xae] sm:$0x1]
    %v3647 = vld [vmem:[%s606 + $0xe6] sm:$0x1]
    %v3648 = vld [vmem:[%s606 + $0x11e] sm:$0x1]
    %v3649 = vld [vmem:[%s606 + $0x156] sm:$0x1]
    %v3650 = vld [vmem:[%s606 + $0x18e] sm:$0x1]
    %v3651 = vld [vmem:[%s606 + $0x1c6] sm:$0x1]
    %v3652 = vld [vmem:[%s606 + $0x1fe] sm:$0x1]
    %v3653 = vld [vmem:[%s606 + $0x236] sm:$0x1]
    %v3654 = vld [vmem:[%s606 + $0x26e] sm:$0x1]
    %v3655 = vld [vmem:[%s606 + $0x2a6] sm:$0x1]
    %v3656 = vld [vmem:[%s606 + $0x2de] sm:$0x1]
    %v3657 = vld [vmem:[%s606 + $0x316] sm:$0x1]
    %v3658 = vld [vmem:[%s606 + $0x34e] sm:$0x1]
    %v3675 = vrot.slane %v3644, 7
    %v3676 = vsel %vm180, %v3675, %v3643
    %v3677 = vrot.slane %v3645, 6
    %v3678 = vsel %vm183, %v3677, %v3676
    %v3679 = vrot.slane %v3646, 5
    %v3680 = vsel %vm186, %v3679, %v3678
    %v3681 = vrot.slane %v3647, 4
    %v3682 = vsel %vm189, %v3681, %v3680
    %v3683 = vrot.slane %v3648, 3
    %v3684 = vsel %vm192, %v3683, %v3682
    %v3685 = vrot.slane %v3649, 2
    %v3686 = vsel %vm195, %v3685, %v3684
    %v3687 = vrot.slane %v3650, 1
    %v3688 = vsel %vm198, %v3687, %v3686
    %v3689 = vrot.slane %v3652, 7
    %v3690 = vsel %vm180, %v3689, %v3651
    %v3691 = vrot.slane %v3653, 6
    %v3692 = vsel %vm183, %v3691, %v3690
    %v3693 = vrot.slane %v3654, 5
    %v3694 = vsel %vm186, %v3693, %v3692
    %v3695 = vrot.slane %v3655, 4
    %v3696 = vsel %vm189, %v3695, %v3694
    %v3697 = vrot.slane %v3656, 3
    %v3698 = vsel %vm192, %v3697, %v3696
    %v3699 = vrot.slane %v3657, 2
    %v3700 = vsel %vm195, %v3699, %v3698
    %v3701 = vrot.slane %v3658, 1
    %v3702 = vsel %vm198, %v3701, %v3700
    %v3705 = vmul.f32 %v997, %v3688
    %v3706 = vmul.f32 %v1001, %v3702
    %v3707 = vadd.f32 %v3575, %v3705
    %v3708 = vadd.f32 %v3576, %v3706
    %v3709 = vld [vmem:[%s1053 + $0x3] sm:$0x1]
    %v3710 = vld [vmem:[%s1053 + $0x3b] sm:$0x1]
    %v3711 = vld [vmem:[%s1053 + $0x73] sm:$0x1]
    %v3712 = vld [vmem:[%s1053 + $0xab] sm:$0x1]
    %v3713 = vld [vmem:[%s1053 + $0xe3] sm:$0x1]
    %v3714 = vld [vmem:[%s1053 + $0x11b] sm:$0x1]
    %v3715 = vld [vmem:[%s1053 + $0x153] sm:$0x1]
    %v3716 = vld [vmem:[%s1053 + $0x18b] sm:$0x1]
    %v3717 = vld [vmem:[%s1053 + $0x1c3] sm:$0x1]
    %v3718 = vld [vmem:[%s1053 + $0x1fb] sm:$0x1]
    %v3719 = vld [vmem:[%s1053 + $0x233] sm:$0x1]
    %v3720 = vld [vmem:[%s1053 + $0x26b] sm:$0x1]
    %v3721 = vld [vmem:[%s1053 + $0x2a3] sm:$0x1]
    %v3722 = vld [vmem:[%s1053 + $0x2db] sm:$0x1]
    %v3723 = vld [vmem:[%s1053 + $0x313] sm:$0x1]
    %v3724 = vld [vmem:[%s1053 + $0x34b] sm:$0x1]
    %v3741 = vrot.slane %v3710, 7
    %v3742 = vsel %vm180, %v3741, %v3709
    %v3743 = vrot.slane %v3711, 6
    %v3744 = vsel %vm183, %v3743, %v3742
    %v3745 = vrot.slane %v3712, 5
    %v3746 = vsel %vm186, %v3745, %v3744
    %v3747 = vrot.slane %v3713, 4
    %v3748 = vsel %vm189, %v3747, %v3746
    %v3749 = vrot.slane %v3714, 3
    %v3750 = vsel %vm192, %v3749, %v3748
    %v3751 = vrot.slane %v3715, 2
    %v3752 = vsel %vm195, %v3751, %v3750
    %v3753 = vrot.slane %v3716, 1
    %v3754 = vsel %vm198, %v3753, %v3752
    %v3755 = vrot.slane %v3718, 7
    %v3756 = vsel %vm180, %v3755, %v3717
    %v3757 = vrot.slane %v3719, 6
    %v3758 = vsel %vm183, %v3757, %v3756
    %v3759 = vrot.slane %v3720, 5
    %v3760 = vsel %vm186, %v3759, %v3758
    %v3761 = vrot.slane %v3721, 4
    %v3762 = vsel %vm189, %v3761, %v3760
    %v3763 = vrot.slane %v3722, 3
    %v3764 = vsel %vm192, %v3763, %v3762
    %v3765 = vrot.slane %v3723, 2
    %v3766 = vsel %vm195, %v3765, %v3764
    %v3767 = vrot.slane %v3724, 1
    %v3768 = vsel %vm198, %v3767, %v3766
    %v3771 = vmul.f32 %v1072, %v3754
    %v3772 = vmul.f32 %v1076, %v3768
    %v3773 = vadd.f32 %v3641, %v3771
    %v3774 = vadd.f32 %v3642, %v3772
    %3777 = vrot.lane.b32.xlu0 %v3707, 64
    %v3778 = vpop.permute.xlu0 %3777
    %3779 = vrot.lane.b32.xlu0 %v3708, 64
    %v3780 = vpop.permute.xlu0 %3779
    %3783 = vst.msk [vmem:[#allocation2 + $0x30] sm:$0xff] %vm1136, %v3778
    %3784 = vst.msk [vmem:[#allocation2 + $0x38] sm:$0xff] %vm1136, %v3780
    %3787 = vrot.lane.b32.xlu0 %v3773, 64
    %v3788 = vpop.permute.xlu0 %3787
    %3789 = vrot.lane.b32.xlu0 %v3774, 64
    %v3790 = vpop.permute.xlu0 %3789
    %3793 = vst.msk [vmem:[#allocation3 + $0x30] sm:$0xff] %vm1136, %v3788
    %3794 = vst.msk [vmem:[#allocation3 + $0x38] sm:$0xff] %vm1136, %v3790
    %v3795 = vld [vmem:[%s755] sm:$0x1]
    %v3796 = vld [vmem:[%s755 + $0x38] sm:$0x1]
    %v3797 = vld [vmem:[%s755 + $0x70] sm:$0x1]
    %v3798 = vld [vmem:[%s755 + $0xa8] sm:$0x1]
    %v3799 = vld [vmem:[%s755 + $0xe0] sm:$0x1]
    %v3800 = vld [vmem:[%s755 + $0x118] sm:$0x1]
    %v3801 = vld [vmem:[%s755 + $0x150] sm:$0x1]
    %v3802 = vld [vmem:[%s755 + $0x188] sm:$0x1]
    %v3803 = vld [vmem:[%s755 + $0x1c0] sm:$0x1]
    %v3804 = vld [vmem:[%s755 + $0x1f8] sm:$0x1]
    %v3805 = vld [vmem:[%s755 + $0x230] sm:$0x1]
    %v3806 = vld [vmem:[%s755 + $0x268] sm:$0x1]
    %v3807 = vld [vmem:[%s755 + $0x2a0] sm:$0x1]
    %v3808 = vld [vmem:[%s755 + $0x2d8] sm:$0x1]
    %v3809 = vld [vmem:[%s755 + $0x310] sm:$0x1]
    %v3810 = vld [vmem:[%s755 + $0x348] sm:$0x1]
    %v3827 = vrot.slane %v3796, 7
    %v3828 = vsel %vm180, %v3827, %v3795
    %v3829 = vrot.slane %v3797, 6
    %v3830 = vsel %vm183, %v3829, %v3828
    %v3831 = vrot.slane %v3798, 5
    %v3832 = vsel %vm186, %v3831, %v3830
    %v3833 = vrot.slane %v3799, 4
    %v3834 = vsel %vm189, %v3833, %v3832
    %v3835 = vrot.slane %v3800, 3
    %v3836 = vsel %vm192, %v3835, %v3834
    %v3837 = vrot.slane %v3801, 2
    %v3838 = vsel %vm195, %v3837, %v3836
    %v3839 = vrot.slane %v3802, 1
    %v3840 = vsel %vm198, %v3839, %v3838
    %v3841 = vrot.slane %v3804, 7
    %v3842 = vsel %vm180, %v3841, %v3803
    %v3843 = vrot.slane %v3805, 6
    %v3844 = vsel %vm183, %v3843, %v3842
    %v3845 = vrot.slane %v3806, 5
    %v3846 = vsel %vm186, %v3845, %v3844
    %v3847 = vrot.slane %v3807, 4
    %v3848 = vsel %vm189, %v3847, %v3846
    %v3849 = vrot.slane %v3808, 3
    %v3850 = vsel %vm192, %v3849, %v3848
    %v3851 = vrot.slane %v3809, 2
    %v3852 = vsel %vm195, %v3851, %v3850
    %v3853 = vrot.slane %v3810, 1
    %v3854 = vsel %vm198, %v3853, %v3852
    %v3857 = vmul.f32 %v156, %v3840
    %v3858 = vmul.f32 %v161, %v3854
    %v3859 = vadd.f32 %v3857, 0.0
    %v3860 = vadd.f32 %v3858, 0.0
    %v3861 = vld [vmem:[%s3 + $0x4] sm:$0x1]
    %v3862 = vld [vmem:[%s3 + $0x3c] sm:$0x1]
    %v3863 = vld [vmem:[%s3 + $0x74] sm:$0x1]
    %v3864 = vld [vmem:[%s3 + $0xac] sm:$0x1]
    %v3865 = vld [vmem:[%s3 + $0xe4] sm:$0x1]
    %v3866 = vld [vmem:[%s3 + $0x11c] sm:$0x1]
    %v3867 = vld [vmem:[%s3 + $0x154] sm:$0x1]
    %v3868 = vld [vmem:[%s3 + $0x18c] sm:$0x1]
    %v3869 = vld [vmem:[%s3 + $0x1c4] sm:$0x1]
    %v3870 = vld [vmem:[%s3 + $0x1fc] sm:$0x1]
    %v3871 = vld [vmem:[%s3 + $0x234] sm:$0x1]
    %v3872 = vld [vmem:[%s3 + $0x26c] sm:$0x1]
    %v3873 = vld [vmem:[%s3 + $0x2a4] sm:$0x1]
    %v3874 = vld [vmem:[%s3 + $0x2dc] sm:$0x1]
    %v3875 = vld [vmem:[%s3 + $0x314] sm:$0x1]
    %v3876 = vld [vmem:[%s3 + $0x34c] sm:$0x1]
    %v3893 = vrot.slane %v3862, 7
    %v3894 = vsel %vm180, %v3893, %v3861
    %v3895 = vrot.slane %v3863, 6
    %v3896 = vsel %vm183, %v3895, %v3894
    %v3897 = vrot.slane %v3864, 5
    %v3898 = vsel %vm186, %v3897, %v3896
    %v3899 = vrot.slane %v3865, 4
    %v3900 = vsel %vm189, %v3899, %v3898
    %v3901 = vrot.slane %v3866, 3
    %v3902 = vsel %vm192, %v3901, %v3900
    %v3903 = vrot.slane %v3867, 2
    %v3904 = vsel %vm195, %v3903, %v3902
    %v3905 = vrot.slane %v3868, 1
    %v3906 = vsel %vm198, %v3905, %v3904
    %v3907 = vrot.slane %v3870, 7
    %v3908 = vsel %vm180, %v3907, %v3869
    %v3909 = vrot.slane %v3871, 6
    %v3910 = vsel %vm183, %v3909, %v3908
    %v3911 = vrot.slane %v3872, 5
    %v3912 = vsel %vm186, %v3911, %v3910
    %v3913 = vrot.slane %v3873, 4
    %v3914 = vsel %vm189, %v3913, %v3912
    %v3915 = vrot.slane %v3874, 3
    %v3916 = vsel %vm192, %v3915, %v3914
    %v3917 = vrot.slane %v3875, 2
    %v3918 = vsel %vm195, %v3917, %v3916
    %v3919 = vrot.slane %v3876, 1
    %v3920 = vsel %vm198, %v3919, %v3918
    %v3923 = vmul.f32 %v223, %v3906
    %v3924 = vmul.f32 %v228, %v3920
    %v3925 = vadd.f32 %v3923, 0.0
    %v3926 = vadd.f32 %v3924, 0.0
    %v3927 = vld [vmem:[%s755 + $0x1] sm:$0x1]
    %v3928 = vld [vmem:[%s755 + $0x39] sm:$0x1]
    %v3929 = vld [vmem:[%s755 + $0x71] sm:$0x1]
    %v3930 = vld [vmem:[%s755 + $0xa9] sm:$0x1]
    %v3931 = vld [vmem:[%s755 + $0xe1] sm:$0x1]
    %v3932 = vld [vmem:[%s755 + $0x119] sm:$0x1]
    %v3933 = vld [vmem:[%s755 + $0x151] sm:$0x1]
    %v3934 = vld [vmem:[%s755 + $0x189] sm:$0x1]
    %v3935 = vld [vmem:[%s755 + $0x1c1] sm:$0x1]
    %v3936 = vld [vmem:[%s755 + $0x1f9] sm:$0x1]
    %v3937 = vld [vmem:[%s755 + $0x231] sm:$0x1]
    %v3938 = vld [vmem:[%s755 + $0x269] sm:$0x1]
    %v3939 = vld [vmem:[%s755 + $0x2a1] sm:$0x1]
    %v3940 = vld [vmem:[%s755 + $0x2d9] sm:$0x1]
    %v3941 = vld [vmem:[%s755 + $0x311] sm:$0x1]
    %v3942 = vld [vmem:[%s755 + $0x349] sm:$0x1]
    %v3959 = vrot.slane %v3928, 7
    %v3960 = vsel %vm180, %v3959, %v3927
    %v3961 = vrot.slane %v3929, 6
    %v3962 = vsel %vm183, %v3961, %v3960
    %v3963 = vrot.slane %v3930, 5
    %v3964 = vsel %vm186, %v3963, %v3962
    %v3965 = vrot.slane %v3931, 4
    %v3966 = vsel %vm189, %v3965, %v3964
    %v3967 = vrot.slane %v3932, 3
    %v3968 = vsel %vm192, %v3967, %v3966
    %v3969 = vrot.slane %v3933, 2
    %v3970 = vsel %vm195, %v3969, %v3968
    %v3971 = vrot.slane %v3934, 1
    %v3972 = vsel %vm198, %v3971, %v3970
    %v3973 = vrot.slane %v3936, 7
    %v3974 = vsel %vm180, %v3973, %v3935
    %v3975 = vrot.slane %v3937, 6
    %v3976 = vsel %vm183, %v3975, %v3974
    %v3977 = vrot.slane %v3938, 5
    %v3978 = vsel %vm186, %v3977, %v3976
    %v3979 = vrot.slane %v3939, 4
    %v3980 = vsel %vm189, %v3979, %v3978
    %v3981 = vrot.slane %v3940, 3
    %v3982 = vsel %vm192, %v3981, %v3980
    %v3983 = vrot.slane %v3941, 2
    %v3984 = vsel %vm195, %v3983, %v3982
    %v3985 = vrot.slane %v3942, 1
    %v3986 = vsel %vm198, %v3985, %v3984
    %v3989 = vmul.f32 %v252, %v3972
    %v3990 = vmul.f32 %v256, %v3986
    %v3991 = vadd.f32 %v3859, %v3989
    %v3992 = vadd.f32 %v3860, %v3990
    %v3993 = vld [vmem:[%s308 + $0x4] sm:$0x1]
    %v3994 = vld [vmem:[%s308 + $0x3c] sm:$0x1]
    %v3995 = vld [vmem:[%s308 + $0x74] sm:$0x1]
    %v3996 = vld [vmem:[%s308 + $0xac] sm:$0x1]
    %v3997 = vld [vmem:[%s308 + $0xe4] sm:$0x1]
    %v3998 = vld [vmem:[%s308 + $0x11c] sm:$0x1]
    %v3999 = vld [vmem:[%s308 + $0x154] sm:$0x1]
    %v4000 = vld [vmem:[%s308 + $0x18c] sm:$0x1]
    %v4001 = vld [vmem:[%s308 + $0x1c4] sm:$0x1]
    %v4002 = vld [vmem:[%s308 + $0x1fc] sm:$0x1]
    %v4003 = vld [vmem:[%s308 + $0x234] sm:$0x1]
    %v4004 = vld [vmem:[%s308 + $0x26c] sm:$0x1]
    %v4005 = vld [vmem:[%s308 + $0x2a4] sm:$0x1]
    %v4006 = vld [vmem:[%s308 + $0x2dc] sm:$0x1]
    %v4007 = vld [vmem:[%s308 + $0x314] sm:$0x1]
    %v4008 = vld [vmem:[%s308 + $0x34c] sm:$0x1]
    %v4025 = vrot.slane %v3994, 7
    %v4026 = vsel %vm180, %v4025, %v3993
    %v4027 = vrot.slane %v3995, 6
    %v4028 = vsel %vm183, %v4027, %v4026
    %v4029 = vrot.slane %v3996, 5
    %v4030 = vsel %vm186, %v4029, %v4028
    %v4031 = vrot.slane %v3997, 4
    %v4032 = vsel %vm189, %v4031, %v4030
    %v4033 = vrot.slane %v3998, 3
    %v4034 = vsel %vm192, %v4033, %v4032
    %v4035 = vrot.slane %v3999, 2
    %v4036 = vsel %vm195, %v4035, %v4034
    %v4037 = vrot.slane %v4000, 1
    %v4038 = vsel %vm198, %v4037, %v4036
    %v4039 = vrot.slane %v4002, 7
    %v4040 = vsel %vm180, %v4039, %v4001
    %v4041 = vrot.slane %v4003, 6
    %v4042 = vsel %vm183, %v4041, %v4040
    %v4043 = vrot.slane %v4004, 5
    %v4044 = vsel %vm186, %v4043, %v4042
    %v4045 = vrot.slane %v4005, 4
    %v4046 = vsel %vm189, %v4045, %v4044
    %v4047 = vrot.slane %v4006, 3
    %v4048 = vsel %vm192, %v4047, %v4046
    %v4049 = vrot.slane %v4007, 2
    %v4050 = vsel %vm195, %v4049, %v4048
    %v4051 = vrot.slane %v4008, 1
    %v4052 = vsel %vm198, %v4051, %v4050
    %v4055 = vmul.f32 %v327, %v4038
    %v4056 = vmul.f32 %v331, %v4052
    %v4057 = vadd.f32 %v3925, %v4055
    %v4058 = vadd.f32 %v3926, %v4056
    %v4059 = vld [vmem:[%s755 + $0x2] sm:$0x1]
    %v4060 = vld [vmem:[%s755 + $0x3a] sm:$0x1]
    %v4061 = vld [vmem:[%s755 + $0x72] sm:$0x1]
    %v4062 = vld [vmem:[%s755 + $0xaa] sm:$0x1]
    %v4063 = vld [vmem:[%s755 + $0xe2] sm:$0x1]
    %v4064 = vld [vmem:[%s755 + $0x11a] sm:$0x1]
    %v4065 = vld [vmem:[%s755 + $0x152] sm:$0x1]
    %v4066 = vld [vmem:[%s755 + $0x18a] sm:$0x1]
    %v4067 = vld [vmem:[%s755 + $0x1c2] sm:$0x1]
    %v4068 = vld [vmem:[%s755 + $0x1fa] sm:$0x1]
    %v4069 = vld [vmem:[%s755 + $0x232] sm:$0x1]
    %v4070 = vld [vmem:[%s755 + $0x26a] sm:$0x1]
    %v4071 = vld [vmem:[%s755 + $0x2a2] sm:$0x1]
    %v4072 = vld [vmem:[%s755 + $0x2da] sm:$0x1]
    %v4073 = vld [vmem:[%s755 + $0x312] sm:$0x1]
    %v4074 = vld [vmem:[%s755 + $0x34a] sm:$0x1]
    %v4091 = vrot.slane %v4060, 7
    %v4092 = vsel %vm180, %v4091, %v4059
    %v4093 = vrot.slane %v4061, 6
    %v4094 = vsel %vm183, %v4093, %v4092
    %v4095 = vrot.slane %v4062, 5
    %v4096 = vsel %vm186, %v4095, %v4094
    %v4097 = vrot.slane %v4063, 4
    %v4098 = vsel %vm189, %v4097, %v4096
    %v4099 = vrot.slane %v4064, 3
    %v4100 = vsel %vm192, %v4099, %v4098
    %v4101 = vrot.slane %v4065, 2
    %v4102 = vsel %vm195, %v4101, %v4100
    %v4103 = vrot.slane %v4066, 1
    %v4104 = vsel %vm198, %v4103, %v4102
    %v4105 = vrot.slane %v4068, 7
    %v4106 = vsel %vm180, %v4105, %v4067
    %v4107 = vrot.slane %v4069, 6
    %v4108 = vsel %vm183, %v4107, %v4106
    %v4109 = vrot.slane %v4070, 5
    %v4110 = vsel %vm186, %v4109, %v4108
    %v4111 = vrot.slane %v4071, 4
    %v4112 = vsel %vm189, %v4111, %v4110
    %v4113 = vrot.slane %v4072, 3
    %v4114 = vsel %vm192, %v4113, %v4112
    %v4115 = vrot.slane %v4073, 2
    %v4116 = vsel %vm195, %v4115, %v4114
    %v4117 = vrot.slane %v4074, 1
    %v4118 = vsel %vm198, %v4117, %v4116
    %v4121 = vmul.f32 %v401, %v4104
    %v4122 = vmul.f32 %v405, %v4118
    %v4123 = vadd.f32 %v3991, %v4121
    %v4124 = vadd.f32 %v3992, %v4122
    %v4125 = vld [vmem:[%s457 + $0x4] sm:$0x1]
    %v4126 = vld [vmem:[%s457 + $0x3c] sm:$0x1]
    %v4127 = vld [vmem:[%s457 + $0x74] sm:$0x1]
    %v4128 = vld [vmem:[%s457 + $0xac] sm:$0x1]
    %v4129 = vld [vmem:[%s457 + $0xe4] sm:$0x1]
    %v4130 = vld [vmem:[%s457 + $0x11c] sm:$0x1]
    %v4131 = vld [vmem:[%s457 + $0x154] sm:$0x1]
    %v4132 = vld [vmem:[%s457 + $0x18c] sm:$0x1]
    %v4133 = vld [vmem:[%s457 + $0x1c4] sm:$0x1]
    %v4134 = vld [vmem:[%s457 + $0x1fc] sm:$0x1]
    %v4135 = vld [vmem:[%s457 + $0x234] sm:$0x1]
    %v4136 = vld [vmem:[%s457 + $0x26c] sm:$0x1]
    %v4137 = vld [vmem:[%s457 + $0x2a4] sm:$0x1]
    %v4138 = vld [vmem:[%s457 + $0x2dc] sm:$0x1]
    %v4139 = vld [vmem:[%s457 + $0x314] sm:$0x1]
    %v4140 = vld [vmem:[%s457 + $0x34c] sm:$0x1]
    %v4157 = vrot.slane %v4126, 7
    %v4158 = vsel %vm180, %v4157, %v4125
    %v4159 = vrot.slane %v4127, 6
    %v4160 = vsel %vm183, %v4159, %v4158
    %v4161 = vrot.slane %v4128, 5
    %v4162 = vsel %vm186, %v4161, %v4160
    %v4163 = vrot.slane %v4129, 4
    %v4164 = vsel %vm189, %v4163, %v4162
    %v4165 = vrot.slane %v4130, 3
    %v4166 = vsel %vm192, %v4165, %v4164
    %v4167 = vrot.slane %v4131, 2
    %v4168 = vsel %vm195, %v4167, %v4166
    %v4169 = vrot.slane %v4132, 1
    %v4170 = vsel %vm198, %v4169, %v4168
    %v4171 = vrot.slane %v4134, 7
    %v4172 = vsel %vm180, %v4171, %v4133
    %v4173 = vrot.slane %v4135, 6
    %v4174 = vsel %vm183, %v4173, %v4172
    %v4175 = vrot.slane %v4136, 5
    %v4176 = vsel %vm186, %v4175, %v4174
    %v4177 = vrot.slane %v4137, 4
    %v4178 = vsel %vm189, %v4177, %v4176
    %v4179 = vrot.slane %v4138, 3
    %v4180 = vsel %vm192, %v4179, %v4178
    %v4181 = vrot.slane %v4139, 2
    %v4182 = vsel %vm195, %v4181, %v4180
    %v4183 = vrot.slane %v4140, 1
    %v4184 = vsel %vm198, %v4183, %v4182
    %v4187 = vmul.f32 %v476, %v4170
    %v4188 = vmul.f32 %v480, %v4184
    %v4189 = vadd.f32 %v4057, %v4187
    %v4190 = vadd.f32 %v4058, %v4188
    %v4191 = vld [vmem:[%s755 + $0x3] sm:$0x1]
    %v4192 = vld [vmem:[%s755 + $0x3b] sm:$0x1]
    %v4193 = vld [vmem:[%s755 + $0x73] sm:$0x1]
    %v4194 = vld [vmem:[%s755 + $0xab] sm:$0x1]
    %v4195 = vld [vmem:[%s755 + $0xe3] sm:$0x1]
    %v4196 = vld [vmem:[%s755 + $0x11b] sm:$0x1]
    %v4197 = vld [vmem:[%s755 + $0x153] sm:$0x1]
    %v4198 = vld [vmem:[%s755 + $0x18b] sm:$0x1]
    %v4199 = vld [vmem:[%s755 + $0x1c3] sm:$0x1]
    %v4200 = vld [vmem:[%s755 + $0x1fb] sm:$0x1]
    %v4201 = vld [vmem:[%s755 + $0x233] sm:$0x1]
    %v4202 = vld [vmem:[%s755 + $0x26b] sm:$0x1]
    %v4203 = vld [vmem:[%s755 + $0x2a3] sm:$0x1]
    %v4204 = vld [vmem:[%s755 + $0x2db] sm:$0x1]
    %v4205 = vld [vmem:[%s755 + $0x313] sm:$0x1]
    %v4206 = vld [vmem:[%s755 + $0x34b] sm:$0x1]
    %v4223 = vrot.slane %v4192, 7
    %v4224 = vsel %vm180, %v4223, %v4191
    %v4225 = vrot.slane %v4193, 6
    %v4226 = vsel %vm183, %v4225, %v4224
    %v4227 = vrot.slane %v4194, 5
    %v4228 = vsel %vm186, %v4227, %v4226
    %v4229 = vrot.slane %v4195, 4
    %v4230 = vsel %vm189, %v4229, %v4228
    %v4231 = vrot.slane %v4196, 3
    %v4232 = vsel %vm192, %v4231, %v4230
    %v4233 = vrot.slane %v4197, 2
    %v4234 = vsel %vm195, %v4233, %v4232
    %v4235 = vrot.slane %v4198, 1
    %v4236 = vsel %vm198, %v4235, %v4234
    %v4237 = vrot.slane %v4200, 7
    %v4238 = vsel %vm180, %v4237, %v4199
    %v4239 = vrot.slane %v4201, 6
    %v4240 = vsel %vm183, %v4239, %v4238
    %v4241 = vrot.slane %v4202, 5
    %v4242 = vsel %vm186, %v4241, %v4240
    %v4243 = vrot.slane %v4203, 4
    %v4244 = vsel %vm189, %v4243, %v4242
    %v4245 = vrot.slane %v4204, 3
    %v4246 = vsel %vm192, %v4245, %v4244
    %v4247 = vrot.slane %v4205, 2
    %v4248 = vsel %vm195, %v4247, %v4246
    %v4249 = vrot.slane %v4206, 1
    %v4250 = vsel %vm198, %v4249, %v4248
    %v4253 = vmul.f32 %v550, %v4236
    %v4254 = vmul.f32 %v554, %v4250
    %v4255 = vadd.f32 %v4123, %v4253
    %v4256 = vadd.f32 %v4124, %v4254
    %v4257 = vld [vmem:[%s606 + $0x4] sm:$0x1]
    %v4258 = vld [vmem:[%s606 + $0x3c] sm:$0x1]
    %v4259 = vld [vmem:[%s606 + $0x74] sm:$0x1]
    %v4260 = vld [vmem:[%s606 + $0xac] sm:$0x1]
    %v4261 = vld [vmem:[%s606 + $0xe4] sm:$0x1]
    %v4262 = vld [vmem:[%s606 + $0x11c] sm:$0x1]
    %v4263 = vld [vmem:[%s606 + $0x154] sm:$0x1]
    %v4264 = vld [vmem:[%s606 + $0x18c] sm:$0x1]
    %v4265 = vld [vmem:[%s606 + $0x1c4] sm:$0x1]
    %v4266 = vld [vmem:[%s606 + $0x1fc] sm:$0x1]
    %v4267 = vld [vmem:[%s606 + $0x234] sm:$0x1]
    %v4268 = vld [vmem:[%s606 + $0x26c] sm:$0x1]
    %v4269 = vld [vmem:[%s606 + $0x2a4] sm:$0x1]
    %v4270 = vld [vmem:[%s606 + $0x2dc] sm:$0x1]
    %v4271 = vld [vmem:[%s606 + $0x314] sm:$0x1]
    %v4272 = vld [vmem:[%s606 + $0x34c] sm:$0x1]
    %v4289 = vrot.slane %v4258, 7
    %v4290 = vsel %vm180, %v4289, %v4257
    %v4291 = vrot.slane %v4259, 6
    %v4292 = vsel %vm183, %v4291, %v4290
    %v4293 = vrot.slane %v4260, 5
    %v4294 = vsel %vm186, %v4293, %v4292
    %v4295 = vrot.slane %v4261, 4
    %v4296 = vsel %vm189, %v4295, %v4294
    %v4297 = vrot.slane %v4262, 3
    %v4298 = vsel %vm192, %v4297, %v4296
    %v4299 = vrot.slane %v4263, 2
    %v4300 = vsel %vm195, %v4299, %v4298
    %v4301 = vrot.slane %v4264, 1
    %v4302 = vsel %vm198, %v4301, %v4300
    %v4303 = vrot.slane %v4266, 7
    %v4304 = vsel %vm180, %v4303, %v4265
    %v4305 = vrot.slane %v4267, 6
    %v4306 = vsel %vm183, %v4305, %v4304
    %v4307 = vrot.slane %v4268, 5
    %v4308 = vsel %vm186, %v4307, %v4306
    %v4309 = vrot.slane %v4269, 4
    %v4310 = vsel %vm189, %v4309, %v4308
    %v4311 = vrot.slane %v4270, 3
    %v4312 = vsel %vm192, %v4311, %v4310
    %v4313 = vrot.slane %v4271, 2
    %v4314 = vsel %vm195, %v4313, %v4312
    %v4315 = vrot.slane %v4272, 1
    %v4316 = vsel %vm198, %v4315, %v4314
    %v4319 = vmul.f32 %v625, %v4302
    %v4320 = vmul.f32 %v629, %v4316
    %v4321 = vadd.f32 %v4189, %v4319
    %v4322 = vadd.f32 %v4190, %v4320
    %v4323 = vld [vmem:[%s755 + $0x4] sm:$0x1]
    %v4324 = vld [vmem:[%s755 + $0x3c] sm:$0x1]
    %v4325 = vld [vmem:[%s755 + $0x74] sm:$0x1]
    %v4326 = vld [vmem:[%s755 + $0xac] sm:$0x1]
    %v4327 = vld [vmem:[%s755 + $0xe4] sm:$0x1]
    %v4328 = vld [vmem:[%s755 + $0x11c] sm:$0x1]
    %v4329 = vld [vmem:[%s755 + $0x154] sm:$0x1]
    %v4330 = vld [vmem:[%s755 + $0x18c] sm:$0x1]
    %v4331 = vld [vmem:[%s755 + $0x1c4] sm:$0x1]
    %v4332 = vld [vmem:[%s755 + $0x1fc] sm:$0x1]
    %v4333 = vld [vmem:[%s755 + $0x234] sm:$0x1]
    %v4334 = vld [vmem:[%s755 + $0x26c] sm:$0x1]
    %v4335 = vld [vmem:[%s755 + $0x2a4] sm:$0x1]
    %v4336 = vld [vmem:[%s755 + $0x2dc] sm:$0x1]
    %v4337 = vld [vmem:[%s755 + $0x314] sm:$0x1]
    %v4338 = vld [vmem:[%s755 + $0x34c] sm:$0x1]
    %v4355 = vrot.slane %v4324, 7
    %v4356 = vsel %vm180, %v4355, %v4323
    %v4357 = vrot.slane %v4325, 6
    %v4358 = vsel %vm183, %v4357, %v4356
    %v4359 = vrot.slane %v4326, 5
    %v4360 = vsel %vm186, %v4359, %v4358
    %v4361 = vrot.slane %v4327, 4
    %v4362 = vsel %vm189, %v4361, %v4360
    %v4363 = vrot.slane %v4328, 3
    %v4364 = vsel %vm192, %v4363, %v4362
    %v4365 = vrot.slane %v4329, 2
    %v4366 = vsel %vm195, %v4365, %v4364
    %v4367 = vrot.slane %v4330, 1
    %v4368 = vsel %vm198, %v4367, %v4366
    %v4369 = vrot.slane %v4332, 7
    %v4370 = vsel %vm180, %v4369, %v4331
    %v4371 = vrot.slane %v4333, 6
    %v4372 = vsel %vm183, %v4371, %v4370
    %v4373 = vrot.slane %v4334, 5
    %v4374 = vsel %vm186, %v4373, %v4372
    %v4375 = vrot.slane %v4335, 4
    %v4376 = vsel %vm189, %v4375, %v4374
    %v4377 = vrot.slane %v4336, 3
    %v4378 = vsel %vm192, %v4377, %v4376
    %v4379 = vrot.slane %v4337, 2
    %v4380 = vsel %vm195, %v4379, %v4378
    %v4381 = vrot.slane %v4338, 1
    %v4382 = vsel %vm198, %v4381, %v4380
    %v4385 = vmul.f32 %v699, %v4368
    %v4386 = vmul.f32 %v703, %v4382
    %v4387 = vadd.f32 %v4255, %v4385
    %v4388 = vadd.f32 %v4256, %v4386
    %v4389 = vmul.f32 %v774, %v4368
    %v4390 = vmul.f32 %v778, %v4382
    %v4391 = vadd.f32 %v4321, %v4389
    %v4392 = vadd.f32 %v4322, %v4390
    %v4393 = vld [vmem:[%s755 + $0x5] sm:$0x1]
    %v4394 = vld [vmem:[%s755 + $0x3d] sm:$0x1]
    %v4395 = vld [vmem:[%s755 + $0x75] sm:$0x1]
    %v4396 = vld [vmem:[%s755 + $0xad] sm:$0x1]
    %v4397 = vld [vmem:[%s755 + $0xe5] sm:$0x1]
    %v4398 = vld [vmem:[%s755 + $0x11d] sm:$0x1]
    %v4399 = vld [vmem:[%s755 + $0x155] sm:$0x1]
    %v4400 = vld [vmem:[%s755 + $0x18d] sm:$0x1]
    %v4401 = vld [vmem:[%s755 + $0x1c5] sm:$0x1]
    %v4402 = vld [vmem:[%s755 + $0x1fd] sm:$0x1]
    %v4403 = vld [vmem:[%s755 + $0x235] sm:$0x1]
    %v4404 = vld [vmem:[%s755 + $0x26d] sm:$0x1]
    %v4405 = vld [vmem:[%s755 + $0x2a5] sm:$0x1]
    %v4406 = vld [vmem:[%s755 + $0x2dd] sm:$0x1]
    %v4407 = vld [vmem:[%s755 + $0x315] sm:$0x1]
    %v4408 = vld [vmem:[%s755 + $0x34d] sm:$0x1]
    %v4425 = vrot.slane %v4394, 7
    %v4426 = vsel %vm180, %v4425, %v4393
    %v4427 = vrot.slane %v4395, 6
    %v4428 = vsel %vm183, %v4427, %v4426
    %v4429 = vrot.slane %v4396, 5
    %v4430 = vsel %vm186, %v4429, %v4428
    %v4431 = vrot.slane %v4397, 4
    %v4432 = vsel %vm189, %v4431, %v4430
    %v4433 = vrot.slane %v4398, 3
    %v4434 = vsel %vm192, %v4433, %v4432
    %v4435 = vrot.slane %v4399, 2
    %v4436 = vsel %vm195, %v4435, %v4434
    %v4437 = vrot.slane %v4400, 1
    %v4438 = vsel %vm198, %v4437, %v4436
    %v4439 = vrot.slane %v4402, 7
    %v4440 = vsel %vm180, %v4439, %v4401
    %v4441 = vrot.slane %v4403, 6
    %v4442 = vsel %vm183, %v4441, %v4440
    %v4443 = vrot.slane %v4404, 5
    %v4444 = vsel %vm186, %v4443, %v4442
    %v4445 = vrot.slane %v4405, 4
    %v4446 = vsel %vm189, %v4445, %v4444
    %v4447 = vrot.slane %v4406, 3
    %v4448 = vsel %vm192, %v4447, %v4446
    %v4449 = vrot.slane %v4407, 2
    %v4450 = vsel %vm195, %v4449, %v4448
    %v4451 = vrot.slane %v4408, 1
    %v4452 = vsel %vm198, %v4451, %v4450
    %v4455 = vmul.f32 %v848, %v4438
    %v4456 = vmul.f32 %v852, %v4452
    %v4457 = vadd.f32 %v4387, %v4455
    %v4458 = vadd.f32 %v4388, %v4456
    %v4459 = vld [vmem:[%s904 + $0x4] sm:$0x1]
    %v4460 = vld [vmem:[%s904 + $0x3c] sm:$0x1]
    %v4461 = vld [vmem:[%s904 + $0x74] sm:$0x1]
    %v4462 = vld [vmem:[%s904 + $0xac] sm:$0x1]
    %v4463 = vld [vmem:[%s904 + $0xe4] sm:$0x1]
    %v4464 = vld [vmem:[%s904 + $0x11c] sm:$0x1]
    %v4465 = vld [vmem:[%s904 + $0x154] sm:$0x1]
    %v4466 = vld [vmem:[%s904 + $0x18c] sm:$0x1]
    %v4467 = vld [vmem:[%s904 + $0x1c4] sm:$0x1]
    %v4468 = vld [vmem:[%s904 + $0x1fc] sm:$0x1]
    %v4469 = vld [vmem:[%s904 + $0x234] sm:$0x1]
    %v4470 = vld [vmem:[%s904 + $0x26c] sm:$0x1]
    %v4471 = vld [vmem:[%s904 + $0x2a4] sm:$0x1]
    %v4472 = vld [vmem:[%s904 + $0x2dc] sm:$0x1]
    %v4473 = vld [vmem:[%s904 + $0x314] sm:$0x1]
    %v4474 = vld [vmem:[%s904 + $0x34c] sm:$0x1]
    %v4491 = vrot.slane %v4460, 7
    %v4492 = vsel %vm180, %v4491, %v4459
    %v4493 = vrot.slane %v4461, 6
    %v4494 = vsel %vm183, %v4493, %v4492
    %v4495 = vrot.slane %v4462, 5
    %v4496 = vsel %vm186, %v4495, %v4494
    %v4497 = vrot.slane %v4463, 4
    %v4498 = vsel %vm189, %v4497, %v4496
    %v4499 = vrot.slane %v4464, 3
    %v4500 = vsel %vm192, %v4499, %v4498
    %v4501 = vrot.slane %v4465, 2
    %v4502 = vsel %vm195, %v4501, %v4500
    %v4503 = vrot.slane %v4466, 1
    %v4504 = vsel %vm198, %v4503, %v4502
    %v4505 = vrot.slane %v4468, 7
    %v4506 = vsel %vm180, %v4505, %v4467
    %v4507 = vrot.slane %v4469, 6
    %v4508 = vsel %vm183, %v4507, %v4506
    %v4509 = vrot.slane %v4470, 5
    %v4510 = vsel %vm186, %v4509, %v4508
    %v4511 = vrot.slane %v4471, 4
    %v4512 = vsel %vm189, %v4511, %v4510
    %v4513 = vrot.slane %v4472, 3
    %v4514 = vsel %vm192, %v4513, %v4512
    %v4515 = vrot.slane %v4473, 2
    %v4516 = vsel %vm195, %v4515, %v4514
    %v4517 = vrot.slane %v4474, 1
    %v4518 = vsel %vm198, %v4517, %v4516
    %v4521 = vmul.f32 %v923, %v4504
    %v4522 = vmul.f32 %v927, %v4518
    %v4523 = vadd.f32 %v4391, %v4521
    %v4524 = vadd.f32 %v4392, %v4522
    %v4525 = vld [vmem:[%s755 + $0x6] sm:$0x1]
    %v4526 = vld [vmem:[%s755 + $0x3e] sm:$0x1]
    %v4527 = vld [vmem:[%s755 + $0x76] sm:$0x1]
    %v4528 = vld [vmem:[%s755 + $0xae] sm:$0x1]
    %v4529 = vld [vmem:[%s755 + $0xe6] sm:$0x1]
    %v4530 = vld [vmem:[%s755 + $0x11e] sm:$0x1]
    %v4531 = vld [vmem:[%s755 + $0x156] sm:$0x1]
    %v4532 = vld [vmem:[%s755 + $0x18e] sm:$0x1]
    %v4533 = vld [vmem:[%s755 + $0x1c6] sm:$0x1]
    %v4534 = vld [vmem:[%s755 + $0x1fe] sm:$0x1]
    %v4535 = vld [vmem:[%s755 + $0x236] sm:$0x1]
    %v4536 = vld [vmem:[%s755 + $0x26e] sm:$0x1]
    %v4537 = vld [vmem:[%s755 + $0x2a6] sm:$0x1]
    %v4538 = vld [vmem:[%s755 + $0x2de] sm:$0x1]
    %v4539 = vld [vmem:[%s755 + $0x316] sm:$0x1]
    %v4540 = vld [vmem:[%s755 + $0x34e] sm:$0x1]
    %v4557 = vrot.slane %v4526, 7
    %v4558 = vsel %vm180, %v4557, %v4525
    %v4559 = vrot.slane %v4527, 6
    %v4560 = vsel %vm183, %v4559, %v4558
    %v4561 = vrot.slane %v4528, 5
    %v4562 = vsel %vm186, %v4561, %v4560
    %v4563 = vrot.slane %v4529, 4
    %v4564 = vsel %vm189, %v4563, %v4562
    %v4565 = vrot.slane %v4530, 3
    %v4566 = vsel %vm192, %v4565, %v4564
    %v4567 = vrot.slane %v4531, 2
    %v4568 = vsel %vm195, %v4567, %v4566
    %v4569 = vrot.slane %v4532, 1
    %v4570 = vsel %vm198, %v4569, %v4568
    %v4571 = vrot.slane %v4534, 7
    %v4572 = vsel %vm180, %v4571, %v4533
    %v4573 = vrot.slane %v4535, 6
    %v4574 = vsel %vm183, %v4573, %v4572
    %v4575 = vrot.slane %v4536, 5
    %v4576 = vsel %vm186, %v4575, %v4574
    %v4577 = vrot.slane %v4537, 4
    %v4578 = vsel %vm189, %v4577, %v4576
    %v4579 = vrot.slane %v4538, 3
    %v4580 = vsel %vm192, %v4579, %v4578
    %v4581 = vrot.slane %v4539, 2
    %v4582 = vsel %vm195, %v4581, %v4580
    %v4583 = vrot.slane %v4540, 1
    %v4584 = vsel %vm198, %v4583, %v4582
    %v4587 = vmul.f32 %v997, %v4570
    %v4588 = vmul.f32 %v1001, %v4584
    %v4589 = vadd.f32 %v4457, %v4587
    %v4590 = vadd.f32 %v4458, %v4588
    %v4591 = vld [vmem:[%s1053 + $0x4] sm:$0x1]
    %v4592 = vld [vmem:[%s1053 + $0x3c] sm:$0x1]
    %v4593 = vld [vmem:[%s1053 + $0x74] sm:$0x1]
    %v4594 = vld [vmem:[%s1053 + $0xac] sm:$0x1]
    %v4595 = vld [vmem:[%s1053 + $0xe4] sm:$0x1]
    %v4596 = vld [vmem:[%s1053 + $0x11c] sm:$0x1]
    %v4597 = vld [vmem:[%s1053 + $0x154] sm:$0x1]
    %v4598 = vld [vmem:[%s1053 + $0x18c] sm:$0x1]
    %v4599 = vld [vmem:[%s1053 + $0x1c4] sm:$0x1]
    %v4600 = vld [vmem:[%s1053 + $0x1fc] sm:$0x1]
    %v4601 = vld [vmem:[%s1053 + $0x234] sm:$0x1]
    %v4602 = vld [vmem:[%s1053 + $0x26c] sm:$0x1]
    %v4603 = vld [vmem:[%s1053 + $0x2a4] sm:$0x1]
    %v4604 = vld [vmem:[%s1053 + $0x2dc] sm:$0x1]
    %v4605 = vld [vmem:[%s1053 + $0x314] sm:$0x1]
    %v4606 = vld [vmem:[%s1053 + $0x34c] sm:$0x1]
    %v4623 = vrot.slane %v4592, 7
    %v4624 = vsel %vm180, %v4623, %v4591
    %v4625 = vrot.slane %v4593, 6
    %v4626 = vsel %vm183, %v4625, %v4624
    %v4627 = vrot.slane %v4594, 5
    %v4628 = vsel %vm186, %v4627, %v4626
    %v4629 = vrot.slane %v4595, 4
    %v4630 = vsel %vm189, %v4629, %v4628
    %v4631 = vrot.slane %v4596, 3
    %v4632 = vsel %vm192, %v4631, %v4630
    %v4633 = vrot.slane %v4597, 2
    %v4634 = vsel %vm195, %v4633, %v4632
    %v4635 = vrot.slane %v4598, 1
    %v4636 = vsel %vm198, %v4635, %v4634
    %v4637 = vrot.slane %v4600, 7
    %v4638 = vsel %vm180, %v4637, %v4599
    %v4639 = vrot.slane %v4601, 6
    %v4640 = vsel %vm183, %v4639, %v4638
    %v4641 = vrot.slane %v4602, 5
    %v4642 = vsel %vm186, %v4641, %v4640
    %v4643 = vrot.slane %v4603, 4
    %v4644 = vsel %vm189, %v4643, %v4642
    %v4645 = vrot.slane %v4604, 3
    %v4646 = vsel %vm192, %v4645, %v4644
    %v4647 = vrot.slane %v4605, 2
    %v4648 = vsel %vm195, %v4647, %v4646
    %v4649 = vrot.slane %v4606, 1
    %v4650 = vsel %vm198, %v4649, %v4648
    %v4653 = vmul.f32 %v1072, %v4636
    %v4654 = vmul.f32 %v1076, %v4650
    %v4655 = vadd.f32 %v4523, %v4653
    %v4656 = vadd.f32 %v4524, %v4654
    %4659 = vrot.lane.b32.xlu0 %v4589, 64
    %v4660 = vpop.permute.xlu0 %4659
    %4661 = vrot.lane.b32.xlu0 %v4590, 64
    %v4662 = vpop.permute.xlu0 %4661
    %4665 = vst.msk [vmem:[#allocation2 + $0x40] sm:$0xff] %vm1136, %v4660
    %4666 = vst.msk [vmem:[#allocation2 + $0x48] sm:$0xff] %vm1136, %v4662
    %4669 = vrot.lane.b32.xlu0 %v4655, 64
    %v4670 = vpop.permute.xlu0 %4669
    %4671 = vrot.lane.b32.xlu0 %v4656, 64
    %v4672 = vpop.permute.xlu0 %4671
    %4675 = vst.msk [vmem:[#allocation3 + $0x40] sm:$0xff] %vm1136, %v4670
    %4676 = vst.msk [vmem:[#allocation3 + $0x48] sm:$0xff] %vm1136, %v4672
    %v4677 = vld [vmem:[%s904] sm:$0x1]
    %v4678 = vld [vmem:[%s904 + $0x38] sm:$0x1]
    %v4679 = vld [vmem:[%s904 + $0x70] sm:$0x1]
    %v4680 = vld [vmem:[%s904 + $0xa8] sm:$0x1]
    %v4681 = vld [vmem:[%s904 + $0xe0] sm:$0x1]
    %v4682 = vld [vmem:[%s904 + $0x118] sm:$0x1]
    %v4683 = vld [vmem:[%s904 + $0x150] sm:$0x1]
    %v4684 = vld [vmem:[%s904 + $0x188] sm:$0x1]
    %v4685 = vld [vmem:[%s904 + $0x1c0] sm:$0x1]
    %v4686 = vld [vmem:[%s904 + $0x1f8] sm:$0x1]
    %v4687 = vld [vmem:[%s904 + $0x230] sm:$0x1]
    %v4688 = vld [vmem:[%s904 + $0x268] sm:$0x1]
    %v4689 = vld [vmem:[%s904 + $0x2a0] sm:$0x1]
    %v4690 = vld [vmem:[%s904 + $0x2d8] sm:$0x1]
    %v4691 = vld [vmem:[%s904 + $0x310] sm:$0x1]
    %v4692 = vld [vmem:[%s904 + $0x348] sm:$0x1]
    %v4709 = vrot.slane %v4678, 7
    %v4710 = vsel %vm180, %v4709, %v4677
    %v4711 = vrot.slane %v4679, 6
    %v4712 = vsel %vm183, %v4711, %v4710
    %v4713 = vrot.slane %v4680, 5
    %v4714 = vsel %vm186, %v4713, %v4712
    %v4715 = vrot.slane %v4681, 4
    %v4716 = vsel %vm189, %v4715, %v4714
    %v4717 = vrot.slane %v4682, 3
    %v4718 = vsel %vm192, %v4717, %v4716
    %v4719 = vrot.slane %v4683, 2
    %v4720 = vsel %vm195, %v4719, %v4718
    %v4721 = vrot.slane %v4684, 1
    %v4722 = vsel %vm198, %v4721, %v4720
    %v4723 = vrot.slane %v4686, 7
    %v4724 = vsel %vm180, %v4723, %v4685
    %v4725 = vrot.slane %v4687, 6
    %v4726 = vsel %vm183, %v4725, %v4724
    %v4727 = vrot.slane %v4688, 5
    %v4728 = vsel %vm186, %v4727, %v4726
    %v4729 = vrot.slane %v4689, 4
    %v4730 = vsel %vm189, %v4729, %v4728
    %v4731 = vrot.slane %v4690, 3
    %v4732 = vsel %vm192, %v4731, %v4730
    %v4733 = vrot.slane %v4691, 2
    %v4734 = vsel %vm195, %v4733, %v4732
    %v4735 = vrot.slane %v4692, 1
    %v4736 = vsel %vm198, %v4735, %v4734
    %v4739 = vmul.f32 %v156, %v4722
    %v4740 = vmul.f32 %v161, %v4736
    %v4741 = vadd.f32 %v4739, 0.0
    %v4742 = vadd.f32 %v4740, 0.0
    %v4743 = vld [vmem:[%s3 + $0x5] sm:$0x1]
    %v4744 = vld [vmem:[%s3 + $0x3d] sm:$0x1]
    %v4745 = vld [vmem:[%s3 + $0x75] sm:$0x1]
    %v4746 = vld [vmem:[%s3 + $0xad] sm:$0x1]
    %v4747 = vld [vmem:[%s3 + $0xe5] sm:$0x1]
    %v4748 = vld [vmem:[%s3 + $0x11d] sm:$0x1]
    %v4749 = vld [vmem:[%s3 + $0x155] sm:$0x1]
    %v4750 = vld [vmem:[%s3 + $0x18d] sm:$0x1]
    %v4751 = vld [vmem:[%s3 + $0x1c5] sm:$0x1]
    %v4752 = vld [vmem:[%s3 + $0x1fd] sm:$0x1]
    %v4753 = vld [vmem:[%s3 + $0x235] sm:$0x1]
    %v4754 = vld [vmem:[%s3 + $0x26d] sm:$0x1]
    %v4755 = vld [vmem:[%s3 + $0x2a5] sm:$0x1]
    %v4756 = vld [vmem:[%s3 + $0x2dd] sm:$0x1]
    %v4757 = vld [vmem:[%s3 + $0x315] sm:$0x1]
    %v4758 = vld [vmem:[%s3 + $0x34d] sm:$0x1]
    %v4775 = vrot.slane %v4744, 7
    %v4776 = vsel %vm180, %v4775, %v4743
    %v4777 = vrot.slane %v4745, 6
    %v4778 = vsel %vm183, %v4777, %v4776
    %v4779 = vrot.slane %v4746, 5
    %v4780 = vsel %vm186, %v4779, %v4778
    %v4781 = vrot.slane %v4747, 4
    %v4782 = vsel %vm189, %v4781, %v4780
    %v4783 = vrot.slane %v4748, 3
    %v4784 = vsel %vm192, %v4783, %v4782
    %v4785 = vrot.slane %v4749, 2
    %v4786 = vsel %vm195, %v4785, %v4784
    %v4787 = vrot.slane %v4750, 1
    %v4788 = vsel %vm198, %v4787, %v4786
    %v4789 = vrot.slane %v4752, 7
    %v4790 = vsel %vm180, %v4789, %v4751
    %v4791 = vrot.slane %v4753, 6
    %v4792 = vsel %vm183, %v4791, %v4790
    %v4793 = vrot.slane %v4754, 5
    %v4794 = vsel %vm186, %v4793, %v4792
    %v4795 = vrot.slane %v4755, 4
    %v4796 = vsel %vm189, %v4795, %v4794
    %v4797 = vrot.slane %v4756, 3
    %v4798 = vsel %vm192, %v4797, %v4796
    %v4799 = vrot.slane %v4757, 2
    %v4800 = vsel %vm195, %v4799, %v4798
    %v4801 = vrot.slane %v4758, 1
    %v4802 = vsel %vm198, %v4801, %v4800
    %v4805 = vmul.f32 %v223, %v4788
    %v4806 = vmul.f32 %v228, %v4802
    %v4807 = vadd.f32 %v4805, 0.0
    %v4808 = vadd.f32 %v4806, 0.0
    %v4809 = vld [vmem:[%s904 + $0x1] sm:$0x1]
    %v4810 = vld [vmem:[%s904 + $0x39] sm:$0x1]
    %v4811 = vld [vmem:[%s904 + $0x71] sm:$0x1]
    %v4812 = vld [vmem:[%s904 + $0xa9] sm:$0x1]
    %v4813 = vld [vmem:[%s904 + $0xe1] sm:$0x1]
    %v4814 = vld [vmem:[%s904 + $0x119] sm:$0x1]
    %v4815 = vld [vmem:[%s904 + $0x151] sm:$0x1]
    %v4816 = vld [vmem:[%s904 + $0x189] sm:$0x1]
    %v4817 = vld [vmem:[%s904 + $0x1c1] sm:$0x1]
    %v4818 = vld [vmem:[%s904 + $0x1f9] sm:$0x1]
    %v4819 = vld [vmem:[%s904 + $0x231] sm:$0x1]
    %v4820 = vld [vmem:[%s904 + $0x269] sm:$0x1]
    %v4821 = vld [vmem:[%s904 + $0x2a1] sm:$0x1]
    %v4822 = vld [vmem:[%s904 + $0x2d9] sm:$0x1]
    %v4823 = vld [vmem:[%s904 + $0x311] sm:$0x1]
    %v4824 = vld [vmem:[%s904 + $0x349] sm:$0x1]
    %v4841 = vrot.slane %v4810, 7
    %v4842 = vsel %vm180, %v4841, %v4809
    %v4843 = vrot.slane %v4811, 6
    %v4844 = vsel %vm183, %v4843, %v4842
    %v4845 = vrot.slane %v4812, 5
    %v4846 = vsel %vm186, %v4845, %v4844
    %v4847 = vrot.slane %v4813, 4
    %v4848 = vsel %vm189, %v4847, %v4846
    %v4849 = vrot.slane %v4814, 3
    %v4850 = vsel %vm192, %v4849, %v4848
    %v4851 = vrot.slane %v4815, 2
    %v4852 = vsel %vm195, %v4851, %v4850
    %v4853 = vrot.slane %v4816, 1
    %v4854 = vsel %vm198, %v4853, %v4852
    %v4855 = vrot.slane %v4818, 7
    %v4856 = vsel %vm180, %v4855, %v4817
    %v4857 = vrot.slane %v4819, 6
    %v4858 = vsel %vm183, %v4857, %v4856
    %v4859 = vrot.slane %v4820, 5
    %v4860 = vsel %vm186, %v4859, %v4858
    %v4861 = vrot.slane %v4821, 4
    %v4862 = vsel %vm189, %v4861, %v4860
    %v4863 = vrot.slane %v4822, 3
    %v4864 = vsel %vm192, %v4863, %v4862
    %v4865 = vrot.slane %v4823, 2
    %v4866 = vsel %vm195, %v4865, %v4864
    %v4867 = vrot.slane %v4824, 1
    %v4868 = vsel %vm198, %v4867, %v4866
    %v4871 = vmul.f32 %v252, %v4854
    %v4872 = vmul.f32 %v256, %v4868
    %v4873 = vadd.f32 %v4741, %v4871
    %v4874 = vadd.f32 %v4742, %v4872
    %v4875 = vld [vmem:[%s308 + $0x5] sm:$0x1]
    %v4876 = vld [vmem:[%s308 + $0x3d] sm:$0x1]
    %v4877 = vld [vmem:[%s308 + $0x75] sm:$0x1]
    %v4878 = vld [vmem:[%s308 + $0xad] sm:$0x1]
    %v4879 = vld [vmem:[%s308 + $0xe5] sm:$0x1]
    %v4880 = vld [vmem:[%s308 + $0x11d] sm:$0x1]
    %v4881 = vld [vmem:[%s308 + $0x155] sm:$0x1]
    %v4882 = vld [vmem:[%s308 + $0x18d] sm:$0x1]
    %v4883 = vld [vmem:[%s308 + $0x1c5] sm:$0x1]
    %v4884 = vld [vmem:[%s308 + $0x1fd] sm:$0x1]
    %v4885 = vld [vmem:[%s308 + $0x235] sm:$0x1]
    %v4886 = vld [vmem:[%s308 + $0x26d] sm:$0x1]
    %v4887 = vld [vmem:[%s308 + $0x2a5] sm:$0x1]
    %v4888 = vld [vmem:[%s308 + $0x2dd] sm:$0x1]
    %v4889 = vld [vmem:[%s308 + $0x315] sm:$0x1]
    %v4890 = vld [vmem:[%s308 + $0x34d] sm:$0x1]
    %v4907 = vrot.slane %v4876, 7
    %v4908 = vsel %vm180, %v4907, %v4875
    %v4909 = vrot.slane %v4877, 6
    %v4910 = vsel %vm183, %v4909, %v4908
    %v4911 = vrot.slane %v4878, 5
    %v4912 = vsel %vm186, %v4911, %v4910
    %v4913 = vrot.slane %v4879, 4
    %v4914 = vsel %vm189, %v4913, %v4912
    %v4915 = vrot.slane %v4880, 3
    %v4916 = vsel %vm192, %v4915, %v4914
    %v4917 = vrot.slane %v4881, 2
    %v4918 = vsel %vm195, %v4917, %v4916
    %v4919 = vrot.slane %v4882, 1
    %v4920 = vsel %vm198, %v4919, %v4918
    %v4921 = vrot.slane %v4884, 7
    %v4922 = vsel %vm180, %v4921, %v4883
    %v4923 = vrot.slane %v4885, 6
    %v4924 = vsel %vm183, %v4923, %v4922
    %v4925 = vrot.slane %v4886, 5
    %v4926 = vsel %vm186, %v4925, %v4924
    %v4927 = vrot.slane %v4887, 4
    %v4928 = vsel %vm189, %v4927, %v4926
    %v4929 = vrot.slane %v4888, 3
    %v4930 = vsel %vm192, %v4929, %v4928
    %v4931 = vrot.slane %v4889, 2
    %v4932 = vsel %vm195, %v4931, %v4930
    %v4933 = vrot.slane %v4890, 1
    %v4934 = vsel %vm198, %v4933, %v4932
    %v4937 = vmul.f32 %v327, %v4920
    %v4938 = vmul.f32 %v331, %v4934
    %v4939 = vadd.f32 %v4807, %v4937
    %v4940 = vadd.f32 %v4808, %v4938
    %v4941 = vld [vmem:[%s904 + $0x2] sm:$0x1]
    %v4942 = vld [vmem:[%s904 + $0x3a] sm:$0x1]
    %v4943 = vld [vmem:[%s904 + $0x72] sm:$0x1]
    %v4944 = vld [vmem:[%s904 + $0xaa] sm:$0x1]
    %v4945 = vld [vmem:[%s904 + $0xe2] sm:$0x1]
    %v4946 = vld [vmem:[%s904 + $0x11a] sm:$0x1]
    %v4947 = vld [vmem:[%s904 + $0x152] sm:$0x1]
    %v4948 = vld [vmem:[%s904 + $0x18a] sm:$0x1]
    %v4949 = vld [vmem:[%s904 + $0x1c2] sm:$0x1]
    %v4950 = vld [vmem:[%s904 + $0x1fa] sm:$0x1]
    %v4951 = vld [vmem:[%s904 + $0x232] sm:$0x1]
    %v4952 = vld [vmem:[%s904 + $0x26a] sm:$0x1]
    %v4953 = vld [vmem:[%s904 + $0x2a2] sm:$0x1]
    %v4954 = vld [vmem:[%s904 + $0x2da] sm:$0x1]
    %v4955 = vld [vmem:[%s904 + $0x312] sm:$0x1]
    %v4956 = vld [vmem:[%s904 + $0x34a] sm:$0x1]
    %v4973 = vrot.slane %v4942, 7
    %v4974 = vsel %vm180, %v4973, %v4941
    %v4975 = vrot.slane %v4943, 6
    %v4976 = vsel %vm183, %v4975, %v4974
    %v4977 = vrot.slane %v4944, 5
    %v4978 = vsel %vm186, %v4977, %v4976
    %v4979 = vrot.slane %v4945, 4
    %v4980 = vsel %vm189, %v4979, %v4978
    %v4981 = vrot.slane %v4946, 3
    %v4982 = vsel %vm192, %v4981, %v4980
    %v4983 = vrot.slane %v4947, 2
    %v4984 = vsel %vm195, %v4983, %v4982
    %v4985 = vrot.slane %v4948, 1
    %v4986 = vsel %vm198, %v4985, %v4984
    %v4987 = vrot.slane %v4950, 7
    %v4988 = vsel %vm180, %v4987, %v4949
    %v4989 = vrot.slane %v4951, 6
    %v4990 = vsel %vm183, %v4989, %v4988
    %v4991 = vrot.slane %v4952, 5
    %v4992 = vsel %vm186, %v4991, %v4990
    %v4993 = vrot.slane %v4953, 4
    %v4994 = vsel %vm189, %v4993, %v4992
    %v4995 = vrot.slane %v4954, 3
    %v4996 = vsel %vm192, %v4995, %v4994
    %v4997 = vrot.slane %v4955, 2
    %v4998 = vsel %vm195, %v4997, %v4996
    %v4999 = vrot.slane %v4956, 1
    %v5000 = vsel %vm198, %v4999, %v4998
    %v5003 = vmul.f32 %v401, %v4986
    %v5004 = vmul.f32 %v405, %v5000
    %v5005 = vadd.f32 %v4873, %v5003
    %v5006 = vadd.f32 %v4874, %v5004
    %v5007 = vld [vmem:[%s457 + $0x5] sm:$0x1]
    %v5008 = vld [vmem:[%s457 + $0x3d] sm:$0x1]
    %v5009 = vld [vmem:[%s457 + $0x75] sm:$0x1]
    %v5010 = vld [vmem:[%s457 + $0xad] sm:$0x1]
    %v5011 = vld [vmem:[%s457 + $0xe5] sm:$0x1]
    %v5012 = vld [vmem:[%s457 + $0x11d] sm:$0x1]
    %v5013 = vld [vmem:[%s457 + $0x155] sm:$0x1]
    %v5014 = vld [vmem:[%s457 + $0x18d] sm:$0x1]
    %v5015 = vld [vmem:[%s457 + $0x1c5] sm:$0x1]
    %v5016 = vld [vmem:[%s457 + $0x1fd] sm:$0x1]
    %v5017 = vld [vmem:[%s457 + $0x235] sm:$0x1]
    %v5018 = vld [vmem:[%s457 + $0x26d] sm:$0x1]
    %v5019 = vld [vmem:[%s457 + $0x2a5] sm:$0x1]
    %v5020 = vld [vmem:[%s457 + $0x2dd] sm:$0x1]
    %v5021 = vld [vmem:[%s457 + $0x315] sm:$0x1]
    %v5022 = vld [vmem:[%s457 + $0x34d] sm:$0x1]
    %v5039 = vrot.slane %v5008, 7
    %v5040 = vsel %vm180, %v5039, %v5007
    %v5041 = vrot.slane %v5009, 6
    %v5042 = vsel %vm183, %v5041, %v5040
    %v5043 = vrot.slane %v5010, 5
    %v5044 = vsel %vm186, %v5043, %v5042
    %v5045 = vrot.slane %v5011, 4
    %v5046 = vsel %vm189, %v5045, %v5044
    %v5047 = vrot.slane %v5012, 3
    %v5048 = vsel %vm192, %v5047, %v5046
    %v5049 = vrot.slane %v5013, 2
    %v5050 = vsel %vm195, %v5049, %v5048
    %v5051 = vrot.slane %v5014, 1
    %v5052 = vsel %vm198, %v5051, %v5050
    %v5053 = vrot.slane %v5016, 7
    %v5054 = vsel %vm180, %v5053, %v5015
    %v5055 = vrot.slane %v5017, 6
    %v5056 = vsel %vm183, %v5055, %v5054
    %v5057 = vrot.slane %v5018, 5
    %v5058 = vsel %vm186, %v5057, %v5056
    %v5059 = vrot.slane %v5019, 4
    %v5060 = vsel %vm189, %v5059, %v5058
    %v5061 = vrot.slane %v5020, 3
    %v5062 = vsel %vm192, %v5061, %v5060
    %v5063 = vrot.slane %v5021, 2
    %v5064 = vsel %vm195, %v5063, %v5062
    %v5065 = vrot.slane %v5022, 1
    %v5066 = vsel %vm198, %v5065, %v5064
    %v5069 = vmul.f32 %v476, %v5052
    %v5070 = vmul.f32 %v480, %v5066
    %v5071 = vadd.f32 %v4939, %v5069
    %v5072 = vadd.f32 %v4940, %v5070
    %v5073 = vld [vmem:[%s904 + $0x3] sm:$0x1]
    %v5074 = vld [vmem:[%s904 + $0x3b] sm:$0x1]
    %v5075 = vld [vmem:[%s904 + $0x73] sm:$0x1]
    %v5076 = vld [vmem:[%s904 + $0xab] sm:$0x1]
    %v5077 = vld [vmem:[%s904 + $0xe3] sm:$0x1]
    %v5078 = vld [vmem:[%s904 + $0x11b] sm:$0x1]
    %v5079 = vld [vmem:[%s904 + $0x153] sm:$0x1]
    %v5080 = vld [vmem:[%s904 + $0x18b] sm:$0x1]
    %v5081 = vld [vmem:[%s904 + $0x1c3] sm:$0x1]
    %v5082 = vld [vmem:[%s904 + $0x1fb] sm:$0x1]
    %v5083 = vld [vmem:[%s904 + $0x233] sm:$0x1]
    %v5084 = vld [vmem:[%s904 + $0x26b] sm:$0x1]
    %v5085 = vld [vmem:[%s904 + $0x2a3] sm:$0x1]
    %v5086 = vld [vmem:[%s904 + $0x2db] sm:$0x1]
    %v5087 = vld [vmem:[%s904 + $0x313] sm:$0x1]
    %v5088 = vld [vmem:[%s904 + $0x34b] sm:$0x1]
    %v5105 = vrot.slane %v5074, 7
    %v5106 = vsel %vm180, %v5105, %v5073
    %v5107 = vrot.slane %v5075, 6
    %v5108 = vsel %vm183, %v5107, %v5106
    %v5109 = vrot.slane %v5076, 5
    %v5110 = vsel %vm186, %v5109, %v5108
    %v5111 = vrot.slane %v5077, 4
    %v5112 = vsel %vm189, %v5111, %v5110
    %v5113 = vrot.slane %v5078, 3
    %v5114 = vsel %vm192, %v5113, %v5112
    %v5115 = vrot.slane %v5079, 2
    %v5116 = vsel %vm195, %v5115, %v5114
    %v5117 = vrot.slane %v5080, 1
    %v5118 = vsel %vm198, %v5117, %v5116
    %v5119 = vrot.slane %v5082, 7
    %v5120 = vsel %vm180, %v5119, %v5081
    %v5121 = vrot.slane %v5083, 6
    %v5122 = vsel %vm183, %v5121, %v5120
    %v5123 = vrot.slane %v5084, 5
    %v5124 = vsel %vm186, %v5123, %v5122
    %v5125 = vrot.slane %v5085, 4
    %v5126 = vsel %vm189, %v5125, %v5124
    %v5127 = vrot.slane %v5086, 3
    %v5128 = vsel %vm192, %v5127, %v5126
    %v5129 = vrot.slane %v5087, 2
    %v5130 = vsel %vm195, %v5129, %v5128
    %v5131 = vrot.slane %v5088, 1
    %v5132 = vsel %vm198, %v5131, %v5130
    %v5135 = vmul.f32 %v550, %v5118
    %v5136 = vmul.f32 %v554, %v5132
    %v5137 = vadd.f32 %v5005, %v5135
    %v5138 = vadd.f32 %v5006, %v5136
    %v5139 = vld [vmem:[%s606 + $0x5] sm:$0x1]
    %v5140 = vld [vmem:[%s606 + $0x3d] sm:$0x1]
    %v5141 = vld [vmem:[%s606 + $0x75] sm:$0x1]
    %v5142 = vld [vmem:[%s606 + $0xad] sm:$0x1]
    %v5143 = vld [vmem:[%s606 + $0xe5] sm:$0x1]
    %v5144 = vld [vmem:[%s606 + $0x11d] sm:$0x1]
    %v5145 = vld [vmem:[%s606 + $0x155] sm:$0x1]
    %v5146 = vld [vmem:[%s606 + $0x18d] sm:$0x1]
    %v5147 = vld [vmem:[%s606 + $0x1c5] sm:$0x1]
    %v5148 = vld [vmem:[%s606 + $0x1fd] sm:$0x1]
    %v5149 = vld [vmem:[%s606 + $0x235] sm:$0x1]
    %v5150 = vld [vmem:[%s606 + $0x26d] sm:$0x1]
    %v5151 = vld [vmem:[%s606 + $0x2a5] sm:$0x1]
    %v5152 = vld [vmem:[%s606 + $0x2dd] sm:$0x1]
    %v5153 = vld [vmem:[%s606 + $0x315] sm:$0x1]
    %v5154 = vld [vmem:[%s606 + $0x34d] sm:$0x1]
    %v5171 = vrot.slane %v5140, 7
    %v5172 = vsel %vm180, %v5171, %v5139
    %v5173 = vrot.slane %v5141, 6
    %v5174 = vsel %vm183, %v5173, %v5172
    %v5175 = vrot.slane %v5142, 5
    %v5176 = vsel %vm186, %v5175, %v5174
    %v5177 = vrot.slane %v5143, 4
    %v5178 = vsel %vm189, %v5177, %v5176
    %v5179 = vrot.slane %v5144, 3
    %v5180 = vsel %vm192, %v5179, %v5178
    %v5181 = vrot.slane %v5145, 2
    %v5182 = vsel %vm195, %v5181, %v5180
    %v5183 = vrot.slane %v5146, 1
    %v5184 = vsel %vm198, %v5183, %v5182
    %v5185 = vrot.slane %v5148, 7
    %v5186 = vsel %vm180, %v5185, %v5147
    %v5187 = vrot.slane %v5149, 6
    %v5188 = vsel %vm183, %v5187, %v5186
    %v5189 = vrot.slane %v5150, 5
    %v5190 = vsel %vm186, %v5189, %v5188
    %v5191 = vrot.slane %v5151, 4
    %v5192 = vsel %vm189, %v5191, %v5190
    %v5193 = vrot.slane %v5152, 3
    %v5194 = vsel %vm192, %v5193, %v5192
    %v5195 = vrot.slane %v5153, 2
    %v5196 = vsel %vm195, %v5195, %v5194
    %v5197 = vrot.slane %v5154, 1
    %v5198 = vsel %vm198, %v5197, %v5196
    %v5201 = vmul.f32 %v625, %v5184
    %v5202 = vmul.f32 %v629, %v5198
    %v5203 = vadd.f32 %v5071, %v5201
    %v5204 = vadd.f32 %v5072, %v5202
    %v5205 = vld [vmem:[%s904 + $0x4] sm:$0x1]
    %v5206 = vld [vmem:[%s904 + $0x3c] sm:$0x1]
    %v5207 = vld [vmem:[%s904 + $0x74] sm:$0x1]
    %v5208 = vld [vmem:[%s904 + $0xac] sm:$0x1]
    %v5209 = vld [vmem:[%s904 + $0xe4] sm:$0x1]
    %v5210 = vld [vmem:[%s904 + $0x11c] sm:$0x1]
    %v5211 = vld [vmem:[%s904 + $0x154] sm:$0x1]
    %v5212 = vld [vmem:[%s904 + $0x18c] sm:$0x1]
    %v5213 = vld [vmem:[%s904 + $0x1c4] sm:$0x1]
    %v5214 = vld [vmem:[%s904 + $0x1fc] sm:$0x1]
    %v5215 = vld [vmem:[%s904 + $0x234] sm:$0x1]
    %v5216 = vld [vmem:[%s904 + $0x26c] sm:$0x1]
    %v5217 = vld [vmem:[%s904 + $0x2a4] sm:$0x1]
    %v5218 = vld [vmem:[%s904 + $0x2dc] sm:$0x1]
    %v5219 = vld [vmem:[%s904 + $0x314] sm:$0x1]
    %v5220 = vld [vmem:[%s904 + $0x34c] sm:$0x1]
    %v5237 = vrot.slane %v5206, 7
    %v5238 = vsel %vm180, %v5237, %v5205
    %v5239 = vrot.slane %v5207, 6
    %v5240 = vsel %vm183, %v5239, %v5238
    %v5241 = vrot.slane %v5208, 5
    %v5242 = vsel %vm186, %v5241, %v5240
    %v5243 = vrot.slane %v5209, 4
    %v5244 = vsel %vm189, %v5243, %v5242
    %v5245 = vrot.slane %v5210, 3
    %v5246 = vsel %vm192, %v5245, %v5244
    %v5247 = vrot.slane %v5211, 2
    %v5248 = vsel %vm195, %v5247, %v5246
    %v5249 = vrot.slane %v5212, 1
    %v5250 = vsel %vm198, %v5249, %v5248
    %v5251 = vrot.slane %v5214, 7
    %v5252 = vsel %vm180, %v5251, %v5213
    %v5253 = vrot.slane %v5215, 6
    %v5254 = vsel %vm183, %v5253, %v5252
    %v5255 = vrot.slane %v5216, 5
    %v5256 = vsel %vm186, %v5255, %v5254
    %v5257 = vrot.slane %v5217, 4
    %v5258 = vsel %vm189, %v5257, %v5256
    %v5259 = vrot.slane %v5218, 3
    %v5260 = vsel %vm192, %v5259, %v5258
    %v5261 = vrot.slane %v5219, 2
    %v5262 = vsel %vm195, %v5261, %v5260
    %v5263 = vrot.slane %v5220, 1
    %v5264 = vsel %vm198, %v5263, %v5262
    %v5267 = vmul.f32 %v699, %v5250
    %v5268 = vmul.f32 %v703, %v5264
    %v5269 = vadd.f32 %v5137, %v5267
    %v5270 = vadd.f32 %v5138, %v5268
    %v5271 = vld [vmem:[%s755 + $0x5] sm:$0x1]
    %v5272 = vld [vmem:[%s755 + $0x3d] sm:$0x1]
    %v5273 = vld [vmem:[%s755 + $0x75] sm:$0x1]
    %v5274 = vld [vmem:[%s755 + $0xad] sm:$0x1]
    %v5275 = vld [vmem:[%s755 + $0xe5] sm:$0x1]
    %v5276 = vld [vmem:[%s755 + $0x11d] sm:$0x1]
    %v5277 = vld [vmem:[%s755 + $0x155] sm:$0x1]
    %v5278 = vld [vmem:[%s755 + $0x18d] sm:$0x1]
    %v5279 = vld [vmem:[%s755 + $0x1c5] sm:$0x1]
    %v5280 = vld [vmem:[%s755 + $0x1fd] sm:$0x1]
    %v5281 = vld [vmem:[%s755 + $0x235] sm:$0x1]
    %v5282 = vld [vmem:[%s755 + $0x26d] sm:$0x1]
    %v5283 = vld [vmem:[%s755 + $0x2a5] sm:$0x1]
    %v5284 = vld [vmem:[%s755 + $0x2dd] sm:$0x1]
    %v5285 = vld [vmem:[%s755 + $0x315] sm:$0x1]
    %v5286 = vld [vmem:[%s755 + $0x34d] sm:$0x1]
    %v5303 = vrot.slane %v5272, 7
    %v5304 = vsel %vm180, %v5303, %v5271
    %v5305 = vrot.slane %v5273, 6
    %v5306 = vsel %vm183, %v5305, %v5304
    %v5307 = vrot.slane %v5274, 5
    %v5308 = vsel %vm186, %v5307, %v5306
    %v5309 = vrot.slane %v5275, 4
    %v5310 = vsel %vm189, %v5309, %v5308
    %v5311 = vrot.slane %v5276, 3
    %v5312 = vsel %vm192, %v5311, %v5310
    %v5313 = vrot.slane %v5277, 2
    %v5314 = vsel %vm195, %v5313, %v5312
    %v5315 = vrot.slane %v5278, 1
    %v5316 = vsel %vm198, %v5315, %v5314
    %v5317 = vrot.slane %v5280, 7
    %v5318 = vsel %vm180, %v5317, %v5279
    %v5319 = vrot.slane %v5281, 6
    %v5320 = vsel %vm183, %v5319, %v5318
    %v5321 = vrot.slane %v5282, 5
    %v5322 = vsel %vm186, %v5321, %v5320
    %v5323 = vrot.slane %v5283, 4
    %v5324 = vsel %vm189, %v5323, %v5322
    %v5325 = vrot.slane %v5284, 3
    %v5326 = vsel %vm192, %v5325, %v5324
    %v5327 = vrot.slane %v5285, 2
    %v5328 = vsel %vm195, %v5327, %v5326
    %v5329 = vrot.slane %v5286, 1
    %v5330 = vsel %vm198, %v5329, %v5328
    %v5333 = vmul.f32 %v774, %v5316
    %v5334 = vmul.f32 %v778, %v5330
    %v5335 = vadd.f32 %v5203, %v5333
    %v5336 = vadd.f32 %v5204, %v5334
    %v5337 = vld [vmem:[%s904 + $0x5] sm:$0x1]
    %v5338 = vld [vmem:[%s904 + $0x3d] sm:$0x1]
    %v5339 = vld [vmem:[%s904 + $0x75] sm:$0x1]
    %v5340 = vld [vmem:[%s904 + $0xad] sm:$0x1]
    %v5341 = vld [vmem:[%s904 + $0xe5] sm:$0x1]
    %v5342 = vld [vmem:[%s904 + $0x11d] sm:$0x1]
    %v5343 = vld [vmem:[%s904 + $0x155] sm:$0x1]
    %v5344 = vld [vmem:[%s904 + $0x18d] sm:$0x1]
    %v5345 = vld [vmem:[%s904 + $0x1c5] sm:$0x1]
    %v5346 = vld [vmem:[%s904 + $0x1fd] sm:$0x1]
    %v5347 = vld [vmem:[%s904 + $0x235] sm:$0x1]
    %v5348 = vld [vmem:[%s904 + $0x26d] sm:$0x1]
    %v5349 = vld [vmem:[%s904 + $0x2a5] sm:$0x1]
    %v5350 = vld [vmem:[%s904 + $0x2dd] sm:$0x1]
    %v5351 = vld [vmem:[%s904 + $0x315] sm:$0x1]
    %v5352 = vld [vmem:[%s904 + $0x34d] sm:$0x1]
    %v5369 = vrot.slane %v5338, 7
    %v5370 = vsel %vm180, %v5369, %v5337
    %v5371 = vrot.slane %v5339, 6
    %v5372 = vsel %vm183, %v5371, %v5370
    %v5373 = vrot.slane %v5340, 5
    %v5374 = vsel %vm186, %v5373, %v5372
    %v5375 = vrot.slane %v5341, 4
    %v5376 = vsel %vm189, %v5375, %v5374
    %v5377 = vrot.slane %v5342, 3
    %v5378 = vsel %vm192, %v5377, %v5376
    %v5379 = vrot.slane %v5343, 2
    %v5380 = vsel %vm195, %v5379, %v5378
    %v5381 = vrot.slane %v5344, 1
    %v5382 = vsel %vm198, %v5381, %v5380
    %v5383 = vrot.slane %v5346, 7
    %v5384 = vsel %vm180, %v5383, %v5345
    %v5385 = vrot.slane %v5347, 6
    %v5386 = vsel %vm183, %v5385, %v5384
    %v5387 = vrot.slane %v5348, 5
    %v5388 = vsel %vm186, %v5387, %v5386
    %v5389 = vrot.slane %v5349, 4
    %v5390 = vsel %vm189, %v5389, %v5388
    %v5391 = vrot.slane %v5350, 3
    %v5392 = vsel %vm192, %v5391, %v5390
    %v5393 = vrot.slane %v5351, 2
    %v5394 = vsel %vm195, %v5393, %v5392
    %v5395 = vrot.slane %v5352, 1
    %v5396 = vsel %vm198, %v5395, %v5394
    %v5399 = vmul.f32 %v848, %v5382
    %v5400 = vmul.f32 %v852, %v5396
    %v5401 = vadd.f32 %v5269, %v5399
    %v5402 = vadd.f32 %v5270, %v5400
    %v5403 = vmul.f32 %v923, %v5382
    %v5404 = vmul.f32 %v927, %v5396
    %v5405 = vadd.f32 %v5335, %v5403
    %v5406 = vadd.f32 %v5336, %v5404
    %v5407 = vld [vmem:[%s904 + $0x6] sm:$0x1]
    %v5408 = vld [vmem:[%s904 + $0x3e] sm:$0x1]
    %v5409 = vld [vmem:[%s904 + $0x76] sm:$0x1]
    %v5410 = vld [vmem:[%s904 + $0xae] sm:$0x1]
    %v5411 = vld [vmem:[%s904 + $0xe6] sm:$0x1]
    %v5412 = vld [vmem:[%s904 + $0x11e] sm:$0x1]
    %v5413 = vld [vmem:[%s904 + $0x156] sm:$0x1]
    %v5414 = vld [vmem:[%s904 + $0x18e] sm:$0x1]
    %v5415 = vld [vmem:[%s904 + $0x1c6] sm:$0x1]
    %v5416 = vld [vmem:[%s904 + $0x1fe] sm:$0x1]
    %v5417 = vld [vmem:[%s904 + $0x236] sm:$0x1]
    %v5418 = vld [vmem:[%s904 + $0x26e] sm:$0x1]
    %v5419 = vld [vmem:[%s904 + $0x2a6] sm:$0x1]
    %v5420 = vld [vmem:[%s904 + $0x2de] sm:$0x1]
    %v5421 = vld [vmem:[%s904 + $0x316] sm:$0x1]
    %v5422 = vld [vmem:[%s904 + $0x34e] sm:$0x1]
    %v5439 = vrot.slane %v5408, 7
    %v5440 = vsel %vm180, %v5439, %v5407
    %v5441 = vrot.slane %v5409, 6
    %v5442 = vsel %vm183, %v5441, %v5440
    %v5443 = vrot.slane %v5410, 5
    %v5444 = vsel %vm186, %v5443, %v5442
    %v5445 = vrot.slane %v5411, 4
    %v5446 = vsel %vm189, %v5445, %v5444
    %v5447 = vrot.slane %v5412, 3
    %v5448 = vsel %vm192, %v5447, %v5446
    %v5449 = vrot.slane %v5413, 2
    %v5450 = vsel %vm195, %v5449, %v5448
    %v5451 = vrot.slane %v5414, 1
    %v5452 = vsel %vm198, %v5451, %v5450
    %v5453 = vrot.slane %v5416, 7
    %v5454 = vsel %vm180, %v5453, %v5415
    %v5455 = vrot.slane %v5417, 6
    %v5456 = vsel %vm183, %v5455, %v5454
    %v5457 = vrot.slane %v5418, 5
    %v5458 = vsel %vm186, %v5457, %v5456
    %v5459 = vrot.slane %v5419, 4
    %v5460 = vsel %vm189, %v5459, %v5458
    %v5461 = vrot.slane %v5420, 3
    %v5462 = vsel %vm192, %v5461, %v5460
    %v5463 = vrot.slane %v5421, 2
    %v5464 = vsel %vm195, %v5463, %v5462
    %v5465 = vrot.slane %v5422, 1
    %v5466 = vsel %vm198, %v5465, %v5464
    %v5469 = vmul.f32 %v997, %v5452
    %v5470 = vmul.f32 %v1001, %v5466
    %v5471 = vadd.f32 %v5401, %v5469
    %v5472 = vadd.f32 %v5402, %v5470
    %v5473 = vld [vmem:[%s1053 + $0x5] sm:$0x1]
    %v5474 = vld [vmem:[%s1053 + $0x3d] sm:$0x1]
    %v5475 = vld [vmem:[%s1053 + $0x75] sm:$0x1]
    %v5476 = vld [vmem:[%s1053 + $0xad] sm:$0x1]
    %v5477 = vld [vmem:[%s1053 + $0xe5] sm:$0x1]
    %v5478 = vld [vmem:[%s1053 + $0x11d] sm:$0x1]
    %v5479 = vld [vmem:[%s1053 + $0x155] sm:$0x1]
    %v5480 = vld [vmem:[%s1053 + $0x18d] sm:$0x1]
    %v5481 = vld [vmem:[%s1053 + $0x1c5] sm:$0x1]
    %v5482 = vld [vmem:[%s1053 + $0x1fd] sm:$0x1]
    %v5483 = vld [vmem:[%s1053 + $0x235] sm:$0x1]
    %v5484 = vld [vmem:[%s1053 + $0x26d] sm:$0x1]
    %v5485 = vld [vmem:[%s1053 + $0x2a5] sm:$0x1]
    %v5486 = vld [vmem:[%s1053 + $0x2dd] sm:$0x1]
    %v5487 = vld [vmem:[%s1053 + $0x315] sm:$0x1]
    %v5488 = vld [vmem:[%s1053 + $0x34d] sm:$0x1]
    %v5505 = vrot.slane %v5474, 7
    %v5506 = vsel %vm180, %v5505, %v5473
    %v5507 = vrot.slane %v5475, 6
    %v5508 = vsel %vm183, %v5507, %v5506
    %v5509 = vrot.slane %v5476, 5
    %v5510 = vsel %vm186, %v5509, %v5508
    %v5511 = vrot.slane %v5477, 4
    %v5512 = vsel %vm189, %v5511, %v5510
    %v5513 = vrot.slane %v5478, 3
    %v5514 = vsel %vm192, %v5513, %v5512
    %v5515 = vrot.slane %v5479, 2
    %v5516 = vsel %vm195, %v5515, %v5514
    %v5517 = vrot.slane %v5480, 1
    %v5518 = vsel %vm198, %v5517, %v5516
    %v5519 = vrot.slane %v5482, 7
    %v5520 = vsel %vm180, %v5519, %v5481
    %v5521 = vrot.slane %v5483, 6
    %v5522 = vsel %vm183, %v5521, %v5520
    %v5523 = vrot.slane %v5484, 5
    %v5524 = vsel %vm186, %v5523, %v5522
    %v5525 = vrot.slane %v5485, 4
    %v5526 = vsel %vm189, %v5525, %v5524
    %v5527 = vrot.slane %v5486, 3
    %v5528 = vsel %vm192, %v5527, %v5526
    %v5529 = vrot.slane %v5487, 2
    %v5530 = vsel %vm195, %v5529, %v5528
    %v5531 = vrot.slane %v5488, 1
    %v5532 = vsel %vm198, %v5531, %v5530
    %v5535 = vmul.f32 %v1072, %v5518
    %v5536 = vmul.f32 %v1076, %v5532
    %v5537 = vadd.f32 %v5405, %v5535
    %v5538 = vadd.f32 %v5406, %v5536
    %5541 = vrot.lane.b32.xlu0 %v5471, 64
    %v5542 = vpop.permute.xlu0 %5541
    %5543 = vrot.lane.b32.xlu0 %v5472, 64
    %v5544 = vpop.permute.xlu0 %5543
    %5547 = vst.msk [vmem:[#allocation2 + $0x50] sm:$0xff] %vm1136, %v5542
    %5548 = vst.msk [vmem:[#allocation2 + $0x58] sm:$0xff] %vm1136, %v5544
    %5551 = vrot.lane.b32.xlu0 %v5537, 64
    %v5552 = vpop.permute.xlu0 %5551
    %5553 = vrot.lane.b32.xlu0 %v5538, 64
    %v5554 = vpop.permute.xlu0 %5553
    %5557 = vst.msk [vmem:[#allocation3 + $0x50] sm:$0xff] %vm1136, %v5552
    %5558 = vst.msk [vmem:[#allocation3 + $0x58] sm:$0xff] %vm1136, %v5554
    %v5559 = vld [vmem:[%s1053] sm:$0x1]
    %v5560 = vld [vmem:[%s1053 + $0x38] sm:$0x1]
    %v5561 = vld [vmem:[%s1053 + $0x70] sm:$0x1]
    %v5562 = vld [vmem:[%s1053 + $0xa8] sm:$0x1]
    %v5563 = vld [vmem:[%s1053 + $0xe0] sm:$0x1]
    %v5564 = vld [vmem:[%s1053 + $0x118] sm:$0x1]
    %v5565 = vld [vmem:[%s1053 + $0x150] sm:$0x1]
    %v5566 = vld [vmem:[%s1053 + $0x188] sm:$0x1]
    %v5567 = vld [vmem:[%s1053 + $0x1c0] sm:$0x1]
    %v5568 = vld [vmem:[%s1053 + $0x1f8] sm:$0x1]
    %v5569 = vld [vmem:[%s1053 + $0x230] sm:$0x1]
    %v5570 = vld [vmem:[%s1053 + $0x268] sm:$0x1]
    %v5571 = vld [vmem:[%s1053 + $0x2a0] sm:$0x1]
    %v5572 = vld [vmem:[%s1053 + $0x2d8] sm:$0x1]
    %v5573 = vld [vmem:[%s1053 + $0x310] sm:$0x1]
    %v5574 = vld [vmem:[%s1053 + $0x348] sm:$0x1]
    %v5591 = vrot.slane %v5560, 7
    %v5592 = vsel %vm180, %v5591, %v5559
    %v5593 = vrot.slane %v5561, 6
    %v5594 = vsel %vm183, %v5593, %v5592
    %v5595 = vrot.slane %v5562, 5
    %v5596 = vsel %vm186, %v5595, %v5594
    %v5597 = vrot.slane %v5563, 4
    %v5598 = vsel %vm189, %v5597, %v5596
    %v5599 = vrot.slane %v5564, 3
    %v5600 = vsel %vm192, %v5599, %v5598
    %v5601 = vrot.slane %v5565, 2
    %v5602 = vsel %vm195, %v5601, %v5600
    %v5603 = vrot.slane %v5566, 1
    %v5604 = vsel %vm198, %v5603, %v5602
    %v5605 = vrot.slane %v5568, 7
    %v5606 = vsel %vm180, %v5605, %v5567
    %v5607 = vrot.slane %v5569, 6
    %v5608 = vsel %vm183, %v5607, %v5606
    %v5609 = vrot.slane %v5570, 5
    %v5610 = vsel %vm186, %v5609, %v5608
    %v5611 = vrot.slane %v5571, 4
    %v5612 = vsel %vm189, %v5611, %v5610
    %v5613 = vrot.slane %v5572, 3
    %v5614 = vsel %vm192, %v5613, %v5612
    %v5615 = vrot.slane %v5573, 2
    %v5616 = vsel %vm195, %v5615, %v5614
    %v5617 = vrot.slane %v5574, 1
    %v5618 = vsel %vm198, %v5617, %v5616
    %v5621 = vmul.f32 %v156, %v5604
    %v5622 = vmul.f32 %v161, %v5618
    %v5623 = vadd.f32 %v5621, 0.0
    %v5624 = vadd.f32 %v5622, 0.0
    %v5625 = vld [vmem:[%s3 + $0x6] sm:$0x1]
    %v5626 = vld [vmem:[%s3 + $0x3e] sm:$0x1]
    %v5627 = vld [vmem:[%s3 + $0x76] sm:$0x1]
    %v5628 = vld [vmem:[%s3 + $0xae] sm:$0x1]
    %v5629 = vld [vmem:[%s3 + $0xe6] sm:$0x1]
    %v5630 = vld [vmem:[%s3 + $0x11e] sm:$0x1]
    %v5631 = vld [vmem:[%s3 + $0x156] sm:$0x1]
    %v5632 = vld [vmem:[%s3 + $0x18e] sm:$0x1]
    %v5633 = vld [vmem:[%s3 + $0x1c6] sm:$0x1]
    %v5634 = vld [vmem:[%s3 + $0x1fe] sm:$0x1]
    %v5635 = vld [vmem:[%s3 + $0x236] sm:$0x1]
    %v5636 = vld [vmem:[%s3 + $0x26e] sm:$0x1]
    %v5637 = vld [vmem:[%s3 + $0x2a6] sm:$0x1]
    %v5638 = vld [vmem:[%s3 + $0x2de] sm:$0x1]
    %v5639 = vld [vmem:[%s3 + $0x316] sm:$0x1]
    %v5640 = vld [vmem:[%s3 + $0x34e] sm:$0x1]
    %v5657 = vrot.slane %v5626, 7
    %v5658 = vsel %vm180, %v5657, %v5625
    %v5659 = vrot.slane %v5627, 6
    %v5660 = vsel %vm183, %v5659, %v5658
    %v5661 = vrot.slane %v5628, 5
    %v5662 = vsel %vm186, %v5661, %v5660
    %v5663 = vrot.slane %v5629, 4
    %v5664 = vsel %vm189, %v5663, %v5662
    %v5665 = vrot.slane %v5630, 3
    %v5666 = vsel %vm192, %v5665, %v5664
    %v5667 = vrot.slane %v5631, 2
    %v5668 = vsel %vm195, %v5667, %v5666
    %v5669 = vrot.slane %v5632, 1
    %v5670 = vsel %vm198, %v5669, %v5668
    %v5671 = vrot.slane %v5634, 7
    %v5672 = vsel %vm180, %v5671, %v5633
    %v5673 = vrot.slane %v5635, 6
    %v5674 = vsel %vm183, %v5673, %v5672
    %v5675 = vrot.slane %v5636, 5
    %v5676 = vsel %vm186, %v5675, %v5674
    %v5677 = vrot.slane %v5637, 4
    %v5678 = vsel %vm189, %v5677, %v5676
    %v5679 = vrot.slane %v5638, 3
    %v5680 = vsel %vm192, %v5679, %v5678
    %v5681 = vrot.slane %v5639, 2
    %v5682 = vsel %vm195, %v5681, %v5680
    %v5683 = vrot.slane %v5640, 1
    %v5684 = vsel %vm198, %v5683, %v5682
    %v5687 = vmul.f32 %v223, %v5670
    %v5688 = vmul.f32 %v228, %v5684
    %v5689 = vadd.f32 %v5687, 0.0
    %v5690 = vadd.f32 %v5688, 0.0
    %v5691 = vld [vmem:[%s1053 + $0x1] sm:$0x1]
    %v5692 = vld [vmem:[%s1053 + $0x39] sm:$0x1]
    %v5693 = vld [vmem:[%s1053 + $0x71] sm:$0x1]
    %v5694 = vld [vmem:[%s1053 + $0xa9] sm:$0x1]
    %v5695 = vld [vmem:[%s1053 + $0xe1] sm:$0x1]
    %v5696 = vld [vmem:[%s1053 + $0x119] sm:$0x1]
    %v5697 = vld [vmem:[%s1053 + $0x151] sm:$0x1]
    %v5698 = vld [vmem:[%s1053 + $0x189] sm:$0x1]
    %v5699 = vld [vmem:[%s1053 + $0x1c1] sm:$0x1]
    %v5700 = vld [vmem:[%s1053 + $0x1f9] sm:$0x1]
    %v5701 = vld [vmem:[%s1053 + $0x231] sm:$0x1]
    %v5702 = vld [vmem:[%s1053 + $0x269] sm:$0x1]
    %v5703 = vld [vmem:[%s1053 + $0x2a1] sm:$0x1]
    %v5704 = vld [vmem:[%s1053 + $0x2d9] sm:$0x1]
    %v5705 = vld [vmem:[%s1053 + $0x311] sm:$0x1]
    %v5706 = vld [vmem:[%s1053 + $0x349] sm:$0x1]
    %v5723 = vrot.slane %v5692, 7
    %v5724 = vsel %vm180, %v5723, %v5691
    %v5725 = vrot.slane %v5693, 6
    %v5726 = vsel %vm183, %v5725, %v5724
    %v5727 = vrot.slane %v5694, 5
    %v5728 = vsel %vm186, %v5727, %v5726
    %v5729 = vrot.slane %v5695, 4
    %v5730 = vsel %vm189, %v5729, %v5728
    %v5731 = vrot.slane %v5696, 3
    %v5732 = vsel %vm192, %v5731, %v5730
    %v5733 = vrot.slane %v5697, 2
    %v5734 = vsel %vm195, %v5733, %v5732
    %v5735 = vrot.slane %v5698, 1
    %v5736 = vsel %vm198, %v5735, %v5734
    %v5737 = vrot.slane %v5700, 7
    %v5738 = vsel %vm180, %v5737, %v5699
    %v5739 = vrot.slane %v5701, 6
    %v5740 = vsel %vm183, %v5739, %v5738
    %v5741 = vrot.slane %v5702, 5
    %v5742 = vsel %vm186, %v5741, %v5740
    %v5743 = vrot.slane %v5703, 4
    %v5744 = vsel %vm189, %v5743, %v5742
    %v5745 = vrot.slane %v5704, 3
    %v5746 = vsel %vm192, %v5745, %v5744
    %v5747 = vrot.slane %v5705, 2
    %v5748 = vsel %vm195, %v5747, %v5746
    %v5749 = vrot.slane %v5706, 1
    %v5750 = vsel %vm198, %v5749, %v5748
    %v5753 = vmul.f32 %v252, %v5736
    %v5754 = vmul.f32 %v256, %v5750
    %v5755 = vadd.f32 %v5623, %v5753
    %v5756 = vadd.f32 %v5624, %v5754
    %v5757 = vld [vmem:[%s308 + $0x6] sm:$0x1]
    %v5758 = vld [vmem:[%s308 + $0x3e] sm:$0x1]
    %v5759 = vld [vmem:[%s308 + $0x76] sm:$0x1]
    %v5760 = vld [vmem:[%s308 + $0xae] sm:$0x1]
    %v5761 = vld [vmem:[%s308 + $0xe6] sm:$0x1]
    %v5762 = vld [vmem:[%s308 + $0x11e] sm:$0x1]
    %v5763 = vld [vmem:[%s308 + $0x156] sm:$0x1]
    %v5764 = vld [vmem:[%s308 + $0x18e] sm:$0x1]
    %v5765 = vld [vmem:[%s308 + $0x1c6] sm:$0x1]
    %v5766 = vld [vmem:[%s308 + $0x1fe] sm:$0x1]
    %v5767 = vld [vmem:[%s308 + $0x236] sm:$0x1]
    %v5768 = vld [vmem:[%s308 + $0x26e] sm:$0x1]
    %v5769 = vld [vmem:[%s308 + $0x2a6] sm:$0x1]
    %v5770 = vld [vmem:[%s308 + $0x2de] sm:$0x1]
    %v5771 = vld [vmem:[%s308 + $0x316] sm:$0x1]
    %v5772 = vld [vmem:[%s308 + $0x34e] sm:$0x1]
    %v5789 = vrot.slane %v5758, 7
    %v5790 = vsel %vm180, %v5789, %v5757
    %v5791 = vrot.slane %v5759, 6
    %v5792 = vsel %vm183, %v5791, %v5790
    %v5793 = vrot.slane %v5760, 5
    %v5794 = vsel %vm186, %v5793, %v5792
    %v5795 = vrot.slane %v5761, 4
    %v5796 = vsel %vm189, %v5795, %v5794
    %v5797 = vrot.slane %v5762, 3
    %v5798 = vsel %vm192, %v5797, %v5796
    %v5799 = vrot.slane %v5763, 2
    %v5800 = vsel %vm195, %v5799, %v5798
    %v5801 = vrot.slane %v5764, 1
    %v5802 = vsel %vm198, %v5801, %v5800
    %v5803 = vrot.slane %v5766, 7
    %v5804 = vsel %vm180, %v5803, %v5765
    %v5805 = vrot.slane %v5767, 6
    %v5806 = vsel %vm183, %v5805, %v5804
    %v5807 = vrot.slane %v5768, 5
    %v5808 = vsel %vm186, %v5807, %v5806
    %v5809 = vrot.slane %v5769, 4
    %v5810 = vsel %vm189, %v5809, %v5808
    %v5811 = vrot.slane %v5770, 3
    %v5812 = vsel %vm192, %v5811, %v5810
    %v5813 = vrot.slane %v5771, 2
    %v5814 = vsel %vm195, %v5813, %v5812
    %v5815 = vrot.slane %v5772, 1
    %v5816 = vsel %vm198, %v5815, %v5814
    %v5819 = vmul.f32 %v327, %v5802
    %v5820 = vmul.f32 %v331, %v5816
    %v5821 = vadd.f32 %v5689, %v5819
    %v5822 = vadd.f32 %v5690, %v5820
    %v5823 = vld [vmem:[%s1053 + $0x2] sm:$0x1]
    %v5824 = vld [vmem:[%s1053 + $0x3a] sm:$0x1]
    %v5825 = vld [vmem:[%s1053 + $0x72] sm:$0x1]
    %v5826 = vld [vmem:[%s1053 + $0xaa] sm:$0x1]
    %v5827 = vld [vmem:[%s1053 + $0xe2] sm:$0x1]
    %v5828 = vld [vmem:[%s1053 + $0x11a] sm:$0x1]
    %v5829 = vld [vmem:[%s1053 + $0x152] sm:$0x1]
    %v5830 = vld [vmem:[%s1053 + $0x18a] sm:$0x1]
    %v5831 = vld [vmem:[%s1053 + $0x1c2] sm:$0x1]
    %v5832 = vld [vmem:[%s1053 + $0x1fa] sm:$0x1]
    %v5833 = vld [vmem:[%s1053 + $0x232] sm:$0x1]
    %v5834 = vld [vmem:[%s1053 + $0x26a] sm:$0x1]
    %v5835 = vld [vmem:[%s1053 + $0x2a2] sm:$0x1]
    %v5836 = vld [vmem:[%s1053 + $0x2da] sm:$0x1]
    %v5837 = vld [vmem:[%s1053 + $0x312] sm:$0x1]
    %v5838 = vld [vmem:[%s1053 + $0x34a] sm:$0x1]
    %v5855 = vrot.slane %v5824, 7
    %v5856 = vsel %vm180, %v5855, %v5823
    %v5857 = vrot.slane %v5825, 6
    %v5858 = vsel %vm183, %v5857, %v5856
    %v5859 = vrot.slane %v5826, 5
    %v5860 = vsel %vm186, %v5859, %v5858
    %v5861 = vrot.slane %v5827, 4
    %v5862 = vsel %vm189, %v5861, %v5860
    %v5863 = vrot.slane %v5828, 3
    %v5864 = vsel %vm192, %v5863, %v5862
    %v5865 = vrot.slane %v5829, 2
    %v5866 = vsel %vm195, %v5865, %v5864
    %v5867 = vrot.slane %v5830, 1
    %v5868 = vsel %vm198, %v5867, %v5866
    %v5869 = vrot.slane %v5832, 7
    %v5870 = vsel %vm180, %v5869, %v5831
    %v5871 = vrot.slane %v5833, 6
    %v5872 = vsel %vm183, %v5871, %v5870
    %v5873 = vrot.slane %v5834, 5
    %v5874 = vsel %vm186, %v5873, %v5872
    %v5875 = vrot.slane %v5835, 4
    %v5876 = vsel %vm189, %v5875, %v5874
    %v5877 = vrot.slane %v5836, 3
    %v5878 = vsel %vm192, %v5877, %v5876
    %v5879 = vrot.slane %v5837, 2
    %v5880 = vsel %vm195, %v5879, %v5878
    %v5881 = vrot.slane %v5838, 1
    %v5882 = vsel %vm198, %v5881, %v5880
    %v5885 = vmul.f32 %v401, %v5868
    %v5886 = vmul.f32 %v405, %v5882
    %v5887 = vadd.f32 %v5755, %v5885
    %v5888 = vadd.f32 %v5756, %v5886
    %v5889 = vld [vmem:[%s457 + $0x6] sm:$0x1]
    %v5890 = vld [vmem:[%s457 + $0x3e] sm:$0x1]
    %v5891 = vld [vmem:[%s457 + $0x76] sm:$0x1]
    %v5892 = vld [vmem:[%s457 + $0xae] sm:$0x1]
    %v5893 = vld [vmem:[%s457 + $0xe6] sm:$0x1]
    %v5894 = vld [vmem:[%s457 + $0x11e] sm:$0x1]
    %v5895 = vld [vmem:[%s457 + $0x156] sm:$0x1]
    %v5896 = vld [vmem:[%s457 + $0x18e] sm:$0x1]
    %v5897 = vld [vmem:[%s457 + $0x1c6] sm:$0x1]
    %v5898 = vld [vmem:[%s457 + $0x1fe] sm:$0x1]
    %v5899 = vld [vmem:[%s457 + $0x236] sm:$0x1]
    %v5900 = vld [vmem:[%s457 + $0x26e] sm:$0x1]
    %v5901 = vld [vmem:[%s457 + $0x2a6] sm:$0x1]
    %v5902 = vld [vmem:[%s457 + $0x2de] sm:$0x1]
    %v5903 = vld [vmem:[%s457 + $0x316] sm:$0x1]
    %v5904 = vld [vmem:[%s457 + $0x34e] sm:$0x1]
    %v5921 = vrot.slane %v5890, 7
    %v5922 = vsel %vm180, %v5921, %v5889
    %v5923 = vrot.slane %v5891, 6
    %v5924 = vsel %vm183, %v5923, %v5922
    %v5925 = vrot.slane %v5892, 5
    %v5926 = vsel %vm186, %v5925, %v5924
    %v5927 = vrot.slane %v5893, 4
    %v5928 = vsel %vm189, %v5927, %v5926
    %v5929 = vrot.slane %v5894, 3
    %v5930 = vsel %vm192, %v5929, %v5928
    %v5931 = vrot.slane %v5895, 2
    %v5932 = vsel %vm195, %v5931, %v5930
    %v5933 = vrot.slane %v5896, 1
    %v5934 = vsel %vm198, %v5933, %v5932
    %v5935 = vrot.slane %v5898, 7
    %v5936 = vsel %vm180, %v5935, %v5897
    %v5937 = vrot.slane %v5899, 6
    %v5938 = vsel %vm183, %v5937, %v5936
    %v5939 = vrot.slane %v5900, 5
    %v5940 = vsel %vm186, %v5939, %v5938
    %v5941 = vrot.slane %v5901, 4
    %v5942 = vsel %vm189, %v5941, %v5940
    %v5943 = vrot.slane %v5902, 3
    %v5944 = vsel %vm192, %v5943, %v5942
    %v5945 = vrot.slane %v5903, 2
    %v5946 = vsel %vm195, %v5945, %v5944
    %v5947 = vrot.slane %v5904, 1
    %v5948 = vsel %vm198, %v5947, %v5946
    %v5951 = vmul.f32 %v476, %v5934
    %v5952 = vmul.f32 %v480, %v5948
    %v5953 = vadd.f32 %v5821, %v5951
    %v5954 = vadd.f32 %v5822, %v5952
    %v5955 = vld [vmem:[%s1053 + $0x3] sm:$0x1]
    %v5956 = vld [vmem:[%s1053 + $0x3b] sm:$0x1]
    %v5957 = vld [vmem:[%s1053 + $0x73] sm:$0x1]
    %v5958 = vld [vmem:[%s1053 + $0xab] sm:$0x1]
    %v5959 = vld [vmem:[%s1053 + $0xe3] sm:$0x1]
    %v5960 = vld [vmem:[%s1053 + $0x11b] sm:$0x1]
    %v5961 = vld [vmem:[%s1053 + $0x153] sm:$0x1]
    %v5962 = vld [vmem:[%s1053 + $0x18b] sm:$0x1]
    %v5963 = vld [vmem:[%s1053 + $0x1c3] sm:$0x1]
    %v5964 = vld [vmem:[%s1053 + $0x1fb] sm:$0x1]
    %v5965 = vld [vmem:[%s1053 + $0x233] sm:$0x1]
    %v5966 = vld [vmem:[%s1053 + $0x26b] sm:$0x1]
    %v5967 = vld [vmem:[%s1053 + $0x2a3] sm:$0x1]
    %v5968 = vld [vmem:[%s1053 + $0x2db] sm:$0x1]
    %v5969 = vld [vmem:[%s1053 + $0x313] sm:$0x1]
    %v5970 = vld [vmem:[%s1053 + $0x34b] sm:$0x1]
    %v5987 = vrot.slane %v5956, 7
    %v5988 = vsel %vm180, %v5987, %v5955
    %v5989 = vrot.slane %v5957, 6
    %v5990 = vsel %vm183, %v5989, %v5988
    %v5991 = vrot.slane %v5958, 5
    %v5992 = vsel %vm186, %v5991, %v5990
    %v5993 = vrot.slane %v5959, 4
    %v5994 = vsel %vm189, %v5993, %v5992
    %v5995 = vrot.slane %v5960, 3
    %v5996 = vsel %vm192, %v5995, %v5994
    %v5997 = vrot.slane %v5961, 2
    %v5998 = vsel %vm195, %v5997, %v5996
    %v5999 = vrot.slane %v5962, 1
    %v6000 = vsel %vm198, %v5999, %v5998
    %v6001 = vrot.slane %v5964, 7
    %v6002 = vsel %vm180, %v6001, %v5963
    %v6003 = vrot.slane %v5965, 6
    %v6004 = vsel %vm183, %v6003, %v6002
    %v6005 = vrot.slane %v5966, 5
    %v6006 = vsel %vm186, %v6005, %v6004
    %v6007 = vrot.slane %v5967, 4
    %v6008 = vsel %vm189, %v6007, %v6006
    %v6009 = vrot.slane %v5968, 3
    %v6010 = vsel %vm192, %v6009, %v6008
    %v6011 = vrot.slane %v5969, 2
    %v6012 = vsel %vm195, %v6011, %v6010
    %v6013 = vrot.slane %v5970, 1
    %v6014 = vsel %vm198, %v6013, %v6012
    %v6017 = vmul.f32 %v550, %v6000
    %v6018 = vmul.f32 %v554, %v6014
    %v6019 = vadd.f32 %v5887, %v6017
    %v6020 = vadd.f32 %v5888, %v6018
    %v6021 = vld [vmem:[%s606 + $0x6] sm:$0x1]
    %v6022 = vld [vmem:[%s606 + $0x3e] sm:$0x1]
    %v6023 = vld [vmem:[%s606 + $0x76] sm:$0x1]
    %v6024 = vld [vmem:[%s606 + $0xae] sm:$0x1]
    %v6025 = vld [vmem:[%s606 + $0xe6] sm:$0x1]
    %v6026 = vld [vmem:[%s606 + $0x11e] sm:$0x1]
    %v6027 = vld [vmem:[%s606 + $0x156] sm:$0x1]
    %v6028 = vld [vmem:[%s606 + $0x18e] sm:$0x1]
    %v6029 = vld [vmem:[%s606 + $0x1c6] sm:$0x1]
    %v6030 = vld [vmem:[%s606 + $0x1fe] sm:$0x1]
    %v6031 = vld [vmem:[%s606 + $0x236] sm:$0x1]
    %v6032 = vld [vmem:[%s606 + $0x26e] sm:$0x1]
    %v6033 = vld [vmem:[%s606 + $0x2a6] sm:$0x1]
    %v6034 = vld [vmem:[%s606 + $0x2de] sm:$0x1]
    %v6035 = vld [vmem:[%s606 + $0x316] sm:$0x1]
    %v6036 = vld [vmem:[%s606 + $0x34e] sm:$0x1]
    %v6053 = vrot.slane %v6022, 7
    %v6054 = vsel %vm180, %v6053, %v6021
    %v6055 = vrot.slane %v6023, 6
    %v6056 = vsel %vm183, %v6055, %v6054
    %v6057 = vrot.slane %v6024, 5
    %v6058 = vsel %vm186, %v6057, %v6056
    %v6059 = vrot.slane %v6025, 4
    %v6060 = vsel %vm189, %v6059, %v6058
    %v6061 = vrot.slane %v6026, 3
    %v6062 = vsel %vm192, %v6061, %v6060
    %v6063 = vrot.slane %v6027, 2
    %v6064 = vsel %vm195, %v6063, %v6062
    %v6065 = vrot.slane %v6028, 1
    %v6066 = vsel %vm198, %v6065, %v6064
    %v6067 = vrot.slane %v6030, 7
    %v6068 = vsel %vm180, %v6067, %v6029
    %v6069 = vrot.slane %v6031, 6
    %v6070 = vsel %vm183, %v6069, %v6068
    %v6071 = vrot.slane %v6032, 5
    %v6072 = vsel %vm186, %v6071, %v6070
    %v6073 = vrot.slane %v6033, 4
    %v6074 = vsel %vm189, %v6073, %v6072
    %v6075 = vrot.slane %v6034, 3
    %v6076 = vsel %vm192, %v6075, %v6074
    %v6077 = vrot.slane %v6035, 2
    %v6078 = vsel %vm195, %v6077, %v6076
    %v6079 = vrot.slane %v6036, 1
    %v6080 = vsel %vm198, %v6079, %v6078
    %v6083 = vmul.f32 %v625, %v6066
    %v6084 = vmul.f32 %v629, %v6080
    %v6085 = vadd.f32 %v5953, %v6083
    %v6086 = vadd.f32 %v5954, %v6084
    %v6087 = vld [vmem:[%s1053 + $0x4] sm:$0x1]
    %v6088 = vld [vmem:[%s1053 + $0x3c] sm:$0x1]
    %v6089 = vld [vmem:[%s1053 + $0x74] sm:$0x1]
    %v6090 = vld [vmem:[%s1053 + $0xac] sm:$0x1]
    %v6091 = vld [vmem:[%s1053 + $0xe4] sm:$0x1]
    %v6092 = vld [vmem:[%s1053 + $0x11c] sm:$0x1]
    %v6093 = vld [vmem:[%s1053 + $0x154] sm:$0x1]
    %v6094 = vld [vmem:[%s1053 + $0x18c] sm:$0x1]
    %v6095 = vld [vmem:[%s1053 + $0x1c4] sm:$0x1]
    %v6096 = vld [vmem:[%s1053 + $0x1fc] sm:$0x1]
    %v6097 = vld [vmem:[%s1053 + $0x234] sm:$0x1]
    %v6098 = vld [vmem:[%s1053 + $0x26c] sm:$0x1]
    %v6099 = vld [vmem:[%s1053 + $0x2a4] sm:$0x1]
    %v6100 = vld [vmem:[%s1053 + $0x2dc] sm:$0x1]
    %v6101 = vld [vmem:[%s1053 + $0x314] sm:$0x1]
    %v6102 = vld [vmem:[%s1053 + $0x34c] sm:$0x1]
    %v6119 = vrot.slane %v6088, 7
    %v6120 = vsel %vm180, %v6119, %v6087
    %v6121 = vrot.slane %v6089, 6
    %v6122 = vsel %vm183, %v6121, %v6120
    %v6123 = vrot.slane %v6090, 5
    %v6124 = vsel %vm186, %v6123, %v6122
    %v6125 = vrot.slane %v6091, 4
    %v6126 = vsel %vm189, %v6125, %v6124
    %v6127 = vrot.slane %v6092, 3
    %v6128 = vsel %vm192, %v6127, %v6126
    %v6129 = vrot.slane %v6093, 2
    %v6130 = vsel %vm195, %v6129, %v6128
    %v6131 = vrot.slane %v6094, 1
    %v6132 = vsel %vm198, %v6131, %v6130
    %v6133 = vrot.slane %v6096, 7
    %v6134 = vsel %vm180, %v6133, %v6095
    %v6135 = vrot.slane %v6097, 6
    %v6136 = vsel %vm183, %v6135, %v6134
    %v6137 = vrot.slane %v6098, 5
    %v6138 = vsel %vm186, %v6137, %v6136
    %v6139 = vrot.slane %v6099, 4
    %v6140 = vsel %vm189, %v6139, %v6138
    %v6141 = vrot.slane %v6100, 3
    %v6142 = vsel %vm192, %v6141, %v6140
    %v6143 = vrot.slane %v6101, 2
    %v6144 = vsel %vm195, %v6143, %v6142
    %v6145 = vrot.slane %v6102, 1
    %v6146 = vsel %vm198, %v6145, %v6144
    %v6149 = vmul.f32 %v699, %v6132
    %v6150 = vmul.f32 %v703, %v6146
    %v6151 = vadd.f32 %v6019, %v6149
    %v6152 = vadd.f32 %v6020, %v6150
    %v6153 = vld [vmem:[%s755 + $0x6] sm:$0x1]
    %v6154 = vld [vmem:[%s755 + $0x3e] sm:$0x1]
    %v6155 = vld [vmem:[%s755 + $0x76] sm:$0x1]
    %v6156 = vld [vmem:[%s755 + $0xae] sm:$0x1]
    %v6157 = vld [vmem:[%s755 + $0xe6] sm:$0x1]
    %v6158 = vld [vmem:[%s755 + $0x11e] sm:$0x1]
    %v6159 = vld [vmem:[%s755 + $0x156] sm:$0x1]
    %v6160 = vld [vmem:[%s755 + $0x18e] sm:$0x1]
    %v6161 = vld [vmem:[%s755 + $0x1c6] sm:$0x1]
    %v6162 = vld [vmem:[%s755 + $0x1fe] sm:$0x1]
    %v6163 = vld [vmem:[%s755 + $0x236] sm:$0x1]
    %v6164 = vld [vmem:[%s755 + $0x26e] sm:$0x1]
    %v6165 = vld [vmem:[%s755 + $0x2a6] sm:$0x1]
    %v6166 = vld [vmem:[%s755 + $0x2de] sm:$0x1]
    %v6167 = vld [vmem:[%s755 + $0x316] sm:$0x1]
    %v6168 = vld [vmem:[%s755 + $0x34e] sm:$0x1]
    %v6185 = vrot.slane %v6154, 7
    %v6186 = vsel %vm180, %v6185, %v6153
    %v6187 = vrot.slane %v6155, 6
    %v6188 = vsel %vm183, %v6187, %v6186
    %v6189 = vrot.slane %v6156, 5
    %v6190 = vsel %vm186, %v6189, %v6188
    %v6191 = vrot.slane %v6157, 4
    %v6192 = vsel %vm189, %v6191, %v6190
    %v6193 = vrot.slane %v6158, 3
    %v6194 = vsel %vm192, %v6193, %v6192
    %v6195 = vrot.slane %v6159, 2
    %v6196 = vsel %vm195, %v6195, %v6194
    %v6197 = vrot.slane %v6160, 1
    %v6198 = vsel %vm198, %v6197, %v6196
    %v6199 = vrot.slane %v6162, 7
    %v6200 = vsel %vm180, %v6199, %v6161
    %v6201 = vrot.slane %v6163, 6
    %v6202 = vsel %vm183, %v6201, %v6200
    %v6203 = vrot.slane %v6164, 5
    %v6204 = vsel %vm186, %v6203, %v6202
    %v6205 = vrot.slane %v6165, 4
    %v6206 = vsel %vm189, %v6205, %v6204
    %v6207 = vrot.slane %v6166, 3
    %v6208 = vsel %vm192, %v6207, %v6206
    %v6209 = vrot.slane %v6167, 2
    %v6210 = vsel %vm195, %v6209, %v6208
    %v6211 = vrot.slane %v6168, 1
    %v6212 = vsel %vm198, %v6211, %v6210
    %v6215 = vmul.f32 %v774, %v6198
    %v6216 = vmul.f32 %v778, %v6212
    %v6217 = vadd.f32 %v6085, %v6215
    %v6218 = vadd.f32 %v6086, %v6216
    %v6219 = vld [vmem:[%s1053 + $0x5] sm:$0x1]
    %v6220 = vld [vmem:[%s1053 + $0x3d] sm:$0x1]
    %v6221 = vld [vmem:[%s1053 + $0x75] sm:$0x1]
    %v6222 = vld [vmem:[%s1053 + $0xad] sm:$0x1]
    %v6223 = vld [vmem:[%s1053 + $0xe5] sm:$0x1]
    %v6224 = vld [vmem:[%s1053 + $0x11d] sm:$0x1]
    %v6225 = vld [vmem:[%s1053 + $0x155] sm:$0x1]
    %v6226 = vld [vmem:[%s1053 + $0x18d] sm:$0x1]
    %v6227 = vld [vmem:[%s1053 + $0x1c5] sm:$0x1]
    %v6228 = vld [vmem:[%s1053 + $0x1fd] sm:$0x1]
    %v6229 = vld [vmem:[%s1053 + $0x235] sm:$0x1]
    %v6230 = vld [vmem:[%s1053 + $0x26d] sm:$0x1]
    %v6231 = vld [vmem:[%s1053 + $0x2a5] sm:$0x1]
    %v6232 = vld [vmem:[%s1053 + $0x2dd] sm:$0x1]
    %v6233 = vld [vmem:[%s1053 + $0x315] sm:$0x1]
    %v6234 = vld [vmem:[%s1053 + $0x34d] sm:$0x1]
    %v6251 = vrot.slane %v6220, 7
    %v6252 = vsel %vm180, %v6251, %v6219
    %v6253 = vrot.slane %v6221, 6
    %v6254 = vsel %vm183, %v6253, %v6252
    %v6255 = vrot.slane %v6222, 5
    %v6256 = vsel %vm186, %v6255, %v6254
    %v6257 = vrot.slane %v6223, 4
    %v6258 = vsel %vm189, %v6257, %v6256
    %v6259 = vrot.slane %v6224, 3
    %v6260 = vsel %vm192, %v6259, %v6258
    %v6261 = vrot.slane %v6225, 2
    %v6262 = vsel %vm195, %v6261, %v6260
    %v6263 = vrot.slane %v6226, 1
    %v6264 = vsel %vm198, %v6263, %v6262
    %v6265 = vrot.slane %v6228, 7
    %v6266 = vsel %vm180, %v6265, %v6227
    %v6267 = vrot.slane %v6229, 6
    %v6268 = vsel %vm183, %v6267, %v6266
    %v6269 = vrot.slane %v6230, 5
    %v6270 = vsel %vm186, %v6269, %v6268
    %v6271 = vrot.slane %v6231, 4
    %v6272 = vsel %vm189, %v6271, %v6270
    %v6273 = vrot.slane %v6232, 3
    %v6274 = vsel %vm192, %v6273, %v6272
    %v6275 = vrot.slane %v6233, 2
    %v6276 = vsel %vm195, %v6275, %v6274
    %v6277 = vrot.slane %v6234, 1
    %v6278 = vsel %vm198, %v6277, %v6276
    %v6281 = vmul.f32 %v848, %v6264
    %v6282 = vmul.f32 %v852, %v6278
    %v6283 = vadd.f32 %v6151, %v6281
    %v6284 = vadd.f32 %v6152, %v6282
    %v6285 = vld [vmem:[%s904 + $0x6] sm:$0x1]
    %v6286 = vld [vmem:[%s904 + $0x3e] sm:$0x1]
    %v6287 = vld [vmem:[%s904 + $0x76] sm:$0x1]
    %v6288 = vld [vmem:[%s904 + $0xae] sm:$0x1]
    %v6289 = vld [vmem:[%s904 + $0xe6] sm:$0x1]
    %v6290 = vld [vmem:[%s904 + $0x11e] sm:$0x1]
    %v6291 = vld [vmem:[%s904 + $0x156] sm:$0x1]
    %v6292 = vld [vmem:[%s904 + $0x18e] sm:$0x1]
    %v6293 = vld [vmem:[%s904 + $0x1c6] sm:$0x1]
    %v6294 = vld [vmem:[%s904 + $0x1fe] sm:$0x1]
    %v6295 = vld [vmem:[%s904 + $0x236] sm:$0x1]
    %v6296 = vld [vmem:[%s904 + $0x26e] sm:$0x1]
    %v6297 = vld [vmem:[%s904 + $0x2a6] sm:$0x1]
    %v6298 = vld [vmem:[%s904 + $0x2de] sm:$0x1]
    %v6299 = vld [vmem:[%s904 + $0x316] sm:$0x1]
    %v6300 = vld [vmem:[%s904 + $0x34e] sm:$0x1]
    %v6317 = vrot.slane %v6286, 7
    %v6318 = vsel %vm180, %v6317, %v6285
    %v6319 = vrot.slane %v6287, 6
    %v6320 = vsel %vm183, %v6319, %v6318
    %v6321 = vrot.slane %v6288, 5
    %v6322 = vsel %vm186, %v6321, %v6320
    %v6323 = vrot.slane %v6289, 4
    %v6324 = vsel %vm189, %v6323, %v6322
    %v6325 = vrot.slane %v6290, 3
    %v6326 = vsel %vm192, %v6325, %v6324
    %v6327 = vrot.slane %v6291, 2
    %v6328 = vsel %vm195, %v6327, %v6326
    %v6329 = vrot.slane %v6292, 1
    %v6330 = vsel %vm198, %v6329, %v6328
    %v6331 = vrot.slane %v6294, 7
    %v6332 = vsel %vm180, %v6331, %v6293
    %v6333 = vrot.slane %v6295, 6
    %v6334 = vsel %vm183, %v6333, %v6332
    %v6335 = vrot.slane %v6296, 5
    %v6336 = vsel %vm186, %v6335, %v6334
    %v6337 = vrot.slane %v6297, 4
    %v6338 = vsel %vm189, %v6337, %v6336
    %v6339 = vrot.slane %v6298, 3
    %v6340 = vsel %vm192, %v6339, %v6338
    %v6341 = vrot.slane %v6299, 2
    %v6342 = vsel %vm195, %v6341, %v6340
    %v6343 = vrot.slane %v6300, 1
    %v6344 = vsel %vm198, %v6343, %v6342
    %v6347 = vmul.f32 %v923, %v6330
    %v6348 = vmul.f32 %v927, %v6344
    %v6349 = vadd.f32 %v6217, %v6347
    %v6350 = vadd.f32 %v6218, %v6348
    %v6351 = vld [vmem:[%s1053 + $0x6] sm:$0x1]
    %v6352 = vld [vmem:[%s1053 + $0x3e] sm:$0x1]
    %v6353 = vld [vmem:[%s1053 + $0x76] sm:$0x1]
    %v6354 = vld [vmem:[%s1053 + $0xae] sm:$0x1]
    %v6355 = vld [vmem:[%s1053 + $0xe6] sm:$0x1]
    %v6356 = vld [vmem:[%s1053 + $0x11e] sm:$0x1]
    %v6357 = vld [vmem:[%s1053 + $0x156] sm:$0x1]
    %v6358 = vld [vmem:[%s1053 + $0x18e] sm:$0x1]
    %v6359 = vld [vmem:[%s1053 + $0x1c6] sm:$0x1]
    %v6360 = vld [vmem:[%s1053 + $0x1fe] sm:$0x1]
    %v6361 = vld [vmem:[%s1053 + $0x236] sm:$0x1]
    %v6362 = vld [vmem:[%s1053 + $0x26e] sm:$0x1]
    %v6363 = vld [vmem:[%s1053 + $0x2a6] sm:$0x1]
    %v6364 = vld [vmem:[%s1053 + $0x2de] sm:$0x1]
    %v6365 = vld [vmem:[%s1053 + $0x316] sm:$0x1]
    %v6366 = vld [vmem:[%s1053 + $0x34e] sm:$0x1]
    %v6383 = vrot.slane %v6352, 7
    %v6384 = vsel %vm180, %v6383, %v6351
    %v6385 = vrot.slane %v6353, 6
    %v6386 = vsel %vm183, %v6385, %v6384
    %v6387 = vrot.slane %v6354, 5
    %v6388 = vsel %vm186, %v6387, %v6386
    %v6389 = vrot.slane %v6355, 4
    %v6390 = vsel %vm189, %v6389, %v6388
    %v6391 = vrot.slane %v6356, 3
    %v6392 = vsel %vm192, %v6391, %v6390
    %v6393 = vrot.slane %v6357, 2
    %v6394 = vsel %vm195, %v6393, %v6392
    %v6395 = vrot.slane %v6358, 1
    %v6396 = vsel %vm198, %v6395, %v6394
    %v6397 = vrot.slane %v6360, 7
    %v6398 = vsel %vm180, %v6397, %v6359
    %v6399 = vrot.slane %v6361, 6
    %v6400 = vsel %vm183, %v6399, %v6398
    %v6401 = vrot.slane %v6362, 5
    %v6402 = vsel %vm186, %v6401, %v6400
    %v6403 = vrot.slane %v6363, 4
    %v6404 = vsel %vm189, %v6403, %v6402
    %v6405 = vrot.slane %v6364, 3
    %v6406 = vsel %vm192, %v6405, %v6404
    %v6407 = vrot.slane %v6365, 2
    %v6408 = vsel %vm195, %v6407, %v6406
    %v6409 = vrot.slane %v6366, 1
    %v6410 = vsel %vm198, %v6409, %v6408
    %v6413 = vmul.f32 %v997, %v6396
    %v6414 = vmul.f32 %v1001, %v6410
    %v6415 = vadd.f32 %v6283, %v6413
    %v6416 = vadd.f32 %v6284, %v6414
    %v6417 = vmul.f32 %v1072, %v6396
    %v6418 = vmul.f32 %v1076, %v6410
    %v6419 = vadd.f32 %v6349, %v6417
    %v6420 = vadd.f32 %v6350, %v6418
    %6423 = vrot.lane.b32.xlu0 %v6415, 64
    %v6424 = vpop.permute.xlu0 %6423
    %6425 = vrot.lane.b32.xlu0 %v6416, 64
    %v6426 = vpop.permute.xlu0 %6425
    %6429 = vst.msk [vmem:[#allocation2 + $0x60] sm:$0xff] %vm1136, %v6424
    %6430 = vst.msk [vmem:[#allocation2 + $0x68] sm:$0xff] %vm1136, %v6426
    %6433 = vrot.lane.b32.xlu0 %v6419, 64
    %v6434 = vpop.permute.xlu0 %6433
    %6435 = vrot.lane.b32.xlu0 %v6420, 64
    %v6436 = vpop.permute.xlu0 %6435
    %6439 = vst.msk [vmem:[#allocation3 + $0x60] sm:$0xff] %vm1136, %v6434
    %6440 = vst.msk [vmem:[#allocation3 + $0x68] sm:$0xff] %vm1136, %v6436
    %v6441 = vld [vmem:[#allocation2] sm:$0xff]
    %v6442 = vld [vmem:[#allocation2 + $0x8] sm:$0xff]
    %v6443 = vld [vmem:[#allocation2 + $0x10] sm:$0xff]
    %v6444 = vld [vmem:[#allocation2 + $0x18] sm:$0xff]
    %v6445 = vld [vmem:[#allocation2 + $0x20] sm:$0xff]
    %v6446 = vld [vmem:[#allocation2 + $0x28] sm:$0xff]
    %v6447 = vld [vmem:[#allocation2 + $0x30] sm:$0xff]
    %v6448 = vld [vmem:[#allocation2 + $0x38] sm:$0xff]
    %v6449 = vld [vmem:[#allocation2 + $0x40] sm:$0xff]
    %v6450 = vld [vmem:[#allocation2 + $0x48] sm:$0xff]
    %v6451 = vld [vmem:[#allocation2 + $0x50] sm:$0xff]
    %v6452 = vld [vmem:[#allocation2 + $0x58] sm:$0xff]
    %v6453 = vld [vmem:[#allocation2 + $0x60] sm:$0xff]
    %v6454 = vld [vmem:[#allocation2 + $0x68] sm:$0xff]
    %v6455 = vld [vmem:[%s4] sm:$0xff]
    %v6456 = vld [vmem:[%s4 + $0x8] sm:$0xff]
    %v6457 = vld [vmem:[%s4 + $0x10] sm:$0xff]
    %v6458 = vld [vmem:[%s4 + $0x18] sm:$0xff]
    %v6459 = vld [vmem:[%s4 + $0x20] sm:$0xff]
    %v6460 = vld [vmem:[%s4 + $0x28] sm:$0xff]
    %v6461 = vld [vmem:[%s4 + $0x30] sm:$0xff]
    %v6462 = vld [vmem:[%s4 + $0x38] sm:$0xff]
    %v6463 = vld [vmem:[%s4 + $0x40] sm:$0xff]
    %v6464 = vld [vmem:[%s4 + $0x48] sm:$0xff]
    %v6465 = vld [vmem:[%s4 + $0x50] sm:$0xff]
    %v6466 = vld [vmem:[%s4 + $0x58] sm:$0xff]
    %v6467 = vld [vmem:[%s4 + $0x60] sm:$0xff]
    %v6468 = vld [vmem:[%s4 + $0x68] sm:$0xff]
    %v6469 = vld [vmem:[%s4 + $0x70] sm:$0xff]
    %v6470 = vld [vmem:[%s4 + $0x78] sm:$0xff]
    %v6471 = vld [vmem:[%s5] sm:$0x1]
    %v6473 = vlaneseq
    %v6474 = vshrl.u32 %v6473, 7
    %v6475 = vsub.s32 0, %v6474
    %v6476 = vrot.slane %v6471, %v6475
    %6478 = vmatprep.subr.mxu0 0.0
    %6479 = vmatpush1.msra.mxu0 %v6455
    %6480 = vmatprep.subr.mxu0 0.0
    %6481 = vmatpush1.msra.mxu0 %v6456
    %6482 = vmatprep.subr.mxu0 0.0
    %6483 = vmatpush1.msra.mxu0 %v6457
    %6484 = vmatprep.subr.mxu0 0.0
    %6485 = vmatpush1.msra.mxu0 %v6458
    %6486 = vmatprep.subr.mxu0 0.0
    %6487 = vmatpush1.msra.mxu0 %v6459
    %6488 = vmatprep.subr.mxu0 0.0
    %6489 = vmatpush1.msra.mxu0 %v6460
    %6490 = vmatprep.subr.mxu0 0.0
    %6491 = vmatpush1.msra.mxu0 %v6461
    %6492 = vmatprep.subr.mxu0 0.0
    %6493 = vmatpush1.msra.mxu0 %v6462
    %6494 = vmatprep.subr.mxu0 0.0
    %6495 = vmatpush1.msra.mxu0 %v6463
    %6496 = vmatprep.subr.mxu0 0.0
    %6497 = vmatpush1.msra.mxu0 %v6464
    %6498 = vmatprep.subr.mxu0 0.0
    %6499 = vmatpush1.msra.mxu0 %v6465
    %6500 = vmatprep.subr.mxu0 0.0
    %6501 = vmatpush1.msra.mxu0 %v6466
    %6502 = vmatprep.subr.mxu0 0.0
    %6503 = vmatpush1.msra.mxu0 %v6467
    %6504 = vmatprep.subr.mxu0 0.0
    %6505 = vmatpush1.msra.mxu0 %v6468
    %6506 = vmatprep.subr.mxu0 0.0
    %6507 = vmatpush1.msra.mxu0 %v6469
    %6508 = vmatprep.subr.mxu0 0.0
    %6509 = vmatpush1.msra.mxu0 %v6470
    %6510 = vmatprep.subr.mxu0 0.0
    %6511 = vmatpush1.msra.mxu0 0.0
    %6512 = vmatprep.subr.mxu0 0.0
    %6513 = vmatpush1.msra.mxu0 0.0
    %6514 = vmatprep.subr.mxu0 0.0
    %6515 = vmatpush1.msra.mxu0 0.0
    %6516 = vmatprep.subr.mxu0 0.0
    %6517 = vmatpush1.msra.mxu0 0.0
    %6518 = vmatprep.subr.mxu0 0.0
    %6519 = vmatpush1.msra.mxu0 0.0
    %6520 = vmatprep.subr.mxu0 0.0
    %6521 = vmatpush1.msra.mxu0 0.0
    %6522 = vmatprep.subr.mxu0 0.0
    %6523 = vmatpush1.msra.mxu0 0.0
    %6524 = vmatprep.subr.mxu0 0.0
    %6525 = vmatpush1.msra.mxu0 0.0
    %6526 = vmatprep.subr.mxu0 0.0
    %6527 = vmatpush1.msra.mxu0 0.0
    %6528 = vmatprep.subr.mxu0 0.0
    %6529 = vmatpush1.msra.mxu0 0.0
    %6530 = vmatprep.subr.mxu0 0.0
    %6531 = vmatpush1.msra.mxu0 0.0
    %6532 = vmatprep.subr.mxu0 0.0
    %6533 = vmatpush1.msra.mxu0 0.0
    %6534 = vmatprep.subr.mxu0 0.0
    %6535 = vmatpush1.msra.mxu0 0.0
    %6536 = vmatprep.subr.mxu0 0.0
    %6537 = vmatpush1.msra.mxu0 0.0
    %6538 = vmatprep.subr.mxu0 0.0
    %6539 = vmatpush1.msra.mxu0 0.0
    %6540 = vmatprep.subr.mxu0 0.0
    %6541 = vmatpush1.msra.mxu0 0.0
    %6542 = vmatprep.mubr.f32.mxu0 0.0
    %6543 = vmatmul.mubr.f32.gmra.mrb[0].mxu0 %v6441
    %v6544 = vpop.f32.mrb[0].mxu0
    %v6545 = vadd.f32 %v6476, %v6544
    %v6546 = vpop.f32.mrb[0].mxu0
    %6547 = vmatprep.mubr.f32.mxu0 0.0
    %6548 = vmatmul.mubr.f32.gmra.mrb[0].mxu0 %v6442
    %v6549 = vpop.f32.mrb[0].mxu0
    %v6550 = vadd.f32 %v6476, %v6549
    %v6551 = vpop.f32.mrb[0].mxu0
    %6552 = vmatprep.mubr.f32.mxu0 0.0
    %6553 = vmatmul.mubr.f32.gmra.mrb[0].mxu0 %v6443
    %v6554 = vpop.f32.mrb[0].mxu0
    %v6555 = vadd.f32 %v6476, %v6554
    %v6556 = vpop.f32.mrb[0].mxu0
    %6557 = vmatprep.mubr.f32.mxu0 0.0
    %6558 = vmatmul.mubr.f32.gmra.mrb[0].mxu0 %v6444
    %v6559 = vpop.f32.mrb[0].mxu0
    %v6560 = vadd.f32 %v6476, %v6559
    %v6561 = vpop.f32.mrb[0].mxu0
    %6562 = vmatprep.mubr.f32.mxu0 0.0
    %6563 = vmatmul.mubr.f32.gmra.mrb[0].mxu0 %v6445
    %v6564 = vpop.f32.mrb[0].mxu0
    %v6565 = vadd.f32 %v6476, %v6564
    %v6566 = vpop.f32.mrb[0].mxu0
    %6567 = vmatprep.mubr.f32.mxu0 0.0
    %6568 = vmatmul.mubr.f32.gmra.mrb[0].mxu0 %v6446
    %v6569 = vpop.f32.mrb[0].mxu0
    %v6570 = vadd.f32 %v6476, %v6569
    %v6571 = vpop.f32.mrb[0].mxu0
    %6572 = vmatprep.mubr.f32.mxu0 0.0
    %6573 = vmatmul.mubr.f32.gmra.mrb[0].mxu0 %v6447
    %v6574 = vpop.f32.mrb[0].mxu0
    %v6575 = vadd.f32 %v6476, %v6574
    %v6576 = vpop.f32.mrb[0].mxu0
    %6577 = vmatprep.mubr.f32.mxu0 0.0
    %6578 = vmatmul.mubr.f32.gmra.mrb[0].mxu0 %v6448
    %v6579 = vpop.f32.mrb[0].mxu0
    %v6580 = vadd.f32 %v6476, %v6579
    %v6581 = vpop.f32.mrb[0].mxu0
    %6582 = vmatprep.mubr.f32.mxu0 0.0
    %6583 = vmatmul.mubr.f32.gmra.mrb[0].mxu0 %v6449
    %v6584 = vpop.f32.mrb[0].mxu0
    %v6585 = vadd.f32 %v6476, %v6584
    %v6586 = vpop.f32.mrb[0].mxu0
    %6587 = vmatprep.mubr.f32.mxu0 0.0
    %6588 = vmatmul.mubr.f32.gmra.mrb[0].mxu0 %v6450
    %v6589 = vpop.f32.mrb[0].mxu0
    %v6590 = vadd.f32 %v6476, %v6589
    %v6591 = vpop.f32.mrb[0].mxu0
    %6592 = vmatprep.mubr.f32.mxu0 0.0
    %6593 = vmatmul.mubr.f32.gmra.mrb[0].mxu0 %v6451
    %v6594 = vpop.f32.mrb[0].mxu0
    %v6595 = vadd.f32 %v6476, %v6594
    %v6596 = vpop.f32.mrb[0].mxu0
    %6597 = vmatprep.mubr.f32.mxu0 0.0
    %6598 = vmatmul.mubr.f32.gmra.mrb[0].mxu0 %v6452
    %v6599 = vpop.f32.mrb[0].mxu0
    %v6600 = vadd.f32 %v6476, %v6599
    %v6601 = vpop.f32.mrb[0].mxu0
    %6602 = vmatprep.mubr.f32.mxu0 0.0
    %6603 = vmatmul.mubr.f32.gmra.mrb[0].mxu0 %v6453
    %v6604 = vpop.f32.mrb[0].mxu0
    %v6605 = vadd.f32 %v6476, %v6604
    %v6606 = vpop.f32.mrb[0].mxu0
    %6607 = vmatprep.mubr.f32.mxu0 0.0
    %6608 = vmatmul.mubr.f32.gmra.mrb[0].mxu0 %v6454
    %v6609 = vpop.f32.mrb[0].mxu0
    %v6610 = vadd.f32 %v6476, %v6609
    %v6611 = vpop.f32.mrb[0].mxu0
    %6612 = vdwg.mxu0
    %v6613 = vtanh.pop %v6545
    %v6614 = vtanh.pop %v6550
    %v6615 = vtanh.pop %v6555
    %v6616 = vtanh.pop %v6560
    %v6617 = vtanh.pop %v6565
    %v6618 = vtanh.pop %v6570
    %v6619 = vtanh.pop %v6575
    %v6620 = vtanh.pop %v6580
    %v6621 = vtanh.pop %v6585
    %v6622 = vtanh.pop %v6590
    %v6623 = vtanh.pop %v6595
    %v6624 = vtanh.pop %v6600
    %v6625 = vtanh.pop %v6605
    %v6626 = vtanh.pop %v6610
    %v6627 = vld [vmem:[#allocation3] sm:$0xff]
    %v6628 = vld [vmem:[#allocation3 + $0x8] sm:$0xff]
    %v6629 = vld [vmem:[#allocation3 + $0x10] sm:$0xff]
    %v6630 = vld [vmem:[#allocation3 + $0x18] sm:$0xff]
    %v6631 = vld [vmem:[#allocation3 + $0x20] sm:$0xff]
    %v6632 = vld [vmem:[#allocation3 + $0x28] sm:$0xff]
    %v6633 = vld [vmem:[#allocation3 + $0x30] sm:$0xff]
    %v6634 = vld [vmem:[#allocation3 + $0x38] sm:$0xff]
    %v6635 = vld [vmem:[#allocation3 + $0x40] sm:$0xff]
    %v6636 = vld [vmem:[#allocation3 + $0x48] sm:$0xff]
    %v6637 = vld [vmem:[#allocation3 + $0x50] sm:$0xff]
    %v6638 = vld [vmem:[#allocation3 + $0x58] sm:$0xff]
    %v6639 = vld [vmem:[#allocation3 + $0x60] sm:$0xff]
    %v6640 = vld [vmem:[#allocation3 + $0x68] sm:$0xff]
    %v6641 = vld [vmem:[%s6] sm:$0xff]
    %v6642 = vld [vmem:[%s6 + $0x8] sm:$0xff]
    %v6643 = vld [vmem:[%s6 + $0x10] sm:$0xff]
    %v6644 = vld [vmem:[%s6 + $0x18] sm:$0xff]
    %v6645 = vld [vmem:[%s6 + $0x20] sm:$0xff]
    %v6646 = vld [vmem:[%s6 + $0x28] sm:$0xff]
    %v6647 = vld [vmem:[%s6 + $0x30] sm:$0xff]
    %v6648 = vld [vmem:[%s6 + $0x38] sm:$0xff]
    %v6649 = vld [vmem:[%s6 + $0x40] sm:$0xff]
    %v6650 = vld [vmem:[%s6 + $0x48] sm:$0xff]
    %v6651 = vld [vmem:[%s6 + $0x50] sm:$0xff]
    %v6652 = vld [vmem:[%s6 + $0x58] sm:$0xff]
    %v6653 = vld [vmem:[%s6 + $0x60] sm:$0xff]
    %v6654 = vld [vmem:[%s6 + $0x68] sm:$0xff]
    %v6655 = vld [vmem:[%s6 + $0x70] sm:$0xff]
    %v6656 = vld [vmem:[%s6 + $0x78] sm:$0xff]
    %v6657 = vld [vmem:[%s7] sm:$0x1]
    %v6659 = vlaneseq
    %v6660 = vshrl.u32 %v6659, 7
    %v6661 = vsub.s32 0, %v6660
    %v6662 = vrot.slane %v6657, %v6661
    %6664 = vmatprep.subr.mxu0 0.0
    %6665 = vmatpush1.msra.mxu0 %v6641
    %6666 = vmatprep.subr.mxu0 0.0
    %6667 = vmatpush1.msra.mxu0 %v6642
    %6668 = vmatprep.subr.mxu0 0.0
    %6669 = vmatpush1.msra.mxu0 %v6643
    %6670 = vmatprep.subr.mxu0 0.0
    %6671 = vmatpush1.msra.mxu0 %v6644
    %6672 = vmatprep.subr.mxu0 0.0
    %6673 = vmatpush1.msra.mxu0 %v6645
    %6674 = vmatprep.subr.mxu0 0.0
    %6675 = vmatpush1.msra.mxu0 %v6646
    %6676 = vmatprep.subr.mxu0 0.0
    %6677 = vmatpush1.msra.mxu0 %v6647
    %6678 = vmatprep.subr.mxu0 0.0
    %6679 = vmatpush1.msra.mxu0 %v6648
    %6680 = vmatprep.subr.mxu0 0.0
    %6681 = vmatpush1.msra.mxu0 %v6649
    %6682 = vmatprep.subr.mxu0 0.0
    %6683 = vmatpush1.msra.mxu0 %v6650
    %6684 = vmatprep.subr.mxu0 0.0
    %6685 = vmatpush1.msra.mxu0 %v6651
    %6686 = vmatprep.subr.mxu0 0.0
    %6687 = vmatpush1.msra.mxu0 %v6652
    %6688 = vmatprep.subr.mxu0 0.0
    %6689 = vmatpush1.msra.mxu0 %v6653
    %6690 = vmatprep.subr.mxu0 0.0
    %6691 = vmatpush1.msra.mxu0 %v6654
    %6692 = vmatprep.subr.mxu0 0.0
    %6693 = vmatpush1.msra.mxu0 %v6655
    %6694 = vmatprep.subr.mxu0 0.0
    %6695 = vmatpush1.msra.mxu0 %v6656
    %6696 = vmatprep.subr.mxu0 0.0
    %6697 = vmatpush1.msra.mxu0 0.0
    %6698 = vmatprep.subr.mxu0 0.0
    %6699 = vmatpush1.msra.mxu0 0.0
    %6700 = vmatprep.subr.mxu0 0.0
    %6701 = vmatpush1.msra.mxu0 0.0
    %6702 = vmatprep.subr.mxu0 0.0
    %6703 = vmatpush1.msra.mxu0 0.0
    %6704 = vmatprep.subr.mxu0 0.0
    %6705 = vmatpush1.msra.mxu0 0.0
    %6706 = vmatprep.subr.mxu0 0.0
    %6707 = vmatpush1.msra.mxu0 0.0
    %6708 = vmatprep.subr.mxu0 0.0
    %6709 = vmatpush1.msra.mxu0 0.0
    %6710 = vmatprep.subr.mxu0 0.0
    %6711 = vmatpush1.msra.mxu0 0.0
    %6712 = vmatprep.subr.mxu0 0.0
    %6713 = vmatpush1.msra.mxu0 0.0
    %6714 = vmatprep.subr.mxu0 0.0
    %6715 = vmatpush1.msra.mxu0 0.0
    %6716 = vmatprep.subr.mxu0 0.0
    %6717 = vmatpush1.msra.mxu0 0.0
    %6718 = vmatprep.subr.mxu0 0.0
    %6719 = vmatpush1.msra.mxu0 0.0
    %6720 = vmatprep.subr.mxu0 0.0
    %6721 = vmatpush1.msra.mxu0 0.0
    %6722 = vmatprep.subr.mxu0 0.0
    %6723 = vmatpush1.msra.mxu0 0.0
    %6724 = vmatprep.subr.mxu0 0.0
    %6725 = vmatpush1.msra.mxu0 0.0
    %6726 = vmatprep.subr.mxu0 0.0
    %6727 = vmatpush1.msra.mxu0 0.0
    %6728 = vmatprep.mubr.f32.mxu0 0.0
    %6729 = vmatmul.mubr.f32.gmra.mrb[0].mxu0 %v6627
    %v6730 = vpop.f32.mrb[0].mxu0
    %v6731 = vadd.f32 %v6662, %v6730
    %v6732 = vpop.f32.mrb[0].mxu0
    %6733 = vmatprep.mubr.f32.mxu0 0.0
    %6734 = vmatmul.mubr.f32.gmra.mrb[0].mxu0 %v6628
    %v6735 = vpop.f32.mrb[0].mxu0
    %v6736 = vadd.f32 %v6662, %v6735
    %v6737 = vpop.f32.mrb[0].mxu0
    %6738 = vmatprep.mubr.f32.mxu0 0.0
    %6739 = vmatmul.mubr.f32.gmra.mrb[0].mxu0 %v6629
    %v6740 = vpop.f32.mrb[0].mxu0
    %v6741 = vadd.f32 %v6662, %v6740
    %v6742 = vpop.f32.mrb[0].mxu0
    %6743 = vmatprep.mubr.f32.mxu0 0.0
    %6744 = vmatmul.mubr.f32.gmra.mrb[0].mxu0 %v6630
    %v6745 = vpop.f32.mrb[0].mxu0
    %v6746 = vadd.f32 %v6662, %v6745
    %v6747 = vpop.f32.mrb[0].mxu0
    %6748 = vmatprep.mubr.f32.mxu0 0.0
    %6749 = vmatmul.mubr.f32.gmra.mrb[0].mxu0 %v6631
    %v6750 = vpop.f32.mrb[0].mxu0
    %v6751 = vadd.f32 %v6662, %v6750
    %v6752 = vpop.f32.mrb[0].mxu0
    %6753 = vmatprep.mubr.f32.mxu0 0.0
    %6754 = vmatmul.mubr.f32.gmra.mrb[0].mxu0 %v6632
    %v6755 = vpop.f32.mrb[0].mxu0
    %v6756 = vadd.f32 %v6662, %v6755
    %v6757 = vpop.f32.mrb[0].mxu0
    %6758 = vmatprep.mubr.f32.mxu0 0.0
    %6759 = vmatmul.mubr.f32.gmra.mrb[0].mxu0 %v6633
    %v6760 = vpop.f32.mrb[0].mxu0
    %v6761 = vadd.f32 %v6662, %v6760
    %v6762 = vpop.f32.mrb[0].mxu0
    %6763 = vmatprep.mubr.f32.mxu0 0.0
    %6764 = vmatmul.mubr.f32.gmra.mrb[0].mxu0 %v6634
    %v6765 = vpop.f32.mrb[0].mxu0
    %v6766 = vadd.f32 %v6662, %v6765
    %v6767 = vpop.f32.mrb[0].mxu0
    %6768 = vmatprep.mubr.f32.mxu0 0.0
    %6769 = vmatmul.mubr.f32.gmra.mrb[0].mxu0 %v6635
    %v6770 = vpop.f32.mrb[0].mxu0
    %v6771 = vadd.f32 %v6662, %v6770
    %v6772 = vpop.f32.mrb[0].mxu0
    %6773 = vmatprep.mubr.f32.mxu0 0.0
    %6774 = vmatmul.mubr.f32.gmra.mrb[0].mxu0 %v6636
    %v6775 = vpop.f32.mrb[0].mxu0
    %v6776 = vadd.f32 %v6662, %v6775
    %v6777 = vpop.f32.mrb[0].mxu0
    %6778 = vmatprep.mubr.f32.mxu0 0.0
    %6779 = vmatmul.mubr.f32.gmra.mrb[0].mxu0 %v6637
    %v6780 = vpop.f32.mrb[0].mxu0
    %v6781 = vadd.f32 %v6662, %v6780
    %v6782 = vpop.f32.mrb[0].mxu0
    %6783 = vmatprep.mubr.f32.mxu0 0.0
    %6784 = vmatmul.mubr.f32.gmra.mrb[0].mxu0 %v6638
    %v6785 = vpop.f32.mrb[0].mxu0
    %v6786 = vadd.f32 %v6662, %v6785
    %v6787 = vpop.f32.mrb[0].mxu0
    %6788 = vmatprep.mubr.f32.mxu0 0.0
    %6789 = vmatmul.mubr.f32.gmra.mrb[0].mxu0 %v6639
    %v6790 = vpop.f32.mrb[0].mxu0
    %v6791 = vadd.f32 %v6662, %v6790
    %v6792 = vpop.f32.mrb[0].mxu0
    %6793 = vmatprep.mubr.f32.mxu0 0.0
    %6794 = vmatmul.mubr.f32.gmra.mrb[0].mxu0 %v6640
    %v6795 = vpop.f32.mrb[0].mxu0
    %v6796 = vadd.f32 %v6662, %v6795
    %v6797 = vpop.f32.mrb[0].mxu0
    %6798 = vdwg.mxu0
    %v6799 = vtanh.pop %v6731
    %v6800 = vtanh.pop %v6736
    %v6801 = vtanh.pop %v6741
    %v6802 = vtanh.pop %v6746
    %v6803 = vtanh.pop %v6751
    %v6804 = vtanh.pop %v6756
    %v6805 = vtanh.pop %v6761
    %v6806 = vtanh.pop %v6766
    %v6807 = vtanh.pop %v6771
    %v6808 = vtanh.pop %v6776
    %v6809 = vtanh.pop %v6781
    %v6810 = vtanh.pop %v6786
    %v6811 = vtanh.pop %v6791
    %v6812 = vtanh.pop %v6796
    %v6813 = vld [vmem:[%s8] sm:$0x1]
    %vm6814 = vcmp.eq.s32.totalorder %v55, 0
    %v6815 = vlaneseq
    %v6816 = vshrl.u32 %v6815, 7
    %v6817 = vsub.s32 0, %v6816
    %v6818 = vrot.slane %v6813, %v6817
    %v6819 = vmul.f32 %v6613, %v6818
    %v6820 = vmul.f32 %v6614, %v6818
    %v6821 = vsel %vm94, %v6819, 0.0
    %6822 = vadd.xlane.f32.xlu0 %v6821
    %v6823 = vpop.xlane.xlu0 %6822
    %v6824 = vsel %vm94, %v6820, 0.0
    %6825 = vadd.xlane.f32.xlu0 %v6824
    %v6826 = vpop.xlane.xlu0 %6825
    %v6827 = vsel %vm6814, %v6823, 0.0
    %v6828 = vsel %vm6814, %v6826, 0.0
    %v6829 = vadd.f32 %v6827, 0.0
    %v6830 = vadd.f32 %v6828, 0.0
    %v6831 = vmul.f32 %v6799, %v6818
    %v6832 = vmul.f32 %v6800, %v6818
    %v6833 = vsel %vm94, %v6831, 0.0
    %6834 = vadd.xlane.f32.xlu0 %v6833
    %v6835 = vpop.xlane.xlu0 %6834
    %v6836 = vsel %vm94, %v6832, 0.0
    %6837 = vadd.xlane.f32.xlu0 %v6836
    %v6838 = vpop.xlane.xlu0 %6837
    %v6839 = vsel %vm6814, %v6835, 0.0
    %v6840 = vsel %vm6814, %v6838, 0.0
    %v6841 = vadd.f32 %v6839, 0.0
    %v6842 = vadd.f32 %v6840, 0.0
    %v6843 = vmul.f32 %v223, %v6613
    %v6844 = vmul.f32 %v228, %v6614
    %v6845 = vadd.f32 %v6843, 0.0
    %v6846 = vadd.f32 %v6844, 0.0
    %v6847 = vmul.f32 %v156, %v6799
    %v6848 = vmul.f32 %v161, %v6800
    %v6849 = vadd.f32 %v6847, 0.0
    %v6850 = vadd.f32 %v6848, 0.0
    %v6851 = vld [vmem:[%s8 + $0x1] sm:$0x1]
    %vm6852 = vcmp.eq.s32.totalorder %v55, 1
    %v6853 = vlaneseq
    %v6854 = vshrl.u32 %v6853, 7
    %v6855 = vsub.s32 0, %v6854
    %v6856 = vrot.slane %v6851, %v6855
    %v6857 = vmul.f32 %v6615, %v6856
    %v6858 = vmul.f32 %v6616, %v6856
    %v6859 = vsel %vm94, %v6857, 0.0
    %6860 = vadd.xlane.f32.xlu0 %v6859
    %v6861 = vpop.xlane.xlu0 %6860
    %v6862 = vsel %vm94, %v6858, 0.0
    %6863 = vadd.xlane.f32.xlu0 %v6862
    %v6864 = vpop.xlane.xlu0 %6863
    %v6865 = vsel %vm6852, %v6861, 0.0
    %v6866 = vsel %vm6852, %v6864, 0.0
    %v6867 = vadd.f32 %v6829, %v6865
    %v6868 = vadd.f32 %v6830, %v6866
    %v6869 = vmul.f32 %v6801, %v6856
    %v6870 = vmul.f32 %v6802, %v6856
    %v6871 = vsel %vm94, %v6869, 0.0
    %6872 = vadd.xlane.f32.xlu0 %v6871
    %v6873 = vpop.xlane.xlu0 %6872
    %v6874 = vsel %vm94, %v6870, 0.0
    %6875 = vadd.xlane.f32.xlu0 %v6874
    %v6876 = vpop.xlane.xlu0 %6875
    %v6877 = vsel %vm6852, %v6873, 0.0
    %v6878 = vsel %vm6852, %v6876, 0.0
    %v6879 = vadd.f32 %v6841, %v6877
    %v6880 = vadd.f32 %v6842, %v6878
    %v6881 = vmul.f32 %v327, %v6615
    %v6882 = vmul.f32 %v331, %v6616
    %v6883 = vadd.f32 %v6845, %v6881
    %v6884 = vadd.f32 %v6846, %v6882
    %v6885 = vmul.f32 %v252, %v6801
    %v6886 = vmul.f32 %v256, %v6802
    %v6887 = vadd.f32 %v6849, %v6885
    %v6888 = vadd.f32 %v6850, %v6886
    %v6889 = vld [vmem:[%s8 + $0x2] sm:$0x1]
    %vm6890 = vcmp.eq.s32.totalorder %v55, 2
    %v6891 = vlaneseq
    %v6892 = vshrl.u32 %v6891, 7
    %v6893 = vsub.s32 0, %v6892
    %v6894 = vrot.slane %v6889, %v6893
    %v6895 = vmul.f32 %v6617, %v6894
    %v6896 = vmul.f32 %v6618, %v6894
    %v6897 = vsel %vm94, %v6895, 0.0
    %6898 = vadd.xlane.f32.xlu0 %v6897
    %v6899 = vpop.xlane.xlu0 %6898
    %v6900 = vsel %vm94, %v6896, 0.0
    %6901 = vadd.xlane.f32.xlu0 %v6900
    %v6902 = vpop.xlane.xlu0 %6901
    %v6903 = vsel %vm6890, %v6899, 0.0
    %v6904 = vsel %vm6890, %v6902, 0.0
    %v6905 = vadd.f32 %v6867, %v6903
    %v6906 = vadd.f32 %v6868, %v6904
    %v6907 = vmul.f32 %v6803, %v6894
    %v6908 = vmul.f32 %v6804, %v6894
    %v6909 = vsel %vm94, %v6907, 0.0
    %6910 = vadd.xlane.f32.xlu0 %v6909
    %v6911 = vpop.xlane.xlu0 %6910
    %v6912 = vsel %vm94, %v6908, 0.0
    %6913 = vadd.xlane.f32.xlu0 %v6912
    %v6914 = vpop.xlane.xlu0 %6913
    %v6915 = vsel %vm6890, %v6911, 0.0
    %v6916 = vsel %vm6890, %v6914, 0.0
    %v6917 = vadd.f32 %v6879, %v6915
    %v6918 = vadd.f32 %v6880, %v6916
    %v6919 = vmul.f32 %v476, %v6617
    %v6920 = vmul.f32 %v480, %v6618
    %v6921 = vadd.f32 %v6883, %v6919
    %v6922 = vadd.f32 %v6884, %v6920
    %v6923 = vmul.f32 %v401, %v6803
    %v6924 = vmul.f32 %v405, %v6804
    %v6925 = vadd.f32 %v6887, %v6923
    %v6926 = vadd.f32 %v6888, %v6924
    %v6927 = vld [vmem:[%s8 + $0x3] sm:$0x1]
    %vm6928 = vcmp.eq.s32.totalorder %v55, 3
    %v6929 = vlaneseq
    %v6930 = vshrl.u32 %v6929, 7
    %v6931 = vsub.s32 0, %v6930
    %v6932 = vrot.slane %v6927, %v6931
    %v6933 = vmul.f32 %v6619, %v6932
    %v6934 = vmul.f32 %v6620, %v6932
    %v6935 = vsel %vm94, %v6933, 0.0
    %6936 = vadd.xlane.f32.xlu0 %v6935
    %v6937 = vpop.xlane.xlu0 %6936
    %v6938 = vsel %vm94, %v6934, 0.0
    %6939 = vadd.xlane.f32.xlu0 %v6938
    %v6940 = vpop.xlane.xlu0 %6939
    %v6941 = vsel %vm6928, %v6937, 0.0
    %v6942 = vsel %vm6928, %v6940, 0.0
    %v6943 = vadd.f32 %v6905, %v6941
    %v6944 = vadd.f32 %v6906, %v6942
    %v6945 = vmul.f32 %v6805, %v6932
    %v6946 = vmul.f32 %v6806, %v6932
    %v6947 = vsel %vm94, %v6945, 0.0
    %6948 = vadd.xlane.f32.xlu0 %v6947
    %v6949 = vpop.xlane.xlu0 %6948
    %v6950 = vsel %vm94, %v6946, 0.0
    %6951 = vadd.xlane.f32.xlu0 %v6950
    %v6952 = vpop.xlane.xlu0 %6951
    %v6953 = vsel %vm6928, %v6949, 0.0
    %v6954 = vsel %vm6928, %v6952, 0.0
    %v6955 = vadd.f32 %v6917, %v6953
    %v6956 = vadd.f32 %v6918, %v6954
    %v6957 = vmul.f32 %v625, %v6619
    %v6958 = vmul.f32 %v629, %v6620
    %v6959 = vadd.f32 %v6921, %v6957
    %v6960 = vadd.f32 %v6922, %v6958
    %v6961 = vmul.f32 %v550, %v6805
    %v6962 = vmul.f32 %v554, %v6806
    %v6963 = vadd.f32 %v6925, %v6961
    %v6964 = vadd.f32 %v6926, %v6962
    %v6965 = vld [vmem:[%s8 + $0x4] sm:$0x1]
    %vm6966 = vcmp.eq.s32.totalorder %v55, 4
    %v6967 = vlaneseq
    %v6968 = vshrl.u32 %v6967, 7
    %v6969 = vsub.s32 0, %v6968
    %v6970 = vrot.slane %v6965, %v6969
    %v6971 = vmul.f32 %v6621, %v6970
    %v6972 = vmul.f32 %v6622, %v6970
    %v6973 = vsel %vm94, %v6971, 0.0
    %6974 = vadd.xlane.f32.xlu0 %v6973
    %v6975 = vpop.xlane.xlu0 %6974
    %v6976 = vsel %vm94, %v6972, 0.0
    %6977 = vadd.xlane.f32.xlu0 %v6976
    %v6978 = vpop.xlane.xlu0 %6977
    %v6979 = vsel %vm6966, %v6975, 0.0
    %v6980 = vsel %vm6966, %v6978, 0.0
    %v6981 = vadd.f32 %v6943, %v6979
    %v6982 = vadd.f32 %v6944, %v6980
    %v6983 = vmul.f32 %v6807, %v6970
    %v6984 = vmul.f32 %v6808, %v6970
    %v6985 = vsel %vm94, %v6983, 0.0
    %6986 = vadd.xlane.f32.xlu0 %v6985
    %v6987 = vpop.xlane.xlu0 %6986
    %v6988 = vsel %vm94, %v6984, 0.0
    %6989 = vadd.xlane.f32.xlu0 %v6988
    %v6990 = vpop.xlane.xlu0 %6989
    %v6991 = vsel %vm6966, %v6987, 0.0
    %v6992 = vsel %vm6966, %v6990, 0.0
    %v6993 = vadd.f32 %v6955, %v6991
    %v6994 = vadd.f32 %v6956, %v6992
    %v6995 = vmul.f32 %v774, %v6621
    %v6996 = vmul.f32 %v778, %v6622
    %v6997 = vadd.f32 %v6959, %v6995
    %v6998 = vadd.f32 %v6960, %v6996
    %v6999 = vmul.f32 %v699, %v6807
    %v7000 = vmul.f32 %v703, %v6808
    %v7001 = vadd.f32 %v6963, %v6999
    %v7002 = vadd.f32 %v6964, %v7000
    %v7003 = vld [vmem:[%s8 + $0x5] sm:$0x1]
    %vm7004 = vcmp.eq.s32.totalorder %v55, 5
    %v7005 = vlaneseq
    %v7006 = vshrl.u32 %v7005, 7
    %v7007 = vsub.s32 0, %v7006
    %v7008 = vrot.slane %v7003, %v7007
    %v7009 = vmul.f32 %v6623, %v7008
    %v7010 = vmul.f32 %v6624, %v7008
    %v7011 = vsel %vm94, %v7009, 0.0
    %7012 = vadd.xlane.f32.xlu0 %v7011
    %v7013 = vpop.xlane.xlu0 %7012
    %v7014 = vsel %vm94, %v7010, 0.0
    %7015 = vadd.xlane.f32.xlu0 %v7014
    %v7016 = vpop.xlane.xlu0 %7015
    %v7017 = vsel %vm7004, %v7013, 0.0
    %v7018 = vsel %vm7004, %v7016, 0.0
    %v7019 = vadd.f32 %v6981, %v7017
    %v7020 = vadd.f32 %v6982, %v7018
    %v7021 = vmul.f32 %v6809, %v7008
    %v7022 = vmul.f32 %v6810, %v7008
    %v7023 = vsel %vm94, %v7021, 0.0
    %7024 = vadd.xlane.f32.xlu0 %v7023
    %v7025 = vpop.xlane.xlu0 %7024
    %v7026 = vsel %vm94, %v7022, 0.0
    %7027 = vadd.xlane.f32.xlu0 %v7026
    %v7028 = vpop.xlane.xlu0 %7027
    %v7029 = vsel %vm7004, %v7025, 0.0
    %v7030 = vsel %vm7004, %v7028, 0.0
    %v7031 = vadd.f32 %v6993, %v7029
    %v7032 = vadd.f32 %v6994, %v7030
    %v7033 = vmul.f32 %v923, %v6623
    %v7034 = vmul.f32 %v927, %v6624
    %v7035 = vadd.f32 %v6997, %v7033
    %v7036 = vadd.f32 %v6998, %v7034
    %v7037 = vmul.f32 %v848, %v6809
    %v7038 = vmul.f32 %v852, %v6810
    %v7039 = vadd.f32 %v7001, %v7037
    %v7040 = vadd.f32 %v7002, %v7038
    %v7041 = vld [vmem:[%s8 + $0x6] sm:$0x1]
    %vm7042 = vcmp.eq.s32.totalorder %v55, 6
    %v7043 = vlaneseq
    %v7044 = vshrl.u32 %v7043, 7
    %v7045 = vsub.s32 0, %v7044
    %v7046 = vrot.slane %v7041, %v7045
    %v7047 = vmul.f32 %v6625, %v7046
    %v7048 = vmul.f32 %v6626, %v7046
    %v7049 = vsel %vm94, %v7047, 0.0
    %7050 = vadd.xlane.f32.xlu0 %v7049
    %v7051 = vpop.xlane.xlu0 %7050
    %v7052 = vsel %vm94, %v7048, 0.0
    %7053 = vadd.xlane.f32.xlu0 %v7052
    %v7054 = vpop.xlane.xlu0 %7053
    %v7055 = vsel %vm7042, %v7051, 0.0
    %v7056 = vsel %vm7042, %v7054, 0.0
    %v7057 = vadd.f32 %v7019, %v7055
    %v7058 = vadd.f32 %v7020, %v7056
    %v7059 = vmul.f32 %v6811, %v7046
    %v7060 = vmul.f32 %v6812, %v7046
    %v7061 = vsel %vm94, %v7059, 0.0
    %7062 = vadd.xlane.f32.xlu0 %v7061
    %v7063 = vpop.xlane.xlu0 %7062
    %v7064 = vsel %vm94, %v7060, 0.0
    %7065 = vadd.xlane.f32.xlu0 %v7064
    %v7066 = vpop.xlane.xlu0 %7065
    %v7067 = vsel %vm7042, %v7063, 0.0
    %v7068 = vsel %vm7042, %v7066, 0.0
    %v7069 = vadd.f32 %v7031, %v7067
    %v7070 = vadd.f32 %v7032, %v7068
    %v7071 = vmul.f32 %v1072, %v6625
    %v7072 = vmul.f32 %v1076, %v6626
    %v7073 = vadd.f32 %v7035, %v7071
    %v7074 = vadd.f32 %v7036, %v7072
    %v7075 = vmul.f32 %v997, %v6811
    %v7076 = vmul.f32 %v1001, %v6812
    %v7077 = vadd.f32 %v7039, %v7075
    %v7078 = vadd.f32 %v7040, %v7076
    %v7079 = vld [vmem:[%s9] sm:$0x1]
    %v7081 = vlaneseq
    %v7082 = vshrl.u32 %v7081, 7
    %v7083 = vsub.s32 0, %v7082
    %v7084 = vrot.slane %v7079, %v7083
    %v7086 = vadd.f32 %v7057, %v7084
    %v7087 = vadd.f32 %v7058, %v7084
    %v7088 = vadd.f32 %v7069, %v7084
    %v7089 = vadd.f32 %v7070, %v7084
    %7090 = vst [vmem:[%s16] sm:$0xff] %v7086
    %7091 = vst [vmem:[%s16 + $0x8] sm:$0xff] %v7087
    %7092 = vst [vmem:[%s16 + $0x10] sm:$0xff] %v7088
    %7093 = vst [vmem:[%s16 + $0x18] sm:$0xff] %v7089
    %v7094 = vld [vmem:[%s10] sm:$0xff]
    %v7095 = vld [vmem:[%s10 + $0x8] sm:$0xff]
    %v7096 = vld [vmem:[%s10 + $0x10] sm:$0xff]
    %v7097 = vld [vmem:[%s10 + $0x18] sm:$0xff]
    %v7098 = vld [vmem:[%s10 + $0x20] sm:$0xff]
    %v7099 = vld [vmem:[%s10 + $0x28] sm:$0xff]
    %v7100 = vld [vmem:[%s10 + $0x30] sm:$0xff]
    %v7101 = vld [vmem:[%s10 + $0x38] sm:$0xff]
    %v7102 = vld [vmem:[%s10 + $0x40] sm:$0xff]
    %v7103 = vld [vmem:[%s10 + $0x48] sm:$0xff]
    %v7104 = vld [vmem:[%s10 + $0x50] sm:$0xff]
    %v7105 = vld [vmem:[%s10 + $0x58] sm:$0xff]
    %v7106 = vld [vmem:[%s10 + $0x60] sm:$0xff]
    %v7107 = vld [vmem:[%s10 + $0x68] sm:$0xff]
    %v7108 = vld [vmem:[%s10 + $0x70] sm:$0xff]
    %v7109 = vld [vmem:[%s10 + $0x78] sm:$0xff]
    %v7110 = vld [vmem:[%s10 + $0x80] sm:$0xff]
    %v7111 = vld [vmem:[%s10 + $0x88] sm:$0xff]
    %v7112 = vld [vmem:[%s10 + $0x90] sm:$0xff]
    %v7113 = vld [vmem:[%s10 + $0x98] sm:$0xff]
    %v7114 = vld [vmem:[%s10 + $0xa0] sm:$0xff]
    %v7115 = vld [vmem:[%s10 + $0xa8] sm:$0xff]
    %v7116 = vld [vmem:[%s10 + $0xb0] sm:$0xff]
    %v7117 = vld [vmem:[%s10 + $0xb8] sm:$0xff]
    %v7118 = vld [vmem:[%s10 + $0xc0] sm:$0xff]
    %v7119 = vld [vmem:[%s10 + $0xc8] sm:$0xff]
    %v7120 = vld [vmem:[%s10 + $0xd0] sm:$0xff]
    %v7121 = vld [vmem:[%s10 + $0xd8] sm:$0xff]
    %v7122 = vld [vmem:[%s10 + $0xe0] sm:$0xff]
    %v7123 = vld [vmem:[%s10 + $0xe8] sm:$0xff]
    %v7124 = vld [vmem:[%s10 + $0xf0] sm:$0xff]
    %v7125 = vld [vmem:[%s10 + $0xf8] sm:$0xff]
    %v7127 = vsel %vm94, %v7073, 0
    %v7130 = vsel %vm94, %v7074, 0
    %7132 = vmatprep.subr.mxu0 %v7095
    %7133 = vmatpush1.msra.mxu0 %v7094
    %7134 = vmatprep.subr.mxu0 %v7099
    %7135 = vmatpush1.msra.mxu0 %v7098
    %7136 = vmatprep.subr.mxu0 %v7103
    %7137 = vmatpush1.msra.mxu0 %v7102
    %7138 = vmatprep.subr.mxu0 %v7107
    %7139 = vmatpush1.msra.mxu0 %v7106
    %7140 = vmatprep.subr.mxu0 %v7111
    %7141 = vmatpush1.msra.mxu0 %v7110
    %7142 = vmatprep.subr.mxu0 %v7115
    %7143 = vmatpush1.msra.mxu0 %v7114
    %7144 = vmatprep.subr.mxu0 %v7119
    %7145 = vmatpush1.msra.mxu0 %v7118
    %7146 = vmatprep.subr.mxu0 %v7123
    %7147 = vmatpush1.msra.mxu0 %v7122
    %7148 = vmatprep.subr.mxu0 0.0
    %7149 = vmatpush1.msra.mxu0 0.0
    %7150 = vmatprep.subr.mxu0 0.0
    %7151 = vmatpush1.msra.mxu0 0.0
    %7152 = vmatprep.subr.mxu0 0.0
    %7153 = vmatpush1.msra.mxu0 0.0
    %7154 = vmatprep.subr.mxu0 0.0
    %7155 = vmatpush1.msra.mxu0 0.0
    %7156 = vmatprep.subr.mxu0 0.0
    %7157 = vmatpush1.msra.mxu0 0.0
    %7158 = vmatprep.subr.mxu0 0.0
    %7159 = vmatpush1.msra.mxu0 0.0
    %7160 = vmatprep.subr.mxu0 0.0
    %7161 = vmatpush1.msra.mxu0 0.0
    %7162 = vmatprep.subr.mxu0 0.0
    %7163 = vmatpush1.msra.mxu0 0.0
    %7164 = vmatprep.subr.mxu0 0.0
    %7165 = vmatpush1.msra.mxu0 0.0
    %7166 = vmatprep.subr.mxu0 0.0
    %7167 = vmatpush1.msra.mxu0 0.0
    %7168 = vmatprep.subr.mxu0 0.0
    %7169 = vmatpush1.msra.mxu0 0.0
    %7170 = vmatprep.subr.mxu0 0.0
    %7171 = vmatpush1.msra.mxu0 0.0
    %7172 = vmatprep.subr.mxu0 0.0
    %7173 = vmatpush1.msra.mxu0 0.0
    %7174 = vmatprep.subr.mxu0 0.0
    %7175 = vmatpush1.msra.mxu0 0.0
    %7176 = vmatprep.subr.mxu0 0.0
    %7177 = vmatpush1.msra.mxu0 0.0
    %7178 = vmatprep.subr.mxu0 0.0
    %7179 = vmatpush1.msra.mxu0 0.0
    %7180 = vmatprep.subr.mxu0 0.0
    %7181 = vmatpush1.msra.mxu0 0.0
    %7182 = vmatprep.subr.mxu0 0.0
    %7183 = vmatpush1.msra.mxu0 0.0
    %7184 = vmatprep.subr.mxu0 0.0
    %7185 = vmatpush1.msra.mxu0 0.0
    %7186 = vmatprep.subr.mxu0 0.0
    %7187 = vmatpush1.msra.mxu0 0.0
    %7188 = vmatprep.subr.mxu0 0.0
    %7189 = vmatpush1.msra.mxu0 0.0
    %7190 = vmatprep.subr.mxu0 0.0
    %7191 = vmatpush1.msra.mxu0 0.0
    %7192 = vmatprep.subr.mxu0 0.0
    %7193 = vmatpush1.msra.mxu0 0.0
    %7194 = vmatprep.subr.mxu0 0.0
    %7195 = vmatpush1.msra.mxu0 0.0
    %7196 = vmatprep.mubr.f32.mxu0 0.0
    %7197 = vmatmul.mubr.f32.gmra.mrb[0].mxu0 %v7127
    %v7198 = vpop.f32.mrb[0].mxu0
    %v7199 = vadd.f32 0.0, %v7198
    %v7200 = vpop.f32.mrb[0].mxu0
    %v7201 = vadd.f32 0.0, %v7200
    %7202 = vmatprep.mubr.f32.mxu0 0.0
    %7203 = vmatmul.mubr.f32.gmra.mrb[0].mxu0 %v7130
    %v7204 = vpop.f32.mrb[0].mxu0
    %v7205 = vadd.f32 0.0, %v7204
    %v7206 = vpop.f32.mrb[0].mxu0
    %v7207 = vadd.f32 0.0, %v7206
    %7208 = vdwg.mxu0
    %7209 = vmatprep.subr.mxu0 %v7097
    %7210 = vmatpush1.msra.mxu0 %v7096
    %7211 = vmatprep.subr.mxu0 %v7101
    %7212 = vmatpush1.msra.mxu0 %v7100
    %7213 = vmatprep.subr.mxu0 %v7105
    %7214 = vmatpush1.msra.mxu0 %v7104
    %7215 = vmatprep.subr.mxu0 %v7109
    %7216 = vmatpush1.msra.mxu0 %v7108
    %7217 = vmatprep.subr.mxu0 %v7113
    %7218 = vmatpush1.msra.mxu0 %v7112
    %7219 = vmatprep.subr.mxu0 %v7117
    %7220 = vmatpush1.msra.mxu0 %v7116
    %7221 = vmatprep.subr.mxu0 %v7121
    %7222 = vmatpush1.msra.mxu0 %v7120
    %7223 = vmatprep.subr.mxu0 %v7125
    %7224 = vmatpush1.msra.mxu0 %v7124
    %7225 = vmatprep.subr.mxu0 0.0
    %7226 = vmatpush1.msra.mxu0 0.0
    %7227 = vmatprep.subr.mxu0 0.0
    %7228 = vmatpush1.msra.mxu0 0.0
    %7229 = vmatprep.subr.mxu0 0.0
    %7230 = vmatpush1.msra.mxu0 0.0
    %7231 = vmatprep.subr.mxu0 0.0
    %7232 = vmatpush1.msra.mxu0 0.0
    %7233 = vmatprep.subr.mxu0 0.0
    %7234 = vmatpush1.msra.mxu0 0.0
    %7235 = vmatprep.subr.mxu0 0.0
    %7236 = vmatpush1.msra.mxu0 0.0
    %7237 = vmatprep.subr.mxu0 0.0
    %7238 = vmatpush1.msra.mxu0 0.0
    %7239 = vmatprep.subr.mxu0 0.0
    %7240 = vmatpush1.msra.mxu0 0.0
    %7241 = vmatprep.subr.mxu0 0.0
    %7242 = vmatpush1.msra.mxu0 0.0
    %7243 = vmatprep.subr.mxu0 0.0
    %7244 = vmatpush1.msra.mxu0 0.0
    %7245 = vmatprep.subr.mxu0 0.0
    %7246 = vmatpush1.msra.mxu0 0.0
    %7247 = vmatprep.subr.mxu0 0.0
    %7248 = vmatpush1.msra.mxu0 0.0
    %7249 = vmatprep.subr.mxu0 0.0
    %7250 = vmatpush1.msra.mxu0 0.0
    %7251 = vmatprep.subr.mxu0 0.0
    %7252 = vmatpush1.msra.mxu0 0.0
    %7253 = vmatprep.subr.mxu0 0.0
    %7254 = vmatpush1.msra.mxu0 0.0
    %7255 = vmatprep.subr.mxu0 0.0
    %7256 = vmatpush1.msra.mxu0 0.0
    %7257 = vmatprep.subr.mxu0 0.0
    %7258 = vmatpush1.msra.mxu0 0.0
    %7259 = vmatprep.subr.mxu0 0.0
    %7260 = vmatpush1.msra.mxu0 0.0
    %7261 = vmatprep.subr.mxu0 0.0
    %7262 = vmatpush1.msra.mxu0 0.0
    %7263 = vmatprep.subr.mxu0 0.0
    %7264 = vmatpush1.msra.mxu0 0.0
    %7265 = vmatprep.subr.mxu0 0.0
    %7266 = vmatpush1.msra.mxu0 0.0
    %7267 = vmatprep.subr.mxu0 0.0
    %7268 = vmatpush1.msra.mxu0 0.0
    %7269 = vmatprep.subr.mxu0 0.0
    %7270 = vmatpush1.msra.mxu0 0.0
    %7271 = vmatprep.subr.mxu0 0.0
    %7272 = vmatpush1.msra.mxu0 0.0
    %7273 = vmatprep.mubr.f32.mxu0 0.0
    %7274 = vmatmul.mubr.f32.gmra.mrb[0].mxu0 %v7127
    %v7275 = vpop.f32.mrb[0].mxu0
    %v7276 = vadd.f32 0.0, %v7275
    %v7277 = vpop.f32.mrb[0].mxu0
    %v7278 = vadd.f32 0.0, %v7277
    %7279 = vmatprep.mubr.f32.mxu0 0.0
    %7280 = vmatmul.mubr.f32.gmra.mrb[0].mxu0 %v7130
    %v7281 = vpop.f32.mrb[0].mxu0
    %v7282 = vadd.f32 0.0, %v7281
    %v7283 = vpop.f32.mrb[0].mxu0
    %v7284 = vadd.f32 0.0, %v7283
    %7285 = vdwg.mxu0
    %v7286 = vld [vmem:[%s11] sm:$0xff]
    %v7287 = vld [vmem:[%s11 + $0x8] sm:$0xff]
    %v7288 = vld [vmem:[%s11 + $0x10] sm:$0xff]
    %v7289 = vld [vmem:[%s11 + $0x18] sm:$0xff]
    %v7290 = vld [vmem:[%s11 + $0x20] sm:$0xff]
    %v7291 = vld [vmem:[%s11 + $0x28] sm:$0xff]
    %v7292 = vld [vmem:[%s11 + $0x30] sm:$0xff]
    %v7293 = vld [vmem:[%s11 + $0x38] sm:$0xff]
    %v7294 = vld [vmem:[%s11 + $0x40] sm:$0xff]
    %v7295 = vld [vmem:[%s11 + $0x48] sm:$0xff]
    %v7296 = vld [vmem:[%s11 + $0x50] sm:$0xff]
    %v7297 = vld [vmem:[%s11 + $0x58] sm:$0xff]
    %v7298 = vld [vmem:[%s11 + $0x60] sm:$0xff]
    %v7299 = vld [vmem:[%s11 + $0x68] sm:$0xff]
    %v7300 = vld [vmem:[%s11 + $0x70] sm:$0xff]
    %v7301 = vld [vmem:[%s11 + $0x78] sm:$0xff]
    %v7302 = vld [vmem:[%s11 + $0x80] sm:$0xff]
    %v7303 = vld [vmem:[%s11 + $0x88] sm:$0xff]
    %v7304 = vld [vmem:[%s11 + $0x90] sm:$0xff]
    %v7305 = vld [vmem:[%s11 + $0x98] sm:$0xff]
    %v7306 = vld [vmem:[%s11 + $0xa0] sm:$0xff]
    %v7307 = vld [vmem:[%s11 + $0xa8] sm:$0xff]
    %v7308 = vld [vmem:[%s11 + $0xb0] sm:$0xff]
    %v7309 = vld [vmem:[%s11 + $0xb8] sm:$0xff]
    %v7310 = vld [vmem:[%s11 + $0xc0] sm:$0xff]
    %v7311 = vld [vmem:[%s11 + $0xc8] sm:$0xff]
    %v7312 = vld [vmem:[%s11 + $0xd0] sm:$0xff]
    %v7313 = vld [vmem:[%s11 + $0xd8] sm:$0xff]
    %v7314 = vld [vmem:[%s11 + $0xe0] sm:$0xff]
    %v7315 = vld [vmem:[%s11 + $0xe8] sm:$0xff]
    %v7316 = vld [vmem:[%s11 + $0xf0] sm:$0xff]
    %v7317 = vld [vmem:[%s11 + $0xf8] sm:$0xff]
    %v7319 = vsel %vm94, %v7077, 0
    %v7322 = vsel %vm94, %v7078, 0
    %7324 = vmatprep.subr.mxu0 %v7287
    %7325 = vmatpush1.msra.mxu0 %v7286
    %7326 = vmatprep.subr.mxu0 %v7291
    %7327 = vmatpush1.msra.mxu0 %v7290
    %7328 = vmatprep.subr.mxu0 %v7295
    %7329 = vmatpush1.msra.mxu0 %v7294
    %7330 = vmatprep.subr.mxu0 %v7299
    %7331 = vmatpush1.msra.mxu0 %v7298
    %7332 = vmatprep.subr.mxu0 %v7303
    %7333 = vmatpush1.msra.mxu0 %v7302
    %7334 = vmatprep.subr.mxu0 %v7307
    %7335 = vmatpush1.msra.mxu0 %v7306
    %7336 = vmatprep.subr.mxu0 %v7311
    %7337 = vmatpush1.msra.mxu0 %v7310
    %7338 = vmatprep.subr.mxu0 %v7315
    %7339 = vmatpush1.msra.mxu0 %v7314
    %7340 = vmatprep.subr.mxu0 0.0
    %7341 = vmatpush1.msra.mxu0 0.0
    %7342 = vmatprep.subr.mxu0 0.0
    %7343 = vmatpush1.msra.mxu0 0.0
    %7344 = vmatprep.subr.mxu0 0.0
    %7345 = vmatpush1.msra.mxu0 0.0
    %7346 = vmatprep.subr.mxu0 0.0
    %7347 = vmatpush1.msra.mxu0 0.0
    %7348 = vmatprep.subr.mxu0 0.0
    %7349 = vmatpush1.msra.mxu0 0.0
    %7350 = vmatprep.subr.mxu0 0.0
    %7351 = vmatpush1.msra.mxu0 0.0
    %7352 = vmatprep.subr.mxu0 0.0
    %7353 = vmatpush1.msra.mxu0 0.0
    %7354 = vmatprep.subr.mxu0 0.0
    %7355 = vmatpush1.msra.mxu0 0.0
    %7356 = vmatprep.subr.mxu0 0.0
    %7357 = vmatpush1.msra.mxu0 0.0
    %7358 = vmatprep.subr.mxu0 0.0
    %7359 = vmatpush1.msra.mxu0 0.0
    %7360 = vmatprep.subr.mxu0 0.0
    %7361 = vmatpush1.msra.mxu0 0.0
    %7362 = vmatprep.subr.mxu0 0.0
    %7363 = vmatpush1.msra.mxu0 0.0
    %7364 = vmatprep.subr.mxu0 0.0
    %7365 = vmatpush1.msra.mxu0 0.0
    %7366 = vmatprep.subr.mxu0 0.0
    %7367 = vmatpush1.msra.mxu0 0.0
    %7368 = vmatprep.subr.mxu0 0.0
    %7369 = vmatpush1.msra.mxu0 0.0
    %7370 = vmatprep.subr.mxu0 0.0
    %7371 = vmatpush1.msra.mxu0 0.0
    %7372 = vmatprep.subr.mxu0 0.0
    %7373 = vmatpush1.msra.mxu0 0.0
    %7374 = vmatprep.subr.mxu0 0.0
    %7375 = vmatpush1.msra.mxu0 0.0
    %7376 = vmatprep.subr.mxu0 0.0
    %7377 = vmatpush1.msra.mxu0 0.0
    %7378 = vmatprep.subr.mxu0 0.0
    %7379 = vmatpush1.msra.mxu0 0.0
    %7380 = vmatprep.subr.mxu0 0.0
    %7381 = vmatpush1.msra.mxu0 0.0
    %7382 = vmatprep.subr.mxu0 0.0
    %7383 = vmatpush1.msra.mxu0 0.0
    %7384 = vmatprep.subr.mxu0 0.0
    %7385 = vmatpush1.msra.mxu0 0.0
    %7386 = vmatprep.subr.mxu0 0.0
    %7387 = vmatpush1.msra.mxu0 0.0
    %7388 = vmatprep.mubr.f32.mxu0 0.0
    %7389 = vmatmul.mubr.f32.gmra.mrb[0].mxu0 %v7319
    %v7390 = vpop.f32.mrb[0].mxu0
    %v7391 = vadd.f32 0.0, %v7390
    %v7392 = vpop.f32.mrb[0].mxu0
    %v7393 = vadd.f32 0.0, %v7392
    %7394 = vmatprep.mubr.f32.mxu0 0.0
    %7395 = vmatmul.mubr.f32.gmra.mrb[0].mxu0 %v7322
    %v7396 = vpop.f32.mrb[0].mxu0
    %v7397 = vadd.f32 0.0, %v7396
    %v7398 = vpop.f32.mrb[0].mxu0
    %v7399 = vadd.f32 0.0, %v7398
    %7400 = vdwg.mxu0
    %7401 = vmatprep.subr.mxu0 %v7289
    %7402 = vmatpush1.msra.mxu0 %v7288
    %7403 = vmatprep.subr.mxu0 %v7293
    %7404 = vmatpush1.msra.mxu0 %v7292
    %7405 = vmatprep.subr.mxu0 %v7297
    %7406 = vmatpush1.msra.mxu0 %v7296
    %7407 = vmatprep.subr.mxu0 %v7301
    %7408 = vmatpush1.msra.mxu0 %v7300
    %7409 = vmatprep.subr.mxu0 %v7305
    %7410 = vmatpush1.msra.mxu0 %v7304
    %7411 = vmatprep.subr.mxu0 %v7309
    %7412 = vmatpush1.msra.mxu0 %v7308
    %7413 = vmatprep.subr.mxu0 %v7313
    %7414 = vmatpush1.msra.mxu0 %v7312
    %7415 = vmatprep.subr.mxu0 %v7317
    %7416 = vmatpush1.msra.mxu0 %v7316
    %7417 = vmatprep.subr.mxu0 0.0
    %7418 = vmatpush1.msra.mxu0 0.0
    %7419 = vmatprep.subr.mxu0 0.0
    %7420 = vmatpush1.msra.mxu0 0.0
    %7421 = vmatprep.subr.mxu0 0.0
    %7422 = vmatpush1.msra.mxu0 0.0
    %7423 = vmatprep.subr.mxu0 0.0
    %7424 = vmatpush1.msra.mxu0 0.0
    %7425 = vmatprep.subr.mxu0 0.0
    %7426 = vmatpush1.msra.mxu0 0.0
    %7427 = vmatprep.subr.mxu0 0.0
    %7428 = vmatpush1.msra.mxu0 0.0
    %7429 = vmatprep.subr.mxu0 0.0
    %7430 = vmatpush1.msra.mxu0 0.0
    %7431 = vmatprep.subr.mxu0 0.0
    %7432 = vmatpush1.msra.mxu0 0.0
    %7433 = vmatprep.subr.mxu0 0.0
    %7434 = vmatpush1.msra.mxu0 0.0
    %7435 = vmatprep.subr.mxu0 0.0
    %7436 = vmatpush1.msra.mxu0 0.0
    %7437 = vmatprep.subr.mxu0 0.0
    %7438 = vmatpush1.msra.mxu0 0.0
    %7439 = vmatprep.subr.mxu0 0.0
    %7440 = vmatpush1.msra.mxu0 0.0
    %7441 = vmatprep.subr.mxu0 0.0
    %7442 = vmatpush1.msra.mxu0 0.0
    %7443 = vmatprep.subr.mxu0 0.0
    %7444 = vmatpush1.msra.mxu0 0.0
    %7445 = vmatprep.subr.mxu0 0.0
    %7446 = vmatpush1.msra.mxu0 0.0
    %7447 = vmatprep.subr.mxu0 0.0
    %7448 = vmatpush1.msra.mxu0 0.0
    %7449 = vmatprep.subr.mxu0 0.0
    %7450 = vmatpush1.msra.mxu0 0.0
    %7451 = vmatprep.subr.mxu0 0.0
    %7452 = vmatpush1.msra.mxu0 0.0
    %7453 = vmatprep.subr.mxu0 0.0
    %7454 = vmatpush1.msra.mxu0 0.0
    %7455 = vmatprep.subr.mxu0 0.0
    %7456 = vmatpush1.msra.mxu0 0.0
    %7457 = vmatprep.subr.mxu0 0.0
    %7458 = vmatpush1.msra.mxu0 0.0
    %7459 = vmatprep.subr.mxu0 0.0
    %7460 = vmatpush1.msra.mxu0 0.0
    %7461 = vmatprep.subr.mxu0 0.0
    %7462 = vmatpush1.msra.mxu0 0.0
    %7463 = vmatprep.subr.mxu0 0.0
    %7464 = vmatpush1.msra.mxu0 0.0
    %7465 = vmatprep.mubr.f32.mxu0 0.0
    %7466 = vmatmul.mubr.f32.gmra.mrb[0].mxu0 %v7319
    %v7467 = vpop.f32.mrb[0].mxu0
    %v7468 = vadd.f32 0.0, %v7467
    %v7469 = vpop.f32.mrb[0].mxu0
    %v7470 = vadd.f32 0.0, %v7469
    %7471 = vmatprep.mubr.f32.mxu0 0.0
    %7472 = vmatmul.mubr.f32.gmra.mrb[0].mxu0 %v7322
    %v7473 = vpop.f32.mrb[0].mxu0
    %v7474 = vadd.f32 0.0, %v7473
    %v7475 = vpop.f32.mrb[0].mxu0
    %v7476 = vadd.f32 0.0, %v7475
    %7477 = vdwg.mxu0
    %v7478 = vmul.f32 %v7199, %v7391
    %v7479 = vmul.f32 %v7201, %v7393
    %v7480 = vmul.f32 %v7276, %v7468
    %v7481 = vmul.f32 %v7278, %v7470
    %v7482 = vmul.f32 %v7205, %v7397
    %v7483 = vmul.f32 %v7207, %v7399
    %v7484 = vmul.f32 %v7282, %v7474
    %v7485 = vmul.f32 %v7284, %v7476
    %7486 = vst [vmem:[#allocation4] sm:$0xff] %v7478
    %7487 = vst [vmem:[#allocation4 + $0x8] sm:$0xff] %v7479
    %7488 = vst [vmem:[#allocation4 + $0x10] sm:$0xff] %v7480
    %7489 = vst [vmem:[#allocation4 + $0x18] sm:$0xff] %v7481
    %7490 = vst [vmem:[#allocation4 + $0x20] sm:$0xff] %v7482
    %7491 = vst [vmem:[#allocation4 + $0x28] sm:$0xff] %v7483
    %7492 = vst [vmem:[#allocation4 + $0x30] sm:$0xff] %v7484
    %7493 = vst [vmem:[#allocation4 + $0x38] sm:$0xff] %v7485
    %v7494 = vld [vmem:[%s12] sm:$0xff]
    %v7495 = vld [vmem:[%s12 + $0x8] sm:$0xff]
    %v7496 = vld [vmem:[%s12 + $0x10] sm:$0xff]
    %v7497 = vld [vmem:[%s12 + $0x18] sm:$0xff]
    %v7498 = vld [vmem:[%s12 + $0x20] sm:$0xff]
    %v7499 = vld [vmem:[%s12 + $0x28] sm:$0xff]
    %v7500 = vld [vmem:[%s12 + $0x30] sm:$0xff]
    %v7501 = vld [vmem:[%s12 + $0x38] sm:$0xff]
    %v7502 = vld [vmem:[%s12 + $0x40] sm:$0xff]
    %v7503 = vld [vmem:[%s12 + $0x48] sm:$0xff]
    %v7504 = vld [vmem:[%s12 + $0x50] sm:$0xff]
    %v7505 = vld [vmem:[%s12 + $0x58] sm:$0xff]
    %v7506 = vld [vmem:[%s12 + $0x60] sm:$0xff]
    %v7507 = vld [vmem:[%s12 + $0x68] sm:$0xff]
    %v7508 = vld [vmem:[%s12 + $0x70] sm:$0xff]
    %v7509 = vld [vmem:[%s12 + $0x78] sm:$0xff]
    %v7510 = vld [vmem:[%s12 + $0x80] sm:$0xff]
    %v7511 = vld [vmem:[%s12 + $0x88] sm:$0xff]
    %v7512 = vld [vmem:[%s12 + $0x90] sm:$0xff]
    %v7513 = vld [vmem:[%s12 + $0x98] sm:$0xff]
    %v7514 = vld [vmem:[%s12 + $0xa0] sm:$0xff]
    %v7515 = vld [vmem:[%s12 + $0xa8] sm:$0xff]
    %v7516 = vld [vmem:[%s12 + $0xb0] sm:$0xff]
    %v7517 = vld [vmem:[%s12 + $0xb8] sm:$0xff]
    %v7518 = vld [vmem:[%s12 + $0xc0] sm:$0xff]
    %v7519 = vld [vmem:[%s12 + $0xc8] sm:$0xff]
    %v7520 = vld [vmem:[%s12 + $0xd0] sm:$0xff]
    %v7521 = vld [vmem:[%s12 + $0xd8] sm:$0xff]
    %v7522 = vld [vmem:[%s12 + $0xe0] sm:$0xff]
    %v7523 = vld [vmem:[%s12 + $0xe8] sm:$0xff]
    %v7524 = vld [vmem:[%s12 + $0xf0] sm:$0xff]
    %v7525 = vld [vmem:[%s12 + $0xf8] sm:$0xff]
    %v7526 = vld [vmem:[%s12 + $0x100] sm:$0xff]
    %v7527 = vld [vmem:[%s12 + $0x108] sm:$0xff]
    %v7528 = vld [vmem:[%s12 + $0x110] sm:$0xff]
    %v7529 = vld [vmem:[%s12 + $0x118] sm:$0xff]
    %v7530 = vld [vmem:[%s12 + $0x120] sm:$0xff]
    %v7531 = vld [vmem:[%s12 + $0x128] sm:$0xff]
    %v7532 = vld [vmem:[%s12 + $0x130] sm:$0xff]
    %v7533 = vld [vmem:[%s12 + $0x138] sm:$0xff]
    %v7534 = vld [vmem:[%s12 + $0x140] sm:$0xff]
    %v7535 = vld [vmem:[%s12 + $0x148] sm:$0xff]
    %v7536 = vld [vmem:[%s12 + $0x150] sm:$0xff]
    %v7537 = vld [vmem:[%s12 + $0x158] sm:$0xff]
    %v7538 = vld [vmem:[%s12 + $0x160] sm:$0xff]
    %v7539 = vld [vmem:[%s12 + $0x168] sm:$0xff]
    %v7540 = vld [vmem:[%s12 + $0x170] sm:$0xff]
    %v7541 = vld [vmem:[%s12 + $0x178] sm:$0xff]
    %v7542 = vld [vmem:[%s12 + $0x180] sm:$0xff]
    %v7543 = vld [vmem:[%s12 + $0x188] sm:$0xff]
    %v7544 = vld [vmem:[%s12 + $0x190] sm:$0xff]
    %v7545 = vld [vmem:[%s12 + $0x198] sm:$0xff]
    %v7546 = vld [vmem:[%s12 + $0x1a0] sm:$0xff]
    %v7547 = vld [vmem:[%s12 + $0x1a8] sm:$0xff]
    %v7548 = vld [vmem:[%s12 + $0x1b0] sm:$0xff]
    %v7549 = vld [vmem:[%s12 + $0x1b8] sm:$0xff]
    %v7550 = vld [vmem:[%s12 + $0x1c0] sm:$0xff]
    %v7551 = vld [vmem:[%s12 + $0x1c8] sm:$0xff]
    %v7552 = vld [vmem:[%s12 + $0x1d0] sm:$0xff]
    %v7553 = vld [vmem:[%s12 + $0x1d8] sm:$0xff]
    %v7554 = vld [vmem:[%s12 + $0x1e0] sm:$0xff]
    %v7555 = vld [vmem:[%s12 + $0x1e8] sm:$0xff]
    %v7556 = vld [vmem:[%s12 + $0x1f0] sm:$0xff]
    %v7557 = vld [vmem:[%s12 + $0x1f8] sm:$0xff]
    %v7558 = vld [vmem:[%s13] sm:$0x1]
    %v7560 = vlaneseq
    %v7561 = vshrl.u32 %v7560, 7
    %v7562 = vsub.s32 0, %v7561
    %v7563 = vrot.slane %v7558, %v7562
    %7565 = vmatprep.subr.mxu0 0.0
    %7566 = vmatpush1.msra.mxu0 %v7494
    %7567 = vmatprep.subr.mxu0 0.0
    %7568 = vmatpush1.msra.mxu0 %v7495
    %7569 = vmatprep.subr.mxu0 0.0
    %7570 = vmatpush1.msra.mxu0 %v7496
    %7571 = vmatprep.subr.mxu0 0.0
    %7572 = vmatpush1.msra.mxu0 %v7497
    %7573 = vmatprep.subr.mxu0 0.0
    %7574 = vmatpush1.msra.mxu0 %v7498
    %7575 = vmatprep.subr.mxu0 0.0
    %7576 = vmatpush1.msra.mxu0 %v7499
    %7577 = vmatprep.subr.mxu0 0.0
    %7578 = vmatpush1.msra.mxu0 %v7500
    %7579 = vmatprep.subr.mxu0 0.0
    %7580 = vmatpush1.msra.mxu0 %v7501
    %7581 = vmatprep.subr.mxu0 0.0
    %7582 = vmatpush1.msra.mxu0 %v7502
    %7583 = vmatprep.subr.mxu0 0.0
    %7584 = vmatpush1.msra.mxu0 %v7503
    %7585 = vmatprep.subr.mxu0 0.0
    %7586 = vmatpush1.msra.mxu0 %v7504
    %7587 = vmatprep.subr.mxu0 0.0
    %7588 = vmatpush1.msra.mxu0 %v7505
    %7589 = vmatprep.subr.mxu0 0.0
    %7590 = vmatpush1.msra.mxu0 %v7506
    %7591 = vmatprep.subr.mxu0 0.0
    %7592 = vmatpush1.msra.mxu0 %v7507
    %7593 = vmatprep.subr.mxu0 0.0
    %7594 = vmatpush1.msra.mxu0 %v7508
    %7595 = vmatprep.subr.mxu0 0.0
    %7596 = vmatpush1.msra.mxu0 %v7509
    %7597 = vmatprep.subr.mxu0 0.0
    %7598 = vmatpush1.msra.mxu0 %v7510
    %7599 = vmatprep.subr.mxu0 0.0
    %7600 = vmatpush1.msra.mxu0 %v7511
    %7601 = vmatprep.subr.mxu0 0.0
    %7602 = vmatpush1.msra.mxu0 %v7512
    %7603 = vmatprep.subr.mxu0 0.0
    %7604 = vmatpush1.msra.mxu0 %v7513
    %7605 = vmatprep.subr.mxu0 0.0
    %7606 = vmatpush1.msra.mxu0 %v7514
    %7607 = vmatprep.subr.mxu0 0.0
    %7608 = vmatpush1.msra.mxu0 %v7515
    %7609 = vmatprep.subr.mxu0 0.0
    %7610 = vmatpush1.msra.mxu0 %v7516
    %7611 = vmatprep.subr.mxu0 0.0
    %7612 = vmatpush1.msra.mxu0 %v7517
    %7613 = vmatprep.subr.mxu0 0.0
    %7614 = vmatpush1.msra.mxu0 %v7518
    %7615 = vmatprep.subr.mxu0 0.0
    %7616 = vmatpush1.msra.mxu0 %v7519
    %7617 = vmatprep.subr.mxu0 0.0
    %7618 = vmatpush1.msra.mxu0 %v7520
    %7619 = vmatprep.subr.mxu0 0.0
    %7620 = vmatpush1.msra.mxu0 %v7521
    %7621 = vmatprep.subr.mxu0 0.0
    %7622 = vmatpush1.msra.mxu0 %v7522
    %7623 = vmatprep.subr.mxu0 0.0
    %7624 = vmatpush1.msra.mxu0 %v7523
    %7625 = vmatprep.subr.mxu0 0.0
    %7626 = vmatpush1.msra.mxu0 %v7524
    %7627 = vmatprep.subr.mxu0 0.0
    %7628 = vmatpush1.msra.mxu0 %v7525
    %7629 = vmatprep.mubr.f32.mxu0 %v7479
    %7630 = vmatmul.mubr.f32.gmra.mrb[0].mxu0 %v7478
    %v7631 = vpop.f32.mrb[0].mxu0
    %v7632 = vadd.f32 %v7563, %v7631
    %v7633 = vpop.f32.mrb[0].mxu0
    %7634 = vmatprep.mubr.f32.mxu0 %v7483
    %7635 = vmatmul.mubr.f32.gmra.mrb[0].mxu0 %v7482
    %v7636 = vpop.f32.mrb[0].mxu0
    %v7637 = vadd.f32 %v7563, %v7636
    %v7638 = vpop.f32.mrb[0].mxu0
    %7639 = vdwg.mxu0
    %7640 = vmatprep.subr.mxu0 0.0
    %7641 = vmatpush1.msra.mxu0 %v7526
    %7642 = vmatprep.subr.mxu0 0.0
    %7643 = vmatpush1.msra.mxu0 %v7527
    %7644 = vmatprep.subr.mxu0 0.0
    %7645 = vmatpush1.msra.mxu0 %v7528
    %7646 = vmatprep.subr.mxu0 0.0
    %7647 = vmatpush1.msra.mxu0 %v7529
    %7648 = vmatprep.subr.mxu0 0.0
    %7649 = vmatpush1.msra.mxu0 %v7530
    %7650 = vmatprep.subr.mxu0 0.0
    %7651 = vmatpush1.msra.mxu0 %v7531
    %7652 = vmatprep.subr.mxu0 0.0
    %7653 = vmatpush1.msra.mxu0 %v7532
    %7654 = vmatprep.subr.mxu0 0.0
    %7655 = vmatpush1.msra.mxu0 %v7533
    %7656 = vmatprep.subr.mxu0 0.0
    %7657 = vmatpush1.msra.mxu0 %v7534
    %7658 = vmatprep.subr.mxu0 0.0
    %7659 = vmatpush1.msra.mxu0 %v7535
    %7660 = vmatprep.subr.mxu0 0.0
    %7661 = vmatpush1.msra.mxu0 %v7536
    %7662 = vmatprep.subr.mxu0 0.0
    %7663 = vmatpush1.msra.mxu0 %v7537
    %7664 = vmatprep.subr.mxu0 0.0
    %7665 = vmatpush1.msra.mxu0 %v7538
    %7666 = vmatprep.subr.mxu0 0.0
    %7667 = vmatpush1.msra.mxu0 %v7539
    %7668 = vmatprep.subr.mxu0 0.0
    %7669 = vmatpush1.msra.mxu0 %v7540
    %7670 = vmatprep.subr.mxu0 0.0
    %7671 = vmatpush1.msra.mxu0 %v7541
    %7672 = vmatprep.subr.mxu0 0.0
    %7673 = vmatpush1.msra.mxu0 %v7542
    %7674 = vmatprep.subr.mxu0 0.0
    %7675 = vmatpush1.msra.mxu0 %v7543
    %7676 = vmatprep.subr.mxu0 0.0
    %7677 = vmatpush1.msra.mxu0 %v7544
    %7678 = vmatprep.subr.mxu0 0.0
    %7679 = vmatpush1.msra.mxu0 %v7545
    %7680 = vmatprep.subr.mxu0 0.0
    %7681 = vmatpush1.msra.mxu0 %v7546
    %7682 = vmatprep.subr.mxu0 0.0
    %7683 = vmatpush1.msra.mxu0 %v7547
    %7684 = vmatprep.subr.mxu0 0.0
    %7685 = vmatpush1.msra.mxu0 %v7548
    %7686 = vmatprep.subr.mxu0 0.0
    %7687 = vmatpush1.msra.mxu0 %v7549
    %7688 = vmatprep.subr.mxu0 0.0
    %7689 = vmatpush1.msra.mxu0 %v7550
    %7690 = vmatprep.subr.mxu0 0.0
    %7691 = vmatpush1.msra.mxu0 %v7551
    %7692 = vmatprep.subr.mxu0 0.0
    %7693 = vmatpush1.msra.mxu0 %v7552
    %7694 = vmatprep.subr.mxu0 0.0
    %7695 = vmatpush1.msra.mxu0 %v7553
    %7696 = vmatprep.subr.mxu0 0.0
    %7697 = vmatpush1.msra.mxu0 %v7554
    %7698 = vmatprep.subr.mxu0 0.0
    %7699 = vmatpush1.msra.mxu0 %v7555
    %7700 = vmatprep.subr.mxu0 0.0
    %7701 = vmatpush1.msra.mxu0 %v7556
    %7702 = vmatprep.subr.mxu0 0.0
    %7703 = vmatpush1.msra.mxu0 %v7557
    %7704 = vmatprep.mubr.f32.mxu0 %v7481
    %7705 = vmatmul.mubr.f32.gmra.mrb[0].mxu0 %v7480
    %v7706 = vpop.f32.mrb[0].mxu0
    %v7707 = vadd.f32 %v7632, %v7706
    %v7708 = vpop.f32.mrb[0].mxu0
    %7709 = vmatprep.mubr.f32.mxu0 %v7485
    %7710 = vmatmul.mubr.f32.gmra.mrb[0].mxu0 %v7484
    %v7711 = vpop.f32.mrb[0].mxu0
    %v7712 = vadd.f32 %v7637, %v7711
    %v7713 = vpop.f32.mrb[0].mxu0
    %7714 = vdwg.mxu0
    %7715 = vst [vmem:[%s14] sm:$0xff] %v7707
    %7716 = vst [vmem:[%s14 + $0x8] sm:$0xff] %v7712
    %7718 = vset.pattern.permute.xlu0 0
    %7719 = vperm.xlu0 %7718, %v7707
    %v7720 = vpop.permute.xlu0 %7719
    %7723 = vset.pattern.permute.xlu0 0
    %7724 = vperm.xlu0 %7723, %v7712
    %v7725 = vpop.permute.xlu0 %7724
    %vm7727 = vcmp.gt.f32.partialorder %v7707, %v7720
    %vm7728 = vcmp.gt.f32.partialorder %v7712, %v7725
    %vm7729 = vcmp.ge.s32.totalorder %v55, 1
    %vm7730 = vmand %vm7727, %vm7729
    %vm7731 = vmand %vm7728, %vm7729
    %vm7732 = vcmp.lt.s32.totalorder %v55, 4
    %vm7733 = vmand %vm7730, %vm7732
    %vm7734 = vmand %vm7731, %vm7732
    %v7735 = vsel %vm7733, 1, 0
    %v7736 = vsel %vm7734, 1, 0
    %v7737 = vcvt.s32.f32 %v7735
    %v7738 = vcvt.s32.f32 %v7736
    %7739 = vadd.xlane.f32.xlu0 %v7737
    %v7740 = vpop.xlane.xlu0 %7739
    %7741 = vadd.xlane.f32.xlu0 %v7738
    %v7742 = vpop.xlane.xlu0 %7741
    %vm7743 = vcmp.gt.f32.partialorder %v7740, 0.0
    %vm7744 = vcmp.gt.f32.partialorder %v7742, 0.0
    %v7745 = vsel %vm7743, 0.0, 1.0
    %v7746 = vsel %vm7744, 0.0, 1.0
    %v7747 = vsel %vm6814, %v7745, %v7737
    %v7748 = vsel %vm6814, %v7746, %v7738
    %7749 = vst [vmem:[%s15] sm:$0xff] %v7747
    %7750 = vst [vmem:[%s15 + $0x8] sm:$0xff] %v7748
    // Predicated region
    $region58: #{docre_forward.1} parent=1 // pred_check
      _
    $region59: #{docre_forward.1} parent=1 // pred_check_branch
      %7752 = sbr.rel (0) target = $region61
    $region60: #{docre_forward.1} parent=1 // pred_region
      _
    $region61: #{docre_forward.1} parent=1 // pred_fallthru
      _
    // Predicated region
    $region62: #{docre_forward.1} parent=1 // pred_check
      _
    $region63: #{docre_forward.1} parent=1 // pred_check_branch
      %7754 = sbr.rel (0) target = $region65
    $region64: #{docre_forward.1} parent=1 // pred_region
      _
    $region65: #{docre_forward.1} parent=1 // pred_fallthru
      _
    // Predicated region
    $region66: #{docre_forward.1} parent=1 // pred_check
      _
    $region67: #{docre_forward.1} parent=1 // pred_check_branch
      %7756 = sbr.rel (0) target = $region69
    $region68: #{docre_forward.1} parent=1 // pred_region
      _
    $region69: #{docre_forward.1} parent=1 // pred_fallthru
      _
    // Predicated region
    $region70: #{docre_forward.1} parent=1 // pred_check
      _
    $region71: #{docre_forward.1} parent=1 // pred_check_branch
      %7758 = sbr.rel (0) target = $region73
    $region72: #{docre_forward.1} parent=1 // pred_region
      %s7760 = ssub.s32 1024, 1024
      %7761 = vsyncadd [#allocation5], %s7760
      %s7762 = sshll.u32 [#allocation4], 4
      %s7763 = int_to_ptr.vmem [resolvable:$true] %s7762
      %7768 = dma.vmem_to_hbm [thread:$0]  %s7763, 1024, %s17, [#allocation5], 512, 512, 32
    $region73: #{docre_forward.1} parent=1 // pred_fallthru
      _
    // Predicated region
    $region74: #{docre_forward.1} parent=1 // pred_check
      _
    $region75: #{docre_forward.1} parent=1 // pred_check_branch
      %7770 = sbr.rel (0) target = $region77
    $region76: #{docre_forward.1} parent=1 // pred_region
      _
    $region77: #{docre_forward.1} parent=1 // pred_fallthru
      _
    // Predicated region
    $region78: #{docre_forward.1} parent=1 // pred_check
      _
    $region79: #{docre_forward.1} parent=1 // pred_check_branch
      %7772 = sbr.rel (0) target = $region81
    $region80: #{docre_forward.1} parent=1 // pred_region
      _
    $region81: #{docre_forward.1} parent=1 // pred_fallthru
      _
    // Predicated region
    $region82: #{docre_forward.1} parent=1 // pred_check
      _
    $region83: #{docre_forward.1} parent=1 // pred_check_branch
      %7774 = sbr.rel (0) target = $region85
    $region84: #{docre_forward.1} parent=1 // pred_region
      _
    $region85: #{docre_forward.1} parent=1 // pred_fallthru
      _
    // Predicated region
    $region86: #{docre_forward.1} parent=1 // pred_check
      _
    $region87: #{docre_forward.1} parent=1 // pred_check_branch
      %7776 = sbr.rel (0) target = $region89
    $region88: #{docre_forward.1} parent=1 // pred_region
      %7777 = dma.done [#allocation5], 1024
    $region89: #{docre_forward.1} parent=1 // pred_fallthru
      _
    %7778 = vsyncpa [#allocation5], 1

</llo_original>
